<compile_context>
chip_gen: v7x
topology: tpu7x:2x2x1
jax: 0.10.0
libtpu: 0.0.40
codegen_flags: <defaults>
</compile_context>

<pallas_src>
import jax
import jax.numpy as jnp
from jax.experimental import pallas as pl
from jax.experimental.pallas import tpu as pltpu


def _projector_kernel(hv_ref, w1_ref, b1_ref, w2_ref, b2_ref, o_ref, acc_ref):
    """Fused Linear(2048->1024) + ReLU + Linear(1024->proj_dim)."""
    k = pl.program_id(1)            # K-reduction axis (last grid dim)
    tk = w1_ref.shape[0]

    @pl.when(k == 0)
    def _():
        acc_ref[...] = jnp.zeros_like(acc_ref)

    # One K-slice of the first matmul (bf16 MXU, f32 accumulation).
    off = pl.multiple_of(k * tk, 128)
    x = hv_ref[:, pl.ds(off, tk)].astype(w1_ref.dtype)
    acc_ref[...] += jnp.dot(x, w1_ref[...], preferred_element_type=jnp.float32)

    @pl.when(k == pl.num_programs(1) - 1)
    def _():
        h = jnp.maximum(acc_ref[...] + b1_ref[...], 0.0)          # bias + ReLU (f32)
        out = jnp.dot(h.astype(w2_ref.dtype), w2_ref[...],
                      preferred_element_type=jnp.float32)
        o_ref[...] = (out + b2_ref[...]).astype(o_ref.dtype)


def projector_forward(hv, w1, b1, w2, b2, *, tk=None, out_dtype=jnp.float32):
    """Pallas projector: hv[B,K] -> ReLU(hv@W1+b1)@W2+b2 -> [B, proj_dim]."""
    B, K = hv.shape
    K2, H = w1.shape
    H2, D = w2.shape
    assert K == K2 and H == H2

    # K tile: full K by default (K=2048 -> single reduction step).
    if tk is None:
        tk = K if K <= 2048 else 2048
    if K % tk != 0:
        tk = K                      # fall back: no K split for odd feat dims
    # Batch tile: fill sublanes / feed megacore for real batches; full B
    # (legal per the "equals full array dim" rule) for toy batches.
    if B % 256 == 0:
        bm = 256
    elif B % 128 == 0:
        bm = 128
    else:
        bm = B

    grid = (B // bm, K // tk)

    def nbytes(a):
        return a.size * a.dtype.itemsize

    flops = 2 * B * K * H + 2 * B * H * D
    bytes_accessed = (nbytes(hv) + nbytes(w1) + nbytes(b1) + nbytes(w2)
                      + nbytes(b2) + B * D * jnp.dtype(out_dtype).itemsize)

    resident = pl.Buffered(1)       # fetched once; no shadow double-buffer

    return pl.pallas_call(
        _projector_kernel,
        out_shape=jax.ShapeDtypeStruct((B, D), out_dtype),
        grid_spec=pltpu.PrefetchScalarGridSpec(
            num_scalar_prefetch=0,
            grid=grid,
            in_specs=[
                # hv: resident per batch tile, sliced in-kernel along K.
                pl.BlockSpec((bm, K), lambda b, k: (b, 0)),
                # W1: streamed in K slices.
                pl.BlockSpec((tk, H), lambda b, k: (k, 0)),
                # b1 / W2 / b2: resident, single-buffered.
                pl.BlockSpec((1, H), lambda b, k: (0, 0), pipeline_mode=resident),
                pl.BlockSpec((H, D), lambda b, k: (0, 0), pipeline_mode=resident),
                pl.BlockSpec((1, D), lambda b, k: (0, 0), pipeline_mode=resident),
            ],
            out_specs=pl.BlockSpec((bm, D), lambda b, k: (b, 0)),
            scratch_shapes=[pltpu.VMEM((bm, H), jnp.float32)],
        ),
        compiler_params=pltpu.CompilerParams(
            # batch axis parallel (v7x megacore), K axis is the reduction.
            dimension_semantics=("parallel", "arbitrary"),
        ),
        cost_estimate=pl.CostEstimate(
            flops=flops, transcendentals=0, bytes_accessed=bytes_accessed),
    )(hv, w1, b1, w2, b2)


class ConVIRTPallas:
    """JAX/Pallas counterpart of the PyTorch ConVIRT module."""

    def __init__(self, image_model, text_model, proj_dim_size, *, key,
                 feat_dim=2048, hidden_dim=1024):
        # image_model / text_model are dependency-injected callables,
        # mirroring the nn.Module arguments of the reference __init__.
        self.image_model = image_model
        self.text_model = text_model

        k1, k2 = jax.random.split(key)
        s1 = 1.0 / jnp.sqrt(jnp.float32(feat_dim))
        s2 = 1.0 / jnp.sqrt(jnp.float32(hidden_dim))
        # Projector(2048, 1024, proj_dim): Linear -> ReLU -> Linear.
        # Weights streamed in bf16 (bandwidth-bound kernel); biases stay f32.
        self.w1 = jax.random.uniform(
            k1, (feat_dim, hidden_dim), jnp.float32, -s1, s1).astype(jnp.bfloat16)
        self.b1 = jnp.zeros((1, hidden_dim), jnp.float32)
        self.w2 = jax.random.uniform(
            k2, (hidden_dim, proj_dim_size), jnp.float32, -s2, s2).astype(jnp.bfloat16)
        self.b2 = jnp.zeros((1, proj_dim_size), jnp.float32)

    def forward(self, input_batch):
        hv = self.image_model(input_batch["image"])
        v = projector_forward(hv.astype(jnp.bfloat16),
                              self.w1, self.b1, self.w2, self.b2)
        u = self.text_model(input_batch["tokenized_data"])
        return (v, u)


if __name__ == "__main__":
    key = jax.random.PRNGKey(0)
    k_img, k_txt, k_params = jax.random.split(key, 3)

    B, C, Hs, Ws = 2, 2048, 4, 4     # image feature map feeding a 2048-d projector
    S, E = 8, 32                     # small "tokenized" sequence
    proj_dim = 512

    image = jax.random.normal(k_img, (B, C, Hs, Ws), dtype=jnp.float32)
    tokens = jax.random.normal(k_txt, (B, S, E), dtype=jnp.float32)

    # TODO(synk): image_model / text_model are dependency-injected nn.Modules
    # with no definition in the spec; deterministic stand-ins (global average
    # pool / sequence mean pool) are used so the ConVIRT forward wiring runs.
    def image_model_stub(x):         # [B, 2048, H, W] -> [B, 2048]
        return jnp.mean(x, axis=(2, 3))

    def text_model_stub(t):          # [B, S, E] -> [B, E]
        return jnp.mean(t, axis=1)

    model = ConVIRTPallas(image_model_stub, text_model_stub, proj_dim, key=k_params)
    v, u = model.forward({"image": image, "tokenized_data": tokens})
    jax.block_until_ready((v, u))

    # Pure-JAX reference emulating the kernel's dtype path
    # (bf16 inputs/weights, f32 accumulation, bf16 intermediate activation).
    hv = image_model_stub(image)
    hv_bf = hv.astype(jnp.bfloat16)
    h_ref = jnp.maximum(
        jnp.dot(hv_bf, model.w1, preferred_element_type=jnp.float32) + model.b1, 0.0)
    v_ref = jnp.dot(h_ref.astype(jnp.bfloat16), model.w2,
                    preferred_element_type=jnp.float32) + model.b2
    u_ref = text_model_stub(tokens)

    assert v.shape == (B, proj_dim) and v.dtype == jnp.float32
    assert u.shape == (B, E)
    assert bool(jnp.allclose(v, v_ref, atol=1e-2, rtol=1e-2))
    assert bool(jnp.allclose(u, u_ref))

    print("KERNEL_OK")
</pallas_src>

<mosaic_0001>
module attributes {stable_mosaic.version = 11 : i64} {
  func.func @_projector_kernel(%arg0: i32, %arg1: i32, %arg2: memref<2x2048xbf16, #tpu.memory_space<vmem>>, %arg3: memref<2048x1024xbf16, #tpu.memory_space<vmem>>, %arg4: memref<1x1024xf32, #tpu.memory_space<vmem>>, %arg5: memref<1024x512xbf16, #tpu.memory_space<vmem>>, %arg6: memref<1x512xf32, #tpu.memory_space<vmem>>, %arg7: memref<2x512xf32, #tpu.memory_space<vmem>>, %arg8: memref<2x1024xf32, #tpu.memory_space<vmem>>) attributes {dimension_semantics = [#tpu.dimension_semantics<parallel>, #tpu.dimension_semantics<arbitrary>], iteration_bounds = array<i64: 1, 1>, scalar_prefetch = 0 : i64, scratch_operands = 1 : i64, tpu.core_type = #tpu.core_type<tc>, window_params = [{transform_indices = @transform_0, window_bounds = array<i64: 2, 2048>}, {transform_indices = @transform_1, window_bounds = array<i64: 2048, 1024>}, {pipeline_mode = #tpu.pipeline_mode<synchronous>, transform_indices = @transform_2, window_bounds = array<i64: 1, 1024>}, {pipeline_mode = #tpu.pipeline_mode<synchronous>, transform_indices = @transform_3, window_bounds = array<i64: 1024, 512>}, {pipeline_mode = #tpu.pipeline_mode<synchronous>, transform_indices = @transform_4, window_bounds = array<i64: 1, 512>}, {transform_indices = @transform_5, window_bounds = array<i64: 2, 512>}]} {
    %c0_i32 = arith.constant 0 : i32
    %0 = arith.cmpi eq, %arg1, %c0_i32 : i32
    %1 = arith.extui %0 : i1 to i32
    %c0_i32_0 = arith.constant 0 : i32
    %2 = arith.cmpi ne, %1, %c0_i32_0 : i32
    scf.if %2 {
      %cst_9 = arith.constant 0.000000e+00 : f32
      %15 = vector.broadcast %cst_9 : f32 to vector<2x1024xf32>
      %c0_10 = arith.constant 0 : index
      %c0_11 = arith.constant 0 : index
      %16 = vector.load %arg8[%c0_10, %c0_11] : memref<2x1024xf32, #tpu.memory_space<vmem>>, vector<2x1024xf32>
      tpu.vector_store %arg8[%c0_10, %c0_11], %15 {strides = array<i32>} : memref<2x1024xf32, #tpu.memory_space<vmem>>, vector<2x1024xf32>,
    } else {
    }
    %c2048_i32 = arith.constant 2048 : i32
    %3 = arith.muli %arg1, %c2048_i32 : i32
    %4 = tpu.assume_multiple %3, 128 : i32
    %c0 = arith.constant 0 : index
    %5 = arith.index_cast %4 : i32 to index
    %6 = vector.load %arg2[%c0, %5] : memref<2x2048xbf16, #tpu.memory_space<vmem>>, vector<2x2048xbf16>
    %c0_1 = arith.constant 0 : index
    %c0_2 = arith.constant 0 : index
    %7 = vector.load %arg8[%c0_1, %c0_2] : memref<2x1024xf32, #tpu.memory_space<vmem>>, vector<2x1024xf32>
    %c0_3 = arith.constant 0 : index
    %c0_4 = arith.constant 0 : index
    %8 = vector.load %arg3[%c0_3, %c0_4] : memref<2048x1024xbf16, #tpu.memory_space<vmem>>, vector<2048x1024xbf16>
    %cst = arith.constant dense<0.000000e+00> : vector<2x1024xf32>
    %9 = tpu.matmul %6, %8, %cst {dimension_numbers = #tpu.dot_dimension_numbers<[1], [0], [0], [1], [0, 0, 1, 1], [], []>} : vector<2x2048xbf16>, vector<2048x1024xbf16>, vector<2x1024xf32> -> vector<2x1024xf32>
    %10 = arith.addf %7, %9 : vector<2x1024xf32>
    %c0_5 = arith.constant 0 : index
    %c0_6 = arith.constant 0 : index
    %11 = vector.load %arg8[%c0_5, %c0_6] : memref<2x1024xf32, #tpu.memory_space<vmem>>, vector<2x1024xf32>
    tpu.vector_store %arg8[%c0_5, %c0_6], %10 {strides = array<i32>} : memref<2x1024xf32, #tpu.memory_space<vmem>>, vector<2x1024xf32>,
    %c0_i32_7 = arith.constant 0 : i32
    %12 = arith.cmpi eq, %arg1, %c0_i32_7 : i32
    %13 = arith.extui %12 : i1 to i32
    %c0_i32_8 = arith.constant 0 : i32
    %14 = arith.cmpi ne, %13, %c0_i32_8 : i32
    scf.if %14 {
      %c0_9 = arith.constant 0 : index
      %c0_10 = arith.constant 0 : index
      %15 = vector.load %arg8[%c0_9, %c0_10] : memref<2x1024xf32, #tpu.memory_space<vmem>>, vector<2x1024xf32>
      %c0_11 = arith.constant 0 : index
      %c0_12 = arith.constant 0 : index
      %16 = vector.load %arg4[%c0_11, %c0_12] : memref<1x1024xf32, #tpu.memory_space<vmem>>, vector<1x1024xf32>
      %17 = vector.broadcast %16 : vector<1x1024xf32> to vector<2x1024xf32>
      %18 = arith.addf %15, %17 : vector<2x1024xf32>
      %cst_13 = arith.constant 0.000000e+00 : f32
      %19 = vector.broadcast %cst_13 : f32 to vector<2x1024xf32>
      %20 = arith.maximumf %18, %19 : vector<2x1024xf32>
      %21 = arith.truncf %20 : vector<2x1024xf32> to vector<2x1024xbf16>
      %c0_14 = arith.constant 0 : index
      %c0_15 = arith.constant 0 : index
      %22 = vector.load %arg5[%c0_14, %c0_15] : memref<1024x512xbf16, #tpu.memory_space<vmem>>, vector<1024x512xbf16>
      %cst_16 = arith.constant dense<0.000000e+00> : vector<2x512xf32>
      %23 = tpu.matmul %21, %22, %cst_16 {dimension_numbers = #tpu.dot_dimension_numbers<[1], [0], [0], [1], [0, 0, 1, 1], [], []>} : vector<2x1024xbf16>, vector<1024x512xbf16>, vector<2x512xf32> -> vector<2x512xf32>
      %c0_17 = arith.constant 0 : index
      %c0_18 = arith.constant 0 : index
      %24 = vector.load %arg6[%c0_17, %c0_18] : memref<1x512xf32, #tpu.memory_space<vmem>>, vector<1x512xf32>
      %25 = vector.broadcast %24 : vector<1x512xf32> to vector<2x512xf32>
      %26 = arith.addf %23, %25 : vector<2x512xf32>
      %c0_19 = arith.constant 0 : index
      %c0_20 = arith.constant 0 : index
      %27 = vector.load %arg7[%c0_19, %c0_20] : memref<2x512xf32, #tpu.memory_space<vmem>>, vector<2x512xf32>
      tpu.vector_store %arg7[%c0_19, %c0_20], %26 {strides = array<i32>} : memref<2x512xf32, #tpu.memory_space<vmem>>, vector<2x512xf32>,
    } else {
    }
    return
  }
  func.func @transform_0(%arg0: i32, %arg1: i32) -> (i32, i32) {
    %c0_i32 = arith.constant 0 : i32
    %c0_i32_0 = arith.constant 0 : i32
    return %arg0, %c0_i32 : i32, i32
  }
  func.func @transform_1(%arg0: i32, %arg1: i32) -> (i32, i32) {
    %c0_i32 = arith.constant 0 : i32
    %c0_i32_0 = arith.constant 0 : i32
    return %arg1, %c0_i32 : i32, i32
  }
  func.func @transform_2(%arg0: i32, %arg1: i32) -> (i32, i32) {
    %c0_i32 = arith.constant 0 : i32
    %c0_i32_0 = arith.constant 0 : i32
    %c0_i32_1 = arith.constant 0 : i32
    return %c0_i32, %c0_i32_0 : i32, i32
  }
  func.func @transform_3(%arg0: i32, %arg1: i32) -> (i32, i32) {
    %c0_i32 = arith.constant 0 : i32
    %c0_i32_0 = arith.constant 0 : i32
    %c0_i32_1 = arith.constant 0 : i32
    return %c0_i32, %c0_i32_0 : i32, i32
  }
  func.func @transform_4(%arg0: i32, %arg1: i32) -> (i32, i32) {
    %c0_i32 = arith.constant 0 : i32
    %c0_i32_0 = arith.constant 0 : i32
    %c0_i32_1 = arith.constant 0 : i32
    return %c0_i32, %c0_i32_0 : i32, i32
  }
  func.func @transform_5(%arg0: i32, %arg1: i32) -> (i32, i32) {
    %c0_i32 = arith.constant 0 : i32
    %c0_i32_0 = arith.constant 0 : i32
    return %arg0, %c0_i32 : i32, i32
  }
}

</mosaic_0001>

<llo_original>
// kernel: tpu_custom_call.1
$region0: #{tpu_custom_call.1}
  #allocation0 [shape = 'u32[]', space=smem, size = 0x4, offset = 0x4, fixed_abs, tag = 'smem constant byte address 0x4 - core index']
  #allocation1 [shape = 'u32[144,128]{1,0:T(1,128)}', space=vmem, size = 0x12000, scoped, tag = 'internal scratch']
  #allocation2 [shape = 'f32[2,1024]{1,0:T(2,128)}', space=vmem, size = 0x2000, scoped, tag = 'scratch operand']
  %s0 = inlined_call_operand.hbm [shape: bf16[2,2048], index: 0, kind: input, shape index: {}]
  %s1 = inlined_call_operand.hbm [shape: bf16[2048,1024], index: 1, kind: input, shape index: {}]
  %s2 = inlined_call_operand.hbm [shape: f32[1,1024], index: 2, kind: input, shape index: {}]
  %s3 = inlined_call_operand.hbm [shape: bf16[1024,512], index: 3, kind: input, shape index: {}]
  %s4 = inlined_call_operand.hbm [shape: f32[1,512], index: 4, kind: input, shape index: {}]
  %s5 = inlined_call_operand.hbm [shape: f32[2,512], index: 5, kind: output, shape index: {}]
  %s6 = sld [smem:[#allocation0]]
  $region58: #{tpu_custom_call.1} parent=0
    _
  %s8 = ssub.s32 1, %s6
  %s9 = scalar_select 0, %s8, %s6
  $region1: #{tpu_custom_call.1} parent=0
    #allocation3 [shape = 'u8[8192]{0}', space=vmem, size = 0x2000, scoped, tag = 'input window, operand 0, single buffered']
    #allocation4 [shape = 's32[1]{0}', space=sflag, size = 0x4, scoped, tag = 'scoped memory for tpu_custom_call.1']
    #allocation5 [shape = 's32[1]{0}', space=sflag, size = 0x4, scoped, tag = 'scoped memory for tpu_custom_call.1']
    #allocation6 [shape = 'u8[4194304]{0}', space=vmem, size = 0x400000, scoped, tag = 'input window, operand 1, single buffered']
    #allocation7 [shape = 's32[1]{0}', space=sflag, size = 0x4, scoped, tag = 'scoped memory for tpu_custom_call.1']
    #allocation8 [shape = 'u8[4096]{0}', space=vmem, size = 0x1000, scoped, tag = 'input window, operand 2, single buffered']
    #allocation9 [shape = 'u8[1048576]{0}', space=vmem, size = 0x100000, scoped, tag = 'input window, operand 3, single buffered']
    #allocation10 [shape = 's32[1]{0}', space=sflag, size = 0x4, scoped, tag = 'scoped memory for tpu_custom_call.1']
    #allocation11 [shape = 'u8[2048]{0}', space=vmem, size = 0x800, scoped, tag = 'input window, operand 4, single buffered']
    #allocation12 [shape = 'u8[4096]{0}', space=vmem, size = 0x1000, scoped, tag = 'output window, operand 0, single buffered']
    %10 = vsyncpa [#allocation4], 0
    %11 = vsyncpa [#allocation7], 0
    %12 = vsyncpa [#allocation10], 0
    %13 = vsyncpa [#allocation5], 0
    // Predicated region
    $region2: #{tpu_custom_call.1} parent=1 // pred_check
      _
    $region3: #{tpu_custom_call.1} parent=1 // pred_check_branch
      %15 = sbr.rel (0) target = $region5
    $region4: #{tpu_custom_call.1} parent=1 // pred_region
      %s17 = ssub.s32 256, 256
      %18 = vsyncadd [#allocation4], %s17
      %s20 = sshll.u32 [#allocation3], 4
      %s21 = int_to_ptr.vmem [resolvable:$true] %s20
      %23 = dma.hbm_to_vmem [thread:$0]  %s0, 256, %s21, [#allocation4]
    $region5: #{tpu_custom_call.1} parent=1 // pred_fallthru
      _
    // Predicated region
    $region6: #{tpu_custom_call.1} parent=1 // pred_check
      _
    $region7: #{tpu_custom_call.1} parent=1 // pred_check_branch
      %25 = sbr.rel (0) target = $region9
    $region8: #{tpu_custom_call.1} parent=1 // pred_region
      %s27 = ssub.s32 131072, 131072
      %28 = vsyncadd [#allocation7], %s27
      %s29 = sshll.u32 [#allocation6], 4
      %s30 = int_to_ptr.vmem [resolvable:$true] %s29
      %35 = dma.hbm_to_vmem [thread:$0]  %s1, 131072, %s30, [#allocation7], 512, 512, 32
    $region9: #{tpu_custom_call.1} parent=1 // pred_fallthru
      _
    // Predicated region
    $region10: #{tpu_custom_call.1} parent=1 // pred_check
      _
    $region11: #{tpu_custom_call.1} parent=1 // pred_check_branch
      %37 = sbr.rel (0) target = $region13
    $region12: #{tpu_custom_call.1} parent=1 // pred_region
      %s39 = ssub.s32 128, 128
      %40 = vsyncadd [#allocation7], %s39
      %s42 = sshll.u32 [#allocation8], 4
      %s43 = int_to_ptr.vmem [resolvable:$true] %s42
      %45 = dma.hbm_to_vmem [thread:$0]  %s2, 128, %s43, [#allocation7]
    $region13: #{tpu_custom_call.1} parent=1 // pred_fallthru
      _
    // Predicated region
    $region14: #{tpu_custom_call.1} parent=1 // pred_check
      _
    $region15: #{tpu_custom_call.1} parent=1 // pred_check_branch
      %47 = sbr.rel (0) target = $region17
    $region16: #{tpu_custom_call.1} parent=1 // pred_region
      %s49 = ssub.s32 32768, 32768
      %50 = vsyncadd [#allocation10], %s49
      %s51 = sshll.u32 [#allocation9], 4
      %s52 = int_to_ptr.vmem [resolvable:$true] %s51
      %57 = dma.hbm_to_vmem [thread:$0]  %s3, 32768, %s52, [#allocation10], 256, 256, 16
    $region17: #{tpu_custom_call.1} parent=1 // pred_fallthru
      _
    // Predicated region
    $region18: #{tpu_custom_call.1} parent=1 // pred_check
      _
    $region19: #{tpu_custom_call.1} parent=1 // pred_check_branch
      %59 = sbr.rel (0) target = $region21
    $region20: #{tpu_custom_call.1} parent=1 // pred_region
      %s61 = ssub.s32 64, 64
      %62 = vsyncadd [#allocation10], %s61
      %s64 = sshll.u32 [#allocation11], 4
      %s65 = int_to_ptr.vmem [resolvable:$true] %s64
      %67 = dma.hbm_to_vmem [thread:$0]  %s4, 64, %s65, [#allocation10]
    $region21: #{tpu_custom_call.1} parent=1 // pred_fallthru
      _
    // Predicated region
    $region22: #{tpu_custom_call.1} parent=1 // pred_check
      _
    $region23: #{tpu_custom_call.1} parent=1 // pred_check_branch
      %69 = sbr.rel (0) target = $region25
    $region24: #{tpu_custom_call.1} parent=1 // pred_region
      %70 = dma.done [#allocation4], 256
    $region25: #{tpu_custom_call.1} parent=1 // pred_fallthru
      _
    // Predicated region
    $region26: #{tpu_custom_call.1} parent=1 // pred_check
      _
    $region27: #{tpu_custom_call.1} parent=1 // pred_check_branch
      %72 = sbr.rel (0) target = $region29
    $region28: #{tpu_custom_call.1} parent=1 // pred_region
      %73 = dma.done [#allocation7], 131072
    $region29: #{tpu_custom_call.1} parent=1 // pred_fallthru
      _
    // Predicated region
    $region30: #{tpu_custom_call.1} parent=1 // pred_check
      _
    $region31: #{tpu_custom_call.1} parent=1 // pred_check_branch
      %75 = sbr.rel (0) target = $region33
    $region32: #{tpu_custom_call.1} parent=1 // pred_region
      %76 = dma.done [#allocation7], 128
    $region33: #{tpu_custom_call.1} parent=1 // pred_fallthru
      _
    // Predicated region
    $region34: #{tpu_custom_call.1} parent=1 // pred_check
      _
    $region35: #{tpu_custom_call.1} parent=1 // pred_check_branch
      %78 = sbr.rel (0) target = $region37
    $region36: #{tpu_custom_call.1} parent=1 // pred_region
      %79 = dma.done [#allocation10], 32768
    $region37: #{tpu_custom_call.1} parent=1 // pred_fallthru
      _
    // Predicated region
    $region38: #{tpu_custom_call.1} parent=1 // pred_check
      _
    $region39: #{tpu_custom_call.1} parent=1 // pred_check_branch
      %81 = sbr.rel (0) target = $region41
    $region40: #{tpu_custom_call.1} parent=1 // pred_region
      %82 = dma.done [#allocation10], 64
    $region41: #{tpu_custom_call.1} parent=1 // pred_fallthru
      _
    %p83 = scmp.eq.s32.totalorder 0, 0
    // Predicated region
    $region42: #{tpu_custom_call.1} parent=1 // pred_check
      %p84 = pneg %p83
    $region43: #{tpu_custom_call.1} parent=1 // pred_check_branch
      %86 = sbr.rel (%p84) target = $region45
    $region44: #{tpu_custom_call.1} parent=1 // pred_region
      %87 = vst [vmem:[#allocation2] sm:$0xff] 0.0
      %88 = vst [vmem:[#allocation2 + $0x8] sm:$0xff] 0.0
    $region45: #{tpu_custom_call.1} parent=1 // pred_fallthru
      _
    %s89 = smul.u32 0, 2048
    %s90 = sshra.s32 %s89, 7
    %s91 = sand.u32 %s89, 127
    %s92 = scalar_lea.vmem [#allocation3], %s90
    %v93 = vld [vmem:[%s92] sm:$0xff]
    %v94 = vld [vmem:[%s92 + $0x8] sm:$0xff]
    %v95 = vld [vmem:[#allocation2] sm:$0xff]
    %v96 = vld [vmem:[#allocation2 + $0x8] sm:$0xff]
    %v97 = vld [vmem:[#allocation6] sm:$0xff]
    %v98 = vld [vmem:[#allocation6 + $0x8] sm:$0xff]
    %v99 = vld [vmem:[#allocation6 + $0x10] sm:$0xff]
    %v100 = vld [vmem:[#allocation6 + $0x18] sm:$0xff]
    %v101 = vld [vmem:[#allocation6 + $0x20] sm:$0xff]
    %v102 = vld [vmem:[#allocation6 + $0x28] sm:$0xff]
    %v103 = vld [vmem:[#allocation6 + $0x30] sm:$0xff]
    %v104 = vld [vmem:[#allocation6 + $0x38] sm:$0xff]
    %v105 = vld [vmem:[#allocation6 + $0x40] sm:$0xff]
    %v106 = vld [vmem:[#allocation6 + $0x48] sm:$0xff]
    %v107 = vld [vmem:[#allocation6 + $0x50] sm:$0xff]
    %v108 = vld [vmem:[#allocation6 + $0x58] sm:$0xff]
    %v109 = vld [vmem:[#allocation6 + $0x60] sm:$0xff]
    %v110 = vld [vmem:[#allocation6 + $0x68] sm:$0xff]
    %v111 = vld [vmem:[#allocation6 + $0x70] sm:$0xff]
    %v112 = vld [vmem:[#allocation6 + $0x78] sm:$0xff]
    %v113 = vld [vmem:[#allocation6 + $0x80] sm:$0xff]
    %v114 = vld [vmem:[#allocation6 + $0x88] sm:$0xff]
    %v115 = vld [vmem:[#allocation6 + $0x90] sm:$0xff]
    %v116 = vld [vmem:[#allocation6 + $0x98] sm:$0xff]
    %v117 = vld [vmem:[#allocation6 + $0xa0] sm:$0xff]
    %v118 = vld [vmem:[#allocation6 + $0xa8] sm:$0xff]
    %v119 = vld [vmem:[#allocation6 + $0xb0] sm:$0xff]
    %v120 = vld [vmem:[#allocation6 + $0xb8] sm:$0xff]
    %v121 = vld [vmem:[#allocation6 + $0xc0] sm:$0xff]
    %v122 = vld [vmem:[#allocation6 + $0xc8] sm:$0xff]
    %v123 = vld [vmem:[#allocation6 + $0xd0] sm:$0xff]
    %v124 = vld [vmem:[#allocation6 + $0xd8] sm:$0xff]
    %v125 = vld [vmem:[#allocation6 + $0xe0] sm:$0xff]
    %v126 = vld [vmem:[#allocation6 + $0xe8] sm:$0xff]
    %v127 = vld [vmem:[#allocation6 + $0xf0] sm:$0xff]
    %v128 = vld [vmem:[#allocation6 + $0xf8] sm:$0xff]
    %v129 = vld [vmem:[#allocation6 + $0x100] sm:$0xff]
    %v130 = vld [vmem:[#allocation6 + $0x108] sm:$0xff]
    %v131 = vld [vmem:[#allocation6 + $0x110] sm:$0xff]
    %v132 = vld [vmem:[#allocation6 + $0x118] sm:$0xff]
    %v133 = vld [vmem:[#allocation6 + $0x120] sm:$0xff]
    %v134 = vld [vmem:[#allocation6 + $0x128] sm:$0xff]
    %v135 = vld [vmem:[#allocation6 + $0x130] sm:$0xff]
    %v136 = vld [vmem:[#allocation6 + $0x138] sm:$0xff]
    %v137 = vld [vmem:[#allocation6 + $0x140] sm:$0xff]
    %v138 = vld [vmem:[#allocation6 + $0x148] sm:$0xff]
    %v139 = vld [vmem:[#allocation6 + $0x150] sm:$0xff]
    %v140 = vld [vmem:[#allocation6 + $0x158] sm:$0xff]
    %v141 = vld [vmem:[#allocation6 + $0x160] sm:$0xff]
    %v142 = vld [vmem:[#allocation6 + $0x168] sm:$0xff]
    %v143 = vld [vmem:[#allocation6 + $0x170] sm:$0xff]
    %v144 = vld [vmem:[#allocation6 + $0x178] sm:$0xff]
    %v145 = vld [vmem:[#allocation6 + $0x180] sm:$0xff]
    %v146 = vld [vmem:[#allocation6 + $0x188] sm:$0xff]
    %v147 = vld [vmem:[#allocation6 + $0x190] sm:$0xff]
    %v148 = vld [vmem:[#allocation6 + $0x198] sm:$0xff]
    %v149 = vld [vmem:[#allocation6 + $0x1a0] sm:$0xff]
    %v150 = vld [vmem:[#allocation6 + $0x1a8] sm:$0xff]
    %v151 = vld [vmem:[#allocation6 + $0x1b0] sm:$0xff]
    %v152 = vld [vmem:[#allocation6 + $0x1b8] sm:$0xff]
    %v153 = vld [vmem:[#allocation6 + $0x1c0] sm:$0xff]
    %v154 = vld [vmem:[#allocation6 + $0x1c8] sm:$0xff]
    %v155 = vld [vmem:[#allocation6 + $0x1d0] sm:$0xff]
    %v156 = vld [vmem:[#allocation6 + $0x1d8] sm:$0xff]
    %v157 = vld [vmem:[#allocation6 + $0x1e0] sm:$0xff]
    %v158 = vld [vmem:[#allocation6 + $0x1e8] sm:$0xff]
    %v159 = vld [vmem:[#allocation6 + $0x1f0] sm:$0xff]
    %v160 = vld [vmem:[#allocation6 + $0x1f8] sm:$0xff]
    %v161 = vld [vmem:[#allocation6 + $0x200] sm:$0xff]
    %v162 = vld [vmem:[#allocation6 + $0x208] sm:$0xff]
    %v163 = vld [vmem:[#allocation6 + $0x210] sm:$0xff]
    %v164 = vld [vmem:[#allocation6 + $0x218] sm:$0xff]
    %v165 = vld [vmem:[#allocation6 + $0x220] sm:$0xff]
    %v166 = vld [vmem:[#allocation6 + $0x228] sm:$0xff]
    %v167 = vld [vmem:[#allocation6 + $0x230] sm:$0xff]
    %v168 = vld [vmem:[#allocation6 + $0x238] sm:$0xff]
    %v169 = vld [vmem:[#allocation6 + $0x240] sm:$0xff]
    %v170 = vld [vmem:[#allocation6 + $0x248] sm:$0xff]
    %v171 = vld [vmem:[#allocation6 + $0x250] sm:$0xff]
    %v172 = vld [vmem:[#allocation6 + $0x258] sm:$0xff]
    %v173 = vld [vmem:[#allocation6 + $0x260] sm:$0xff]
    %v174 = vld [vmem:[#allocation6 + $0x268] sm:$0xff]
    %v175 = vld [vmem:[#allocation6 + $0x270] sm:$0xff]
    %v176 = vld [vmem:[#allocation6 + $0x278] sm:$0xff]
    %v177 = vld [vmem:[#allocation6 + $0x280] sm:$0xff]
    %v178 = vld [vmem:[#allocation6 + $0x288] sm:$0xff]
    %v179 = vld [vmem:[#allocation6 + $0x290] sm:$0xff]
    %v180 = vld [vmem:[#allocation6 + $0x298] sm:$0xff]
    %v181 = vld [vmem:[#allocation6 + $0x2a0] sm:$0xff]
    %v182 = vld [vmem:[#allocation6 + $0x2a8] sm:$0xff]
    %v183 = vld [vmem:[#allocation6 + $0x2b0] sm:$0xff]
    %v184 = vld [vmem:[#allocation6 + $0x2b8] sm:$0xff]
    %v185 = vld [vmem:[#allocation6 + $0x2c0] sm:$0xff]
    %v186 = vld [vmem:[#allocation6 + $0x2c8] sm:$0xff]
    %v187 = vld [vmem:[#allocation6 + $0x2d0] sm:$0xff]
    %v188 = vld [vmem:[#allocation6 + $0x2d8] sm:$0xff]
    %v189 = vld [vmem:[#allocation6 + $0x2e0] sm:$0xff]
    %v190 = vld [vmem:[#allocation6 + $0x2e8] sm:$0xff]
    %v191 = vld [vmem:[#allocation6 + $0x2f0] sm:$0xff]
    %v192 = vld [vmem:[#allocation6 + $0x2f8] sm:$0xff]
    %v193 = vld [vmem:[#allocation6 + $0x300] sm:$0xff]
    %v194 = vld [vmem:[#allocation6 + $0x308] sm:$0xff]
    %v195 = vld [vmem:[#allocation6 + $0x310] sm:$0xff]
    %v196 = vld [vmem:[#allocation6 + $0x318] sm:$0xff]
    %v197 = vld [vmem:[#allocation6 + $0x320] sm:$0xff]
    %v198 = vld [vmem:[#allocation6 + $0x328] sm:$0xff]
    %v199 = vld [vmem:[#allocation6 + $0x330] sm:$0xff]
    %v200 = vld [vmem:[#allocation6 + $0x338] sm:$0xff]
    %v201 = vld [vmem:[#allocation6 + $0x340] sm:$0xff]
    %v202 = vld [vmem:[#allocation6 + $0x348] sm:$0xff]
    %v203 = vld [vmem:[#allocation6 + $0x350] sm:$0xff]
    %v204 = vld [vmem:[#allocation6 + $0x358] sm:$0xff]
    %v205 = vld [vmem:[#allocation6 + $0x360] sm:$0xff]
    %v206 = vld [vmem:[#allocation6 + $0x368] sm:$0xff]
    %v207 = vld [vmem:[#allocation6 + $0x370] sm:$0xff]
    %v208 = vld [vmem:[#allocation6 + $0x378] sm:$0xff]
    %v209 = vld [vmem:[#allocation6 + $0x380] sm:$0xff]
    %v210 = vld [vmem:[#allocation6 + $0x388] sm:$0xff]
    %v211 = vld [vmem:[#allocation6 + $0x390] sm:$0xff]
    %v212 = vld [vmem:[#allocation6 + $0x398] sm:$0xff]
    %v213 = vld [vmem:[#allocation6 + $0x3a0] sm:$0xff]
    %v214 = vld [vmem:[#allocation6 + $0x3a8] sm:$0xff]
    %v215 = vld [vmem:[#allocation6 + $0x3b0] sm:$0xff]
    %v216 = vld [vmem:[#allocation6 + $0x3b8] sm:$0xff]
    %v217 = vld [vmem:[#allocation6 + $0x3c0] sm:$0xff]
    %v218 = vld [vmem:[#allocation6 + $0x3c8] sm:$0xff]
    %v219 = vld [vmem:[#allocation6 + $0x3d0] sm:$0xff]
    %v220 = vld [vmem:[#allocation6 + $0x3d8] sm:$0xff]
    %v221 = vld [vmem:[#allocation6 + $0x3e0] sm:$0xff]
    %v222 = vld [vmem:[#allocation6 + $0x3e8] sm:$0xff]
    %v223 = vld [vmem:[#allocation6 + $0x3f0] sm:$0xff]
    %v224 = vld [vmem:[#allocation6 + $0x3f8] sm:$0xff]
    %v225 = vld [vmem:[#allocation6 + $0x400] sm:$0xff]
    %v226 = vld [vmem:[#allocation6 + $0x408] sm:$0xff]
    %v227 = vld [vmem:[#allocation6 + $0x410] sm:$0xff]
    %v228 = vld [vmem:[#allocation6 + $0x418] sm:$0xff]
    %v229 = vld [vmem:[#allocation6 + $0x420] sm:$0xff]
    %v230 = vld [vmem:[#allocation6 + $0x428] sm:$0xff]
    %v231 = vld [vmem:[#allocation6 + $0x430] sm:$0xff]
    %v232 = vld [vmem:[#allocation6 + $0x438] sm:$0xff]
    %v233 = vld [vmem:[#allocation6 + $0x440] sm:$0xff]
    %v234 = vld [vmem:[#allocation6 + $0x448] sm:$0xff]
    %v235 = vld [vmem:[#allocation6 + $0x450] sm:$0xff]
    %v236 = vld [vmem:[#allocation6 + $0x458] sm:$0xff]
    %v237 = vld [vmem:[#allocation6 + $0x460] sm:$0xff]
    %v238 = vld [vmem:[#allocation6 + $0x468] sm:$0xff]
    %v239 = vld [vmem:[#allocation6 + $0x470] sm:$0xff]
    %v240 = vld [vmem:[#allocation6 + $0x478] sm:$0xff]
    %v241 = vld [vmem:[#allocation6 + $0x480] sm:$0xff]
    %v242 = vld [vmem:[#allocation6 + $0x488] sm:$0xff]
    %v243 = vld [vmem:[#allocation6 + $0x490] sm:$0xff]
    %v244 = vld [vmem:[#allocation6 + $0x498] sm:$0xff]
    %v245 = vld [vmem:[#allocation6 + $0x4a0] sm:$0xff]
    %v246 = vld [vmem:[#allocation6 + $0x4a8] sm:$0xff]
    %v247 = vld [vmem:[#allocation6 + $0x4b0] sm:$0xff]
    %v248 = vld [vmem:[#allocation6 + $0x4b8] sm:$0xff]
    %v249 = vld [vmem:[#allocation6 + $0x4c0] sm:$0xff]
    %v250 = vld [vmem:[#allocation6 + $0x4c8] sm:$0xff]
    %v251 = vld [vmem:[#allocation6 + $0x4d0] sm:$0xff]
    %v252 = vld [vmem:[#allocation6 + $0x4d8] sm:$0xff]
    %v253 = vld [vmem:[#allocation6 + $0x4e0] sm:$0xff]
    %v254 = vld [vmem:[#allocation6 + $0x4e8] sm:$0xff]
    %v255 = vld [vmem:[#allocation6 + $0x4f0] sm:$0xff]
    %v256 = vld [vmem:[#allocation6 + $0x4f8] sm:$0xff]
    %v257 = vld [vmem:[#allocation6 + $0x500] sm:$0xff]
    %v258 = vld [vmem:[#allocation6 + $0x508] sm:$0xff]
    %v259 = vld [vmem:[#allocation6 + $0x510] sm:$0xff]
    %v260 = vld [vmem:[#allocation6 + $0x518] sm:$0xff]
    %v261 = vld [vmem:[#allocation6 + $0x520] sm:$0xff]
    %v262 = vld [vmem:[#allocation6 + $0x528] sm:$0xff]
    %v263 = vld [vmem:[#allocation6 + $0x530] sm:$0xff]
    %v264 = vld [vmem:[#allocation6 + $0x538] sm:$0xff]
    %v265 = vld [vmem:[#allocation6 + $0x540] sm:$0xff]
    %v266 = vld [vmem:[#allocation6 + $0x548] sm:$0xff]
    %v267 = vld [vmem:[#allocation6 + $0x550] sm:$0xff]
    %v268 = vld [vmem:[#allocation6 + $0x558] sm:$0xff]
    %v269 = vld [vmem:[#allocation6 + $0x560] sm:$0xff]
    %v270 = vld [vmem:[#allocation6 + $0x568] sm:$0xff]
    %v271 = vld [vmem:[#allocation6 + $0x570] sm:$0xff]
    %v272 = vld [vmem:[#allocation6 + $0x578] sm:$0xff]
    %v273 = vld [vmem:[#allocation6 + $0x580] sm:$0xff]
    %v274 = vld [vmem:[#allocation6 + $0x588] sm:$0xff]
    %v275 = vld [vmem:[#allocation6 + $0x590] sm:$0xff]
    %v276 = vld [vmem:[#allocation6 + $0x598] sm:$0xff]
    %v277 = vld [vmem:[#allocation6 + $0x5a0] sm:$0xff]
    %v278 = vld [vmem:[#allocation6 + $0x5a8] sm:$0xff]
    %v279 = vld [vmem:[#allocation6 + $0x5b0] sm:$0xff]
    %v280 = vld [vmem:[#allocation6 + $0x5b8] sm:$0xff]
    %v281 = vld [vmem:[#allocation6 + $0x5c0] sm:$0xff]
    %v282 = vld [vmem:[#allocation6 + $0x5c8] sm:$0xff]
    %v283 = vld [vmem:[#allocation6 + $0x5d0] sm:$0xff]
    %v284 = vld [vmem:[#allocation6 + $0x5d8] sm:$0xff]
    %v285 = vld [vmem:[#allocation6 + $0x5e0] sm:$0xff]
    %v286 = vld [vmem:[#allocation6 + $0x5e8] sm:$0xff]
    %v287 = vld [vmem:[#allocation6 + $0x5f0] sm:$0xff]
    %v288 = vld [vmem:[#allocation6 + $0x5f8] sm:$0xff]
    %v289 = vld [vmem:[#allocation6 + $0x600] sm:$0xff]
    %v290 = vld [vmem:[#allocation6 + $0x608] sm:$0xff]
    %v291 = vld [vmem:[#allocation6 + $0x610] sm:$0xff]
    %v292 = vld [vmem:[#allocation6 + $0x618] sm:$0xff]
    %v293 = vld [vmem:[#allocation6 + $0x620] sm:$0xff]
    %v294 = vld [vmem:[#allocation6 + $0x628] sm:$0xff]
    %v295 = vld [vmem:[#allocation6 + $0x630] sm:$0xff]
    %v296 = vld [vmem:[#allocation6 + $0x638] sm:$0xff]
    %v297 = vld [vmem:[#allocation6 + $0x640] sm:$0xff]
    %v298 = vld [vmem:[#allocation6 + $0x648] sm:$0xff]
    %v299 = vld [vmem:[#allocation6 + $0x650] sm:$0xff]
    %v300 = vld [vmem:[#allocation6 + $0x658] sm:$0xff]
    %v301 = vld [vmem:[#allocation6 + $0x660] sm:$0xff]
    %v302 = vld [vmem:[#allocation6 + $0x668] sm:$0xff]
    %v303 = vld [vmem:[#allocation6 + $0x670] sm:$0xff]
    %v304 = vld [vmem:[#allocation6 + $0x678] sm:$0xff]
    %v305 = vld [vmem:[#allocation6 + $0x680] sm:$0xff]
    %v306 = vld [vmem:[#allocation6 + $0x688] sm:$0xff]
    %v307 = vld [vmem:[#allocation6 + $0x690] sm:$0xff]
    %v308 = vld [vmem:[#allocation6 + $0x698] sm:$0xff]
    %v309 = vld [vmem:[#allocation6 + $0x6a0] sm:$0xff]
    %v310 = vld [vmem:[#allocation6 + $0x6a8] sm:$0xff]
    %v311 = vld [vmem:[#allocation6 + $0x6b0] sm:$0xff]
    %v312 = vld [vmem:[#allocation6 + $0x6b8] sm:$0xff]
    %v313 = vld [vmem:[#allocation6 + $0x6c0] sm:$0xff]
    %v314 = vld [vmem:[#allocation6 + $0x6c8] sm:$0xff]
    %v315 = vld [vmem:[#allocation6 + $0x6d0] sm:$0xff]
    %v316 = vld [vmem:[#allocation6 + $0x6d8] sm:$0xff]
    %v317 = vld [vmem:[#allocation6 + $0x6e0] sm:$0xff]
    %v318 = vld [vmem:[#allocation6 + $0x6e8] sm:$0xff]
    %v319 = vld [vmem:[#allocation6 + $0x6f0] sm:$0xff]
    %v320 = vld [vmem:[#allocation6 + $0x6f8] sm:$0xff]
    %v321 = vld [vmem:[#allocation6 + $0x700] sm:$0xff]
    %v322 = vld [vmem:[#allocation6 + $0x708] sm:$0xff]
    %v323 = vld [vmem:[#allocation6 + $0x710] sm:$0xff]
    %v324 = vld [vmem:[#allocation6 + $0x718] sm:$0xff]
    %v325 = vld [vmem:[#allocation6 + $0x720] sm:$0xff]
    %v326 = vld [vmem:[#allocation6 + $0x728] sm:$0xff]
    %v327 = vld [vmem:[#allocation6 + $0x730] sm:$0xff]
    %v328 = vld [vmem:[#allocation6 + $0x738] sm:$0xff]
    %v329 = vld [vmem:[#allocation6 + $0x740] sm:$0xff]
    %v330 = vld [vmem:[#allocation6 + $0x748] sm:$0xff]
    %v331 = vld [vmem:[#allocation6 + $0x750] sm:$0xff]
    %v332 = vld [vmem:[#allocation6 + $0x758] sm:$0xff]
    %v333 = vld [vmem:[#allocation6 + $0x760] sm:$0xff]
    %v334 = vld [vmem:[#allocation6 + $0x768] sm:$0xff]
    %v335 = vld [vmem:[#allocation6 + $0x770] sm:$0xff]
    %v336 = vld [vmem:[#allocation6 + $0x778] sm:$0xff]
    %v337 = vld [vmem:[#allocation6 + $0x780] sm:$0xff]
    %v338 = vld [vmem:[#allocation6 + $0x788] sm:$0xff]
    %v339 = vld [vmem:[#allocation6 + $0x790] sm:$0xff]
    %v340 = vld [vmem:[#allocation6 + $0x798] sm:$0xff]
    %v341 = vld [vmem:[#allocation6 + $0x7a0] sm:$0xff]
    %v342 = vld [vmem:[#allocation6 + $0x7a8] sm:$0xff]
    %v343 = vld [vmem:[#allocation6 + $0x7b0] sm:$0xff]
    %v344 = vld [vmem:[#allocation6 + $0x7b8] sm:$0xff]
    %v345 = vld [vmem:[#allocation6 + $0x7c0] sm:$0xff]
    %v346 = vld [vmem:[#allocation6 + $0x7c8] sm:$0xff]
    %v347 = vld [vmem:[#allocation6 + $0x7d0] sm:$0xff]
    %v348 = vld [vmem:[#allocation6 + $0x7d8] sm:$0xff]
    %v349 = vld [vmem:[#allocation6 + $0x7e0] sm:$0xff]
    %v350 = vld [vmem:[#allocation6 + $0x7e8] sm:$0xff]
    %v351 = vld [vmem:[#allocation6 + $0x7f0] sm:$0xff]
    %v352 = vld [vmem:[#allocation6 + $0x7f8] sm:$0xff]
    %v353 = vld [vmem:[#allocation6 + $0x800] sm:$0xff]
    %v354 = vld [vmem:[#allocation6 + $0x808] sm:$0xff]
    %v355 = vld [vmem:[#allocation6 + $0x810] sm:$0xff]
    %v356 = vld [vmem:[#allocation6 + $0x818] sm:$0xff]
    %v357 = vld [vmem:[#allocation6 + $0x820] sm:$0xff]
    %v358 = vld [vmem:[#allocation6 + $0x828] sm:$0xff]
    %v359 = vld [vmem:[#allocation6 + $0x830] sm:$0xff]
    %v360 = vld [vmem:[#allocation6 + $0x838] sm:$0xff]
    %v361 = vld [vmem:[#allocation6 + $0x840] sm:$0xff]
    %v362 = vld [vmem:[#allocation6 + $0x848] sm:$0xff]
    %v363 = vld [vmem:[#allocation6 + $0x850] sm:$0xff]
    %v364 = vld [vmem:[#allocation6 + $0x858] sm:$0xff]
    %v365 = vld [vmem:[#allocation6 + $0x860] sm:$0xff]
    %v366 = vld [vmem:[#allocation6 + $0x868] sm:$0xff]
    %v367 = vld [vmem:[#allocation6 + $0x870] sm:$0xff]
    %v368 = vld [vmem:[#allocation6 + $0x878] sm:$0xff]
    %v369 = vld [vmem:[#allocation6 + $0x880] sm:$0xff]
    %v370 = vld [vmem:[#allocation6 + $0x888] sm:$0xff]
    %v371 = vld [vmem:[#allocation6 + $0x890] sm:$0xff]
    %v372 = vld [vmem:[#allocation6 + $0x898] sm:$0xff]
    %v373 = vld [vmem:[#allocation6 + $0x8a0] sm:$0xff]
    %v374 = vld [vmem:[#allocation6 + $0x8a8] sm:$0xff]
    %v375 = vld [vmem:[#allocation6 + $0x8b0] sm:$0xff]
    %v376 = vld [vmem:[#allocation6 + $0x8b8] sm:$0xff]
    %v377 = vld [vmem:[#allocation6 + $0x8c0] sm:$0xff]
    %v378 = vld [vmem:[#allocation6 + $0x8c8] sm:$0xff]
    %v379 = vld [vmem:[#allocation6 + $0x8d0] sm:$0xff]
    %v380 = vld [vmem:[#allocation6 + $0x8d8] sm:$0xff]
    %v381 = vld [vmem:[#allocation6 + $0x8e0] sm:$0xff]
    %v382 = vld [vmem:[#allocation6 + $0x8e8] sm:$0xff]
    %v383 = vld [vmem:[#allocation6 + $0x8f0] sm:$0xff]
    %v384 = vld [vmem:[#allocation6 + $0x8f8] sm:$0xff]
    %v385 = vld [vmem:[#allocation6 + $0x900] sm:$0xff]
    %v386 = vld [vmem:[#allocation6 + $0x908] sm:$0xff]
    %v387 = vld [vmem:[#allocation6 + $0x910] sm:$0xff]
    %v388 = vld [vmem:[#allocation6 + $0x918] sm:$0xff]
    %v389 = vld [vmem:[#allocation6 + $0x920] sm:$0xff]
    %v390 = vld [vmem:[#allocation6 + $0x928] sm:$0xff]
    %v391 = vld [vmem:[#allocation6 + $0x930] sm:$0xff]
    %v392 = vld [vmem:[#allocation6 + $0x938] sm:$0xff]
    %v393 = vld [vmem:[#allocation6 + $0x940] sm:$0xff]
    %v394 = vld [vmem:[#allocation6 + $0x948] sm:$0xff]
    %v395 = vld [vmem:[#allocation6 + $0x950] sm:$0xff]
    %v396 = vld [vmem:[#allocation6 + $0x958] sm:$0xff]
    %v397 = vld [vmem:[#allocation6 + $0x960] sm:$0xff]
    %v398 = vld [vmem:[#allocation6 + $0x968] sm:$0xff]
    %v399 = vld [vmem:[#allocation6 + $0x970] sm:$0xff]
    %v400 = vld [vmem:[#allocation6 + $0x978] sm:$0xff]
    %v401 = vld [vmem:[#allocation6 + $0x980] sm:$0xff]
    %v402 = vld [vmem:[#allocation6 + $0x988] sm:$0xff]
    %v403 = vld [vmem:[#allocation6 + $0x990] sm:$0xff]
    %v404 = vld [vmem:[#allocation6 + $0x998] sm:$0xff]
    %v405 = vld [vmem:[#allocation6 + $0x9a0] sm:$0xff]
    %v406 = vld [vmem:[#allocation6 + $0x9a8] sm:$0xff]
    %v407 = vld [vmem:[#allocation6 + $0x9b0] sm:$0xff]
    %v408 = vld [vmem:[#allocation6 + $0x9b8] sm:$0xff]
    %v409 = vld [vmem:[#allocation6 + $0x9c0] sm:$0xff]
    %v410 = vld [vmem:[#allocation6 + $0x9c8] sm:$0xff]
    %v411 = vld [vmem:[#allocation6 + $0x9d0] sm:$0xff]
    %v412 = vld [vmem:[#allocation6 + $0x9d8] sm:$0xff]
    %v413 = vld [vmem:[#allocation6 + $0x9e0] sm:$0xff]
    %v414 = vld [vmem:[#allocation6 + $0x9e8] sm:$0xff]
    %v415 = vld [vmem:[#allocation6 + $0x9f0] sm:$0xff]
    %v416 = vld [vmem:[#allocation6 + $0x9f8] sm:$0xff]
    %v417 = vld [vmem:[#allocation6 + $0xa00] sm:$0xff]
    %v418 = vld [vmem:[#allocation6 + $0xa08] sm:$0xff]
    %v419 = vld [vmem:[#allocation6 + $0xa10] sm:$0xff]
    %v420 = vld [vmem:[#allocation6 + $0xa18] sm:$0xff]
    %v421 = vld [vmem:[#allocation6 + $0xa20] sm:$0xff]
    %v422 = vld [vmem:[#allocation6 + $0xa28] sm:$0xff]
    %v423 = vld [vmem:[#allocation6 + $0xa30] sm:$0xff]
    %v424 = vld [vmem:[#allocation6 + $0xa38] sm:$0xff]
    %v425 = vld [vmem:[#allocation6 + $0xa40] sm:$0xff]
    %v426 = vld [vmem:[#allocation6 + $0xa48] sm:$0xff]
    %v427 = vld [vmem:[#allocation6 + $0xa50] sm:$0xff]
    %v428 = vld [vmem:[#allocation6 + $0xa58] sm:$0xff]
    %v429 = vld [vmem:[#allocation6 + $0xa60] sm:$0xff]
    %v430 = vld [vmem:[#allocation6 + $0xa68] sm:$0xff]
    %v431 = vld [vmem:[#allocation6 + $0xa70] sm:$0xff]
    %v432 = vld [vmem:[#allocation6 + $0xa78] sm:$0xff]
    %v433 = vld [vmem:[#allocation6 + $0xa80] sm:$0xff]
    %v434 = vld [vmem:[#allocation6 + $0xa88] sm:$0xff]
    %v435 = vld [vmem:[#allocation6 + $0xa90] sm:$0xff]
    %v436 = vld [vmem:[#allocation6 + $0xa98] sm:$0xff]
    %v437 = vld [vmem:[#allocation6 + $0xaa0] sm:$0xff]
    %v438 = vld [vmem:[#allocation6 + $0xaa8] sm:$0xff]
    %v439 = vld [vmem:[#allocation6 + $0xab0] sm:$0xff]
    %v440 = vld [vmem:[#allocation6 + $0xab8] sm:$0xff]
    %v441 = vld [vmem:[#allocation6 + $0xac0] sm:$0xff]
    %v442 = vld [vmem:[#allocation6 + $0xac8] sm:$0xff]
    %v443 = vld [vmem:[#allocation6 + $0xad0] sm:$0xff]
    %v444 = vld [vmem:[#allocation6 + $0xad8] sm:$0xff]
    %v445 = vld [vmem:[#allocation6 + $0xae0] sm:$0xff]
    %v446 = vld [vmem:[#allocation6 + $0xae8] sm:$0xff]
    %v447 = vld [vmem:[#allocation6 + $0xaf0] sm:$0xff]
    %v448 = vld [vmem:[#allocation6 + $0xaf8] sm:$0xff]
    %v449 = vld [vmem:[#allocation6 + $0xb00] sm:$0xff]
    %v450 = vld [vmem:[#allocation6 + $0xb08] sm:$0xff]
    %v451 = vld [vmem:[#allocation6 + $0xb10] sm:$0xff]
    %v452 = vld [vmem:[#allocation6 + $0xb18] sm:$0xff]
    %v453 = vld [vmem:[#allocation6 + $0xb20] sm:$0xff]
    %v454 = vld [vmem:[#allocation6 + $0xb28] sm:$0xff]
    %v455 = vld [vmem:[#allocation6 + $0xb30] sm:$0xff]
    %v456 = vld [vmem:[#allocation6 + $0xb38] sm:$0xff]
    %v457 = vld [vmem:[#allocation6 + $0xb40] sm:$0xff]
    %v458 = vld [vmem:[#allocation6 + $0xb48] sm:$0xff]
    %v459 = vld [vmem:[#allocation6 + $0xb50] sm:$0xff]
    %v460 = vld [vmem:[#allocation6 + $0xb58] sm:$0xff]
    %v461 = vld [vmem:[#allocation6 + $0xb60] sm:$0xff]
    %v462 = vld [vmem:[#allocation6 + $0xb68] sm:$0xff]
    %v463 = vld [vmem:[#allocation6 + $0xb70] sm:$0xff]
    %v464 = vld [vmem:[#allocation6 + $0xb78] sm:$0xff]
    %v465 = vld [vmem:[#allocation6 + $0xb80] sm:$0xff]
    %v466 = vld [vmem:[#allocation6 + $0xb88] sm:$0xff]
    %v467 = vld [vmem:[#allocation6 + $0xb90] sm:$0xff]
    %v468 = vld [vmem:[#allocation6 + $0xb98] sm:$0xff]
    %v469 = vld [vmem:[#allocation6 + $0xba0] sm:$0xff]
    %v470 = vld [vmem:[#allocation6 + $0xba8] sm:$0xff]
    %v471 = vld [vmem:[#allocation6 + $0xbb0] sm:$0xff]
    %v472 = vld [vmem:[#allocation6 + $0xbb8] sm:$0xff]
    %v473 = vld [vmem:[#allocation6 + $0xbc0] sm:$0xff]
    %v474 = vld [vmem:[#allocation6 + $0xbc8] sm:$0xff]
    %v475 = vld [vmem:[#allocation6 + $0xbd0] sm:$0xff]
    %v476 = vld [vmem:[#allocation6 + $0xbd8] sm:$0xff]
    %v477 = vld [vmem:[#allocation6 + $0xbe0] sm:$0xff]
    %v478 = vld [vmem:[#allocation6 + $0xbe8] sm:$0xff]
    %v479 = vld [vmem:[#allocation6 + $0xbf0] sm:$0xff]
    %v480 = vld [vmem:[#allocation6 + $0xbf8] sm:$0xff]
    %v481 = vld [vmem:[#allocation6 + $0xc00] sm:$0xff]
    %v482 = vld [vmem:[#allocation6 + $0xc08] sm:$0xff]
    %v483 = vld [vmem:[#allocation6 + $0xc10] sm:$0xff]
    %v484 = vld [vmem:[#allocation6 + $0xc18] sm:$0xff]
    %v485 = vld [vmem:[#allocation6 + $0xc20] sm:$0xff]
    %v486 = vld [vmem:[#allocation6 + $0xc28] sm:$0xff]
    %v487 = vld [vmem:[#allocation6 + $0xc30] sm:$0xff]
    %v488 = vld [vmem:[#allocation6 + $0xc38] sm:$0xff]
    %v489 = vld [vmem:[#allocation6 + $0xc40] sm:$0xff]
    %v490 = vld [vmem:[#allocation6 + $0xc48] sm:$0xff]
    %v491 = vld [vmem:[#allocation6 + $0xc50] sm:$0xff]
    %v492 = vld [vmem:[#allocation6 + $0xc58] sm:$0xff]
    %v493 = vld [vmem:[#allocation6 + $0xc60] sm:$0xff]
    %v494 = vld [vmem:[#allocation6 + $0xc68] sm:$0xff]
    %v495 = vld [vmem:[#allocation6 + $0xc70] sm:$0xff]
    %v496 = vld [vmem:[#allocation6 + $0xc78] sm:$0xff]
    %v497 = vld [vmem:[#allocation6 + $0xc80] sm:$0xff]
    %v498 = vld [vmem:[#allocation6 + $0xc88] sm:$0xff]
    %v499 = vld [vmem:[#allocation6 + $0xc90] sm:$0xff]
    %v500 = vld [vmem:[#allocation6 + $0xc98] sm:$0xff]
    %v501 = vld [vmem:[#allocation6 + $0xca0] sm:$0xff]
    %v502 = vld [vmem:[#allocation6 + $0xca8] sm:$0xff]
    %v503 = vld [vmem:[#allocation6 + $0xcb0] sm:$0xff]
    %v504 = vld [vmem:[#allocation6 + $0xcb8] sm:$0xff]
    %v505 = vld [vmem:[#allocation6 + $0xcc0] sm:$0xff]
    %v506 = vld [vmem:[#allocation6 + $0xcc8] sm:$0xff]
    %v507 = vld [vmem:[#allocation6 + $0xcd0] sm:$0xff]
    %v508 = vld [vmem:[#allocation6 + $0xcd8] sm:$0xff]
    %v509 = vld [vmem:[#allocation6 + $0xce0] sm:$0xff]
    %v510 = vld [vmem:[#allocation6 + $0xce8] sm:$0xff]
    %v511 = vld [vmem:[#allocation6 + $0xcf0] sm:$0xff]
    %v512 = vld [vmem:[#allocation6 + $0xcf8] sm:$0xff]
    %v513 = vld [vmem:[#allocation6 + $0xd00] sm:$0xff]
    %v514 = vld [vmem:[#allocation6 + $0xd08] sm:$0xff]
    %v515 = vld [vmem:[#allocation6 + $0xd10] sm:$0xff]
    %v516 = vld [vmem:[#allocation6 + $0xd18] sm:$0xff]
    %v517 = vld [vmem:[#allocation6 + $0xd20] sm:$0xff]
    %v518 = vld [vmem:[#allocation6 + $0xd28] sm:$0xff]
    %v519 = vld [vmem:[#allocation6 + $0xd30] sm:$0xff]
    %v520 = vld [vmem:[#allocation6 + $0xd38] sm:$0xff]
    %v521 = vld [vmem:[#allocation6 + $0xd40] sm:$0xff]
    %v522 = vld [vmem:[#allocation6 + $0xd48] sm:$0xff]
    %v523 = vld [vmem:[#allocation6 + $0xd50] sm:$0xff]
    %v524 = vld [vmem:[#allocation6 + $0xd58] sm:$0xff]
    %v525 = vld [vmem:[#allocation6 + $0xd60] sm:$0xff]
    %v526 = vld [vmem:[#allocation6 + $0xd68] sm:$0xff]
    %v527 = vld [vmem:[#allocation6 + $0xd70] sm:$0xff]
    %v528 = vld [vmem:[#allocation6 + $0xd78] sm:$0xff]
    %v529 = vld [vmem:[#allocation6 + $0xd80] sm:$0xff]
    %v530 = vld [vmem:[#allocation6 + $0xd88] sm:$0xff]
    %v531 = vld [vmem:[#allocation6 + $0xd90] sm:$0xff]
    %v532 = vld [vmem:[#allocation6 + $0xd98] sm:$0xff]
    %v533 = vld [vmem:[#allocation6 + $0xda0] sm:$0xff]
    %v534 = vld [vmem:[#allocation6 + $0xda8] sm:$0xff]
    %v535 = vld [vmem:[#allocation6 + $0xdb0] sm:$0xff]
    %v536 = vld [vmem:[#allocation6 + $0xdb8] sm:$0xff]
    %v537 = vld [vmem:[#allocation6 + $0xdc0] sm:$0xff]
    %v538 = vld [vmem:[#allocation6 + $0xdc8] sm:$0xff]
    %v539 = vld [vmem:[#allocation6 + $0xdd0] sm:$0xff]
    %v540 = vld [vmem:[#allocation6 + $0xdd8] sm:$0xff]
    %v541 = vld [vmem:[#allocation6 + $0xde0] sm:$0xff]
    %v542 = vld [vmem:[#allocation6 + $0xde8] sm:$0xff]
    %v543 = vld [vmem:[#allocation6 + $0xdf0] sm:$0xff]
    %v544 = vld [vmem:[#allocation6 + $0xdf8] sm:$0xff]
    %v545 = vld [vmem:[#allocation6 + $0xe00] sm:$0xff]
    %v546 = vld [vmem:[#allocation6 + $0xe08] sm:$0xff]
    %v547 = vld [vmem:[#allocation6 + $0xe10] sm:$0xff]
    %v548 = vld [vmem:[#allocation6 + $0xe18] sm:$0xff]
    %v549 = vld [vmem:[#allocation6 + $0xe20] sm:$0xff]
    %v550 = vld [vmem:[#allocation6 + $0xe28] sm:$0xff]
    %v551 = vld [vmem:[#allocation6 + $0xe30] sm:$0xff]
    %v552 = vld [vmem:[#allocation6 + $0xe38] sm:$0xff]
    %v553 = vld [vmem:[#allocation6 + $0xe40] sm:$0xff]
    %v554 = vld [vmem:[#allocation6 + $0xe48] sm:$0xff]
    %v555 = vld [vmem:[#allocation6 + $0xe50] sm:$0xff]
    %v556 = vld [vmem:[#allocation6 + $0xe58] sm:$0xff]
    %v557 = vld [vmem:[#allocation6 + $0xe60] sm:$0xff]
    %v558 = vld [vmem:[#allocation6 + $0xe68] sm:$0xff]
    %v559 = vld [vmem:[#allocation6 + $0xe70] sm:$0xff]
    %v560 = vld [vmem:[#allocation6 + $0xe78] sm:$0xff]
    %v561 = vld [vmem:[#allocation6 + $0xe80] sm:$0xff]
    %v562 = vld [vmem:[#allocation6 + $0xe88] sm:$0xff]
    %v563 = vld [vmem:[#allocation6 + $0xe90] sm:$0xff]
    %v564 = vld [vmem:[#allocation6 + $0xe98] sm:$0xff]
    %v565 = vld [vmem:[#allocation6 + $0xea0] sm:$0xff]
    %v566 = vld [vmem:[#allocation6 + $0xea8] sm:$0xff]
    %v567 = vld [vmem:[#allocation6 + $0xeb0] sm:$0xff]
    %v568 = vld [vmem:[#allocation6 + $0xeb8] sm:$0xff]
    %v569 = vld [vmem:[#allocation6 + $0xec0] sm:$0xff]
    %v570 = vld [vmem:[#allocation6 + $0xec8] sm:$0xff]
    %v571 = vld [vmem:[#allocation6 + $0xed0] sm:$0xff]
    %v572 = vld [vmem:[#allocation6 + $0xed8] sm:$0xff]
    %v573 = vld [vmem:[#allocation6 + $0xee0] sm:$0xff]
    %v574 = vld [vmem:[#allocation6 + $0xee8] sm:$0xff]
    %v575 = vld [vmem:[#allocation6 + $0xef0] sm:$0xff]
    %v576 = vld [vmem:[#allocation6 + $0xef8] sm:$0xff]
    %v577 = vld [vmem:[#allocation6 + $0xf00] sm:$0xff]
    %v578 = vld [vmem:[#allocation6 + $0xf08] sm:$0xff]
    %v579 = vld [vmem:[#allocation6 + $0xf10] sm:$0xff]
    %v580 = vld [vmem:[#allocation6 + $0xf18] sm:$0xff]
    %v581 = vld [vmem:[#allocation6 + $0xf20] sm:$0xff]
    %v582 = vld [vmem:[#allocation6 + $0xf28] sm:$0xff]
    %v583 = vld [vmem:[#allocation6 + $0xf30] sm:$0xff]
    %v584 = vld [vmem:[#allocation6 + $0xf38] sm:$0xff]
    %v585 = vld [vmem:[#allocation6 + $0xf40] sm:$0xff]
    %v586 = vld [vmem:[#allocation6 + $0xf48] sm:$0xff]
    %v587 = vld [vmem:[#allocation6 + $0xf50] sm:$0xff]
    %v588 = vld [vmem:[#allocation6 + $0xf58] sm:$0xff]
    %v589 = vld [vmem:[#allocation6 + $0xf60] sm:$0xff]
    %v590 = vld [vmem:[#allocation6 + $0xf68] sm:$0xff]
    %v591 = vld [vmem:[#allocation6 + $0xf70] sm:$0xff]
    %v592 = vld [vmem:[#allocation6 + $0xf78] sm:$0xff]
    %v593 = vld [vmem:[#allocation6 + $0xf80] sm:$0xff]
    %v594 = vld [vmem:[#allocation6 + $0xf88] sm:$0xff]
    %v595 = vld [vmem:[#allocation6 + $0xf90] sm:$0xff]
    %v596 = vld [vmem:[#allocation6 + $0xf98] sm:$0xff]
    %v597 = vld [vmem:[#allocation6 + $0xfa0] sm:$0xff]
    %v598 = vld [vmem:[#allocation6 + $0xfa8] sm:$0xff]
    %v599 = vld [vmem:[#allocation6 + $0xfb0] sm:$0xff]
    %v600 = vld [vmem:[#allocation6 + $0xfb8] sm:$0xff]
    %v601 = vld [vmem:[#allocation6 + $0xfc0] sm:$0xff]
    %v602 = vld [vmem:[#allocation6 + $0xfc8] sm:$0xff]
    %v603 = vld [vmem:[#allocation6 + $0xfd0] sm:$0xff]
    %v604 = vld [vmem:[#allocation6 + $0xfd8] sm:$0xff]
    %v605 = vld [vmem:[#allocation6 + $0xfe0] sm:$0xff]
    %v606 = vld [vmem:[#allocation6 + $0xfe8] sm:$0xff]
    %v607 = vld [vmem:[#allocation6 + $0xff0] sm:$0xff]
    %v608 = vld [vmem:[#allocation6 + $0xff8] sm:$0xff]
    %v609 = vld [vmem:[#allocation6 + $0x1000] sm:$0xff]
    %v610 = vld [vmem:[#allocation6 + $0x1008] sm:$0xff]
    %v611 = vld [vmem:[#allocation6 + $0x1010] sm:$0xff]
    %v612 = vld [vmem:[#allocation6 + $0x1018] sm:$0xff]
    %v613 = vld [vmem:[#allocation6 + $0x1020] sm:$0xff]
    %v614 = vld [vmem:[#allocation6 + $0x1028] sm:$0xff]
    %v615 = vld [vmem:[#allocation6 + $0x1030] sm:$0xff]
    %v616 = vld [vmem:[#allocation6 + $0x1038] sm:$0xff]
    %v617 = vld [vmem:[#allocation6 + $0x1040] sm:$0xff]
    %v618 = vld [vmem:[#allocation6 + $0x1048] sm:$0xff]
    %v619 = vld [vmem:[#allocation6 + $0x1050] sm:$0xff]
    %v620 = vld [vmem:[#allocation6 + $0x1058] sm:$0xff]
    %v621 = vld [vmem:[#allocation6 + $0x1060] sm:$0xff]
    %v622 = vld [vmem:[#allocation6 + $0x1068] sm:$0xff]
    %v623 = vld [vmem:[#allocation6 + $0x1070] sm:$0xff]
    %v624 = vld [vmem:[#allocation6 + $0x1078] sm:$0xff]
    %v625 = vld [vmem:[#allocation6 + $0x1080] sm:$0xff]
    %v626 = vld [vmem:[#allocation6 + $0x1088] sm:$0xff]
    %v627 = vld [vmem:[#allocation6 + $0x1090] sm:$0xff]
    %v628 = vld [vmem:[#allocation6 + $0x1098] sm:$0xff]
    %v629 = vld [vmem:[#allocation6 + $0x10a0] sm:$0xff]
    %v630 = vld [vmem:[#allocation6 + $0x10a8] sm:$0xff]
    %v631 = vld [vmem:[#allocation6 + $0x10b0] sm:$0xff]
    %v632 = vld [vmem:[#allocation6 + $0x10b8] sm:$0xff]
    %v633 = vld [vmem:[#allocation6 + $0x10c0] sm:$0xff]
    %v634 = vld [vmem:[#allocation6 + $0x10c8] sm:$0xff]
    %v635 = vld [vmem:[#allocation6 + $0x10d0] sm:$0xff]
    %v636 = vld [vmem:[#allocation6 + $0x10d8] sm:$0xff]
    %v637 = vld [vmem:[#allocation6 + $0x10e0] sm:$0xff]
    %v638 = vld [vmem:[#allocation6 + $0x10e8] sm:$0xff]
    %v639 = vld [vmem:[#allocation6 + $0x10f0] sm:$0xff]
    %v640 = vld [vmem:[#allocation6 + $0x10f8] sm:$0xff]
    %v641 = vld [vmem:[#allocation6 + $0x1100] sm:$0xff]
    %v642 = vld [vmem:[#allocation6 + $0x1108] sm:$0xff]
    %v643 = vld [vmem:[#allocation6 + $0x1110] sm:$0xff]
    %v644 = vld [vmem:[#allocation6 + $0x1118] sm:$0xff]
    %v645 = vld [vmem:[#allocation6 + $0x1120] sm:$0xff]
    %v646 = vld [vmem:[#allocation6 + $0x1128] sm:$0xff]
    %v647 = vld [vmem:[#allocation6 + $0x1130] sm:$0xff]
    %v648 = vld [vmem:[#allocation6 + $0x1138] sm:$0xff]
    %v649 = vld [vmem:[#allocation6 + $0x1140] sm:$0xff]
    %v650 = vld [vmem:[#allocation6 + $0x1148] sm:$0xff]
    %v651 = vld [vmem:[#allocation6 + $0x1150] sm:$0xff]
    %v652 = vld [vmem:[#allocation6 + $0x1158] sm:$0xff]
    %v653 = vld [vmem:[#allocation6 + $0x1160] sm:$0xff]
    %v654 = vld [vmem:[#allocation6 + $0x1168] sm:$0xff]
    %v655 = vld [vmem:[#allocation6 + $0x1170] sm:$0xff]
    %v656 = vld [vmem:[#allocation6 + $0x1178] sm:$0xff]
    %v657 = vld [vmem:[#allocation6 + $0x1180] sm:$0xff]
    %v658 = vld [vmem:[#allocation6 + $0x1188] sm:$0xff]
    %v659 = vld [vmem:[#allocation6 + $0x1190] sm:$0xff]
    %v660 = vld [vmem:[#allocation6 + $0x1198] sm:$0xff]
    %v661 = vld [vmem:[#allocation6 + $0x11a0] sm:$0xff]
    %v662 = vld [vmem:[#allocation6 + $0x11a8] sm:$0xff]
    %v663 = vld [vmem:[#allocation6 + $0x11b0] sm:$0xff]
    %v664 = vld [vmem:[#allocation6 + $0x11b8] sm:$0xff]
    %v665 = vld [vmem:[#allocation6 + $0x11c0] sm:$0xff]
    %v666 = vld [vmem:[#allocation6 + $0x11c8] sm:$0xff]
    %v667 = vld [vmem:[#allocation6 + $0x11d0] sm:$0xff]
    %v668 = vld [vmem:[#allocation6 + $0x11d8] sm:$0xff]
    %v669 = vld [vmem:[#allocation6 + $0x11e0] sm:$0xff]
    %v670 = vld [vmem:[#allocation6 + $0x11e8] sm:$0xff]
    %v671 = vld [vmem:[#allocation6 + $0x11f0] sm:$0xff]
    %v672 = vld [vmem:[#allocation6 + $0x11f8] sm:$0xff]
    %v673 = vld [vmem:[#allocation6 + $0x1200] sm:$0xff]
    %v674 = vld [vmem:[#allocation6 + $0x1208] sm:$0xff]
    %v675 = vld [vmem:[#allocation6 + $0x1210] sm:$0xff]
    %v676 = vld [vmem:[#allocation6 + $0x1218] sm:$0xff]
    %v677 = vld [vmem:[#allocation6 + $0x1220] sm:$0xff]
    %v678 = vld [vmem:[#allocation6 + $0x1228] sm:$0xff]
    %v679 = vld [vmem:[#allocation6 + $0x1230] sm:$0xff]
    %v680 = vld [vmem:[#allocation6 + $0x1238] sm:$0xff]
    %v681 = vld [vmem:[#allocation6 + $0x1240] sm:$0xff]
    %v682 = vld [vmem:[#allocation6 + $0x1248] sm:$0xff]
    %v683 = vld [vmem:[#allocation6 + $0x1250] sm:$0xff]
    %v684 = vld [vmem:[#allocation6 + $0x1258] sm:$0xff]
    %v685 = vld [vmem:[#allocation6 + $0x1260] sm:$0xff]
    %v686 = vld [vmem:[#allocation6 + $0x1268] sm:$0xff]
    %v687 = vld [vmem:[#allocation6 + $0x1270] sm:$0xff]
    %v688 = vld [vmem:[#allocation6 + $0x1278] sm:$0xff]
    %v689 = vld [vmem:[#allocation6 + $0x1280] sm:$0xff]
    %v690 = vld [vmem:[#allocation6 + $0x1288] sm:$0xff]
    %v691 = vld [vmem:[#allocation6 + $0x1290] sm:$0xff]
    %v692 = vld [vmem:[#allocation6 + $0x1298] sm:$0xff]
    %v693 = vld [vmem:[#allocation6 + $0x12a0] sm:$0xff]
    %v694 = vld [vmem:[#allocation6 + $0x12a8] sm:$0xff]
    %v695 = vld [vmem:[#allocation6 + $0x12b0] sm:$0xff]
    %v696 = vld [vmem:[#allocation6 + $0x12b8] sm:$0xff]
    %v697 = vld [vmem:[#allocation6 + $0x12c0] sm:$0xff]
    %v698 = vld [vmem:[#allocation6 + $0x12c8] sm:$0xff]
    %v699 = vld [vmem:[#allocation6 + $0x12d0] sm:$0xff]
    %v700 = vld [vmem:[#allocation6 + $0x12d8] sm:$0xff]
    %v701 = vld [vmem:[#allocation6 + $0x12e0] sm:$0xff]
    %v702 = vld [vmem:[#allocation6 + $0x12e8] sm:$0xff]
    %v703 = vld [vmem:[#allocation6 + $0x12f0] sm:$0xff]
    %v704 = vld [vmem:[#allocation6 + $0x12f8] sm:$0xff]
    %v705 = vld [vmem:[#allocation6 + $0x1300] sm:$0xff]
    %v706 = vld [vmem:[#allocation6 + $0x1308] sm:$0xff]
    %v707 = vld [vmem:[#allocation6 + $0x1310] sm:$0xff]
    %v708 = vld [vmem:[#allocation6 + $0x1318] sm:$0xff]
    %v709 = vld [vmem:[#allocation6 + $0x1320] sm:$0xff]
    %v710 = vld [vmem:[#allocation6 + $0x1328] sm:$0xff]
    %v711 = vld [vmem:[#allocation6 + $0x1330] sm:$0xff]
    %v712 = vld [vmem:[#allocation6 + $0x1338] sm:$0xff]
    %v713 = vld [vmem:[#allocation6 + $0x1340] sm:$0xff]
    %v714 = vld [vmem:[#allocation6 + $0x1348] sm:$0xff]
    %v715 = vld [vmem:[#allocation6 + $0x1350] sm:$0xff]
    %v716 = vld [vmem:[#allocation6 + $0x1358] sm:$0xff]
    %v717 = vld [vmem:[#allocation6 + $0x1360] sm:$0xff]
    %v718 = vld [vmem:[#allocation6 + $0x1368] sm:$0xff]
    %v719 = vld [vmem:[#allocation6 + $0x1370] sm:$0xff]
    %v720 = vld [vmem:[#allocation6 + $0x1378] sm:$0xff]
    %v721 = vld [vmem:[#allocation6 + $0x1380] sm:$0xff]
    %v722 = vld [vmem:[#allocation6 + $0x1388] sm:$0xff]
    %v723 = vld [vmem:[#allocation6 + $0x1390] sm:$0xff]
    %v724 = vld [vmem:[#allocation6 + $0x1398] sm:$0xff]
    %v725 = vld [vmem:[#allocation6 + $0x13a0] sm:$0xff]
    %v726 = vld [vmem:[#allocation6 + $0x13a8] sm:$0xff]
    %v727 = vld [vmem:[#allocation6 + $0x13b0] sm:$0xff]
    %v728 = vld [vmem:[#allocation6 + $0x13b8] sm:$0xff]
    %v729 = vld [vmem:[#allocation6 + $0x13c0] sm:$0xff]
    %v730 = vld [vmem:[#allocation6 + $0x13c8] sm:$0xff]
    %v731 = vld [vmem:[#allocation6 + $0x13d0] sm:$0xff]
    %v732 = vld [vmem:[#allocation6 + $0x13d8] sm:$0xff]
    %v733 = vld [vmem:[#allocation6 + $0x13e0] sm:$0xff]
    %v734 = vld [vmem:[#allocation6 + $0x13e8] sm:$0xff]
    %v735 = vld [vmem:[#allocation6 + $0x13f0] sm:$0xff]
    %v736 = vld [vmem:[#allocation6 + $0x13f8] sm:$0xff]
    %v737 = vld [vmem:[#allocation6 + $0x1400] sm:$0xff]
    %v738 = vld [vmem:[#allocation6 + $0x1408] sm:$0xff]
    %v739 = vld [vmem:[#allocation6 + $0x1410] sm:$0xff]
    %v740 = vld [vmem:[#allocation6 + $0x1418] sm:$0xff]
    %v741 = vld [vmem:[#allocation6 + $0x1420] sm:$0xff]
    %v742 = vld [vmem:[#allocation6 + $0x1428] sm:$0xff]
    %v743 = vld [vmem:[#allocation6 + $0x1430] sm:$0xff]
    %v744 = vld [vmem:[#allocation6 + $0x1438] sm:$0xff]
    %v745 = vld [vmem:[#allocation6 + $0x1440] sm:$0xff]
    %v746 = vld [vmem:[#allocation6 + $0x1448] sm:$0xff]
    %v747 = vld [vmem:[#allocation6 + $0x1450] sm:$0xff]
    %v748 = vld [vmem:[#allocation6 + $0x1458] sm:$0xff]
    %v749 = vld [vmem:[#allocation6 + $0x1460] sm:$0xff]
    %v750 = vld [vmem:[#allocation6 + $0x1468] sm:$0xff]
    %v751 = vld [vmem:[#allocation6 + $0x1470] sm:$0xff]
    %v752 = vld [vmem:[#allocation6 + $0x1478] sm:$0xff]
    %v753 = vld [vmem:[#allocation6 + $0x1480] sm:$0xff]
    %v754 = vld [vmem:[#allocation6 + $0x1488] sm:$0xff]
    %v755 = vld [vmem:[#allocation6 + $0x1490] sm:$0xff]
    %v756 = vld [vmem:[#allocation6 + $0x1498] sm:$0xff]
    %v757 = vld [vmem:[#allocation6 + $0x14a0] sm:$0xff]
    %v758 = vld [vmem:[#allocation6 + $0x14a8] sm:$0xff]
    %v759 = vld [vmem:[#allocation6 + $0x14b0] sm:$0xff]
    %v760 = vld [vmem:[#allocation6 + $0x14b8] sm:$0xff]
    %v761 = vld [vmem:[#allocation6 + $0x14c0] sm:$0xff]
    %v762 = vld [vmem:[#allocation6 + $0x14c8] sm:$0xff]
    %v763 = vld [vmem:[#allocation6 + $0x14d0] sm:$0xff]
    %v764 = vld [vmem:[#allocation6 + $0x14d8] sm:$0xff]
    %v765 = vld [vmem:[#allocation6 + $0x14e0] sm:$0xff]
    %v766 = vld [vmem:[#allocation6 + $0x14e8] sm:$0xff]
    %v767 = vld [vmem:[#allocation6 + $0x14f0] sm:$0xff]
    %v768 = vld [vmem:[#allocation6 + $0x14f8] sm:$0xff]
    %v769 = vld [vmem:[#allocation6 + $0x1500] sm:$0xff]
    %v770 = vld [vmem:[#allocation6 + $0x1508] sm:$0xff]
    %v771 = vld [vmem:[#allocation6 + $0x1510] sm:$0xff]
    %v772 = vld [vmem:[#allocation6 + $0x1518] sm:$0xff]
    %v773 = vld [vmem:[#allocation6 + $0x1520] sm:$0xff]
    %v774 = vld [vmem:[#allocation6 + $0x1528] sm:$0xff]
    %v775 = vld [vmem:[#allocation6 + $0x1530] sm:$0xff]
    %v776 = vld [vmem:[#allocation6 + $0x1538] sm:$0xff]
    %v777 = vld [vmem:[#allocation6 + $0x1540] sm:$0xff]
    %v778 = vld [vmem:[#allocation6 + $0x1548] sm:$0xff]
    %v779 = vld [vmem:[#allocation6 + $0x1550] sm:$0xff]
    %v780 = vld [vmem:[#allocation6 + $0x1558] sm:$0xff]
    %v781 = vld [vmem:[#allocation6 + $0x1560] sm:$0xff]
    %v782 = vld [vmem:[#allocation6 + $0x1568] sm:$0xff]
    %v783 = vld [vmem:[#allocation6 + $0x1570] sm:$0xff]
    %v784 = vld [vmem:[#allocation6 + $0x1578] sm:$0xff]
    %v785 = vld [vmem:[#allocation6 + $0x1580] sm:$0xff]
    %v786 = vld [vmem:[#allocation6 + $0x1588] sm:$0xff]
    %v787 = vld [vmem:[#allocation6 + $0x1590] sm:$0xff]
    %v788 = vld [vmem:[#allocation6 + $0x1598] sm:$0xff]
    %v789 = vld [vmem:[#allocation6 + $0x15a0] sm:$0xff]
    %v790 = vld [vmem:[#allocation6 + $0x15a8] sm:$0xff]
    %v791 = vld [vmem:[#allocation6 + $0x15b0] sm:$0xff]
    %v792 = vld [vmem:[#allocation6 + $0x15b8] sm:$0xff]
    %v793 = vld [vmem:[#allocation6 + $0x15c0] sm:$0xff]
    %v794 = vld [vmem:[#allocation6 + $0x15c8] sm:$0xff]
    %v795 = vld [vmem:[#allocation6 + $0x15d0] sm:$0xff]
    %v796 = vld [vmem:[#allocation6 + $0x15d8] sm:$0xff]
    %v797 = vld [vmem:[#allocation6 + $0x15e0] sm:$0xff]
    %v798 = vld [vmem:[#allocation6 + $0x15e8] sm:$0xff]
    %v799 = vld [vmem:[#allocation6 + $0x15f0] sm:$0xff]
    %v800 = vld [vmem:[#allocation6 + $0x15f8] sm:$0xff]
    %v801 = vld [vmem:[#allocation6 + $0x1600] sm:$0xff]
    %v802 = vld [vmem:[#allocation6 + $0x1608] sm:$0xff]
    %v803 = vld [vmem:[#allocation6 + $0x1610] sm:$0xff]
    %v804 = vld [vmem:[#allocation6 + $0x1618] sm:$0xff]
    %v805 = vld [vmem:[#allocation6 + $0x1620] sm:$0xff]
    %v806 = vld [vmem:[#allocation6 + $0x1628] sm:$0xff]
    %v807 = vld [vmem:[#allocation6 + $0x1630] sm:$0xff]
    %v808 = vld [vmem:[#allocation6 + $0x1638] sm:$0xff]
    %v809 = vld [vmem:[#allocation6 + $0x1640] sm:$0xff]
    %v810 = vld [vmem:[#allocation6 + $0x1648] sm:$0xff]
    %v811 = vld [vmem:[#allocation6 + $0x1650] sm:$0xff]
    %v812 = vld [vmem:[#allocation6 + $0x1658] sm:$0xff]
    %v813 = vld [vmem:[#allocation6 + $0x1660] sm:$0xff]
    %v814 = vld [vmem:[#allocation6 + $0x1668] sm:$0xff]
    %v815 = vld [vmem:[#allocation6 + $0x1670] sm:$0xff]
    %v816 = vld [vmem:[#allocation6 + $0x1678] sm:$0xff]
    %v817 = vld [vmem:[#allocation6 + $0x1680] sm:$0xff]
    %v818 = vld [vmem:[#allocation6 + $0x1688] sm:$0xff]
    %v819 = vld [vmem:[#allocation6 + $0x1690] sm:$0xff]
    %v820 = vld [vmem:[#allocation6 + $0x1698] sm:$0xff]
    %v821 = vld [vmem:[#allocation6 + $0x16a0] sm:$0xff]
    %v822 = vld [vmem:[#allocation6 + $0x16a8] sm:$0xff]
    %v823 = vld [vmem:[#allocation6 + $0x16b0] sm:$0xff]
    %v824 = vld [vmem:[#allocation6 + $0x16b8] sm:$0xff]
    %v825 = vld [vmem:[#allocation6 + $0x16c0] sm:$0xff]
    %v826 = vld [vmem:[#allocation6 + $0x16c8] sm:$0xff]
    %v827 = vld [vmem:[#allocation6 + $0x16d0] sm:$0xff]
    %v828 = vld [vmem:[#allocation6 + $0x16d8] sm:$0xff]
    %v829 = vld [vmem:[#allocation6 + $0x16e0] sm:$0xff]
    %v830 = vld [vmem:[#allocation6 + $0x16e8] sm:$0xff]
    %v831 = vld [vmem:[#allocation6 + $0x16f0] sm:$0xff]
    %v832 = vld [vmem:[#allocation6 + $0x16f8] sm:$0xff]
    %v833 = vld [vmem:[#allocation6 + $0x1700] sm:$0xff]
    %v834 = vld [vmem:[#allocation6 + $0x1708] sm:$0xff]
    %v835 = vld [vmem:[#allocation6 + $0x1710] sm:$0xff]
    %v836 = vld [vmem:[#allocation6 + $0x1718] sm:$0xff]
    %v837 = vld [vmem:[#allocation6 + $0x1720] sm:$0xff]
    %v838 = vld [vmem:[#allocation6 + $0x1728] sm:$0xff]
    %v839 = vld [vmem:[#allocation6 + $0x1730] sm:$0xff]
    %v840 = vld [vmem:[#allocation6 + $0x1738] sm:$0xff]
    %v841 = vld [vmem:[#allocation6 + $0x1740] sm:$0xff]
    %v842 = vld [vmem:[#allocation6 + $0x1748] sm:$0xff]
    %v843 = vld [vmem:[#allocation6 + $0x1750] sm:$0xff]
    %v844 = vld [vmem:[#allocation6 + $0x1758] sm:$0xff]
    %v845 = vld [vmem:[#allocation6 + $0x1760] sm:$0xff]
    %v846 = vld [vmem:[#allocation6 + $0x1768] sm:$0xff]
    %v847 = vld [vmem:[#allocation6 + $0x1770] sm:$0xff]
    %v848 = vld [vmem:[#allocation6 + $0x1778] sm:$0xff]
    %v849 = vld [vmem:[#allocation6 + $0x1780] sm:$0xff]
    %v850 = vld [vmem:[#allocation6 + $0x1788] sm:$0xff]
    %v851 = vld [vmem:[#allocation6 + $0x1790] sm:$0xff]
    %v852 = vld [vmem:[#allocation6 + $0x1798] sm:$0xff]
    %v853 = vld [vmem:[#allocation6 + $0x17a0] sm:$0xff]
    %v854 = vld [vmem:[#allocation6 + $0x17a8] sm:$0xff]
    %v855 = vld [vmem:[#allocation6 + $0x17b0] sm:$0xff]
    %v856 = vld [vmem:[#allocation6 + $0x17b8] sm:$0xff]
    %v857 = vld [vmem:[#allocation6 + $0x17c0] sm:$0xff]
    %v858 = vld [vmem:[#allocation6 + $0x17c8] sm:$0xff]
    %v859 = vld [vmem:[#allocation6 + $0x17d0] sm:$0xff]
    %v860 = vld [vmem:[#allocation6 + $0x17d8] sm:$0xff]
    %v861 = vld [vmem:[#allocation6 + $0x17e0] sm:$0xff]
    %v862 = vld [vmem:[#allocation6 + $0x17e8] sm:$0xff]
    %v863 = vld [vmem:[#allocation6 + $0x17f0] sm:$0xff]
    %v864 = vld [vmem:[#allocation6 + $0x17f8] sm:$0xff]
    %v865 = vld [vmem:[#allocation6 + $0x1800] sm:$0xff]
    %v866 = vld [vmem:[#allocation6 + $0x1808] sm:$0xff]
    %v867 = vld [vmem:[#allocation6 + $0x1810] sm:$0xff]
    %v868 = vld [vmem:[#allocation6 + $0x1818] sm:$0xff]
    %v869 = vld [vmem:[#allocation6 + $0x1820] sm:$0xff]
    %v870 = vld [vmem:[#allocation6 + $0x1828] sm:$0xff]
    %v871 = vld [vmem:[#allocation6 + $0x1830] sm:$0xff]
    %v872 = vld [vmem:[#allocation6 + $0x1838] sm:$0xff]
    %v873 = vld [vmem:[#allocation6 + $0x1840] sm:$0xff]
    %v874 = vld [vmem:[#allocation6 + $0x1848] sm:$0xff]
    %v875 = vld [vmem:[#allocation6 + $0x1850] sm:$0xff]
    %v876 = vld [vmem:[#allocation6 + $0x1858] sm:$0xff]
    %v877 = vld [vmem:[#allocation6 + $0x1860] sm:$0xff]
    %v878 = vld [vmem:[#allocation6 + $0x1868] sm:$0xff]
    %v879 = vld [vmem:[#allocation6 + $0x1870] sm:$0xff]
    %v880 = vld [vmem:[#allocation6 + $0x1878] sm:$0xff]
    %v881 = vld [vmem:[#allocation6 + $0x1880] sm:$0xff]
    %v882 = vld [vmem:[#allocation6 + $0x1888] sm:$0xff]
    %v883 = vld [vmem:[#allocation6 + $0x1890] sm:$0xff]
    %v884 = vld [vmem:[#allocation6 + $0x1898] sm:$0xff]
    %v885 = vld [vmem:[#allocation6 + $0x18a0] sm:$0xff]
    %v886 = vld [vmem:[#allocation6 + $0x18a8] sm:$0xff]
    %v887 = vld [vmem:[#allocation6 + $0x18b0] sm:$0xff]
    %v888 = vld [vmem:[#allocation6 + $0x18b8] sm:$0xff]
    %v889 = vld [vmem:[#allocation6 + $0x18c0] sm:$0xff]
    %v890 = vld [vmem:[#allocation6 + $0x18c8] sm:$0xff]
    %v891 = vld [vmem:[#allocation6 + $0x18d0] sm:$0xff]
    %v892 = vld [vmem:[#allocation6 + $0x18d8] sm:$0xff]
    %v893 = vld [vmem:[#allocation6 + $0x18e0] sm:$0xff]
    %v894 = vld [vmem:[#allocation6 + $0x18e8] sm:$0xff]
    %v895 = vld [vmem:[#allocation6 + $0x18f0] sm:$0xff]
    %v896 = vld [vmem:[#allocation6 + $0x18f8] sm:$0xff]
    %v897 = vld [vmem:[#allocation6 + $0x1900] sm:$0xff]
    %v898 = vld [vmem:[#allocation6 + $0x1908] sm:$0xff]
    %v899 = vld [vmem:[#allocation6 + $0x1910] sm:$0xff]
    %v900 = vld [vmem:[#allocation6 + $0x1918] sm:$0xff]
    %v901 = vld [vmem:[#allocation6 + $0x1920] sm:$0xff]
    %v902 = vld [vmem:[#allocation6 + $0x1928] sm:$0xff]
    %v903 = vld [vmem:[#allocation6 + $0x1930] sm:$0xff]
    %v904 = vld [vmem:[#allocation6 + $0x1938] sm:$0xff]
    %v905 = vld [vmem:[#allocation6 + $0x1940] sm:$0xff]
    %v906 = vld [vmem:[#allocation6 + $0x1948] sm:$0xff]
    %v907 = vld [vmem:[#allocation6 + $0x1950] sm:$0xff]
    %v908 = vld [vmem:[#allocation6 + $0x1958] sm:$0xff]
    %v909 = vld [vmem:[#allocation6 + $0x1960] sm:$0xff]
    %v910 = vld [vmem:[#allocation6 + $0x1968] sm:$0xff]
    %v911 = vld [vmem:[#allocation6 + $0x1970] sm:$0xff]
    %v912 = vld [vmem:[#allocation6 + $0x1978] sm:$0xff]
    %v913 = vld [vmem:[#allocation6 + $0x1980] sm:$0xff]
    %v914 = vld [vmem:[#allocation6 + $0x1988] sm:$0xff]
    %v915 = vld [vmem:[#allocation6 + $0x1990] sm:$0xff]
    %v916 = vld [vmem:[#allocation6 + $0x1998] sm:$0xff]
    %v917 = vld [vmem:[#allocation6 + $0x19a0] sm:$0xff]
    %v918 = vld [vmem:[#allocation6 + $0x19a8] sm:$0xff]
    %v919 = vld [vmem:[#allocation6 + $0x19b0] sm:$0xff]
    %v920 = vld [vmem:[#allocation6 + $0x19b8] sm:$0xff]
    %v921 = vld [vmem:[#allocation6 + $0x19c0] sm:$0xff]
    %v922 = vld [vmem:[#allocation6 + $0x19c8] sm:$0xff]
    %v923 = vld [vmem:[#allocation6 + $0x19d0] sm:$0xff]
    %v924 = vld [vmem:[#allocation6 + $0x19d8] sm:$0xff]
    %v925 = vld [vmem:[#allocation6 + $0x19e0] sm:$0xff]
    %v926 = vld [vmem:[#allocation6 + $0x19e8] sm:$0xff]
    %v927 = vld [vmem:[#allocation6 + $0x19f0] sm:$0xff]
    %v928 = vld [vmem:[#allocation6 + $0x19f8] sm:$0xff]
    %v929 = vld [vmem:[#allocation6 + $0x1a00] sm:$0xff]
    %v930 = vld [vmem:[#allocation6 + $0x1a08] sm:$0xff]
    %v931 = vld [vmem:[#allocation6 + $0x1a10] sm:$0xff]
    %v932 = vld [vmem:[#allocation6 + $0x1a18] sm:$0xff]
    %v933 = vld [vmem:[#allocation6 + $0x1a20] sm:$0xff]
    %v934 = vld [vmem:[#allocation6 + $0x1a28] sm:$0xff]
    %v935 = vld [vmem:[#allocation6 + $0x1a30] sm:$0xff]
    %v936 = vld [vmem:[#allocation6 + $0x1a38] sm:$0xff]
    %v937 = vld [vmem:[#allocation6 + $0x1a40] sm:$0xff]
    %v938 = vld [vmem:[#allocation6 + $0x1a48] sm:$0xff]
    %v939 = vld [vmem:[#allocation6 + $0x1a50] sm:$0xff]
    %v940 = vld [vmem:[#allocation6 + $0x1a58] sm:$0xff]
    %v941 = vld [vmem:[#allocation6 + $0x1a60] sm:$0xff]
    %v942 = vld [vmem:[#allocation6 + $0x1a68] sm:$0xff]
    %v943 = vld [vmem:[#allocation6 + $0x1a70] sm:$0xff]
    %v944 = vld [vmem:[#allocation6 + $0x1a78] sm:$0xff]
    %v945 = vld [vmem:[#allocation6 + $0x1a80] sm:$0xff]
    %v946 = vld [vmem:[#allocation6 + $0x1a88] sm:$0xff]
    %v947 = vld [vmem:[#allocation6 + $0x1a90] sm:$0xff]
    %v948 = vld [vmem:[#allocation6 + $0x1a98] sm:$0xff]
    %v949 = vld [vmem:[#allocation6 + $0x1aa0] sm:$0xff]
    %v950 = vld [vmem:[#allocation6 + $0x1aa8] sm:$0xff]
    %v951 = vld [vmem:[#allocation6 + $0x1ab0] sm:$0xff]
    %v952 = vld [vmem:[#allocation6 + $0x1ab8] sm:$0xff]
    %v953 = vld [vmem:[#allocation6 + $0x1ac0] sm:$0xff]
    %v954 = vld [vmem:[#allocation6 + $0x1ac8] sm:$0xff]
    %v955 = vld [vmem:[#allocation6 + $0x1ad0] sm:$0xff]
    %v956 = vld [vmem:[#allocation6 + $0x1ad8] sm:$0xff]
    %v957 = vld [vmem:[#allocation6 + $0x1ae0] sm:$0xff]
    %v958 = vld [vmem:[#allocation6 + $0x1ae8] sm:$0xff]
    %v959 = vld [vmem:[#allocation6 + $0x1af0] sm:$0xff]
    %v960 = vld [vmem:[#allocation6 + $0x1af8] sm:$0xff]
    %v961 = vld [vmem:[#allocation6 + $0x1b00] sm:$0xff]
    %v962 = vld [vmem:[#allocation6 + $0x1b08] sm:$0xff]
    %v963 = vld [vmem:[#allocation6 + $0x1b10] sm:$0xff]
    %v964 = vld [vmem:[#allocation6 + $0x1b18] sm:$0xff]
    %v965 = vld [vmem:[#allocation6 + $0x1b20] sm:$0xff]
    %v966 = vld [vmem:[#allocation6 + $0x1b28] sm:$0xff]
    %v967 = vld [vmem:[#allocation6 + $0x1b30] sm:$0xff]
    %v968 = vld [vmem:[#allocation6 + $0x1b38] sm:$0xff]
    %v969 = vld [vmem:[#allocation6 + $0x1b40] sm:$0xff]
    %v970 = vld [vmem:[#allocation6 + $0x1b48] sm:$0xff]
    %v971 = vld [vmem:[#allocation6 + $0x1b50] sm:$0xff]
    %v972 = vld [vmem:[#allocation6 + $0x1b58] sm:$0xff]
    %v973 = vld [vmem:[#allocation6 + $0x1b60] sm:$0xff]
    %v974 = vld [vmem:[#allocation6 + $0x1b68] sm:$0xff]
    %v975 = vld [vmem:[#allocation6 + $0x1b70] sm:$0xff]
    %v976 = vld [vmem:[#allocation6 + $0x1b78] sm:$0xff]
    %v977 = vld [vmem:[#allocation6 + $0x1b80] sm:$0xff]
    %v978 = vld [vmem:[#allocation6 + $0x1b88] sm:$0xff]
    %v979 = vld [vmem:[#allocation6 + $0x1b90] sm:$0xff]
    %v980 = vld [vmem:[#allocation6 + $0x1b98] sm:$0xff]
    %v981 = vld [vmem:[#allocation6 + $0x1ba0] sm:$0xff]
    %v982 = vld [vmem:[#allocation6 + $0x1ba8] sm:$0xff]
    %v983 = vld [vmem:[#allocation6 + $0x1bb0] sm:$0xff]
    %v984 = vld [vmem:[#allocation6 + $0x1bb8] sm:$0xff]
    %v985 = vld [vmem:[#allocation6 + $0x1bc0] sm:$0xff]
    %v986 = vld [vmem:[#allocation6 + $0x1bc8] sm:$0xff]
    %v987 = vld [vmem:[#allocation6 + $0x1bd0] sm:$0xff]
    %v988 = vld [vmem:[#allocation6 + $0x1bd8] sm:$0xff]
    %v989 = vld [vmem:[#allocation6 + $0x1be0] sm:$0xff]
    %v990 = vld [vmem:[#allocation6 + $0x1be8] sm:$0xff]
    %v991 = vld [vmem:[#allocation6 + $0x1bf0] sm:$0xff]
    %v992 = vld [vmem:[#allocation6 + $0x1bf8] sm:$0xff]
    %v993 = vld [vmem:[#allocation6 + $0x1c00] sm:$0xff]
    %v994 = vld [vmem:[#allocation6 + $0x1c08] sm:$0xff]
    %v995 = vld [vmem:[#allocation6 + $0x1c10] sm:$0xff]
    %v996 = vld [vmem:[#allocation6 + $0x1c18] sm:$0xff]
    %v997 = vld [vmem:[#allocation6 + $0x1c20] sm:$0xff]
    %v998 = vld [vmem:[#allocation6 + $0x1c28] sm:$0xff]
    %v999 = vld [vmem:[#allocation6 + $0x1c30] sm:$0xff]
    %v1000 = vld [vmem:[#allocation6 + $0x1c38] sm:$0xff]
    %v1001 = vld [vmem:[#allocation6 + $0x1c40] sm:$0xff]
    %v1002 = vld [vmem:[#allocation6 + $0x1c48] sm:$0xff]
    %v1003 = vld [vmem:[#allocation6 + $0x1c50] sm:$0xff]
    %v1004 = vld [vmem:[#allocation6 + $0x1c58] sm:$0xff]
    %v1005 = vld [vmem:[#allocation6 + $0x1c60] sm:$0xff]
    %v1006 = vld [vmem:[#allocation6 + $0x1c68] sm:$0xff]
    %v1007 = vld [vmem:[#allocation6 + $0x1c70] sm:$0xff]
    %v1008 = vld [vmem:[#allocation6 + $0x1c78] sm:$0xff]
    %v1009 = vld [vmem:[#allocation6 + $0x1c80] sm:$0xff]
    %v1010 = vld [vmem:[#allocation6 + $0x1c88] sm:$0xff]
    %v1011 = vld [vmem:[#allocation6 + $0x1c90] sm:$0xff]
    %v1012 = vld [vmem:[#allocation6 + $0x1c98] sm:$0xff]
    %v1013 = vld [vmem:[#allocation6 + $0x1ca0] sm:$0xff]
    %v1014 = vld [vmem:[#allocation6 + $0x1ca8] sm:$0xff]
    %v1015 = vld [vmem:[#allocation6 + $0x1cb0] sm:$0xff]
    %v1016 = vld [vmem:[#allocation6 + $0x1cb8] sm:$0xff]
    %v1017 = vld [vmem:[#allocation6 + $0x1cc0] sm:$0xff]
    %v1018 = vld [vmem:[#allocation6 + $0x1cc8] sm:$0xff]
    %v1019 = vld [vmem:[#allocation6 + $0x1cd0] sm:$0xff]
    %v1020 = vld [vmem:[#allocation6 + $0x1cd8] sm:$0xff]
    %v1021 = vld [vmem:[#allocation6 + $0x1ce0] sm:$0xff]
    %v1022 = vld [vmem:[#allocation6 + $0x1ce8] sm:$0xff]
    %v1023 = vld [vmem:[#allocation6 + $0x1cf0] sm:$0xff]
    %v1024 = vld [vmem:[#allocation6 + $0x1cf8] sm:$0xff]
    %v1025 = vld [vmem:[#allocation6 + $0x1d00] sm:$0xff]
    %v1026 = vld [vmem:[#allocation6 + $0x1d08] sm:$0xff]
    %v1027 = vld [vmem:[#allocation6 + $0x1d10] sm:$0xff]
    %v1028 = vld [vmem:[#allocation6 + $0x1d18] sm:$0xff]
    %v1029 = vld [vmem:[#allocation6 + $0x1d20] sm:$0xff]
    %v1030 = vld [vmem:[#allocation6 + $0x1d28] sm:$0xff]
    %v1031 = vld [vmem:[#allocation6 + $0x1d30] sm:$0xff]
    %v1032 = vld [vmem:[#allocation6 + $0x1d38] sm:$0xff]
    %v1033 = vld [vmem:[#allocation6 + $0x1d40] sm:$0xff]
    %v1034 = vld [vmem:[#allocation6 + $0x1d48] sm:$0xff]
    %v1035 = vld [vmem:[#allocation6 + $0x1d50] sm:$0xff]
    %v1036 = vld [vmem:[#allocation6 + $0x1d58] sm:$0xff]
    %v1037 = vld [vmem:[#allocation6 + $0x1d60] sm:$0xff]
    %v1038 = vld [vmem:[#allocation6 + $0x1d68] sm:$0xff]
    %v1039 = vld [vmem:[#allocation6 + $0x1d70] sm:$0xff]
    %v1040 = vld [vmem:[#allocation6 + $0x1d78] sm:$0xff]
    %v1041 = vld [vmem:[#allocation6 + $0x1d80] sm:$0xff]
    %v1042 = vld [vmem:[#allocation6 + $0x1d88] sm:$0xff]
    %v1043 = vld [vmem:[#allocation6 + $0x1d90] sm:$0xff]
    %v1044 = vld [vmem:[#allocation6 + $0x1d98] sm:$0xff]
    %v1045 = vld [vmem:[#allocation6 + $0x1da0] sm:$0xff]
    %v1046 = vld [vmem:[#allocation6 + $0x1da8] sm:$0xff]
    %v1047 = vld [vmem:[#allocation6 + $0x1db0] sm:$0xff]
    %v1048 = vld [vmem:[#allocation6 + $0x1db8] sm:$0xff]
    %v1049 = vld [vmem:[#allocation6 + $0x1dc0] sm:$0xff]
    %v1050 = vld [vmem:[#allocation6 + $0x1dc8] sm:$0xff]
    %v1051 = vld [vmem:[#allocation6 + $0x1dd0] sm:$0xff]
    %v1052 = vld [vmem:[#allocation6 + $0x1dd8] sm:$0xff]
    %v1053 = vld [vmem:[#allocation6 + $0x1de0] sm:$0xff]
    %v1054 = vld [vmem:[#allocation6 + $0x1de8] sm:$0xff]
    %v1055 = vld [vmem:[#allocation6 + $0x1df0] sm:$0xff]
    %v1056 = vld [vmem:[#allocation6 + $0x1df8] sm:$0xff]
    %v1057 = vld [vmem:[#allocation6 + $0x1e00] sm:$0xff]
    %v1058 = vld [vmem:[#allocation6 + $0x1e08] sm:$0xff]
    %v1059 = vld [vmem:[#allocation6 + $0x1e10] sm:$0xff]
    %v1060 = vld [vmem:[#allocation6 + $0x1e18] sm:$0xff]
    %v1061 = vld [vmem:[#allocation6 + $0x1e20] sm:$0xff]
    %v1062 = vld [vmem:[#allocation6 + $0x1e28] sm:$0xff]
    %v1063 = vld [vmem:[#allocation6 + $0x1e30] sm:$0xff]
    %v1064 = vld [vmem:[#allocation6 + $0x1e38] sm:$0xff]
    %v1065 = vld [vmem:[#allocation6 + $0x1e40] sm:$0xff]
    %v1066 = vld [vmem:[#allocation6 + $0x1e48] sm:$0xff]
    %v1067 = vld [vmem:[#allocation6 + $0x1e50] sm:$0xff]
    %v1068 = vld [vmem:[#allocation6 + $0x1e58] sm:$0xff]
    %v1069 = vld [vmem:[#allocation6 + $0x1e60] sm:$0xff]
    %v1070 = vld [vmem:[#allocation6 + $0x1e68] sm:$0xff]
    %v1071 = vld [vmem:[#allocation6 + $0x1e70] sm:$0xff]
    %v1072 = vld [vmem:[#allocation6 + $0x1e78] sm:$0xff]
    %v1073 = vld [vmem:[#allocation6 + $0x1e80] sm:$0xff]
    %v1074 = vld [vmem:[#allocation6 + $0x1e88] sm:$0xff]
    %v1075 = vld [vmem:[#allocation6 + $0x1e90] sm:$0xff]
    %v1076 = vld [vmem:[#allocation6 + $0x1e98] sm:$0xff]
    %v1077 = vld [vmem:[#allocation6 + $0x1ea0] sm:$0xff]
    %v1078 = vld [vmem:[#allocation6 + $0x1ea8] sm:$0xff]
    %v1079 = vld [vmem:[#allocation6 + $0x1eb0] sm:$0xff]
    %v1080 = vld [vmem:[#allocation6 + $0x1eb8] sm:$0xff]
    %v1081 = vld [vmem:[#allocation6 + $0x1ec0] sm:$0xff]
    %v1082 = vld [vmem:[#allocation6 + $0x1ec8] sm:$0xff]
    %v1083 = vld [vmem:[#allocation6 + $0x1ed0] sm:$0xff]
    %v1084 = vld [vmem:[#allocation6 + $0x1ed8] sm:$0xff]
    %v1085 = vld [vmem:[#allocation6 + $0x1ee0] sm:$0xff]
    %v1086 = vld [vmem:[#allocation6 + $0x1ee8] sm:$0xff]
    %v1087 = vld [vmem:[#allocation6 + $0x1ef0] sm:$0xff]
    %v1088 = vld [vmem:[#allocation6 + $0x1ef8] sm:$0xff]
    %v1089 = vld [vmem:[#allocation6 + $0x1f00] sm:$0xff]
    %v1090 = vld [vmem:[#allocation6 + $0x1f08] sm:$0xff]
    %v1091 = vld [vmem:[#allocation6 + $0x1f10] sm:$0xff]
    %v1092 = vld [vmem:[#allocation6 + $0x1f18] sm:$0xff]
    %v1093 = vld [vmem:[#allocation6 + $0x1f20] sm:$0xff]
    %v1094 = vld [vmem:[#allocation6 + $0x1f28] sm:$0xff]
    %v1095 = vld [vmem:[#allocation6 + $0x1f30] sm:$0xff]
    %v1096 = vld [vmem:[#allocation6 + $0x1f38] sm:$0xff]
    %v1097 = vld [vmem:[#allocation6 + $0x1f40] sm:$0xff]
    %v1098 = vld [vmem:[#allocation6 + $0x1f48] sm:$0xff]
    %v1099 = vld [vmem:[#allocation6 + $0x1f50] sm:$0xff]
    %v1100 = vld [vmem:[#allocation6 + $0x1f58] sm:$0xff]
    %v1101 = vld [vmem:[#allocation6 + $0x1f60] sm:$0xff]
    %v1102 = vld [vmem:[#allocation6 + $0x1f68] sm:$0xff]
    %v1103 = vld [vmem:[#allocation6 + $0x1f70] sm:$0xff]
    %v1104 = vld [vmem:[#allocation6 + $0x1f78] sm:$0xff]
    %v1105 = vld [vmem:[#allocation6 + $0x1f80] sm:$0xff]
    %v1106 = vld [vmem:[#allocation6 + $0x1f88] sm:$0xff]
    %v1107 = vld [vmem:[#allocation6 + $0x1f90] sm:$0xff]
    %v1108 = vld [vmem:[#allocation6 + $0x1f98] sm:$0xff]
    %v1109 = vld [vmem:[#allocation6 + $0x1fa0] sm:$0xff]
    %v1110 = vld [vmem:[#allocation6 + $0x1fa8] sm:$0xff]
    %v1111 = vld [vmem:[#allocation6 + $0x1fb0] sm:$0xff]
    %v1112 = vld [vmem:[#allocation6 + $0x1fb8] sm:$0xff]
    %v1113 = vld [vmem:[#allocation6 + $0x1fc0] sm:$0xff]
    %v1114 = vld [vmem:[#allocation6 + $0x1fc8] sm:$0xff]
    %v1115 = vld [vmem:[#allocation6 + $0x1fd0] sm:$0xff]
    %v1116 = vld [vmem:[#allocation6 + $0x1fd8] sm:$0xff]
    %v1117 = vld [vmem:[#allocation6 + $0x1fe0] sm:$0xff]
    %v1118 = vld [vmem:[#allocation6 + $0x1fe8] sm:$0xff]
    %v1119 = vld [vmem:[#allocation6 + $0x1ff0] sm:$0xff]
    %v1120 = vld [vmem:[#allocation6 + $0x1ff8] sm:$0xff]
    %v1123 = vcombine.high %v93, %v93
    %v1125 = vunpack.c.l.s4 1966171168
    %v1126 = vunpack.c.0.s8 %v1125
    %v1127 = vlaneseq
    %v1128 = vshrl.u32 %v1127, 7
    %v1129 = vsub.s32 %v1126, %v1128
    %v1130 = vrot.slane %v93, %v1129
    %v1132 = vunpack.c.l.s4 1966171168
    %v1133 = vunpack.c.0.s8 %v1132
    %v1134 = vlaneseq
    %v1135 = vshrl.u32 %v1134, 7
    %v1136 = vsub.s32 %v1133, %v1135
    %v1137 = vrot.slane %v1123, %v1136
    %v1138 = vcombine.high %v1130, %v1130
    %v1139 = vcombine.high %v1137, %v1137
    %v1141 = vunpack.c.l.s4 1966171168
    %v1142 = vunpack.c.0.s8 %v1141
    %v1143 = vlaneseq
    %v1144 = vshrl.u32 %v1143, 7
    %v1145 = vsub.s32 %v1142, %v1144
    %v1146 = vrot.slane %v1130, %v1145
    %v1148 = vunpack.c.l.s4 1966171168
    %v1149 = vunpack.c.0.s8 %v1148
    %v1150 = vlaneseq
    %v1151 = vshrl.u32 %v1150, 7
    %v1152 = vsub.s32 %v1149, %v1151
    %v1153 = vrot.slane %v1137, %v1152
    %v1155 = vunpack.c.l.s4 1966171168
    %v1156 = vunpack.c.0.s8 %v1155
    %v1157 = vlaneseq
    %v1158 = vshrl.u32 %v1157, 7
    %v1159 = vsub.s32 %v1156, %v1158
    %v1160 = vrot.slane %v1138, %v1159
    %v1162 = vunpack.c.l.s4 1966171168
    %v1163 = vunpack.c.0.s8 %v1162
    %v1164 = vlaneseq
    %v1165 = vshrl.u32 %v1164, 7
    %v1166 = vsub.s32 %v1163, %v1165
    %v1167 = vrot.slane %v1139, %v1166
    %v1168 = vcombine.high %v1146, %v1146
    %v1169 = vcombine.high %v1153, %v1153
    %v1170 = vcombine.high %v1160, %v1160
    %v1171 = vcombine.high %v1167, %v1167
    %v1172 = vcombine.high %v94, %v94
    %v1174 = vunpack.c.l.s4 1966171168
    %v1175 = vunpack.c.0.s8 %v1174
    %v1176 = vlaneseq
    %v1177 = vshrl.u32 %v1176, 7
    %v1178 = vsub.s32 %v1175, %v1177
    %v1179 = vrot.slane %v94, %v1178
    %v1181 = vunpack.c.l.s4 1966171168
    %v1182 = vunpack.c.0.s8 %v1181
    %v1183 = vlaneseq
    %v1184 = vshrl.u32 %v1183, 7
    %v1185 = vsub.s32 %v1182, %v1184
    %v1186 = vrot.slane %v1172, %v1185
    %v1187 = vcombine.high %v1179, %v1179
    %v1188 = vcombine.high %v1186, %v1186
    %v1190 = vunpack.c.l.s4 1966171168
    %v1191 = vunpack.c.0.s8 %v1190
    %v1192 = vlaneseq
    %v1193 = vshrl.u32 %v1192, 7
    %v1194 = vsub.s32 %v1191, %v1193
    %v1195 = vrot.slane %v1179, %v1194
    %v1197 = vunpack.c.l.s4 1966171168
    %v1198 = vunpack.c.0.s8 %v1197
    %v1199 = vlaneseq
    %v1200 = vshrl.u32 %v1199, 7
    %v1201 = vsub.s32 %v1198, %v1200
    %v1202 = vrot.slane %v1186, %v1201
    %v1204 = vunpack.c.l.s4 1966171168
    %v1205 = vunpack.c.0.s8 %v1204
    %v1206 = vlaneseq
    %v1207 = vshrl.u32 %v1206, 7
    %v1208 = vsub.s32 %v1205, %v1207
    %v1209 = vrot.slane %v1187, %v1208
    %v1211 = vunpack.c.l.s4 1966171168
    %v1212 = vunpack.c.0.s8 %v1211
    %v1213 = vlaneseq
    %v1214 = vshrl.u32 %v1213, 7
    %v1215 = vsub.s32 %v1212, %v1214
    %v1216 = vrot.slane %v1188, %v1215
    %v1217 = vcombine.high %v1195, %v1195
    %v1218 = vcombine.high %v1202, %v1202
    %v1219 = vcombine.high %v1209, %v1209
    %v1220 = vcombine.high %v1216, %v1216
    %v2261 = vunpack.c.l.b16 %v97
    %v2262 = vunpack.c.h.b16 %v97
    %v2263 = vunpack.c.l.b16 %v98
    %v2264 = vunpack.c.h.b16 %v98
    %v2265 = vunpack.c.l.b16 %v99
    %v2266 = vunpack.c.h.b16 %v99
    %v2267 = vunpack.c.l.b16 %v100
    %v2268 = vunpack.c.h.b16 %v100
    %v2269 = vunpack.c.l.b16 %v101
    %v2270 = vunpack.c.h.b16 %v101
    %v2271 = vunpack.c.l.b16 %v102
    %v2272 = vunpack.c.h.b16 %v102
    %v2273 = vunpack.c.l.b16 %v103
    %v2274 = vunpack.c.h.b16 %v103
    %v2275 = vunpack.c.l.b16 %v104
    %v2276 = vunpack.c.h.b16 %v104
    %v2277 = vunpack.c.l.b16 %v105
    %v2278 = vunpack.c.h.b16 %v105
    %v2279 = vunpack.c.l.b16 %v106
    %v2280 = vunpack.c.h.b16 %v106
    %v2281 = vunpack.c.l.b16 %v107
    %v2282 = vunpack.c.h.b16 %v107
    %v2283 = vunpack.c.l.b16 %v108
    %v2284 = vunpack.c.h.b16 %v108
    %v2285 = vunpack.c.l.b16 %v109
    %v2286 = vunpack.c.h.b16 %v109
    %v2287 = vunpack.c.l.b16 %v110
    %v2288 = vunpack.c.h.b16 %v110
    %v2289 = vunpack.c.l.b16 %v111
    %v2290 = vunpack.c.h.b16 %v111
    %v2291 = vunpack.c.l.b16 %v112
    %v2292 = vunpack.c.h.b16 %v112
    %v2293 = vunpack.c.l.b16 %v113
    %v2294 = vunpack.c.h.b16 %v113
    %v2295 = vunpack.c.l.b16 %v114
    %v2296 = vunpack.c.h.b16 %v114
    %v2297 = vunpack.c.l.b16 %v115
    %v2298 = vunpack.c.h.b16 %v115
    %v2299 = vunpack.c.l.b16 %v116
    %v2300 = vunpack.c.h.b16 %v116
    %v2301 = vunpack.c.l.b16 %v117
    %v2302 = vunpack.c.h.b16 %v117
    %v2303 = vunpack.c.l.b16 %v118
    %v2304 = vunpack.c.h.b16 %v118
    %v2305 = vunpack.c.l.b16 %v119
    %v2306 = vunpack.c.h.b16 %v119
    %v2307 = vunpack.c.l.b16 %v120
    %v2308 = vunpack.c.h.b16 %v120
    %v2309 = vunpack.c.l.b16 %v121
    %v2310 = vunpack.c.h.b16 %v121
    %v2311 = vunpack.c.l.b16 %v122
    %v2312 = vunpack.c.h.b16 %v122
    %v2313 = vunpack.c.l.b16 %v123
    %v2314 = vunpack.c.h.b16 %v123
    %v2315 = vunpack.c.l.b16 %v124
    %v2316 = vunpack.c.h.b16 %v124
    %v2317 = vunpack.c.l.b16 %v125
    %v2318 = vunpack.c.h.b16 %v125
    %v2319 = vunpack.c.l.b16 %v126
    %v2320 = vunpack.c.h.b16 %v126
    %v2321 = vunpack.c.l.b16 %v127
    %v2322 = vunpack.c.h.b16 %v127
    %v2323 = vunpack.c.l.b16 %v128
    %v2324 = vunpack.c.h.b16 %v128
    %v2325 = vunpack.c.l.b16 %v129
    %v2326 = vunpack.c.h.b16 %v129
    %v2327 = vunpack.c.l.b16 %v130
    %v2328 = vunpack.c.h.b16 %v130
    %v2329 = vunpack.c.l.b16 %v131
    %v2330 = vunpack.c.h.b16 %v131
    %v2331 = vunpack.c.l.b16 %v132
    %v2332 = vunpack.c.h.b16 %v132
    %v2333 = vunpack.c.l.b16 %v133
    %v2334 = vunpack.c.h.b16 %v133
    %v2335 = vunpack.c.l.b16 %v134
    %v2336 = vunpack.c.h.b16 %v134
    %v2337 = vunpack.c.l.b16 %v135
    %v2338 = vunpack.c.h.b16 %v135
    %v2339 = vunpack.c.l.b16 %v136
    %v2340 = vunpack.c.h.b16 %v136
    %v2341 = vunpack.c.l.b16 %v137
    %v2342 = vunpack.c.h.b16 %v137
    %v2343 = vunpack.c.l.b16 %v138
    %v2344 = vunpack.c.h.b16 %v138
    %v2345 = vunpack.c.l.b16 %v139
    %v2346 = vunpack.c.h.b16 %v139
    %v2347 = vunpack.c.l.b16 %v140
    %v2348 = vunpack.c.h.b16 %v140
    %v2349 = vunpack.c.l.b16 %v141
    %v2350 = vunpack.c.h.b16 %v141
    %v2351 = vunpack.c.l.b16 %v142
    %v2352 = vunpack.c.h.b16 %v142
    %v2353 = vunpack.c.l.b16 %v143
    %v2354 = vunpack.c.h.b16 %v143
    %v2355 = vunpack.c.l.b16 %v144
    %v2356 = vunpack.c.h.b16 %v144
    %v2357 = vunpack.c.l.b16 %v145
    %v2358 = vunpack.c.h.b16 %v145
    %v2359 = vunpack.c.l.b16 %v146
    %v2360 = vunpack.c.h.b16 %v146
    %v2361 = vunpack.c.l.b16 %v147
    %v2362 = vunpack.c.h.b16 %v147
    %v2363 = vunpack.c.l.b16 %v148
    %v2364 = vunpack.c.h.b16 %v148
    %v2365 = vunpack.c.l.b16 %v149
    %v2366 = vunpack.c.h.b16 %v149
    %v2367 = vunpack.c.l.b16 %v150
    %v2368 = vunpack.c.h.b16 %v150
    %v2369 = vunpack.c.l.b16 %v151
    %v2370 = vunpack.c.h.b16 %v151
    %v2371 = vunpack.c.l.b16 %v152
    %v2372 = vunpack.c.h.b16 %v152
    %v2373 = vunpack.c.l.b16 %v153
    %v2374 = vunpack.c.h.b16 %v153
    %v2375 = vunpack.c.l.b16 %v154
    %v2376 = vunpack.c.h.b16 %v154
    %v2377 = vunpack.c.l.b16 %v155
    %v2378 = vunpack.c.h.b16 %v155
    %v2379 = vunpack.c.l.b16 %v156
    %v2380 = vunpack.c.h.b16 %v156
    %v2381 = vunpack.c.l.b16 %v157
    %v2382 = vunpack.c.h.b16 %v157
    %v2383 = vunpack.c.l.b16 %v158
    %v2384 = vunpack.c.h.b16 %v158
    %v2385 = vunpack.c.l.b16 %v159
    %v2386 = vunpack.c.h.b16 %v159
    %v2387 = vunpack.c.l.b16 %v160
    %v2388 = vunpack.c.h.b16 %v160
    %v2389 = vunpack.c.l.b16 %v161
    %v2390 = vunpack.c.h.b16 %v161
    %v2391 = vunpack.c.l.b16 %v162
    %v2392 = vunpack.c.h.b16 %v162
    %v2393 = vunpack.c.l.b16 %v163
    %v2394 = vunpack.c.h.b16 %v163
    %v2395 = vunpack.c.l.b16 %v164
    %v2396 = vunpack.c.h.b16 %v164
    %v2397 = vunpack.c.l.b16 %v165
    %v2398 = vunpack.c.h.b16 %v165
    %v2399 = vunpack.c.l.b16 %v166
    %v2400 = vunpack.c.h.b16 %v166
    %v2401 = vunpack.c.l.b16 %v167
    %v2402 = vunpack.c.h.b16 %v167
    %v2403 = vunpack.c.l.b16 %v168
    %v2404 = vunpack.c.h.b16 %v168
    %v2405 = vunpack.c.l.b16 %v169
    %v2406 = vunpack.c.h.b16 %v169
    %v2407 = vunpack.c.l.b16 %v170
    %v2408 = vunpack.c.h.b16 %v170
    %v2409 = vunpack.c.l.b16 %v171
    %v2410 = vunpack.c.h.b16 %v171
    %v2411 = vunpack.c.l.b16 %v172
    %v2412 = vunpack.c.h.b16 %v172
    %v2413 = vunpack.c.l.b16 %v173
    %v2414 = vunpack.c.h.b16 %v173
    %v2415 = vunpack.c.l.b16 %v174
    %v2416 = vunpack.c.h.b16 %v174
    %v2417 = vunpack.c.l.b16 %v175
    %v2418 = vunpack.c.h.b16 %v175
    %v2419 = vunpack.c.l.b16 %v176
    %v2420 = vunpack.c.h.b16 %v176
    %v2421 = vunpack.c.l.b16 %v177
    %v2422 = vunpack.c.h.b16 %v177
    %v2423 = vunpack.c.l.b16 %v178
    %v2424 = vunpack.c.h.b16 %v178
    %v2425 = vunpack.c.l.b16 %v179
    %v2426 = vunpack.c.h.b16 %v179
    %v2427 = vunpack.c.l.b16 %v180
    %v2428 = vunpack.c.h.b16 %v180
    %v2429 = vunpack.c.l.b16 %v181
    %v2430 = vunpack.c.h.b16 %v181
    %v2431 = vunpack.c.l.b16 %v182
    %v2432 = vunpack.c.h.b16 %v182
    %v2433 = vunpack.c.l.b16 %v183
    %v2434 = vunpack.c.h.b16 %v183
    %v2435 = vunpack.c.l.b16 %v184
    %v2436 = vunpack.c.h.b16 %v184
    %v2437 = vunpack.c.l.b16 %v185
    %v2438 = vunpack.c.h.b16 %v185
    %v2439 = vunpack.c.l.b16 %v186
    %v2440 = vunpack.c.h.b16 %v186
    %v2441 = vunpack.c.l.b16 %v187
    %v2442 = vunpack.c.h.b16 %v187
    %v2443 = vunpack.c.l.b16 %v188
    %v2444 = vunpack.c.h.b16 %v188
    %v2445 = vunpack.c.l.b16 %v189
    %v2446 = vunpack.c.h.b16 %v189
    %v2447 = vunpack.c.l.b16 %v190
    %v2448 = vunpack.c.h.b16 %v190
    %v2449 = vunpack.c.l.b16 %v191
    %v2450 = vunpack.c.h.b16 %v191
    %v2451 = vunpack.c.l.b16 %v192
    %v2452 = vunpack.c.h.b16 %v192
    %v2453 = vunpack.c.l.b16 %v193
    %v2454 = vunpack.c.h.b16 %v193
    %v2455 = vunpack.c.l.b16 %v194
    %v2456 = vunpack.c.h.b16 %v194
    %v2457 = vunpack.c.l.b16 %v195
    %v2458 = vunpack.c.h.b16 %v195
    %v2459 = vunpack.c.l.b16 %v196
    %v2460 = vunpack.c.h.b16 %v196
    %v2461 = vunpack.c.l.b16 %v197
    %v2462 = vunpack.c.h.b16 %v197
    %v2463 = vunpack.c.l.b16 %v198
    %v2464 = vunpack.c.h.b16 %v198
    %v2465 = vunpack.c.l.b16 %v199
    %v2466 = vunpack.c.h.b16 %v199
    %v2467 = vunpack.c.l.b16 %v200
    %v2468 = vunpack.c.h.b16 %v200
    %v2469 = vunpack.c.l.b16 %v201
    %v2470 = vunpack.c.h.b16 %v201
    %v2471 = vunpack.c.l.b16 %v202
    %v2472 = vunpack.c.h.b16 %v202
    %v2473 = vunpack.c.l.b16 %v203
    %v2474 = vunpack.c.h.b16 %v203
    %v2475 = vunpack.c.l.b16 %v204
    %v2476 = vunpack.c.h.b16 %v204
    %v2477 = vunpack.c.l.b16 %v205
    %v2478 = vunpack.c.h.b16 %v205
    %v2479 = vunpack.c.l.b16 %v206
    %v2480 = vunpack.c.h.b16 %v206
    %v2481 = vunpack.c.l.b16 %v207
    %v2482 = vunpack.c.h.b16 %v207
    %v2483 = vunpack.c.l.b16 %v208
    %v2484 = vunpack.c.h.b16 %v208
    %v2485 = vunpack.c.l.b16 %v209
    %v2486 = vunpack.c.h.b16 %v209
    %v2487 = vunpack.c.l.b16 %v210
    %v2488 = vunpack.c.h.b16 %v210
    %v2489 = vunpack.c.l.b16 %v211
    %v2490 = vunpack.c.h.b16 %v211
    %v2491 = vunpack.c.l.b16 %v212
    %v2492 = vunpack.c.h.b16 %v212
    %v2493 = vunpack.c.l.b16 %v213
    %v2494 = vunpack.c.h.b16 %v213
    %v2495 = vunpack.c.l.b16 %v214
    %v2496 = vunpack.c.h.b16 %v214
    %v2497 = vunpack.c.l.b16 %v215
    %v2498 = vunpack.c.h.b16 %v215
    %v2499 = vunpack.c.l.b16 %v216
    %v2500 = vunpack.c.h.b16 %v216
    %v2501 = vunpack.c.l.b16 %v217
    %v2502 = vunpack.c.h.b16 %v217
    %v2503 = vunpack.c.l.b16 %v218
    %v2504 = vunpack.c.h.b16 %v218
    %v2505 = vunpack.c.l.b16 %v219
    %v2506 = vunpack.c.h.b16 %v219
    %v2507 = vunpack.c.l.b16 %v220
    %v2508 = vunpack.c.h.b16 %v220
    %v2509 = vunpack.c.l.b16 %v221
    %v2510 = vunpack.c.h.b16 %v221
    %v2511 = vunpack.c.l.b16 %v222
    %v2512 = vunpack.c.h.b16 %v222
    %v2513 = vunpack.c.l.b16 %v223
    %v2514 = vunpack.c.h.b16 %v223
    %v2515 = vunpack.c.l.b16 %v224
    %v2516 = vunpack.c.h.b16 %v224
    %v2517 = vunpack.c.l.b16 %v225
    %v2518 = vunpack.c.h.b16 %v225
    %v2519 = vunpack.c.l.b16 %v226
    %v2520 = vunpack.c.h.b16 %v226
    %v2521 = vunpack.c.l.b16 %v227
    %v2522 = vunpack.c.h.b16 %v227
    %v2523 = vunpack.c.l.b16 %v228
    %v2524 = vunpack.c.h.b16 %v228
    %v2525 = vunpack.c.l.b16 %v229
    %v2526 = vunpack.c.h.b16 %v229
    %v2527 = vunpack.c.l.b16 %v230
    %v2528 = vunpack.c.h.b16 %v230
    %v2529 = vunpack.c.l.b16 %v231
    %v2530 = vunpack.c.h.b16 %v231
    %v2531 = vunpack.c.l.b16 %v232
    %v2532 = vunpack.c.h.b16 %v232
    %v2533 = vunpack.c.l.b16 %v233
    %v2534 = vunpack.c.h.b16 %v233
    %v2535 = vunpack.c.l.b16 %v234
    %v2536 = vunpack.c.h.b16 %v234
    %v2537 = vunpack.c.l.b16 %v235
    %v2538 = vunpack.c.h.b16 %v235
    %v2539 = vunpack.c.l.b16 %v236
    %v2540 = vunpack.c.h.b16 %v236
    %v2541 = vunpack.c.l.b16 %v237
    %v2542 = vunpack.c.h.b16 %v237
    %v2543 = vunpack.c.l.b16 %v238
    %v2544 = vunpack.c.h.b16 %v238
    %v2545 = vunpack.c.l.b16 %v239
    %v2546 = vunpack.c.h.b16 %v239
    %v2547 = vunpack.c.l.b16 %v240
    %v2548 = vunpack.c.h.b16 %v240
    %v2549 = vunpack.c.l.b16 %v241
    %v2550 = vunpack.c.h.b16 %v241
    %v2551 = vunpack.c.l.b16 %v242
    %v2552 = vunpack.c.h.b16 %v242
    %v2553 = vunpack.c.l.b16 %v243
    %v2554 = vunpack.c.h.b16 %v243
    %v2555 = vunpack.c.l.b16 %v244
    %v2556 = vunpack.c.h.b16 %v244
    %v2557 = vunpack.c.l.b16 %v245
    %v2558 = vunpack.c.h.b16 %v245
    %v2559 = vunpack.c.l.b16 %v246
    %v2560 = vunpack.c.h.b16 %v246
    %v2561 = vunpack.c.l.b16 %v247
    %v2562 = vunpack.c.h.b16 %v247
    %v2563 = vunpack.c.l.b16 %v248
    %v2564 = vunpack.c.h.b16 %v248
    %v2565 = vunpack.c.l.b16 %v249
    %v2566 = vunpack.c.h.b16 %v249
    %v2567 = vunpack.c.l.b16 %v250
    %v2568 = vunpack.c.h.b16 %v250
    %v2569 = vunpack.c.l.b16 %v251
    %v2570 = vunpack.c.h.b16 %v251
    %v2571 = vunpack.c.l.b16 %v252
    %v2572 = vunpack.c.h.b16 %v252
    %v2573 = vunpack.c.l.b16 %v253
    %v2574 = vunpack.c.h.b16 %v253
    %v2575 = vunpack.c.l.b16 %v254
    %v2576 = vunpack.c.h.b16 %v254
    %v2577 = vunpack.c.l.b16 %v255
    %v2578 = vunpack.c.h.b16 %v255
    %v2579 = vunpack.c.l.b16 %v256
    %v2580 = vunpack.c.h.b16 %v256
    %v2581 = vunpack.c.l.b16 %v257
    %v2582 = vunpack.c.h.b16 %v257
    %v2583 = vunpack.c.l.b16 %v258
    %v2584 = vunpack.c.h.b16 %v258
    %v2585 = vunpack.c.l.b16 %v259
    %v2586 = vunpack.c.h.b16 %v259
    %v2587 = vunpack.c.l.b16 %v260
    %v2588 = vunpack.c.h.b16 %v260
    %v2589 = vunpack.c.l.b16 %v261
    %v2590 = vunpack.c.h.b16 %v261
    %v2591 = vunpack.c.l.b16 %v262
    %v2592 = vunpack.c.h.b16 %v262
    %v2593 = vunpack.c.l.b16 %v263
    %v2594 = vunpack.c.h.b16 %v263
    %v2595 = vunpack.c.l.b16 %v264
    %v2596 = vunpack.c.h.b16 %v264
    %v2597 = vunpack.c.l.b16 %v265
    %v2598 = vunpack.c.h.b16 %v265
    %v2599 = vunpack.c.l.b16 %v266
    %v2600 = vunpack.c.h.b16 %v266
    %v2601 = vunpack.c.l.b16 %v267
    %v2602 = vunpack.c.h.b16 %v267
    %v2603 = vunpack.c.l.b16 %v268
    %v2604 = vunpack.c.h.b16 %v268
    %v2605 = vunpack.c.l.b16 %v269
    %v2606 = vunpack.c.h.b16 %v269
    %v2607 = vunpack.c.l.b16 %v270
    %v2608 = vunpack.c.h.b16 %v270
    %v2609 = vunpack.c.l.b16 %v271
    %v2610 = vunpack.c.h.b16 %v271
    %v2611 = vunpack.c.l.b16 %v272
    %v2612 = vunpack.c.h.b16 %v272
    %v2613 = vunpack.c.l.b16 %v273
    %v2614 = vunpack.c.h.b16 %v273
    %v2615 = vunpack.c.l.b16 %v274
    %v2616 = vunpack.c.h.b16 %v274
    %v2617 = vunpack.c.l.b16 %v275
    %v2618 = vunpack.c.h.b16 %v275
    %v2619 = vunpack.c.l.b16 %v276
    %v2620 = vunpack.c.h.b16 %v276
    %v2621 = vunpack.c.l.b16 %v277
    %v2622 = vunpack.c.h.b16 %v277
    %v2623 = vunpack.c.l.b16 %v278
    %v2624 = vunpack.c.h.b16 %v278
    %v2625 = vunpack.c.l.b16 %v279
    %v2626 = vunpack.c.h.b16 %v279
    %v2627 = vunpack.c.l.b16 %v280
    %v2628 = vunpack.c.h.b16 %v280
    %v2629 = vunpack.c.l.b16 %v281
    %v2630 = vunpack.c.h.b16 %v281
    %v2631 = vunpack.c.l.b16 %v282
    %v2632 = vunpack.c.h.b16 %v282
    %v2633 = vunpack.c.l.b16 %v283
    %v2634 = vunpack.c.h.b16 %v283
    %v2635 = vunpack.c.l.b16 %v284
    %v2636 = vunpack.c.h.b16 %v284
    %v2637 = vunpack.c.l.b16 %v285
    %v2638 = vunpack.c.h.b16 %v285
    %v2639 = vunpack.c.l.b16 %v286
    %v2640 = vunpack.c.h.b16 %v286
    %v2641 = vunpack.c.l.b16 %v287
    %v2642 = vunpack.c.h.b16 %v287
    %v2643 = vunpack.c.l.b16 %v288
    %v2644 = vunpack.c.h.b16 %v288
    %v2645 = vunpack.c.l.b16 %v289
    %v2646 = vunpack.c.h.b16 %v289
    %v2647 = vunpack.c.l.b16 %v290
    %v2648 = vunpack.c.h.b16 %v290
    %v2649 = vunpack.c.l.b16 %v291
    %v2650 = vunpack.c.h.b16 %v291
    %v2651 = vunpack.c.l.b16 %v292
    %v2652 = vunpack.c.h.b16 %v292
    %v2653 = vunpack.c.l.b16 %v293
    %v2654 = vunpack.c.h.b16 %v293
    %v2655 = vunpack.c.l.b16 %v294
    %v2656 = vunpack.c.h.b16 %v294
    %v2657 = vunpack.c.l.b16 %v295
    %v2658 = vunpack.c.h.b16 %v295
    %v2659 = vunpack.c.l.b16 %v296
    %v2660 = vunpack.c.h.b16 %v296
    %v2661 = vunpack.c.l.b16 %v297
    %v2662 = vunpack.c.h.b16 %v297
    %v2663 = vunpack.c.l.b16 %v298
    %v2664 = vunpack.c.h.b16 %v298
    %v2665 = vunpack.c.l.b16 %v299
    %v2666 = vunpack.c.h.b16 %v299
    %v2667 = vunpack.c.l.b16 %v300
    %v2668 = vunpack.c.h.b16 %v300
    %v2669 = vunpack.c.l.b16 %v301
    %v2670 = vunpack.c.h.b16 %v301
    %v2671 = vunpack.c.l.b16 %v302
    %v2672 = vunpack.c.h.b16 %v302
    %v2673 = vunpack.c.l.b16 %v303
    %v2674 = vunpack.c.h.b16 %v303
    %v2675 = vunpack.c.l.b16 %v304
    %v2676 = vunpack.c.h.b16 %v304
    %v2677 = vunpack.c.l.b16 %v305
    %v2678 = vunpack.c.h.b16 %v305
    %v2679 = vunpack.c.l.b16 %v306
    %v2680 = vunpack.c.h.b16 %v306
    %v2681 = vunpack.c.l.b16 %v307
    %v2682 = vunpack.c.h.b16 %v307
    %v2683 = vunpack.c.l.b16 %v308
    %v2684 = vunpack.c.h.b16 %v308
    %v2685 = vunpack.c.l.b16 %v309
    %v2686 = vunpack.c.h.b16 %v309
    %v2687 = vunpack.c.l.b16 %v310
    %v2688 = vunpack.c.h.b16 %v310
    %v2689 = vunpack.c.l.b16 %v311
    %v2690 = vunpack.c.h.b16 %v311
    %v2691 = vunpack.c.l.b16 %v312
    %v2692 = vunpack.c.h.b16 %v312
    %v2693 = vunpack.c.l.b16 %v313
    %v2694 = vunpack.c.h.b16 %v313
    %v2695 = vunpack.c.l.b16 %v314
    %v2696 = vunpack.c.h.b16 %v314
    %v2697 = vunpack.c.l.b16 %v315
    %v2698 = vunpack.c.h.b16 %v315
    %v2699 = vunpack.c.l.b16 %v316
    %v2700 = vunpack.c.h.b16 %v316
    %v2701 = vunpack.c.l.b16 %v317
    %v2702 = vunpack.c.h.b16 %v317
    %v2703 = vunpack.c.l.b16 %v318
    %v2704 = vunpack.c.h.b16 %v318
    %v2705 = vunpack.c.l.b16 %v319
    %v2706 = vunpack.c.h.b16 %v319
    %v2707 = vunpack.c.l.b16 %v320
    %v2708 = vunpack.c.h.b16 %v320
    %v2709 = vunpack.c.l.b16 %v321
    %v2710 = vunpack.c.h.b16 %v321
    %v2711 = vunpack.c.l.b16 %v322
    %v2712 = vunpack.c.h.b16 %v322
    %v2713 = vunpack.c.l.b16 %v323
    %v2714 = vunpack.c.h.b16 %v323
    %v2715 = vunpack.c.l.b16 %v324
    %v2716 = vunpack.c.h.b16 %v324
    %v2717 = vunpack.c.l.b16 %v325
    %v2718 = vunpack.c.h.b16 %v325
    %v2719 = vunpack.c.l.b16 %v326
    %v2720 = vunpack.c.h.b16 %v326
    %v2721 = vunpack.c.l.b16 %v327
    %v2722 = vunpack.c.h.b16 %v327
    %v2723 = vunpack.c.l.b16 %v328
    %v2724 = vunpack.c.h.b16 %v328
    %v2725 = vunpack.c.l.b16 %v329
    %v2726 = vunpack.c.h.b16 %v329
    %v2727 = vunpack.c.l.b16 %v330
    %v2728 = vunpack.c.h.b16 %v330
    %v2729 = vunpack.c.l.b16 %v331
    %v2730 = vunpack.c.h.b16 %v331
    %v2731 = vunpack.c.l.b16 %v332
    %v2732 = vunpack.c.h.b16 %v332
    %v2733 = vunpack.c.l.b16 %v333
    %v2734 = vunpack.c.h.b16 %v333
    %v2735 = vunpack.c.l.b16 %v334
    %v2736 = vunpack.c.h.b16 %v334
    %v2737 = vunpack.c.l.b16 %v335
    %v2738 = vunpack.c.h.b16 %v335
    %v2739 = vunpack.c.l.b16 %v336
    %v2740 = vunpack.c.h.b16 %v336
    %v2741 = vunpack.c.l.b16 %v337
    %v2742 = vunpack.c.h.b16 %v337
    %v2743 = vunpack.c.l.b16 %v338
    %v2744 = vunpack.c.h.b16 %v338
    %v2745 = vunpack.c.l.b16 %v339
    %v2746 = vunpack.c.h.b16 %v339
    %v2747 = vunpack.c.l.b16 %v340
    %v2748 = vunpack.c.h.b16 %v340
    %v2749 = vunpack.c.l.b16 %v341
    %v2750 = vunpack.c.h.b16 %v341
    %v2751 = vunpack.c.l.b16 %v342
    %v2752 = vunpack.c.h.b16 %v342
    %v2753 = vunpack.c.l.b16 %v343
    %v2754 = vunpack.c.h.b16 %v343
    %v2755 = vunpack.c.l.b16 %v344
    %v2756 = vunpack.c.h.b16 %v344
    %v2757 = vunpack.c.l.b16 %v345
    %v2758 = vunpack.c.h.b16 %v345
    %v2759 = vunpack.c.l.b16 %v346
    %v2760 = vunpack.c.h.b16 %v346
    %v2761 = vunpack.c.l.b16 %v347
    %v2762 = vunpack.c.h.b16 %v347
    %v2763 = vunpack.c.l.b16 %v348
    %v2764 = vunpack.c.h.b16 %v348
    %v2765 = vunpack.c.l.b16 %v349
    %v2766 = vunpack.c.h.b16 %v349
    %v2767 = vunpack.c.l.b16 %v350
    %v2768 = vunpack.c.h.b16 %v350
    %v2769 = vunpack.c.l.b16 %v351
    %v2770 = vunpack.c.h.b16 %v351
    %v2771 = vunpack.c.l.b16 %v352
    %v2772 = vunpack.c.h.b16 %v352
    %v2773 = vunpack.c.l.b16 %v353
    %v2774 = vunpack.c.h.b16 %v353
    %v2775 = vunpack.c.l.b16 %v354
    %v2776 = vunpack.c.h.b16 %v354
    %v2777 = vunpack.c.l.b16 %v355
    %v2778 = vunpack.c.h.b16 %v355
    %v2779 = vunpack.c.l.b16 %v356
    %v2780 = vunpack.c.h.b16 %v356
    %v2781 = vunpack.c.l.b16 %v357
    %v2782 = vunpack.c.h.b16 %v357
    %v2783 = vunpack.c.l.b16 %v358
    %v2784 = vunpack.c.h.b16 %v358
    %v2785 = vunpack.c.l.b16 %v359
    %v2786 = vunpack.c.h.b16 %v359
    %v2787 = vunpack.c.l.b16 %v360
    %v2788 = vunpack.c.h.b16 %v360
    %v2789 = vunpack.c.l.b16 %v361
    %v2790 = vunpack.c.h.b16 %v361
    %v2791 = vunpack.c.l.b16 %v362
    %v2792 = vunpack.c.h.b16 %v362
    %v2793 = vunpack.c.l.b16 %v363
    %v2794 = vunpack.c.h.b16 %v363
    %v2795 = vunpack.c.l.b16 %v364
    %v2796 = vunpack.c.h.b16 %v364
    %v2797 = vunpack.c.l.b16 %v365
    %v2798 = vunpack.c.h.b16 %v365
    %v2799 = vunpack.c.l.b16 %v366
    %v2800 = vunpack.c.h.b16 %v366
    %v2801 = vunpack.c.l.b16 %v367
    %v2802 = vunpack.c.h.b16 %v367
    %v2803 = vunpack.c.l.b16 %v368
    %v2804 = vunpack.c.h.b16 %v368
    %v2805 = vunpack.c.l.b16 %v369
    %v2806 = vunpack.c.h.b16 %v369
    %v2807 = vunpack.c.l.b16 %v370
    %v2808 = vunpack.c.h.b16 %v370
    %v2809 = vunpack.c.l.b16 %v371
    %v2810 = vunpack.c.h.b16 %v371
    %v2811 = vunpack.c.l.b16 %v372
    %v2812 = vunpack.c.h.b16 %v372
    %v2813 = vunpack.c.l.b16 %v373
    %v2814 = vunpack.c.h.b16 %v373
    %v2815 = vunpack.c.l.b16 %v374
    %v2816 = vunpack.c.h.b16 %v374
    %v2817 = vunpack.c.l.b16 %v375
    %v2818 = vunpack.c.h.b16 %v375
    %v2819 = vunpack.c.l.b16 %v376
    %v2820 = vunpack.c.h.b16 %v376
    %v2821 = vunpack.c.l.b16 %v377
    %v2822 = vunpack.c.h.b16 %v377
    %v2823 = vunpack.c.l.b16 %v378
    %v2824 = vunpack.c.h.b16 %v378
    %v2825 = vunpack.c.l.b16 %v379
    %v2826 = vunpack.c.h.b16 %v379
    %v2827 = vunpack.c.l.b16 %v380
    %v2828 = vunpack.c.h.b16 %v380
    %v2829 = vunpack.c.l.b16 %v381
    %v2830 = vunpack.c.h.b16 %v381
    %v2831 = vunpack.c.l.b16 %v382
    %v2832 = vunpack.c.h.b16 %v382
    %v2833 = vunpack.c.l.b16 %v383
    %v2834 = vunpack.c.h.b16 %v383
    %v2835 = vunpack.c.l.b16 %v384
    %v2836 = vunpack.c.h.b16 %v384
    %v2837 = vunpack.c.l.b16 %v385
    %v2838 = vunpack.c.h.b16 %v385
    %v2839 = vunpack.c.l.b16 %v386
    %v2840 = vunpack.c.h.b16 %v386
    %v2841 = vunpack.c.l.b16 %v387
    %v2842 = vunpack.c.h.b16 %v387
    %v2843 = vunpack.c.l.b16 %v388
    %v2844 = vunpack.c.h.b16 %v388
    %v2845 = vunpack.c.l.b16 %v389
    %v2846 = vunpack.c.h.b16 %v389
    %v2847 = vunpack.c.l.b16 %v390
    %v2848 = vunpack.c.h.b16 %v390
    %v2849 = vunpack.c.l.b16 %v391
    %v2850 = vunpack.c.h.b16 %v391
    %v2851 = vunpack.c.l.b16 %v392
    %v2852 = vunpack.c.h.b16 %v392
    %v2853 = vunpack.c.l.b16 %v393
    %v2854 = vunpack.c.h.b16 %v393
    %v2855 = vunpack.c.l.b16 %v394
    %v2856 = vunpack.c.h.b16 %v394
    %v2857 = vunpack.c.l.b16 %v395
    %v2858 = vunpack.c.h.b16 %v395
    %v2859 = vunpack.c.l.b16 %v396
    %v2860 = vunpack.c.h.b16 %v396
    %v2861 = vunpack.c.l.b16 %v397
    %v2862 = vunpack.c.h.b16 %v397
    %v2863 = vunpack.c.l.b16 %v398
    %v2864 = vunpack.c.h.b16 %v398
    %v2865 = vunpack.c.l.b16 %v399
    %v2866 = vunpack.c.h.b16 %v399
    %v2867 = vunpack.c.l.b16 %v400
    %v2868 = vunpack.c.h.b16 %v400
    %v2869 = vunpack.c.l.b16 %v401
    %v2870 = vunpack.c.h.b16 %v401
    %v2871 = vunpack.c.l.b16 %v402
    %v2872 = vunpack.c.h.b16 %v402
    %v2873 = vunpack.c.l.b16 %v403
    %v2874 = vunpack.c.h.b16 %v403
    %v2875 = vunpack.c.l.b16 %v404
    %v2876 = vunpack.c.h.b16 %v404
    %v2877 = vunpack.c.l.b16 %v405
    %v2878 = vunpack.c.h.b16 %v405
    %v2879 = vunpack.c.l.b16 %v406
    %v2880 = vunpack.c.h.b16 %v406
    %v2881 = vunpack.c.l.b16 %v407
    %v2882 = vunpack.c.h.b16 %v407
    %v2883 = vunpack.c.l.b16 %v408
    %v2884 = vunpack.c.h.b16 %v408
    %v2885 = vunpack.c.l.b16 %v409
    %v2886 = vunpack.c.h.b16 %v409
    %v2887 = vunpack.c.l.b16 %v410
    %v2888 = vunpack.c.h.b16 %v410
    %v2889 = vunpack.c.l.b16 %v411
    %v2890 = vunpack.c.h.b16 %v411
    %v2891 = vunpack.c.l.b16 %v412
    %v2892 = vunpack.c.h.b16 %v412
    %v2893 = vunpack.c.l.b16 %v413
    %v2894 = vunpack.c.h.b16 %v413
    %v2895 = vunpack.c.l.b16 %v414
    %v2896 = vunpack.c.h.b16 %v414
    %v2897 = vunpack.c.l.b16 %v415
    %v2898 = vunpack.c.h.b16 %v415
    %v2899 = vunpack.c.l.b16 %v416
    %v2900 = vunpack.c.h.b16 %v416
    %v2901 = vunpack.c.l.b16 %v417
    %v2902 = vunpack.c.h.b16 %v417
    %v2903 = vunpack.c.l.b16 %v418
    %v2904 = vunpack.c.h.b16 %v418
    %v2905 = vunpack.c.l.b16 %v419
    %v2906 = vunpack.c.h.b16 %v419
    %v2907 = vunpack.c.l.b16 %v420
    %v2908 = vunpack.c.h.b16 %v420
    %v2909 = vunpack.c.l.b16 %v421
    %v2910 = vunpack.c.h.b16 %v421
    %v2911 = vunpack.c.l.b16 %v422
    %v2912 = vunpack.c.h.b16 %v422
    %v2913 = vunpack.c.l.b16 %v423
    %v2914 = vunpack.c.h.b16 %v423
    %v2915 = vunpack.c.l.b16 %v424
    %v2916 = vunpack.c.h.b16 %v424
    %v2917 = vunpack.c.l.b16 %v425
    %v2918 = vunpack.c.h.b16 %v425
    %v2919 = vunpack.c.l.b16 %v426
    %v2920 = vunpack.c.h.b16 %v426
    %v2921 = vunpack.c.l.b16 %v427
    %v2922 = vunpack.c.h.b16 %v427
    %v2923 = vunpack.c.l.b16 %v428
    %v2924 = vunpack.c.h.b16 %v428
    %v2925 = vunpack.c.l.b16 %v429
    %v2926 = vunpack.c.h.b16 %v429
    %v2927 = vunpack.c.l.b16 %v430
    %v2928 = vunpack.c.h.b16 %v430
    %v2929 = vunpack.c.l.b16 %v431
    %v2930 = vunpack.c.h.b16 %v431
    %v2931 = vunpack.c.l.b16 %v432
    %v2932 = vunpack.c.h.b16 %v432
    %v2933 = vunpack.c.l.b16 %v433
    %v2934 = vunpack.c.h.b16 %v433
    %v2935 = vunpack.c.l.b16 %v434
    %v2936 = vunpack.c.h.b16 %v434
    %v2937 = vunpack.c.l.b16 %v435
    %v2938 = vunpack.c.h.b16 %v435
    %v2939 = vunpack.c.l.b16 %v436
    %v2940 = vunpack.c.h.b16 %v436
    %v2941 = vunpack.c.l.b16 %v437
    %v2942 = vunpack.c.h.b16 %v437
    %v2943 = vunpack.c.l.b16 %v438
    %v2944 = vunpack.c.h.b16 %v438
    %v2945 = vunpack.c.l.b16 %v439
    %v2946 = vunpack.c.h.b16 %v439
    %v2947 = vunpack.c.l.b16 %v440
    %v2948 = vunpack.c.h.b16 %v440
    %v2949 = vunpack.c.l.b16 %v441
    %v2950 = vunpack.c.h.b16 %v441
    %v2951 = vunpack.c.l.b16 %v442
    %v2952 = vunpack.c.h.b16 %v442
    %v2953 = vunpack.c.l.b16 %v443
    %v2954 = vunpack.c.h.b16 %v443
    %v2955 = vunpack.c.l.b16 %v444
    %v2956 = vunpack.c.h.b16 %v444
    %v2957 = vunpack.c.l.b16 %v445
    %v2958 = vunpack.c.h.b16 %v445
    %v2959 = vunpack.c.l.b16 %v446
    %v2960 = vunpack.c.h.b16 %v446
    %v2961 = vunpack.c.l.b16 %v447
    %v2962 = vunpack.c.h.b16 %v447
    %v2963 = vunpack.c.l.b16 %v448
    %v2964 = vunpack.c.h.b16 %v448
    %v2965 = vunpack.c.l.b16 %v449
    %v2966 = vunpack.c.h.b16 %v449
    %v2967 = vunpack.c.l.b16 %v450
    %v2968 = vunpack.c.h.b16 %v450
    %v2969 = vunpack.c.l.b16 %v451
    %v2970 = vunpack.c.h.b16 %v451
    %v2971 = vunpack.c.l.b16 %v452
    %v2972 = vunpack.c.h.b16 %v452
    %v2973 = vunpack.c.l.b16 %v453
    %v2974 = vunpack.c.h.b16 %v453
    %v2975 = vunpack.c.l.b16 %v454
    %v2976 = vunpack.c.h.b16 %v454
    %v2977 = vunpack.c.l.b16 %v455
    %v2978 = vunpack.c.h.b16 %v455
    %v2979 = vunpack.c.l.b16 %v456
    %v2980 = vunpack.c.h.b16 %v456
    %v2981 = vunpack.c.l.b16 %v457
    %v2982 = vunpack.c.h.b16 %v457
    %v2983 = vunpack.c.l.b16 %v458
    %v2984 = vunpack.c.h.b16 %v458
    %v2985 = vunpack.c.l.b16 %v459
    %v2986 = vunpack.c.h.b16 %v459
    %v2987 = vunpack.c.l.b16 %v460
    %v2988 = vunpack.c.h.b16 %v460
    %v2989 = vunpack.c.l.b16 %v461
    %v2990 = vunpack.c.h.b16 %v461
    %v2991 = vunpack.c.l.b16 %v462
    %v2992 = vunpack.c.h.b16 %v462
    %v2993 = vunpack.c.l.b16 %v463
    %v2994 = vunpack.c.h.b16 %v463
    %v2995 = vunpack.c.l.b16 %v464
    %v2996 = vunpack.c.h.b16 %v464
    %v2997 = vunpack.c.l.b16 %v465
    %v2998 = vunpack.c.h.b16 %v465
    %v2999 = vunpack.c.l.b16 %v466
    %v3000 = vunpack.c.h.b16 %v466
    %v3001 = vunpack.c.l.b16 %v467
    %v3002 = vunpack.c.h.b16 %v467
    %v3003 = vunpack.c.l.b16 %v468
    %v3004 = vunpack.c.h.b16 %v468
    %v3005 = vunpack.c.l.b16 %v469
    %v3006 = vunpack.c.h.b16 %v469
    %v3007 = vunpack.c.l.b16 %v470
    %v3008 = vunpack.c.h.b16 %v470
    %v3009 = vunpack.c.l.b16 %v471
    %v3010 = vunpack.c.h.b16 %v471
    %v3011 = vunpack.c.l.b16 %v472
    %v3012 = vunpack.c.h.b16 %v472
    %v3013 = vunpack.c.l.b16 %v473
    %v3014 = vunpack.c.h.b16 %v473
    %v3015 = vunpack.c.l.b16 %v474
    %v3016 = vunpack.c.h.b16 %v474
    %v3017 = vunpack.c.l.b16 %v475
    %v3018 = vunpack.c.h.b16 %v475
    %v3019 = vunpack.c.l.b16 %v476
    %v3020 = vunpack.c.h.b16 %v476
    %v3021 = vunpack.c.l.b16 %v477
    %v3022 = vunpack.c.h.b16 %v477
    %v3023 = vunpack.c.l.b16 %v478
    %v3024 = vunpack.c.h.b16 %v478
    %v3025 = vunpack.c.l.b16 %v479
    %v3026 = vunpack.c.h.b16 %v479
    %v3027 = vunpack.c.l.b16 %v480
    %v3028 = vunpack.c.h.b16 %v480
    %v3029 = vunpack.c.l.b16 %v481
    %v3030 = vunpack.c.h.b16 %v481
    %v3031 = vunpack.c.l.b16 %v482
    %v3032 = vunpack.c.h.b16 %v482
    %v3033 = vunpack.c.l.b16 %v483
    %v3034 = vunpack.c.h.b16 %v483
    %v3035 = vunpack.c.l.b16 %v484
    %v3036 = vunpack.c.h.b16 %v484
    %v3037 = vunpack.c.l.b16 %v485
    %v3038 = vunpack.c.h.b16 %v485
    %v3039 = vunpack.c.l.b16 %v486
    %v3040 = vunpack.c.h.b16 %v486
    %v3041 = vunpack.c.l.b16 %v487
    %v3042 = vunpack.c.h.b16 %v487
    %v3043 = vunpack.c.l.b16 %v488
    %v3044 = vunpack.c.h.b16 %v488
    %v3045 = vunpack.c.l.b16 %v489
    %v3046 = vunpack.c.h.b16 %v489
    %v3047 = vunpack.c.l.b16 %v490
    %v3048 = vunpack.c.h.b16 %v490
    %v3049 = vunpack.c.l.b16 %v491
    %v3050 = vunpack.c.h.b16 %v491
    %v3051 = vunpack.c.l.b16 %v492
    %v3052 = vunpack.c.h.b16 %v492
    %v3053 = vunpack.c.l.b16 %v493
    %v3054 = vunpack.c.h.b16 %v493
    %v3055 = vunpack.c.l.b16 %v494
    %v3056 = vunpack.c.h.b16 %v494
    %v3057 = vunpack.c.l.b16 %v495
    %v3058 = vunpack.c.h.b16 %v495
    %v3059 = vunpack.c.l.b16 %v496
    %v3060 = vunpack.c.h.b16 %v496
    %v3061 = vunpack.c.l.b16 %v497
    %v3062 = vunpack.c.h.b16 %v497
    %v3063 = vunpack.c.l.b16 %v498
    %v3064 = vunpack.c.h.b16 %v498
    %v3065 = vunpack.c.l.b16 %v499
    %v3066 = vunpack.c.h.b16 %v499
    %v3067 = vunpack.c.l.b16 %v500
    %v3068 = vunpack.c.h.b16 %v500
    %v3069 = vunpack.c.l.b16 %v501
    %v3070 = vunpack.c.h.b16 %v501
    %v3071 = vunpack.c.l.b16 %v502
    %v3072 = vunpack.c.h.b16 %v502
    %v3073 = vunpack.c.l.b16 %v503
    %v3074 = vunpack.c.h.b16 %v503
    %v3075 = vunpack.c.l.b16 %v504
    %v3076 = vunpack.c.h.b16 %v504
    %v3077 = vunpack.c.l.b16 %v505
    %v3078 = vunpack.c.h.b16 %v505
    %v3079 = vunpack.c.l.b16 %v506
    %v3080 = vunpack.c.h.b16 %v506
    %v3081 = vunpack.c.l.b16 %v507
    %v3082 = vunpack.c.h.b16 %v507
    %v3083 = vunpack.c.l.b16 %v508
    %v3084 = vunpack.c.h.b16 %v508
    %v3085 = vunpack.c.l.b16 %v509
    %v3086 = vunpack.c.h.b16 %v509
    %v3087 = vunpack.c.l.b16 %v510
    %v3088 = vunpack.c.h.b16 %v510
    %v3089 = vunpack.c.l.b16 %v511
    %v3090 = vunpack.c.h.b16 %v511
    %v3091 = vunpack.c.l.b16 %v512
    %v3092 = vunpack.c.h.b16 %v512
    %v3093 = vunpack.c.l.b16 %v513
    %v3094 = vunpack.c.h.b16 %v513
    %v3095 = vunpack.c.l.b16 %v514
    %v3096 = vunpack.c.h.b16 %v514
    %v3097 = vunpack.c.l.b16 %v515
    %v3098 = vunpack.c.h.b16 %v515
    %v3099 = vunpack.c.l.b16 %v516
    %v3100 = vunpack.c.h.b16 %v516
    %v3101 = vunpack.c.l.b16 %v517
    %v3102 = vunpack.c.h.b16 %v517
    %v3103 = vunpack.c.l.b16 %v518
    %v3104 = vunpack.c.h.b16 %v518
    %v3105 = vunpack.c.l.b16 %v519
    %v3106 = vunpack.c.h.b16 %v519
    %v3107 = vunpack.c.l.b16 %v520
    %v3108 = vunpack.c.h.b16 %v520
    %v3109 = vunpack.c.l.b16 %v521
    %v3110 = vunpack.c.h.b16 %v521
    %v3111 = vunpack.c.l.b16 %v522
    %v3112 = vunpack.c.h.b16 %v522
    %v3113 = vunpack.c.l.b16 %v523
    %v3114 = vunpack.c.h.b16 %v523
    %v3115 = vunpack.c.l.b16 %v524
    %v3116 = vunpack.c.h.b16 %v524
    %v3117 = vunpack.c.l.b16 %v525
    %v3118 = vunpack.c.h.b16 %v525
    %v3119 = vunpack.c.l.b16 %v526
    %v3120 = vunpack.c.h.b16 %v526
    %v3121 = vunpack.c.l.b16 %v527
    %v3122 = vunpack.c.h.b16 %v527
    %v3123 = vunpack.c.l.b16 %v528
    %v3124 = vunpack.c.h.b16 %v528
    %v3125 = vunpack.c.l.b16 %v529
    %v3126 = vunpack.c.h.b16 %v529
    %v3127 = vunpack.c.l.b16 %v530
    %v3128 = vunpack.c.h.b16 %v530
    %v3129 = vunpack.c.l.b16 %v531
    %v3130 = vunpack.c.h.b16 %v531
    %v3131 = vunpack.c.l.b16 %v532
    %v3132 = vunpack.c.h.b16 %v532
    %v3133 = vunpack.c.l.b16 %v533
    %v3134 = vunpack.c.h.b16 %v533
    %v3135 = vunpack.c.l.b16 %v534
    %v3136 = vunpack.c.h.b16 %v534
    %v3137 = vunpack.c.l.b16 %v535
    %v3138 = vunpack.c.h.b16 %v535
    %v3139 = vunpack.c.l.b16 %v536
    %v3140 = vunpack.c.h.b16 %v536
    %v3141 = vunpack.c.l.b16 %v537
    %v3142 = vunpack.c.h.b16 %v537
    %v3143 = vunpack.c.l.b16 %v538
    %v3144 = vunpack.c.h.b16 %v538
    %v3145 = vunpack.c.l.b16 %v539
    %v3146 = vunpack.c.h.b16 %v539
    %v3147 = vunpack.c.l.b16 %v540
    %v3148 = vunpack.c.h.b16 %v540
    %v3149 = vunpack.c.l.b16 %v541
    %v3150 = vunpack.c.h.b16 %v541
    %v3151 = vunpack.c.l.b16 %v542
    %v3152 = vunpack.c.h.b16 %v542
    %v3153 = vunpack.c.l.b16 %v543
    %v3154 = vunpack.c.h.b16 %v543
    %v3155 = vunpack.c.l.b16 %v544
    %v3156 = vunpack.c.h.b16 %v544
    %v3157 = vunpack.c.l.b16 %v545
    %v3158 = vunpack.c.h.b16 %v545
    %v3159 = vunpack.c.l.b16 %v546
    %v3160 = vunpack.c.h.b16 %v546
    %v3161 = vunpack.c.l.b16 %v547
    %v3162 = vunpack.c.h.b16 %v547
    %v3163 = vunpack.c.l.b16 %v548
    %v3164 = vunpack.c.h.b16 %v548
    %v3165 = vunpack.c.l.b16 %v549
    %v3166 = vunpack.c.h.b16 %v549
    %v3167 = vunpack.c.l.b16 %v550
    %v3168 = vunpack.c.h.b16 %v550
    %v3169 = vunpack.c.l.b16 %v551
    %v3170 = vunpack.c.h.b16 %v551
    %v3171 = vunpack.c.l.b16 %v552
    %v3172 = vunpack.c.h.b16 %v552
    %v3173 = vunpack.c.l.b16 %v553
    %v3174 = vunpack.c.h.b16 %v553
    %v3175 = vunpack.c.l.b16 %v554
    %v3176 = vunpack.c.h.b16 %v554
    %v3177 = vunpack.c.l.b16 %v555
    %v3178 = vunpack.c.h.b16 %v555
    %v3179 = vunpack.c.l.b16 %v556
    %v3180 = vunpack.c.h.b16 %v556
    %v3181 = vunpack.c.l.b16 %v557
    %v3182 = vunpack.c.h.b16 %v557
    %v3183 = vunpack.c.l.b16 %v558
    %v3184 = vunpack.c.h.b16 %v558
    %v3185 = vunpack.c.l.b16 %v559
    %v3186 = vunpack.c.h.b16 %v559
    %v3187 = vunpack.c.l.b16 %v560
    %v3188 = vunpack.c.h.b16 %v560
    %v3189 = vunpack.c.l.b16 %v561
    %v3190 = vunpack.c.h.b16 %v561
    %v3191 = vunpack.c.l.b16 %v562
    %v3192 = vunpack.c.h.b16 %v562
    %v3193 = vunpack.c.l.b16 %v563
    %v3194 = vunpack.c.h.b16 %v563
    %v3195 = vunpack.c.l.b16 %v564
    %v3196 = vunpack.c.h.b16 %v564
    %v3197 = vunpack.c.l.b16 %v565
    %v3198 = vunpack.c.h.b16 %v565
    %v3199 = vunpack.c.l.b16 %v566
    %v3200 = vunpack.c.h.b16 %v566
    %v3201 = vunpack.c.l.b16 %v567
    %v3202 = vunpack.c.h.b16 %v567
    %v3203 = vunpack.c.l.b16 %v568
    %v3204 = vunpack.c.h.b16 %v568
    %v3205 = vunpack.c.l.b16 %v569
    %v3206 = vunpack.c.h.b16 %v569
    %v3207 = vunpack.c.l.b16 %v570
    %v3208 = vunpack.c.h.b16 %v570
    %v3209 = vunpack.c.l.b16 %v571
    %v3210 = vunpack.c.h.b16 %v571
    %v3211 = vunpack.c.l.b16 %v572
    %v3212 = vunpack.c.h.b16 %v572
    %v3213 = vunpack.c.l.b16 %v573
    %v3214 = vunpack.c.h.b16 %v573
    %v3215 = vunpack.c.l.b16 %v574
    %v3216 = vunpack.c.h.b16 %v574
    %v3217 = vunpack.c.l.b16 %v575
    %v3218 = vunpack.c.h.b16 %v575
    %v3219 = vunpack.c.l.b16 %v576
    %v3220 = vunpack.c.h.b16 %v576
    %v3221 = vunpack.c.l.b16 %v577
    %v3222 = vunpack.c.h.b16 %v577
    %v3223 = vunpack.c.l.b16 %v578
    %v3224 = vunpack.c.h.b16 %v578
    %v3225 = vunpack.c.l.b16 %v579
    %v3226 = vunpack.c.h.b16 %v579
    %v3227 = vunpack.c.l.b16 %v580
    %v3228 = vunpack.c.h.b16 %v580
    %v3229 = vunpack.c.l.b16 %v581
    %v3230 = vunpack.c.h.b16 %v581
    %v3231 = vunpack.c.l.b16 %v582
    %v3232 = vunpack.c.h.b16 %v582
    %v3233 = vunpack.c.l.b16 %v583
    %v3234 = vunpack.c.h.b16 %v583
    %v3235 = vunpack.c.l.b16 %v584
    %v3236 = vunpack.c.h.b16 %v584
    %v3237 = vunpack.c.l.b16 %v585
    %v3238 = vunpack.c.h.b16 %v585
    %v3239 = vunpack.c.l.b16 %v586
    %v3240 = vunpack.c.h.b16 %v586
    %v3241 = vunpack.c.l.b16 %v587
    %v3242 = vunpack.c.h.b16 %v587
    %v3243 = vunpack.c.l.b16 %v588
    %v3244 = vunpack.c.h.b16 %v588
    %v3245 = vunpack.c.l.b16 %v589
    %v3246 = vunpack.c.h.b16 %v589
    %v3247 = vunpack.c.l.b16 %v590
    %v3248 = vunpack.c.h.b16 %v590
    %v3249 = vunpack.c.l.b16 %v591
    %v3250 = vunpack.c.h.b16 %v591
    %v3251 = vunpack.c.l.b16 %v592
    %v3252 = vunpack.c.h.b16 %v592
    %v3253 = vunpack.c.l.b16 %v593
    %v3254 = vunpack.c.h.b16 %v593
    %v3255 = vunpack.c.l.b16 %v594
    %v3256 = vunpack.c.h.b16 %v594
    %v3257 = vunpack.c.l.b16 %v595
    %v3258 = vunpack.c.h.b16 %v595
    %v3259 = vunpack.c.l.b16 %v596
    %v3260 = vunpack.c.h.b16 %v596
    %v3261 = vunpack.c.l.b16 %v597
    %v3262 = vunpack.c.h.b16 %v597
    %v3263 = vunpack.c.l.b16 %v598
    %v3264 = vunpack.c.h.b16 %v598
    %v3265 = vunpack.c.l.b16 %v599
    %v3266 = vunpack.c.h.b16 %v599
    %v3267 = vunpack.c.l.b16 %v600
    %v3268 = vunpack.c.h.b16 %v600
    %v3269 = vunpack.c.l.b16 %v601
    %v3270 = vunpack.c.h.b16 %v601
    %v3271 = vunpack.c.l.b16 %v602
    %v3272 = vunpack.c.h.b16 %v602
    %v3273 = vunpack.c.l.b16 %v603
    %v3274 = vunpack.c.h.b16 %v603
    %v3275 = vunpack.c.l.b16 %v604
    %v3276 = vunpack.c.h.b16 %v604
    %v3277 = vunpack.c.l.b16 %v605
    %v3278 = vunpack.c.h.b16 %v605
    %v3279 = vunpack.c.l.b16 %v606
    %v3280 = vunpack.c.h.b16 %v606
    %v3281 = vunpack.c.l.b16 %v607
    %v3282 = vunpack.c.h.b16 %v607
    %v3283 = vunpack.c.l.b16 %v608
    %v3284 = vunpack.c.h.b16 %v608
    %v3285 = vunpack.c.l.b16 %v609
    %v3286 = vunpack.c.h.b16 %v609
    %v3287 = vunpack.c.l.b16 %v610
    %v3288 = vunpack.c.h.b16 %v610
    %v3289 = vunpack.c.l.b16 %v611
    %v3290 = vunpack.c.h.b16 %v611
    %v3291 = vunpack.c.l.b16 %v612
    %v3292 = vunpack.c.h.b16 %v612
    %v3293 = vunpack.c.l.b16 %v613
    %v3294 = vunpack.c.h.b16 %v613
    %v3295 = vunpack.c.l.b16 %v614
    %v3296 = vunpack.c.h.b16 %v614
    %v3297 = vunpack.c.l.b16 %v615
    %v3298 = vunpack.c.h.b16 %v615
    %v3299 = vunpack.c.l.b16 %v616
    %v3300 = vunpack.c.h.b16 %v616
    %v3301 = vunpack.c.l.b16 %v617
    %v3302 = vunpack.c.h.b16 %v617
    %v3303 = vunpack.c.l.b16 %v618
    %v3304 = vunpack.c.h.b16 %v618
    %v3305 = vunpack.c.l.b16 %v619
    %v3306 = vunpack.c.h.b16 %v619
    %v3307 = vunpack.c.l.b16 %v620
    %v3308 = vunpack.c.h.b16 %v620
    %v3309 = vunpack.c.l.b16 %v621
    %v3310 = vunpack.c.h.b16 %v621
    %v3311 = vunpack.c.l.b16 %v622
    %v3312 = vunpack.c.h.b16 %v622
    %v3313 = vunpack.c.l.b16 %v623
    %v3314 = vunpack.c.h.b16 %v623
    %v3315 = vunpack.c.l.b16 %v624
    %v3316 = vunpack.c.h.b16 %v624
    %v3317 = vunpack.c.l.b16 %v625
    %v3318 = vunpack.c.h.b16 %v625
    %v3319 = vunpack.c.l.b16 %v626
    %v3320 = vunpack.c.h.b16 %v626
    %v3321 = vunpack.c.l.b16 %v627
    %v3322 = vunpack.c.h.b16 %v627
    %v3323 = vunpack.c.l.b16 %v628
    %v3324 = vunpack.c.h.b16 %v628
    %v3325 = vunpack.c.l.b16 %v629
    %v3326 = vunpack.c.h.b16 %v629
    %v3327 = vunpack.c.l.b16 %v630
    %v3328 = vunpack.c.h.b16 %v630
    %v3329 = vunpack.c.l.b16 %v631
    %v3330 = vunpack.c.h.b16 %v631
    %v3331 = vunpack.c.l.b16 %v632
    %v3332 = vunpack.c.h.b16 %v632
    %v3333 = vunpack.c.l.b16 %v633
    %v3334 = vunpack.c.h.b16 %v633
    %v3335 = vunpack.c.l.b16 %v634
    %v3336 = vunpack.c.h.b16 %v634
    %v3337 = vunpack.c.l.b16 %v635
    %v3338 = vunpack.c.h.b16 %v635
    %v3339 = vunpack.c.l.b16 %v636
    %v3340 = vunpack.c.h.b16 %v636
    %v3341 = vunpack.c.l.b16 %v637
    %v3342 = vunpack.c.h.b16 %v637
    %v3343 = vunpack.c.l.b16 %v638
    %v3344 = vunpack.c.h.b16 %v638
    %v3345 = vunpack.c.l.b16 %v639
    %v3346 = vunpack.c.h.b16 %v639
    %v3347 = vunpack.c.l.b16 %v640
    %v3348 = vunpack.c.h.b16 %v640
    %v3349 = vunpack.c.l.b16 %v641
    %v3350 = vunpack.c.h.b16 %v641
    %v3351 = vunpack.c.l.b16 %v642
    %v3352 = vunpack.c.h.b16 %v642
    %v3353 = vunpack.c.l.b16 %v643
    %v3354 = vunpack.c.h.b16 %v643
    %v3355 = vunpack.c.l.b16 %v644
    %v3356 = vunpack.c.h.b16 %v644
    %v3357 = vunpack.c.l.b16 %v645
    %v3358 = vunpack.c.h.b16 %v645
    %v3359 = vunpack.c.l.b16 %v646
    %v3360 = vunpack.c.h.b16 %v646
    %v3361 = vunpack.c.l.b16 %v647
    %v3362 = vunpack.c.h.b16 %v647
    %v3363 = vunpack.c.l.b16 %v648
    %v3364 = vunpack.c.h.b16 %v648
    %v3365 = vunpack.c.l.b16 %v649
    %v3366 = vunpack.c.h.b16 %v649
    %v3367 = vunpack.c.l.b16 %v650
    %v3368 = vunpack.c.h.b16 %v650
    %v3369 = vunpack.c.l.b16 %v651
    %v3370 = vunpack.c.h.b16 %v651
    %v3371 = vunpack.c.l.b16 %v652
    %v3372 = vunpack.c.h.b16 %v652
    %v3373 = vunpack.c.l.b16 %v653
    %v3374 = vunpack.c.h.b16 %v653
    %v3375 = vunpack.c.l.b16 %v654
    %v3376 = vunpack.c.h.b16 %v654
    %v3377 = vunpack.c.l.b16 %v655
    %v3378 = vunpack.c.h.b16 %v655
    %v3379 = vunpack.c.l.b16 %v656
    %v3380 = vunpack.c.h.b16 %v656
    %v3381 = vunpack.c.l.b16 %v657
    %v3382 = vunpack.c.h.b16 %v657
    %v3383 = vunpack.c.l.b16 %v658
    %v3384 = vunpack.c.h.b16 %v658
    %v3385 = vunpack.c.l.b16 %v659
    %v3386 = vunpack.c.h.b16 %v659
    %v3387 = vunpack.c.l.b16 %v660
    %v3388 = vunpack.c.h.b16 %v660
    %v3389 = vunpack.c.l.b16 %v661
    %v3390 = vunpack.c.h.b16 %v661
    %v3391 = vunpack.c.l.b16 %v662
    %v3392 = vunpack.c.h.b16 %v662
    %v3393 = vunpack.c.l.b16 %v663
    %v3394 = vunpack.c.h.b16 %v663
    %v3395 = vunpack.c.l.b16 %v664
    %v3396 = vunpack.c.h.b16 %v664
    %v3397 = vunpack.c.l.b16 %v665
    %v3398 = vunpack.c.h.b16 %v665
    %v3399 = vunpack.c.l.b16 %v666
    %v3400 = vunpack.c.h.b16 %v666
    %v3401 = vunpack.c.l.b16 %v667
    %v3402 = vunpack.c.h.b16 %v667
    %v3403 = vunpack.c.l.b16 %v668
    %v3404 = vunpack.c.h.b16 %v668
    %v3405 = vunpack.c.l.b16 %v669
    %v3406 = vunpack.c.h.b16 %v669
    %v3407 = vunpack.c.l.b16 %v670
    %v3408 = vunpack.c.h.b16 %v670
    %v3409 = vunpack.c.l.b16 %v671
    %v3410 = vunpack.c.h.b16 %v671
    %v3411 = vunpack.c.l.b16 %v672
    %v3412 = vunpack.c.h.b16 %v672
    %v3413 = vunpack.c.l.b16 %v673
    %v3414 = vunpack.c.h.b16 %v673
    %v3415 = vunpack.c.l.b16 %v674
    %v3416 = vunpack.c.h.b16 %v674
    %v3417 = vunpack.c.l.b16 %v675
    %v3418 = vunpack.c.h.b16 %v675
    %v3419 = vunpack.c.l.b16 %v676
    %v3420 = vunpack.c.h.b16 %v676
    %v3421 = vunpack.c.l.b16 %v677
    %v3422 = vunpack.c.h.b16 %v677
    %v3423 = vunpack.c.l.b16 %v678
    %v3424 = vunpack.c.h.b16 %v678
    %v3425 = vunpack.c.l.b16 %v679
    %v3426 = vunpack.c.h.b16 %v679
    %v3427 = vunpack.c.l.b16 %v680
    %v3428 = vunpack.c.h.b16 %v680
    %v3429 = vunpack.c.l.b16 %v681
    %v3430 = vunpack.c.h.b16 %v681
    %v3431 = vunpack.c.l.b16 %v682
    %v3432 = vunpack.c.h.b16 %v682
    %v3433 = vunpack.c.l.b16 %v683
    %v3434 = vunpack.c.h.b16 %v683
    %v3435 = vunpack.c.l.b16 %v684
    %v3436 = vunpack.c.h.b16 %v684
    %v3437 = vunpack.c.l.b16 %v685
    %v3438 = vunpack.c.h.b16 %v685
    %v3439 = vunpack.c.l.b16 %v686
    %v3440 = vunpack.c.h.b16 %v686
    %v3441 = vunpack.c.l.b16 %v687
    %v3442 = vunpack.c.h.b16 %v687
    %v3443 = vunpack.c.l.b16 %v688
    %v3444 = vunpack.c.h.b16 %v688
    %v3445 = vunpack.c.l.b16 %v689
    %v3446 = vunpack.c.h.b16 %v689
    %v3447 = vunpack.c.l.b16 %v690
    %v3448 = vunpack.c.h.b16 %v690
    %v3449 = vunpack.c.l.b16 %v691
    %v3450 = vunpack.c.h.b16 %v691
    %v3451 = vunpack.c.l.b16 %v692
    %v3452 = vunpack.c.h.b16 %v692
    %v3453 = vunpack.c.l.b16 %v693
    %v3454 = vunpack.c.h.b16 %v693
    %v3455 = vunpack.c.l.b16 %v694
    %v3456 = vunpack.c.h.b16 %v694
    %v3457 = vunpack.c.l.b16 %v695
    %v3458 = vunpack.c.h.b16 %v695
    %v3459 = vunpack.c.l.b16 %v696
    %v3460 = vunpack.c.h.b16 %v696
    %v3461 = vunpack.c.l.b16 %v697
    %v3462 = vunpack.c.h.b16 %v697
    %v3463 = vunpack.c.l.b16 %v698
    %v3464 = vunpack.c.h.b16 %v698
    %v3465 = vunpack.c.l.b16 %v699
    %v3466 = vunpack.c.h.b16 %v699
    %v3467 = vunpack.c.l.b16 %v700
    %v3468 = vunpack.c.h.b16 %v700
    %v3469 = vunpack.c.l.b16 %v701
    %v3470 = vunpack.c.h.b16 %v701
    %v3471 = vunpack.c.l.b16 %v702
    %v3472 = vunpack.c.h.b16 %v702
    %v3473 = vunpack.c.l.b16 %v703
    %v3474 = vunpack.c.h.b16 %v703
    %v3475 = vunpack.c.l.b16 %v704
    %v3476 = vunpack.c.h.b16 %v704
    %v3477 = vunpack.c.l.b16 %v705
    %v3478 = vunpack.c.h.b16 %v705
    %v3479 = vunpack.c.l.b16 %v706
    %v3480 = vunpack.c.h.b16 %v706
    %v3481 = vunpack.c.l.b16 %v707
    %v3482 = vunpack.c.h.b16 %v707
    %v3483 = vunpack.c.l.b16 %v708
    %v3484 = vunpack.c.h.b16 %v708
    %v3485 = vunpack.c.l.b16 %v709
    %v3486 = vunpack.c.h.b16 %v709
    %v3487 = vunpack.c.l.b16 %v710
    %v3488 = vunpack.c.h.b16 %v710
    %v3489 = vunpack.c.l.b16 %v711
    %v3490 = vunpack.c.h.b16 %v711
    %v3491 = vunpack.c.l.b16 %v712
    %v3492 = vunpack.c.h.b16 %v712
    %v3493 = vunpack.c.l.b16 %v713
    %v3494 = vunpack.c.h.b16 %v713
    %v3495 = vunpack.c.l.b16 %v714
    %v3496 = vunpack.c.h.b16 %v714
    %v3497 = vunpack.c.l.b16 %v715
    %v3498 = vunpack.c.h.b16 %v715
    %v3499 = vunpack.c.l.b16 %v716
    %v3500 = vunpack.c.h.b16 %v716
    %v3501 = vunpack.c.l.b16 %v717
    %v3502 = vunpack.c.h.b16 %v717
    %v3503 = vunpack.c.l.b16 %v718
    %v3504 = vunpack.c.h.b16 %v718
    %v3505 = vunpack.c.l.b16 %v719
    %v3506 = vunpack.c.h.b16 %v719
    %v3507 = vunpack.c.l.b16 %v720
    %v3508 = vunpack.c.h.b16 %v720
    %v3509 = vunpack.c.l.b16 %v721
    %v3510 = vunpack.c.h.b16 %v721
    %v3511 = vunpack.c.l.b16 %v722
    %v3512 = vunpack.c.h.b16 %v722
    %v3513 = vunpack.c.l.b16 %v723
    %v3514 = vunpack.c.h.b16 %v723
    %v3515 = vunpack.c.l.b16 %v724
    %v3516 = vunpack.c.h.b16 %v724
    %v3517 = vunpack.c.l.b16 %v725
    %v3518 = vunpack.c.h.b16 %v725
    %v3519 = vunpack.c.l.b16 %v726
    %v3520 = vunpack.c.h.b16 %v726
    %v3521 = vunpack.c.l.b16 %v727
    %v3522 = vunpack.c.h.b16 %v727
    %v3523 = vunpack.c.l.b16 %v728
    %v3524 = vunpack.c.h.b16 %v728
    %v3525 = vunpack.c.l.b16 %v729
    %v3526 = vunpack.c.h.b16 %v729
    %v3527 = vunpack.c.l.b16 %v730
    %v3528 = vunpack.c.h.b16 %v730
    %v3529 = vunpack.c.l.b16 %v731
    %v3530 = vunpack.c.h.b16 %v731
    %v3531 = vunpack.c.l.b16 %v732
    %v3532 = vunpack.c.h.b16 %v732
    %v3533 = vunpack.c.l.b16 %v733
    %v3534 = vunpack.c.h.b16 %v733
    %v3535 = vunpack.c.l.b16 %v734
    %v3536 = vunpack.c.h.b16 %v734
    %v3537 = vunpack.c.l.b16 %v735
    %v3538 = vunpack.c.h.b16 %v735
    %v3539 = vunpack.c.l.b16 %v736
    %v3540 = vunpack.c.h.b16 %v736
    %v3541 = vunpack.c.l.b16 %v737
    %v3542 = vunpack.c.h.b16 %v737
    %v3543 = vunpack.c.l.b16 %v738
    %v3544 = vunpack.c.h.b16 %v738
    %v3545 = vunpack.c.l.b16 %v739
    %v3546 = vunpack.c.h.b16 %v739
    %v3547 = vunpack.c.l.b16 %v740
    %v3548 = vunpack.c.h.b16 %v740
    %v3549 = vunpack.c.l.b16 %v741
    %v3550 = vunpack.c.h.b16 %v741
    %v3551 = vunpack.c.l.b16 %v742
    %v3552 = vunpack.c.h.b16 %v742
    %v3553 = vunpack.c.l.b16 %v743
    %v3554 = vunpack.c.h.b16 %v743
    %v3555 = vunpack.c.l.b16 %v744
    %v3556 = vunpack.c.h.b16 %v744
    %v3557 = vunpack.c.l.b16 %v745
    %v3558 = vunpack.c.h.b16 %v745
    %v3559 = vunpack.c.l.b16 %v746
    %v3560 = vunpack.c.h.b16 %v746
    %v3561 = vunpack.c.l.b16 %v747
    %v3562 = vunpack.c.h.b16 %v747
    %v3563 = vunpack.c.l.b16 %v748
    %v3564 = vunpack.c.h.b16 %v748
    %v3565 = vunpack.c.l.b16 %v749
    %v3566 = vunpack.c.h.b16 %v749
    %v3567 = vunpack.c.l.b16 %v750
    %v3568 = vunpack.c.h.b16 %v750
    %v3569 = vunpack.c.l.b16 %v751
    %v3570 = vunpack.c.h.b16 %v751
    %v3571 = vunpack.c.l.b16 %v752
    %v3572 = vunpack.c.h.b16 %v752
    %v3573 = vunpack.c.l.b16 %v753
    %v3574 = vunpack.c.h.b16 %v753
    %v3575 = vunpack.c.l.b16 %v754
    %v3576 = vunpack.c.h.b16 %v754
    %v3577 = vunpack.c.l.b16 %v755
    %v3578 = vunpack.c.h.b16 %v755
    %v3579 = vunpack.c.l.b16 %v756
    %v3580 = vunpack.c.h.b16 %v756
    %v3581 = vunpack.c.l.b16 %v757
    %v3582 = vunpack.c.h.b16 %v757
    %v3583 = vunpack.c.l.b16 %v758
    %v3584 = vunpack.c.h.b16 %v758
    %v3585 = vunpack.c.l.b16 %v759
    %v3586 = vunpack.c.h.b16 %v759
    %v3587 = vunpack.c.l.b16 %v760
    %v3588 = vunpack.c.h.b16 %v760
    %v3589 = vunpack.c.l.b16 %v761
    %v3590 = vunpack.c.h.b16 %v761
    %v3591 = vunpack.c.l.b16 %v762
    %v3592 = vunpack.c.h.b16 %v762
    %v3593 = vunpack.c.l.b16 %v763
    %v3594 = vunpack.c.h.b16 %v763
    %v3595 = vunpack.c.l.b16 %v764
    %v3596 = vunpack.c.h.b16 %v764
    %v3597 = vunpack.c.l.b16 %v765
    %v3598 = vunpack.c.h.b16 %v765
    %v3599 = vunpack.c.l.b16 %v766
    %v3600 = vunpack.c.h.b16 %v766
    %v3601 = vunpack.c.l.b16 %v767
    %v3602 = vunpack.c.h.b16 %v767
    %v3603 = vunpack.c.l.b16 %v768
    %v3604 = vunpack.c.h.b16 %v768
    %v3605 = vunpack.c.l.b16 %v769
    %v3606 = vunpack.c.h.b16 %v769
    %v3607 = vunpack.c.l.b16 %v770
    %v3608 = vunpack.c.h.b16 %v770
    %v3609 = vunpack.c.l.b16 %v771
    %v3610 = vunpack.c.h.b16 %v771
    %v3611 = vunpack.c.l.b16 %v772
    %v3612 = vunpack.c.h.b16 %v772
    %v3613 = vunpack.c.l.b16 %v773
    %v3614 = vunpack.c.h.b16 %v773
    %v3615 = vunpack.c.l.b16 %v774
    %v3616 = vunpack.c.h.b16 %v774
    %v3617 = vunpack.c.l.b16 %v775
    %v3618 = vunpack.c.h.b16 %v775
    %v3619 = vunpack.c.l.b16 %v776
    %v3620 = vunpack.c.h.b16 %v776
    %v3621 = vunpack.c.l.b16 %v777
    %v3622 = vunpack.c.h.b16 %v777
    %v3623 = vunpack.c.l.b16 %v778
    %v3624 = vunpack.c.h.b16 %v778
    %v3625 = vunpack.c.l.b16 %v779
    %v3626 = vunpack.c.h.b16 %v779
    %v3627 = vunpack.c.l.b16 %v780
    %v3628 = vunpack.c.h.b16 %v780
    %v3629 = vunpack.c.l.b16 %v781
    %v3630 = vunpack.c.h.b16 %v781
    %v3631 = vunpack.c.l.b16 %v782
    %v3632 = vunpack.c.h.b16 %v782
    %v3633 = vunpack.c.l.b16 %v783
    %v3634 = vunpack.c.h.b16 %v783
    %v3635 = vunpack.c.l.b16 %v784
    %v3636 = vunpack.c.h.b16 %v784
    %v3637 = vunpack.c.l.b16 %v785
    %v3638 = vunpack.c.h.b16 %v785
    %v3639 = vunpack.c.l.b16 %v786
    %v3640 = vunpack.c.h.b16 %v786
    %v3641 = vunpack.c.l.b16 %v787
    %v3642 = vunpack.c.h.b16 %v787
    %v3643 = vunpack.c.l.b16 %v788
    %v3644 = vunpack.c.h.b16 %v788
    %v3645 = vunpack.c.l.b16 %v789
    %v3646 = vunpack.c.h.b16 %v789
    %v3647 = vunpack.c.l.b16 %v790
    %v3648 = vunpack.c.h.b16 %v790
    %v3649 = vunpack.c.l.b16 %v791
    %v3650 = vunpack.c.h.b16 %v791
    %v3651 = vunpack.c.l.b16 %v792
    %v3652 = vunpack.c.h.b16 %v792
    %v3653 = vunpack.c.l.b16 %v793
    %v3654 = vunpack.c.h.b16 %v793
    %v3655 = vunpack.c.l.b16 %v794
    %v3656 = vunpack.c.h.b16 %v794
    %v3657 = vunpack.c.l.b16 %v795
    %v3658 = vunpack.c.h.b16 %v795
    %v3659 = vunpack.c.l.b16 %v796
    %v3660 = vunpack.c.h.b16 %v796
    %v3661 = vunpack.c.l.b16 %v797
    %v3662 = vunpack.c.h.b16 %v797
    %v3663 = vunpack.c.l.b16 %v798
    %v3664 = vunpack.c.h.b16 %v798
    %v3665 = vunpack.c.l.b16 %v799
    %v3666 = vunpack.c.h.b16 %v799
    %v3667 = vunpack.c.l.b16 %v800
    %v3668 = vunpack.c.h.b16 %v800
    %v3669 = vunpack.c.l.b16 %v801
    %v3670 = vunpack.c.h.b16 %v801
    %v3671 = vunpack.c.l.b16 %v802
    %v3672 = vunpack.c.h.b16 %v802
    %v3673 = vunpack.c.l.b16 %v803
    %v3674 = vunpack.c.h.b16 %v803
    %v3675 = vunpack.c.l.b16 %v804
    %v3676 = vunpack.c.h.b16 %v804
    %v3677 = vunpack.c.l.b16 %v805
    %v3678 = vunpack.c.h.b16 %v805
    %v3679 = vunpack.c.l.b16 %v806
    %v3680 = vunpack.c.h.b16 %v806
    %v3681 = vunpack.c.l.b16 %v807
    %v3682 = vunpack.c.h.b16 %v807
    %v3683 = vunpack.c.l.b16 %v808
    %v3684 = vunpack.c.h.b16 %v808
    %v3685 = vunpack.c.l.b16 %v809
    %v3686 = vunpack.c.h.b16 %v809
    %v3687 = vunpack.c.l.b16 %v810
    %v3688 = vunpack.c.h.b16 %v810
    %v3689 = vunpack.c.l.b16 %v811
    %v3690 = vunpack.c.h.b16 %v811
    %v3691 = vunpack.c.l.b16 %v812
    %v3692 = vunpack.c.h.b16 %v812
    %v3693 = vunpack.c.l.b16 %v813
    %v3694 = vunpack.c.h.b16 %v813
    %v3695 = vunpack.c.l.b16 %v814
    %v3696 = vunpack.c.h.b16 %v814
    %v3697 = vunpack.c.l.b16 %v815
    %v3698 = vunpack.c.h.b16 %v815
    %v3699 = vunpack.c.l.b16 %v816
    %v3700 = vunpack.c.h.b16 %v816
    %v3701 = vunpack.c.l.b16 %v817
    %v3702 = vunpack.c.h.b16 %v817
    %v3703 = vunpack.c.l.b16 %v818
    %v3704 = vunpack.c.h.b16 %v818
    %v3705 = vunpack.c.l.b16 %v819
    %v3706 = vunpack.c.h.b16 %v819
    %v3707 = vunpack.c.l.b16 %v820
    %v3708 = vunpack.c.h.b16 %v820
    %v3709 = vunpack.c.l.b16 %v821
    %v3710 = vunpack.c.h.b16 %v821
    %v3711 = vunpack.c.l.b16 %v822
    %v3712 = vunpack.c.h.b16 %v822
    %v3713 = vunpack.c.l.b16 %v823
    %v3714 = vunpack.c.h.b16 %v823
    %v3715 = vunpack.c.l.b16 %v824
    %v3716 = vunpack.c.h.b16 %v824
    %v3717 = vunpack.c.l.b16 %v825
    %v3718 = vunpack.c.h.b16 %v825
    %v3719 = vunpack.c.l.b16 %v826
    %v3720 = vunpack.c.h.b16 %v826
    %v3721 = vunpack.c.l.b16 %v827
    %v3722 = vunpack.c.h.b16 %v827
    %v3723 = vunpack.c.l.b16 %v828
    %v3724 = vunpack.c.h.b16 %v828
    %v3725 = vunpack.c.l.b16 %v829
    %v3726 = vunpack.c.h.b16 %v829
    %v3727 = vunpack.c.l.b16 %v830
    %v3728 = vunpack.c.h.b16 %v830
    %v3729 = vunpack.c.l.b16 %v831
    %v3730 = vunpack.c.h.b16 %v831
    %v3731 = vunpack.c.l.b16 %v832
    %v3732 = vunpack.c.h.b16 %v832
    %v3733 = vunpack.c.l.b16 %v833
    %v3734 = vunpack.c.h.b16 %v833
    %v3735 = vunpack.c.l.b16 %v834
    %v3736 = vunpack.c.h.b16 %v834
    %v3737 = vunpack.c.l.b16 %v835
    %v3738 = vunpack.c.h.b16 %v835
    %v3739 = vunpack.c.l.b16 %v836
    %v3740 = vunpack.c.h.b16 %v836
    %v3741 = vunpack.c.l.b16 %v837
    %v3742 = vunpack.c.h.b16 %v837
    %v3743 = vunpack.c.l.b16 %v838
    %v3744 = vunpack.c.h.b16 %v838
    %v3745 = vunpack.c.l.b16 %v839
    %v3746 = vunpack.c.h.b16 %v839
    %v3747 = vunpack.c.l.b16 %v840
    %v3748 = vunpack.c.h.b16 %v840
    %v3749 = vunpack.c.l.b16 %v841
    %v3750 = vunpack.c.h.b16 %v841
    %v3751 = vunpack.c.l.b16 %v842
    %v3752 = vunpack.c.h.b16 %v842
    %v3753 = vunpack.c.l.b16 %v843
    %v3754 = vunpack.c.h.b16 %v843
    %v3755 = vunpack.c.l.b16 %v844
    %v3756 = vunpack.c.h.b16 %v844
    %v3757 = vunpack.c.l.b16 %v845
    %v3758 = vunpack.c.h.b16 %v845
    %v3759 = vunpack.c.l.b16 %v846
    %v3760 = vunpack.c.h.b16 %v846
    %v3761 = vunpack.c.l.b16 %v847
    %v3762 = vunpack.c.h.b16 %v847
    %v3763 = vunpack.c.l.b16 %v848
    %v3764 = vunpack.c.h.b16 %v848
    %v3765 = vunpack.c.l.b16 %v849
    %v3766 = vunpack.c.h.b16 %v849
    %v3767 = vunpack.c.l.b16 %v850
    %v3768 = vunpack.c.h.b16 %v850
    %v3769 = vunpack.c.l.b16 %v851
    %v3770 = vunpack.c.h.b16 %v851
    %v3771 = vunpack.c.l.b16 %v852
    %v3772 = vunpack.c.h.b16 %v852
    %v3773 = vunpack.c.l.b16 %v853
    %v3774 = vunpack.c.h.b16 %v853
    %v3775 = vunpack.c.l.b16 %v854
    %v3776 = vunpack.c.h.b16 %v854
    %v3777 = vunpack.c.l.b16 %v855
    %v3778 = vunpack.c.h.b16 %v855
    %v3779 = vunpack.c.l.b16 %v856
    %v3780 = vunpack.c.h.b16 %v856
    %v3781 = vunpack.c.l.b16 %v857
    %v3782 = vunpack.c.h.b16 %v857
    %v3783 = vunpack.c.l.b16 %v858
    %v3784 = vunpack.c.h.b16 %v858
    %v3785 = vunpack.c.l.b16 %v859
    %v3786 = vunpack.c.h.b16 %v859
    %v3787 = vunpack.c.l.b16 %v860
    %v3788 = vunpack.c.h.b16 %v860
    %v3789 = vunpack.c.l.b16 %v861
    %v3790 = vunpack.c.h.b16 %v861
    %v3791 = vunpack.c.l.b16 %v862
    %v3792 = vunpack.c.h.b16 %v862
    %v3793 = vunpack.c.l.b16 %v863
    %v3794 = vunpack.c.h.b16 %v863
    %v3795 = vunpack.c.l.b16 %v864
    %v3796 = vunpack.c.h.b16 %v864
    %v3797 = vunpack.c.l.b16 %v865
    %v3798 = vunpack.c.h.b16 %v865
    %v3799 = vunpack.c.l.b16 %v866
    %v3800 = vunpack.c.h.b16 %v866
    %v3801 = vunpack.c.l.b16 %v867
    %v3802 = vunpack.c.h.b16 %v867
    %v3803 = vunpack.c.l.b16 %v868
    %v3804 = vunpack.c.h.b16 %v868
    %v3805 = vunpack.c.l.b16 %v869
    %v3806 = vunpack.c.h.b16 %v869
    %v3807 = vunpack.c.l.b16 %v870
    %v3808 = vunpack.c.h.b16 %v870
    %v3809 = vunpack.c.l.b16 %v871
    %v3810 = vunpack.c.h.b16 %v871
    %v3811 = vunpack.c.l.b16 %v872
    %v3812 = vunpack.c.h.b16 %v872
    %v3813 = vunpack.c.l.b16 %v873
    %v3814 = vunpack.c.h.b16 %v873
    %v3815 = vunpack.c.l.b16 %v874
    %v3816 = vunpack.c.h.b16 %v874
    %v3817 = vunpack.c.l.b16 %v875
    %v3818 = vunpack.c.h.b16 %v875
    %v3819 = vunpack.c.l.b16 %v876
    %v3820 = vunpack.c.h.b16 %v876
    %v3821 = vunpack.c.l.b16 %v877
    %v3822 = vunpack.c.h.b16 %v877
    %v3823 = vunpack.c.l.b16 %v878
    %v3824 = vunpack.c.h.b16 %v878
    %v3825 = vunpack.c.l.b16 %v879
    %v3826 = vunpack.c.h.b16 %v879
    %v3827 = vunpack.c.l.b16 %v880
    %v3828 = vunpack.c.h.b16 %v880
    %v3829 = vunpack.c.l.b16 %v881
    %v3830 = vunpack.c.h.b16 %v881
    %v3831 = vunpack.c.l.b16 %v882
    %v3832 = vunpack.c.h.b16 %v882
    %v3833 = vunpack.c.l.b16 %v883
    %v3834 = vunpack.c.h.b16 %v883
    %v3835 = vunpack.c.l.b16 %v884
    %v3836 = vunpack.c.h.b16 %v884
    %v3837 = vunpack.c.l.b16 %v885
    %v3838 = vunpack.c.h.b16 %v885
    %v3839 = vunpack.c.l.b16 %v886
    %v3840 = vunpack.c.h.b16 %v886
    %v3841 = vunpack.c.l.b16 %v887
    %v3842 = vunpack.c.h.b16 %v887
    %v3843 = vunpack.c.l.b16 %v888
    %v3844 = vunpack.c.h.b16 %v888
    %v3845 = vunpack.c.l.b16 %v889
    %v3846 = vunpack.c.h.b16 %v889
    %v3847 = vunpack.c.l.b16 %v890
    %v3848 = vunpack.c.h.b16 %v890
    %v3849 = vunpack.c.l.b16 %v891
    %v3850 = vunpack.c.h.b16 %v891
    %v3851 = vunpack.c.l.b16 %v892
    %v3852 = vunpack.c.h.b16 %v892
    %v3853 = vunpack.c.l.b16 %v893
    %v3854 = vunpack.c.h.b16 %v893
    %v3855 = vunpack.c.l.b16 %v894
    %v3856 = vunpack.c.h.b16 %v894
    %v3857 = vunpack.c.l.b16 %v895
    %v3858 = vunpack.c.h.b16 %v895
    %v3859 = vunpack.c.l.b16 %v896
    %v3860 = vunpack.c.h.b16 %v896
    %v3861 = vunpack.c.l.b16 %v897
    %v3862 = vunpack.c.h.b16 %v897
    %v3863 = vunpack.c.l.b16 %v898
    %v3864 = vunpack.c.h.b16 %v898
    %v3865 = vunpack.c.l.b16 %v899
    %v3866 = vunpack.c.h.b16 %v899
    %v3867 = vunpack.c.l.b16 %v900
    %v3868 = vunpack.c.h.b16 %v900
    %v3869 = vunpack.c.l.b16 %v901
    %v3870 = vunpack.c.h.b16 %v901
    %v3871 = vunpack.c.l.b16 %v902
    %v3872 = vunpack.c.h.b16 %v902
    %v3873 = vunpack.c.l.b16 %v903
    %v3874 = vunpack.c.h.b16 %v903
    %v3875 = vunpack.c.l.b16 %v904
    %v3876 = vunpack.c.h.b16 %v904
    %v3877 = vunpack.c.l.b16 %v905
    %v3878 = vunpack.c.h.b16 %v905
    %v3879 = vunpack.c.l.b16 %v906
    %v3880 = vunpack.c.h.b16 %v906
    %v3881 = vunpack.c.l.b16 %v907
    %v3882 = vunpack.c.h.b16 %v907
    %v3883 = vunpack.c.l.b16 %v908
    %v3884 = vunpack.c.h.b16 %v908
    %v3885 = vunpack.c.l.b16 %v909
    %v3886 = vunpack.c.h.b16 %v909
    %v3887 = vunpack.c.l.b16 %v910
    %v3888 = vunpack.c.h.b16 %v910
    %v3889 = vunpack.c.l.b16 %v911
    %v3890 = vunpack.c.h.b16 %v911
    %v3891 = vunpack.c.l.b16 %v912
    %v3892 = vunpack.c.h.b16 %v912
    %v3893 = vunpack.c.l.b16 %v913
    %v3894 = vunpack.c.h.b16 %v913
    %v3895 = vunpack.c.l.b16 %v914
    %v3896 = vunpack.c.h.b16 %v914
    %v3897 = vunpack.c.l.b16 %v915
    %v3898 = vunpack.c.h.b16 %v915
    %v3899 = vunpack.c.l.b16 %v916
    %v3900 = vunpack.c.h.b16 %v916
    %v3901 = vunpack.c.l.b16 %v917
    %v3902 = vunpack.c.h.b16 %v917
    %v3903 = vunpack.c.l.b16 %v918
    %v3904 = vunpack.c.h.b16 %v918
    %v3905 = vunpack.c.l.b16 %v919
    %v3906 = vunpack.c.h.b16 %v919
    %v3907 = vunpack.c.l.b16 %v920
    %v3908 = vunpack.c.h.b16 %v920
    %v3909 = vunpack.c.l.b16 %v921
    %v3910 = vunpack.c.h.b16 %v921
    %v3911 = vunpack.c.l.b16 %v922
    %v3912 = vunpack.c.h.b16 %v922
    %v3913 = vunpack.c.l.b16 %v923
    %v3914 = vunpack.c.h.b16 %v923
    %v3915 = vunpack.c.l.b16 %v924
    %v3916 = vunpack.c.h.b16 %v924
    %v3917 = vunpack.c.l.b16 %v925
    %v3918 = vunpack.c.h.b16 %v925
    %v3919 = vunpack.c.l.b16 %v926
    %v3920 = vunpack.c.h.b16 %v926
    %v3921 = vunpack.c.l.b16 %v927
    %v3922 = vunpack.c.h.b16 %v927
    %v3923 = vunpack.c.l.b16 %v928
    %v3924 = vunpack.c.h.b16 %v928
    %v3925 = vunpack.c.l.b16 %v929
    %v3926 = vunpack.c.h.b16 %v929
    %v3927 = vunpack.c.l.b16 %v930
    %v3928 = vunpack.c.h.b16 %v930
    %v3929 = vunpack.c.l.b16 %v931
    %v3930 = vunpack.c.h.b16 %v931
    %v3931 = vunpack.c.l.b16 %v932
    %v3932 = vunpack.c.h.b16 %v932
    %v3933 = vunpack.c.l.b16 %v933
    %v3934 = vunpack.c.h.b16 %v933
    %v3935 = vunpack.c.l.b16 %v934
    %v3936 = vunpack.c.h.b16 %v934
    %v3937 = vunpack.c.l.b16 %v935
    %v3938 = vunpack.c.h.b16 %v935
    %v3939 = vunpack.c.l.b16 %v936
    %v3940 = vunpack.c.h.b16 %v936
    %v3941 = vunpack.c.l.b16 %v937
    %v3942 = vunpack.c.h.b16 %v937
    %v3943 = vunpack.c.l.b16 %v938
    %v3944 = vunpack.c.h.b16 %v938
    %v3945 = vunpack.c.l.b16 %v939
    %v3946 = vunpack.c.h.b16 %v939
    %v3947 = vunpack.c.l.b16 %v940
    %v3948 = vunpack.c.h.b16 %v940
    %v3949 = vunpack.c.l.b16 %v941
    %v3950 = vunpack.c.h.b16 %v941
    %v3951 = vunpack.c.l.b16 %v942
    %v3952 = vunpack.c.h.b16 %v942
    %v3953 = vunpack.c.l.b16 %v943
    %v3954 = vunpack.c.h.b16 %v943
    %v3955 = vunpack.c.l.b16 %v944
    %v3956 = vunpack.c.h.b16 %v944
    %v3957 = vunpack.c.l.b16 %v945
    %v3958 = vunpack.c.h.b16 %v945
    %v3959 = vunpack.c.l.b16 %v946
    %v3960 = vunpack.c.h.b16 %v946
    %v3961 = vunpack.c.l.b16 %v947
    %v3962 = vunpack.c.h.b16 %v947
    %v3963 = vunpack.c.l.b16 %v948
    %v3964 = vunpack.c.h.b16 %v948
    %v3965 = vunpack.c.l.b16 %v949
    %v3966 = vunpack.c.h.b16 %v949
    %v3967 = vunpack.c.l.b16 %v950
    %v3968 = vunpack.c.h.b16 %v950
    %v3969 = vunpack.c.l.b16 %v951
    %v3970 = vunpack.c.h.b16 %v951
    %v3971 = vunpack.c.l.b16 %v952
    %v3972 = vunpack.c.h.b16 %v952
    %v3973 = vunpack.c.l.b16 %v953
    %v3974 = vunpack.c.h.b16 %v953
    %v3975 = vunpack.c.l.b16 %v954
    %v3976 = vunpack.c.h.b16 %v954
    %v3977 = vunpack.c.l.b16 %v955
    %v3978 = vunpack.c.h.b16 %v955
    %v3979 = vunpack.c.l.b16 %v956
    %v3980 = vunpack.c.h.b16 %v956
    %v3981 = vunpack.c.l.b16 %v957
    %v3982 = vunpack.c.h.b16 %v957
    %v3983 = vunpack.c.l.b16 %v958
    %v3984 = vunpack.c.h.b16 %v958
    %v3985 = vunpack.c.l.b16 %v959
    %v3986 = vunpack.c.h.b16 %v959
    %v3987 = vunpack.c.l.b16 %v960
    %v3988 = vunpack.c.h.b16 %v960
    %v3989 = vunpack.c.l.b16 %v961
    %v3990 = vunpack.c.h.b16 %v961
    %v3991 = vunpack.c.l.b16 %v962
    %v3992 = vunpack.c.h.b16 %v962
    %v3993 = vunpack.c.l.b16 %v963
    %v3994 = vunpack.c.h.b16 %v963
    %v3995 = vunpack.c.l.b16 %v964
    %v3996 = vunpack.c.h.b16 %v964
    %v3997 = vunpack.c.l.b16 %v965
    %v3998 = vunpack.c.h.b16 %v965
    %v3999 = vunpack.c.l.b16 %v966
    %v4000 = vunpack.c.h.b16 %v966
    %v4001 = vunpack.c.l.b16 %v967
    %v4002 = vunpack.c.h.b16 %v967
    %v4003 = vunpack.c.l.b16 %v968
    %v4004 = vunpack.c.h.b16 %v968
    %v4005 = vunpack.c.l.b16 %v969
    %v4006 = vunpack.c.h.b16 %v969
    %v4007 = vunpack.c.l.b16 %v970
    %v4008 = vunpack.c.h.b16 %v970
    %v4009 = vunpack.c.l.b16 %v971
    %v4010 = vunpack.c.h.b16 %v971
    %v4011 = vunpack.c.l.b16 %v972
    %v4012 = vunpack.c.h.b16 %v972
    %v4013 = vunpack.c.l.b16 %v973
    %v4014 = vunpack.c.h.b16 %v973
    %v4015 = vunpack.c.l.b16 %v974
    %v4016 = vunpack.c.h.b16 %v974
    %v4017 = vunpack.c.l.b16 %v975
    %v4018 = vunpack.c.h.b16 %v975
    %v4019 = vunpack.c.l.b16 %v976
    %v4020 = vunpack.c.h.b16 %v976
    %v4021 = vunpack.c.l.b16 %v977
    %v4022 = vunpack.c.h.b16 %v977
    %v4023 = vunpack.c.l.b16 %v978
    %v4024 = vunpack.c.h.b16 %v978
    %v4025 = vunpack.c.l.b16 %v979
    %v4026 = vunpack.c.h.b16 %v979
    %v4027 = vunpack.c.l.b16 %v980
    %v4028 = vunpack.c.h.b16 %v980
    %v4029 = vunpack.c.l.b16 %v981
    %v4030 = vunpack.c.h.b16 %v981
    %v4031 = vunpack.c.l.b16 %v982
    %v4032 = vunpack.c.h.b16 %v982
    %v4033 = vunpack.c.l.b16 %v983
    %v4034 = vunpack.c.h.b16 %v983
    %v4035 = vunpack.c.l.b16 %v984
    %v4036 = vunpack.c.h.b16 %v984
    %v4037 = vunpack.c.l.b16 %v985
    %v4038 = vunpack.c.h.b16 %v985
    %v4039 = vunpack.c.l.b16 %v986
    %v4040 = vunpack.c.h.b16 %v986
    %v4041 = vunpack.c.l.b16 %v987
    %v4042 = vunpack.c.h.b16 %v987
    %v4043 = vunpack.c.l.b16 %v988
    %v4044 = vunpack.c.h.b16 %v988
    %v4045 = vunpack.c.l.b16 %v989
    %v4046 = vunpack.c.h.b16 %v989
    %v4047 = vunpack.c.l.b16 %v990
    %v4048 = vunpack.c.h.b16 %v990
    %v4049 = vunpack.c.l.b16 %v991
    %v4050 = vunpack.c.h.b16 %v991
    %v4051 = vunpack.c.l.b16 %v992
    %v4052 = vunpack.c.h.b16 %v992
    %v4053 = vunpack.c.l.b16 %v993
    %v4054 = vunpack.c.h.b16 %v993
    %v4055 = vunpack.c.l.b16 %v994
    %v4056 = vunpack.c.h.b16 %v994
    %v4057 = vunpack.c.l.b16 %v995
    %v4058 = vunpack.c.h.b16 %v995
    %v4059 = vunpack.c.l.b16 %v996
    %v4060 = vunpack.c.h.b16 %v996
    %v4061 = vunpack.c.l.b16 %v997
    %v4062 = vunpack.c.h.b16 %v997
    %v4063 = vunpack.c.l.b16 %v998
    %v4064 = vunpack.c.h.b16 %v998
    %v4065 = vunpack.c.l.b16 %v999
    %v4066 = vunpack.c.h.b16 %v999
    %v4067 = vunpack.c.l.b16 %v1000
    %v4068 = vunpack.c.h.b16 %v1000
    %v4069 = vunpack.c.l.b16 %v1001
    %v4070 = vunpack.c.h.b16 %v1001
    %v4071 = vunpack.c.l.b16 %v1002
    %v4072 = vunpack.c.h.b16 %v1002
    %v4073 = vunpack.c.l.b16 %v1003
    %v4074 = vunpack.c.h.b16 %v1003
    %v4075 = vunpack.c.l.b16 %v1004
    %v4076 = vunpack.c.h.b16 %v1004
    %v4077 = vunpack.c.l.b16 %v1005
    %v4078 = vunpack.c.h.b16 %v1005
    %v4079 = vunpack.c.l.b16 %v1006
    %v4080 = vunpack.c.h.b16 %v1006
    %v4081 = vunpack.c.l.b16 %v1007
    %v4082 = vunpack.c.h.b16 %v1007
    %v4083 = vunpack.c.l.b16 %v1008
    %v4084 = vunpack.c.h.b16 %v1008
    %v4085 = vunpack.c.l.b16 %v1009
    %v4086 = vunpack.c.h.b16 %v1009
    %v4087 = vunpack.c.l.b16 %v1010
    %v4088 = vunpack.c.h.b16 %v1010
    %v4089 = vunpack.c.l.b16 %v1011
    %v4090 = vunpack.c.h.b16 %v1011
    %v4091 = vunpack.c.l.b16 %v1012
    %v4092 = vunpack.c.h.b16 %v1012
    %v4093 = vunpack.c.l.b16 %v1013
    %v4094 = vunpack.c.h.b16 %v1013
    %v4095 = vunpack.c.l.b16 %v1014
    %v4096 = vunpack.c.h.b16 %v1014
    %v4097 = vunpack.c.l.b16 %v1015
    %v4098 = vunpack.c.h.b16 %v1015
    %v4099 = vunpack.c.l.b16 %v1016
    %v4100 = vunpack.c.h.b16 %v1016
    %v4101 = vunpack.c.l.b16 %v1017
    %v4102 = vunpack.c.h.b16 %v1017
    %v4103 = vunpack.c.l.b16 %v1018
    %v4104 = vunpack.c.h.b16 %v1018
    %v4105 = vunpack.c.l.b16 %v1019
    %v4106 = vunpack.c.h.b16 %v1019
    %v4107 = vunpack.c.l.b16 %v1020
    %v4108 = vunpack.c.h.b16 %v1020
    %v4109 = vunpack.c.l.b16 %v1021
    %v4110 = vunpack.c.h.b16 %v1021
    %v4111 = vunpack.c.l.b16 %v1022
    %v4112 = vunpack.c.h.b16 %v1022
    %v4113 = vunpack.c.l.b16 %v1023
    %v4114 = vunpack.c.h.b16 %v1023
    %v4115 = vunpack.c.l.b16 %v1024
    %v4116 = vunpack.c.h.b16 %v1024
    %v4117 = vunpack.c.l.b16 %v1025
    %v4118 = vunpack.c.h.b16 %v1025
    %v4119 = vunpack.c.l.b16 %v1026
    %v4120 = vunpack.c.h.b16 %v1026
    %v4121 = vunpack.c.l.b16 %v1027
    %v4122 = vunpack.c.h.b16 %v1027
    %v4123 = vunpack.c.l.b16 %v1028
    %v4124 = vunpack.c.h.b16 %v1028
    %v4125 = vunpack.c.l.b16 %v1029
    %v4126 = vunpack.c.h.b16 %v1029
    %v4127 = vunpack.c.l.b16 %v1030
    %v4128 = vunpack.c.h.b16 %v1030
    %v4129 = vunpack.c.l.b16 %v1031
    %v4130 = vunpack.c.h.b16 %v1031
    %v4131 = vunpack.c.l.b16 %v1032
    %v4132 = vunpack.c.h.b16 %v1032
    %v4133 = vunpack.c.l.b16 %v1033
    %v4134 = vunpack.c.h.b16 %v1033
    %v4135 = vunpack.c.l.b16 %v1034
    %v4136 = vunpack.c.h.b16 %v1034
    %v4137 = vunpack.c.l.b16 %v1035
    %v4138 = vunpack.c.h.b16 %v1035
    %v4139 = vunpack.c.l.b16 %v1036
    %v4140 = vunpack.c.h.b16 %v1036
    %v4141 = vunpack.c.l.b16 %v1037
    %v4142 = vunpack.c.h.b16 %v1037
    %v4143 = vunpack.c.l.b16 %v1038
    %v4144 = vunpack.c.h.b16 %v1038
    %v4145 = vunpack.c.l.b16 %v1039
    %v4146 = vunpack.c.h.b16 %v1039
    %v4147 = vunpack.c.l.b16 %v1040
    %v4148 = vunpack.c.h.b16 %v1040
    %v4149 = vunpack.c.l.b16 %v1041
    %v4150 = vunpack.c.h.b16 %v1041
    %v4151 = vunpack.c.l.b16 %v1042
    %v4152 = vunpack.c.h.b16 %v1042
    %v4153 = vunpack.c.l.b16 %v1043
    %v4154 = vunpack.c.h.b16 %v1043
    %v4155 = vunpack.c.l.b16 %v1044
    %v4156 = vunpack.c.h.b16 %v1044
    %v4157 = vunpack.c.l.b16 %v1045
    %v4158 = vunpack.c.h.b16 %v1045
    %v4159 = vunpack.c.l.b16 %v1046
    %v4160 = vunpack.c.h.b16 %v1046
    %v4161 = vunpack.c.l.b16 %v1047
    %v4162 = vunpack.c.h.b16 %v1047
    %v4163 = vunpack.c.l.b16 %v1048
    %v4164 = vunpack.c.h.b16 %v1048
    %v4165 = vunpack.c.l.b16 %v1049
    %v4166 = vunpack.c.h.b16 %v1049
    %v4167 = vunpack.c.l.b16 %v1050
    %v4168 = vunpack.c.h.b16 %v1050
    %v4169 = vunpack.c.l.b16 %v1051
    %v4170 = vunpack.c.h.b16 %v1051
    %v4171 = vunpack.c.l.b16 %v1052
    %v4172 = vunpack.c.h.b16 %v1052
    %v4173 = vunpack.c.l.b16 %v1053
    %v4174 = vunpack.c.h.b16 %v1053
    %v4175 = vunpack.c.l.b16 %v1054
    %v4176 = vunpack.c.h.b16 %v1054
    %v4177 = vunpack.c.l.b16 %v1055
    %v4178 = vunpack.c.h.b16 %v1055
    %v4179 = vunpack.c.l.b16 %v1056
    %v4180 = vunpack.c.h.b16 %v1056
    %v4181 = vunpack.c.l.b16 %v1057
    %v4182 = vunpack.c.h.b16 %v1057
    %v4183 = vunpack.c.l.b16 %v1058
    %v4184 = vunpack.c.h.b16 %v1058
    %v4185 = vunpack.c.l.b16 %v1059
    %v4186 = vunpack.c.h.b16 %v1059
    %v4187 = vunpack.c.l.b16 %v1060
    %v4188 = vunpack.c.h.b16 %v1060
    %v4189 = vunpack.c.l.b16 %v1061
    %v4190 = vunpack.c.h.b16 %v1061
    %v4191 = vunpack.c.l.b16 %v1062
    %v4192 = vunpack.c.h.b16 %v1062
    %v4193 = vunpack.c.l.b16 %v1063
    %v4194 = vunpack.c.h.b16 %v1063
    %v4195 = vunpack.c.l.b16 %v1064
    %v4196 = vunpack.c.h.b16 %v1064
    %v4197 = vunpack.c.l.b16 %v1065
    %v4198 = vunpack.c.h.b16 %v1065
    %v4199 = vunpack.c.l.b16 %v1066
    %v4200 = vunpack.c.h.b16 %v1066
    %v4201 = vunpack.c.l.b16 %v1067
    %v4202 = vunpack.c.h.b16 %v1067
    %v4203 = vunpack.c.l.b16 %v1068
    %v4204 = vunpack.c.h.b16 %v1068
    %v4205 = vunpack.c.l.b16 %v1069
    %v4206 = vunpack.c.h.b16 %v1069
    %v4207 = vunpack.c.l.b16 %v1070
    %v4208 = vunpack.c.h.b16 %v1070
    %v4209 = vunpack.c.l.b16 %v1071
    %v4210 = vunpack.c.h.b16 %v1071
    %v4211 = vunpack.c.l.b16 %v1072
    %v4212 = vunpack.c.h.b16 %v1072
    %v4213 = vunpack.c.l.b16 %v1073
    %v4214 = vunpack.c.h.b16 %v1073
    %v4215 = vunpack.c.l.b16 %v1074
    %v4216 = vunpack.c.h.b16 %v1074
    %v4217 = vunpack.c.l.b16 %v1075
    %v4218 = vunpack.c.h.b16 %v1075
    %v4219 = vunpack.c.l.b16 %v1076
    %v4220 = vunpack.c.h.b16 %v1076
    %v4221 = vunpack.c.l.b16 %v1077
    %v4222 = vunpack.c.h.b16 %v1077
    %v4223 = vunpack.c.l.b16 %v1078
    %v4224 = vunpack.c.h.b16 %v1078
    %v4225 = vunpack.c.l.b16 %v1079
    %v4226 = vunpack.c.h.b16 %v1079
    %v4227 = vunpack.c.l.b16 %v1080
    %v4228 = vunpack.c.h.b16 %v1080
    %v4229 = vunpack.c.l.b16 %v1081
    %v4230 = vunpack.c.h.b16 %v1081
    %v4231 = vunpack.c.l.b16 %v1082
    %v4232 = vunpack.c.h.b16 %v1082
    %v4233 = vunpack.c.l.b16 %v1083
    %v4234 = vunpack.c.h.b16 %v1083
    %v4235 = vunpack.c.l.b16 %v1084
    %v4236 = vunpack.c.h.b16 %v1084
    %v4237 = vunpack.c.l.b16 %v1085
    %v4238 = vunpack.c.h.b16 %v1085
    %v4239 = vunpack.c.l.b16 %v1086
    %v4240 = vunpack.c.h.b16 %v1086
    %v4241 = vunpack.c.l.b16 %v1087
    %v4242 = vunpack.c.h.b16 %v1087
    %v4243 = vunpack.c.l.b16 %v1088
    %v4244 = vunpack.c.h.b16 %v1088
    %v4245 = vunpack.c.l.b16 %v1089
    %v4246 = vunpack.c.h.b16 %v1089
    %v4247 = vunpack.c.l.b16 %v1090
    %v4248 = vunpack.c.h.b16 %v1090
    %v4249 = vunpack.c.l.b16 %v1091
    %v4250 = vunpack.c.h.b16 %v1091
    %v4251 = vunpack.c.l.b16 %v1092
    %v4252 = vunpack.c.h.b16 %v1092
    %v4253 = vunpack.c.l.b16 %v1093
    %v4254 = vunpack.c.h.b16 %v1093
    %v4255 = vunpack.c.l.b16 %v1094
    %v4256 = vunpack.c.h.b16 %v1094
    %v4257 = vunpack.c.l.b16 %v1095
    %v4258 = vunpack.c.h.b16 %v1095
    %v4259 = vunpack.c.l.b16 %v1096
    %v4260 = vunpack.c.h.b16 %v1096
    %v4261 = vunpack.c.l.b16 %v1097
    %v4262 = vunpack.c.h.b16 %v1097
    %v4263 = vunpack.c.l.b16 %v1098
    %v4264 = vunpack.c.h.b16 %v1098
    %v4265 = vunpack.c.l.b16 %v1099
    %v4266 = vunpack.c.h.b16 %v1099
    %v4267 = vunpack.c.l.b16 %v1100
    %v4268 = vunpack.c.h.b16 %v1100
    %v4269 = vunpack.c.l.b16 %v1101
    %v4270 = vunpack.c.h.b16 %v1101
    %v4271 = vunpack.c.l.b16 %v1102
    %v4272 = vunpack.c.h.b16 %v1102
    %v4273 = vunpack.c.l.b16 %v1103
    %v4274 = vunpack.c.h.b16 %v1103
    %v4275 = vunpack.c.l.b16 %v1104
    %v4276 = vunpack.c.h.b16 %v1104
    %v4277 = vunpack.c.l.b16 %v1105
    %v4278 = vunpack.c.h.b16 %v1105
    %v4279 = vunpack.c.l.b16 %v1106
    %v4280 = vunpack.c.h.b16 %v1106
    %v4281 = vunpack.c.l.b16 %v1107
    %v4282 = vunpack.c.h.b16 %v1107
    %v4283 = vunpack.c.l.b16 %v1108
    %v4284 = vunpack.c.h.b16 %v1108
    %v4285 = vunpack.c.l.b16 %v1109
    %v4286 = vunpack.c.h.b16 %v1109
    %v4287 = vunpack.c.l.b16 %v1110
    %v4288 = vunpack.c.h.b16 %v1110
    %v4289 = vunpack.c.l.b16 %v1111
    %v4290 = vunpack.c.h.b16 %v1111
    %v4291 = vunpack.c.l.b16 %v1112
    %v4292 = vunpack.c.h.b16 %v1112
    %v4293 = vunpack.c.l.b16 %v1113
    %v4294 = vunpack.c.h.b16 %v1113
    %v4295 = vunpack.c.l.b16 %v1114
    %v4296 = vunpack.c.h.b16 %v1114
    %v4297 = vunpack.c.l.b16 %v1115
    %v4298 = vunpack.c.h.b16 %v1115
    %v4299 = vunpack.c.l.b16 %v1116
    %v4300 = vunpack.c.h.b16 %v1116
    %v4301 = vunpack.c.l.b16 %v1117
    %v4302 = vunpack.c.h.b16 %v1117
    %v4303 = vunpack.c.l.b16 %v1118
    %v4304 = vunpack.c.h.b16 %v1118
    %v4305 = vunpack.c.l.b16 %v1119
    %v4306 = vunpack.c.h.b16 %v1119
    %v4307 = vunpack.c.l.b16 %v1120
    %v4308 = vunpack.c.h.b16 %v1120
    %v4309 = vpack.c.b16 %v2269, %v2261
    %v4310 = vpack.c.b16 %v2270, %v2262
    %v4311 = vpack.c.b16 %v2271, %v2263
    %v4312 = vpack.c.b16 %v2272, %v2264
    %v4313 = vpack.c.b16 %v2273, %v2265
    %v4314 = vpack.c.b16 %v2274, %v2266
    %v4315 = vpack.c.b16 %v2275, %v2267
    %v4316 = vpack.c.b16 %v2276, %v2268
    %v4317 = vpack.c.b16 %v2285, %v2277
    %v4318 = vpack.c.b16 %v2286, %v2278
    %v4319 = vpack.c.b16 %v2287, %v2279
    %v4320 = vpack.c.b16 %v2288, %v2280
    %v4321 = vpack.c.b16 %v2289, %v2281
    %v4322 = vpack.c.b16 %v2290, %v2282
    %v4323 = vpack.c.b16 %v2291, %v2283
    %v4324 = vpack.c.b16 %v2292, %v2284
    %v4325 = vpack.c.b16 %v2301, %v2293
    %v4326 = vpack.c.b16 %v2302, %v2294
    %v4327 = vpack.c.b16 %v2303, %v2295
    %v4328 = vpack.c.b16 %v2304, %v2296
    %v4329 = vpack.c.b16 %v2305, %v2297
    %v4330 = vpack.c.b16 %v2306, %v2298
    %v4331 = vpack.c.b16 %v2307, %v2299
    %v4332 = vpack.c.b16 %v2308, %v2300
    %v4333 = vpack.c.b16 %v2317, %v2309
    %v4334 = vpack.c.b16 %v2318, %v2310
    %v4335 = vpack.c.b16 %v2319, %v2311
    %v4336 = vpack.c.b16 %v2320, %v2312
    %v4337 = vpack.c.b16 %v2321, %v2313
    %v4338 = vpack.c.b16 %v2322, %v2314
    %v4339 = vpack.c.b16 %v2323, %v2315
    %v4340 = vpack.c.b16 %v2324, %v2316
    %v4341 = vpack.c.b16 %v2333, %v2325
    %v4342 = vpack.c.b16 %v2334, %v2326
    %v4343 = vpack.c.b16 %v2335, %v2327
    %v4344 = vpack.c.b16 %v2336, %v2328
    %v4345 = vpack.c.b16 %v2337, %v2329
    %v4346 = vpack.c.b16 %v2338, %v2330
    %v4347 = vpack.c.b16 %v2339, %v2331
    %v4348 = vpack.c.b16 %v2340, %v2332
    %v4349 = vpack.c.b16 %v2349, %v2341
    %v4350 = vpack.c.b16 %v2350, %v2342
    %v4351 = vpack.c.b16 %v2351, %v2343
    %v4352 = vpack.c.b16 %v2352, %v2344
    %v4353 = vpack.c.b16 %v2353, %v2345
    %v4354 = vpack.c.b16 %v2354, %v2346
    %v4355 = vpack.c.b16 %v2355, %v2347
    %v4356 = vpack.c.b16 %v2356, %v2348
    %v4357 = vpack.c.b16 %v2365, %v2357
    %v4358 = vpack.c.b16 %v2366, %v2358
    %v4359 = vpack.c.b16 %v2367, %v2359
    %v4360 = vpack.c.b16 %v2368, %v2360
    %v4361 = vpack.c.b16 %v2369, %v2361
    %v4362 = vpack.c.b16 %v2370, %v2362
    %v4363 = vpack.c.b16 %v2371, %v2363
    %v4364 = vpack.c.b16 %v2372, %v2364
    %v4365 = vpack.c.b16 %v2381, %v2373
    %v4366 = vpack.c.b16 %v2382, %v2374
    %v4367 = vpack.c.b16 %v2383, %v2375
    %v4368 = vpack.c.b16 %v2384, %v2376
    %v4369 = vpack.c.b16 %v2385, %v2377
    %v4370 = vpack.c.b16 %v2386, %v2378
    %v4371 = vpack.c.b16 %v2387, %v2379
    %v4372 = vpack.c.b16 %v2388, %v2380
    %v4373 = vpack.c.b16 %v2397, %v2389
    %v4374 = vpack.c.b16 %v2398, %v2390
    %v4375 = vpack.c.b16 %v2399, %v2391
    %v4376 = vpack.c.b16 %v2400, %v2392
    %v4377 = vpack.c.b16 %v2401, %v2393
    %v4378 = vpack.c.b16 %v2402, %v2394
    %v4379 = vpack.c.b16 %v2403, %v2395
    %v4380 = vpack.c.b16 %v2404, %v2396
    %v4381 = vpack.c.b16 %v2413, %v2405
    %v4382 = vpack.c.b16 %v2414, %v2406
    %v4383 = vpack.c.b16 %v2415, %v2407
    %v4384 = vpack.c.b16 %v2416, %v2408
    %v4385 = vpack.c.b16 %v2417, %v2409
    %v4386 = vpack.c.b16 %v2418, %v2410
    %v4387 = vpack.c.b16 %v2419, %v2411
    %v4388 = vpack.c.b16 %v2420, %v2412
    %v4389 = vpack.c.b16 %v2429, %v2421
    %v4390 = vpack.c.b16 %v2430, %v2422
    %v4391 = vpack.c.b16 %v2431, %v2423
    %v4392 = vpack.c.b16 %v2432, %v2424
    %v4393 = vpack.c.b16 %v2433, %v2425
    %v4394 = vpack.c.b16 %v2434, %v2426
    %v4395 = vpack.c.b16 %v2435, %v2427
    %v4396 = vpack.c.b16 %v2436, %v2428
    %v4397 = vpack.c.b16 %v2445, %v2437
    %v4398 = vpack.c.b16 %v2446, %v2438
    %v4399 = vpack.c.b16 %v2447, %v2439
    %v4400 = vpack.c.b16 %v2448, %v2440
    %v4401 = vpack.c.b16 %v2449, %v2441
    %v4402 = vpack.c.b16 %v2450, %v2442
    %v4403 = vpack.c.b16 %v2451, %v2443
    %v4404 = vpack.c.b16 %v2452, %v2444
    %v4405 = vpack.c.b16 %v2461, %v2453
    %v4406 = vpack.c.b16 %v2462, %v2454
    %v4407 = vpack.c.b16 %v2463, %v2455
    %v4408 = vpack.c.b16 %v2464, %v2456
    %v4409 = vpack.c.b16 %v2465, %v2457
    %v4410 = vpack.c.b16 %v2466, %v2458
    %v4411 = vpack.c.b16 %v2467, %v2459
    %v4412 = vpack.c.b16 %v2468, %v2460
    %v4413 = vpack.c.b16 %v2477, %v2469
    %v4414 = vpack.c.b16 %v2478, %v2470
    %v4415 = vpack.c.b16 %v2479, %v2471
    %v4416 = vpack.c.b16 %v2480, %v2472
    %v4417 = vpack.c.b16 %v2481, %v2473
    %v4418 = vpack.c.b16 %v2482, %v2474
    %v4419 = vpack.c.b16 %v2483, %v2475
    %v4420 = vpack.c.b16 %v2484, %v2476
    %v4421 = vpack.c.b16 %v2493, %v2485
    %v4422 = vpack.c.b16 %v2494, %v2486
    %v4423 = vpack.c.b16 %v2495, %v2487
    %v4424 = vpack.c.b16 %v2496, %v2488
    %v4425 = vpack.c.b16 %v2497, %v2489
    %v4426 = vpack.c.b16 %v2498, %v2490
    %v4427 = vpack.c.b16 %v2499, %v2491
    %v4428 = vpack.c.b16 %v2500, %v2492
    %v4429 = vpack.c.b16 %v2509, %v2501
    %v4430 = vpack.c.b16 %v2510, %v2502
    %v4431 = vpack.c.b16 %v2511, %v2503
    %v4432 = vpack.c.b16 %v2512, %v2504
    %v4433 = vpack.c.b16 %v2513, %v2505
    %v4434 = vpack.c.b16 %v2514, %v2506
    %v4435 = vpack.c.b16 %v2515, %v2507
    %v4436 = vpack.c.b16 %v2516, %v2508
    %v4437 = vpack.c.b16 %v2525, %v2517
    %v4438 = vpack.c.b16 %v2526, %v2518
    %v4439 = vpack.c.b16 %v2527, %v2519
    %v4440 = vpack.c.b16 %v2528, %v2520
    %v4441 = vpack.c.b16 %v2529, %v2521
    %v4442 = vpack.c.b16 %v2530, %v2522
    %v4443 = vpack.c.b16 %v2531, %v2523
    %v4444 = vpack.c.b16 %v2532, %v2524
    %v4445 = vpack.c.b16 %v2541, %v2533
    %v4446 = vpack.c.b16 %v2542, %v2534
    %v4447 = vpack.c.b16 %v2543, %v2535
    %v4448 = vpack.c.b16 %v2544, %v2536
    %v4449 = vpack.c.b16 %v2545, %v2537
    %v4450 = vpack.c.b16 %v2546, %v2538
    %v4451 = vpack.c.b16 %v2547, %v2539
    %v4452 = vpack.c.b16 %v2548, %v2540
    %v4453 = vpack.c.b16 %v2557, %v2549
    %v4454 = vpack.c.b16 %v2558, %v2550
    %v4455 = vpack.c.b16 %v2559, %v2551
    %v4456 = vpack.c.b16 %v2560, %v2552
    %v4457 = vpack.c.b16 %v2561, %v2553
    %v4458 = vpack.c.b16 %v2562, %v2554
    %v4459 = vpack.c.b16 %v2563, %v2555
    %v4460 = vpack.c.b16 %v2564, %v2556
    %v4461 = vpack.c.b16 %v2573, %v2565
    %v4462 = vpack.c.b16 %v2574, %v2566
    %v4463 = vpack.c.b16 %v2575, %v2567
    %v4464 = vpack.c.b16 %v2576, %v2568
    %v4465 = vpack.c.b16 %v2577, %v2569
    %v4466 = vpack.c.b16 %v2578, %v2570
    %v4467 = vpack.c.b16 %v2579, %v2571
    %v4468 = vpack.c.b16 %v2580, %v2572
    %v4469 = vpack.c.b16 %v2589, %v2581
    %v4470 = vpack.c.b16 %v2590, %v2582
    %v4471 = vpack.c.b16 %v2591, %v2583
    %v4472 = vpack.c.b16 %v2592, %v2584
    %v4473 = vpack.c.b16 %v2593, %v2585
    %v4474 = vpack.c.b16 %v2594, %v2586
    %v4475 = vpack.c.b16 %v2595, %v2587
    %v4476 = vpack.c.b16 %v2596, %v2588
    %v4477 = vpack.c.b16 %v2605, %v2597
    %v4478 = vpack.c.b16 %v2606, %v2598
    %v4479 = vpack.c.b16 %v2607, %v2599
    %v4480 = vpack.c.b16 %v2608, %v2600
    %v4481 = vpack.c.b16 %v2609, %v2601
    %v4482 = vpack.c.b16 %v2610, %v2602
    %v4483 = vpack.c.b16 %v2611, %v2603
    %v4484 = vpack.c.b16 %v2612, %v2604
    %v4485 = vpack.c.b16 %v2621, %v2613
    %v4486 = vpack.c.b16 %v2622, %v2614
    %v4487 = vpack.c.b16 %v2623, %v2615
    %v4488 = vpack.c.b16 %v2624, %v2616
    %v4489 = vpack.c.b16 %v2625, %v2617
    %v4490 = vpack.c.b16 %v2626, %v2618
    %v4491 = vpack.c.b16 %v2627, %v2619
    %v4492 = vpack.c.b16 %v2628, %v2620
    %v4493 = vpack.c.b16 %v2637, %v2629
    %v4494 = vpack.c.b16 %v2638, %v2630
    %v4495 = vpack.c.b16 %v2639, %v2631
    %v4496 = vpack.c.b16 %v2640, %v2632
    %v4497 = vpack.c.b16 %v2641, %v2633
    %v4498 = vpack.c.b16 %v2642, %v2634
    %v4499 = vpack.c.b16 %v2643, %v2635
    %v4500 = vpack.c.b16 %v2644, %v2636
    %v4501 = vpack.c.b16 %v2653, %v2645
    %v4502 = vpack.c.b16 %v2654, %v2646
    %v4503 = vpack.c.b16 %v2655, %v2647
    %v4504 = vpack.c.b16 %v2656, %v2648
    %v4505 = vpack.c.b16 %v2657, %v2649
    %v4506 = vpack.c.b16 %v2658, %v2650
    %v4507 = vpack.c.b16 %v2659, %v2651
    %v4508 = vpack.c.b16 %v2660, %v2652
    %v4509 = vpack.c.b16 %v2669, %v2661
    %v4510 = vpack.c.b16 %v2670, %v2662
    %v4511 = vpack.c.b16 %v2671, %v2663
    %v4512 = vpack.c.b16 %v2672, %v2664
    %v4513 = vpack.c.b16 %v2673, %v2665
    %v4514 = vpack.c.b16 %v2674, %v2666
    %v4515 = vpack.c.b16 %v2675, %v2667
    %v4516 = vpack.c.b16 %v2676, %v2668
    %v4517 = vpack.c.b16 %v2685, %v2677
    %v4518 = vpack.c.b16 %v2686, %v2678
    %v4519 = vpack.c.b16 %v2687, %v2679
    %v4520 = vpack.c.b16 %v2688, %v2680
    %v4521 = vpack.c.b16 %v2689, %v2681
    %v4522 = vpack.c.b16 %v2690, %v2682
    %v4523 = vpack.c.b16 %v2691, %v2683
    %v4524 = vpack.c.b16 %v2692, %v2684
    %v4525 = vpack.c.b16 %v2701, %v2693
    %v4526 = vpack.c.b16 %v2702, %v2694
    %v4527 = vpack.c.b16 %v2703, %v2695
    %v4528 = vpack.c.b16 %v2704, %v2696
    %v4529 = vpack.c.b16 %v2705, %v2697
    %v4530 = vpack.c.b16 %v2706, %v2698
    %v4531 = vpack.c.b16 %v2707, %v2699
    %v4532 = vpack.c.b16 %v2708, %v2700
    %v4533 = vpack.c.b16 %v2717, %v2709
    %v4534 = vpack.c.b16 %v2718, %v2710
    %v4535 = vpack.c.b16 %v2719, %v2711
    %v4536 = vpack.c.b16 %v2720, %v2712
    %v4537 = vpack.c.b16 %v2721, %v2713
    %v4538 = vpack.c.b16 %v2722, %v2714
    %v4539 = vpack.c.b16 %v2723, %v2715
    %v4540 = vpack.c.b16 %v2724, %v2716
    %v4541 = vpack.c.b16 %v2733, %v2725
    %v4542 = vpack.c.b16 %v2734, %v2726
    %v4543 = vpack.c.b16 %v2735, %v2727
    %v4544 = vpack.c.b16 %v2736, %v2728
    %v4545 = vpack.c.b16 %v2737, %v2729
    %v4546 = vpack.c.b16 %v2738, %v2730
    %v4547 = vpack.c.b16 %v2739, %v2731
    %v4548 = vpack.c.b16 %v2740, %v2732
    %v4549 = vpack.c.b16 %v2749, %v2741
    %v4550 = vpack.c.b16 %v2750, %v2742
    %v4551 = vpack.c.b16 %v2751, %v2743
    %v4552 = vpack.c.b16 %v2752, %v2744
    %v4553 = vpack.c.b16 %v2753, %v2745
    %v4554 = vpack.c.b16 %v2754, %v2746
    %v4555 = vpack.c.b16 %v2755, %v2747
    %v4556 = vpack.c.b16 %v2756, %v2748
    %v4557 = vpack.c.b16 %v2765, %v2757
    %v4558 = vpack.c.b16 %v2766, %v2758
    %v4559 = vpack.c.b16 %v2767, %v2759
    %v4560 = vpack.c.b16 %v2768, %v2760
    %v4561 = vpack.c.b16 %v2769, %v2761
    %v4562 = vpack.c.b16 %v2770, %v2762
    %v4563 = vpack.c.b16 %v2771, %v2763
    %v4564 = vpack.c.b16 %v2772, %v2764
    %v4565 = vpack.c.b16 %v2781, %v2773
    %v4566 = vpack.c.b16 %v2782, %v2774
    %v4567 = vpack.c.b16 %v2783, %v2775
    %v4568 = vpack.c.b16 %v2784, %v2776
    %v4569 = vpack.c.b16 %v2785, %v2777
    %v4570 = vpack.c.b16 %v2786, %v2778
    %v4571 = vpack.c.b16 %v2787, %v2779
    %v4572 = vpack.c.b16 %v2788, %v2780
    %v4573 = vpack.c.b16 %v2797, %v2789
    %v4574 = vpack.c.b16 %v2798, %v2790
    %v4575 = vpack.c.b16 %v2799, %v2791
    %v4576 = vpack.c.b16 %v2800, %v2792
    %v4577 = vpack.c.b16 %v2801, %v2793
    %v4578 = vpack.c.b16 %v2802, %v2794
    %v4579 = vpack.c.b16 %v2803, %v2795
    %v4580 = vpack.c.b16 %v2804, %v2796
    %v4581 = vpack.c.b16 %v2813, %v2805
    %v4582 = vpack.c.b16 %v2814, %v2806
    %v4583 = vpack.c.b16 %v2815, %v2807
    %v4584 = vpack.c.b16 %v2816, %v2808
    %v4585 = vpack.c.b16 %v2817, %v2809
    %v4586 = vpack.c.b16 %v2818, %v2810
    %v4587 = vpack.c.b16 %v2819, %v2811
    %v4588 = vpack.c.b16 %v2820, %v2812
    %v4589 = vpack.c.b16 %v2829, %v2821
    %v4590 = vpack.c.b16 %v2830, %v2822
    %v4591 = vpack.c.b16 %v2831, %v2823
    %v4592 = vpack.c.b16 %v2832, %v2824
    %v4593 = vpack.c.b16 %v2833, %v2825
    %v4594 = vpack.c.b16 %v2834, %v2826
    %v4595 = vpack.c.b16 %v2835, %v2827
    %v4596 = vpack.c.b16 %v2836, %v2828
    %v4597 = vpack.c.b16 %v2845, %v2837
    %v4598 = vpack.c.b16 %v2846, %v2838
    %v4599 = vpack.c.b16 %v2847, %v2839
    %v4600 = vpack.c.b16 %v2848, %v2840
    %v4601 = vpack.c.b16 %v2849, %v2841
    %v4602 = vpack.c.b16 %v2850, %v2842
    %v4603 = vpack.c.b16 %v2851, %v2843
    %v4604 = vpack.c.b16 %v2852, %v2844
    %v4605 = vpack.c.b16 %v2861, %v2853
    %v4606 = vpack.c.b16 %v2862, %v2854
    %v4607 = vpack.c.b16 %v2863, %v2855
    %v4608 = vpack.c.b16 %v2864, %v2856
    %v4609 = vpack.c.b16 %v2865, %v2857
    %v4610 = vpack.c.b16 %v2866, %v2858
    %v4611 = vpack.c.b16 %v2867, %v2859
    %v4612 = vpack.c.b16 %v2868, %v2860
    %v4613 = vpack.c.b16 %v2877, %v2869
    %v4614 = vpack.c.b16 %v2878, %v2870
    %v4615 = vpack.c.b16 %v2879, %v2871
    %v4616 = vpack.c.b16 %v2880, %v2872
    %v4617 = vpack.c.b16 %v2881, %v2873
    %v4618 = vpack.c.b16 %v2882, %v2874
    %v4619 = vpack.c.b16 %v2883, %v2875
    %v4620 = vpack.c.b16 %v2884, %v2876
    %v4621 = vpack.c.b16 %v2893, %v2885
    %v4622 = vpack.c.b16 %v2894, %v2886
    %v4623 = vpack.c.b16 %v2895, %v2887
    %v4624 = vpack.c.b16 %v2896, %v2888
    %v4625 = vpack.c.b16 %v2897, %v2889
    %v4626 = vpack.c.b16 %v2898, %v2890
    %v4627 = vpack.c.b16 %v2899, %v2891
    %v4628 = vpack.c.b16 %v2900, %v2892
    %v4629 = vpack.c.b16 %v2909, %v2901
    %v4630 = vpack.c.b16 %v2910, %v2902
    %v4631 = vpack.c.b16 %v2911, %v2903
    %v4632 = vpack.c.b16 %v2912, %v2904
    %v4633 = vpack.c.b16 %v2913, %v2905
    %v4634 = vpack.c.b16 %v2914, %v2906
    %v4635 = vpack.c.b16 %v2915, %v2907
    %v4636 = vpack.c.b16 %v2916, %v2908
    %v4637 = vpack.c.b16 %v2925, %v2917
    %v4638 = vpack.c.b16 %v2926, %v2918
    %v4639 = vpack.c.b16 %v2927, %v2919
    %v4640 = vpack.c.b16 %v2928, %v2920
    %v4641 = vpack.c.b16 %v2929, %v2921
    %v4642 = vpack.c.b16 %v2930, %v2922
    %v4643 = vpack.c.b16 %v2931, %v2923
    %v4644 = vpack.c.b16 %v2932, %v2924
    %v4645 = vpack.c.b16 %v2941, %v2933
    %v4646 = vpack.c.b16 %v2942, %v2934
    %v4647 = vpack.c.b16 %v2943, %v2935
    %v4648 = vpack.c.b16 %v2944, %v2936
    %v4649 = vpack.c.b16 %v2945, %v2937
    %v4650 = vpack.c.b16 %v2946, %v2938
    %v4651 = vpack.c.b16 %v2947, %v2939
    %v4652 = vpack.c.b16 %v2948, %v2940
    %v4653 = vpack.c.b16 %v2957, %v2949
    %v4654 = vpack.c.b16 %v2958, %v2950
    %v4655 = vpack.c.b16 %v2959, %v2951
    %v4656 = vpack.c.b16 %v2960, %v2952
    %v4657 = vpack.c.b16 %v2961, %v2953
    %v4658 = vpack.c.b16 %v2962, %v2954
    %v4659 = vpack.c.b16 %v2963, %v2955
    %v4660 = vpack.c.b16 %v2964, %v2956
    %v4661 = vpack.c.b16 %v2973, %v2965
    %v4662 = vpack.c.b16 %v2974, %v2966
    %v4663 = vpack.c.b16 %v2975, %v2967
    %v4664 = vpack.c.b16 %v2976, %v2968
    %v4665 = vpack.c.b16 %v2977, %v2969
    %v4666 = vpack.c.b16 %v2978, %v2970
    %v4667 = vpack.c.b16 %v2979, %v2971
    %v4668 = vpack.c.b16 %v2980, %v2972
    %v4669 = vpack.c.b16 %v2989, %v2981
    %v4670 = vpack.c.b16 %v2990, %v2982
    %v4671 = vpack.c.b16 %v2991, %v2983
    %v4672 = vpack.c.b16 %v2992, %v2984
    %v4673 = vpack.c.b16 %v2993, %v2985
    %v4674 = vpack.c.b16 %v2994, %v2986
    %v4675 = vpack.c.b16 %v2995, %v2987
    %v4676 = vpack.c.b16 %v2996, %v2988
    %v4677 = vpack.c.b16 %v3005, %v2997
    %v4678 = vpack.c.b16 %v3006, %v2998
    %v4679 = vpack.c.b16 %v3007, %v2999
    %v4680 = vpack.c.b16 %v3008, %v3000
    %v4681 = vpack.c.b16 %v3009, %v3001
    %v4682 = vpack.c.b16 %v3010, %v3002
    %v4683 = vpack.c.b16 %v3011, %v3003
    %v4684 = vpack.c.b16 %v3012, %v3004
    %v4685 = vpack.c.b16 %v3021, %v3013
    %v4686 = vpack.c.b16 %v3022, %v3014
    %v4687 = vpack.c.b16 %v3023, %v3015
    %v4688 = vpack.c.b16 %v3024, %v3016
    %v4689 = vpack.c.b16 %v3025, %v3017
    %v4690 = vpack.c.b16 %v3026, %v3018
    %v4691 = vpack.c.b16 %v3027, %v3019
    %v4692 = vpack.c.b16 %v3028, %v3020
    %v4693 = vpack.c.b16 %v3037, %v3029
    %v4694 = vpack.c.b16 %v3038, %v3030
    %v4695 = vpack.c.b16 %v3039, %v3031
    %v4696 = vpack.c.b16 %v3040, %v3032
    %v4697 = vpack.c.b16 %v3041, %v3033
    %v4698 = vpack.c.b16 %v3042, %v3034
    %v4699 = vpack.c.b16 %v3043, %v3035
    %v4700 = vpack.c.b16 %v3044, %v3036
    %v4701 = vpack.c.b16 %v3053, %v3045
    %v4702 = vpack.c.b16 %v3054, %v3046
    %v4703 = vpack.c.b16 %v3055, %v3047
    %v4704 = vpack.c.b16 %v3056, %v3048
    %v4705 = vpack.c.b16 %v3057, %v3049
    %v4706 = vpack.c.b16 %v3058, %v3050
    %v4707 = vpack.c.b16 %v3059, %v3051
    %v4708 = vpack.c.b16 %v3060, %v3052
    %v4709 = vpack.c.b16 %v3069, %v3061
    %v4710 = vpack.c.b16 %v3070, %v3062
    %v4711 = vpack.c.b16 %v3071, %v3063
    %v4712 = vpack.c.b16 %v3072, %v3064
    %v4713 = vpack.c.b16 %v3073, %v3065
    %v4714 = vpack.c.b16 %v3074, %v3066
    %v4715 = vpack.c.b16 %v3075, %v3067
    %v4716 = vpack.c.b16 %v3076, %v3068
    %v4717 = vpack.c.b16 %v3085, %v3077
    %v4718 = vpack.c.b16 %v3086, %v3078
    %v4719 = vpack.c.b16 %v3087, %v3079
    %v4720 = vpack.c.b16 %v3088, %v3080
    %v4721 = vpack.c.b16 %v3089, %v3081
    %v4722 = vpack.c.b16 %v3090, %v3082
    %v4723 = vpack.c.b16 %v3091, %v3083
    %v4724 = vpack.c.b16 %v3092, %v3084
    %v4725 = vpack.c.b16 %v3101, %v3093
    %v4726 = vpack.c.b16 %v3102, %v3094
    %v4727 = vpack.c.b16 %v3103, %v3095
    %v4728 = vpack.c.b16 %v3104, %v3096
    %v4729 = vpack.c.b16 %v3105, %v3097
    %v4730 = vpack.c.b16 %v3106, %v3098
    %v4731 = vpack.c.b16 %v3107, %v3099
    %v4732 = vpack.c.b16 %v3108, %v3100
    %v4733 = vpack.c.b16 %v3117, %v3109
    %v4734 = vpack.c.b16 %v3118, %v3110
    %v4735 = vpack.c.b16 %v3119, %v3111
    %v4736 = vpack.c.b16 %v3120, %v3112
    %v4737 = vpack.c.b16 %v3121, %v3113
    %v4738 = vpack.c.b16 %v3122, %v3114
    %v4739 = vpack.c.b16 %v3123, %v3115
    %v4740 = vpack.c.b16 %v3124, %v3116
    %v4741 = vpack.c.b16 %v3133, %v3125
    %v4742 = vpack.c.b16 %v3134, %v3126
    %v4743 = vpack.c.b16 %v3135, %v3127
    %v4744 = vpack.c.b16 %v3136, %v3128
    %v4745 = vpack.c.b16 %v3137, %v3129
    %v4746 = vpack.c.b16 %v3138, %v3130
    %v4747 = vpack.c.b16 %v3139, %v3131
    %v4748 = vpack.c.b16 %v3140, %v3132
    %v4749 = vpack.c.b16 %v3149, %v3141
    %v4750 = vpack.c.b16 %v3150, %v3142
    %v4751 = vpack.c.b16 %v3151, %v3143
    %v4752 = vpack.c.b16 %v3152, %v3144
    %v4753 = vpack.c.b16 %v3153, %v3145
    %v4754 = vpack.c.b16 %v3154, %v3146
    %v4755 = vpack.c.b16 %v3155, %v3147
    %v4756 = vpack.c.b16 %v3156, %v3148
    %v4757 = vpack.c.b16 %v3165, %v3157
    %v4758 = vpack.c.b16 %v3166, %v3158
    %v4759 = vpack.c.b16 %v3167, %v3159
    %v4760 = vpack.c.b16 %v3168, %v3160
    %v4761 = vpack.c.b16 %v3169, %v3161
    %v4762 = vpack.c.b16 %v3170, %v3162
    %v4763 = vpack.c.b16 %v3171, %v3163
    %v4764 = vpack.c.b16 %v3172, %v3164
    %v4765 = vpack.c.b16 %v3181, %v3173
    %v4766 = vpack.c.b16 %v3182, %v3174
    %v4767 = vpack.c.b16 %v3183, %v3175
    %v4768 = vpack.c.b16 %v3184, %v3176
    %v4769 = vpack.c.b16 %v3185, %v3177
    %v4770 = vpack.c.b16 %v3186, %v3178
    %v4771 = vpack.c.b16 %v3187, %v3179
    %v4772 = vpack.c.b16 %v3188, %v3180
    %v4773 = vpack.c.b16 %v3197, %v3189
    %v4774 = vpack.c.b16 %v3198, %v3190
    %v4775 = vpack.c.b16 %v3199, %v3191
    %v4776 = vpack.c.b16 %v3200, %v3192
    %v4777 = vpack.c.b16 %v3201, %v3193
    %v4778 = vpack.c.b16 %v3202, %v3194
    %v4779 = vpack.c.b16 %v3203, %v3195
    %v4780 = vpack.c.b16 %v3204, %v3196
    %v4781 = vpack.c.b16 %v3213, %v3205
    %v4782 = vpack.c.b16 %v3214, %v3206
    %v4783 = vpack.c.b16 %v3215, %v3207
    %v4784 = vpack.c.b16 %v3216, %v3208
    %v4785 = vpack.c.b16 %v3217, %v3209
    %v4786 = vpack.c.b16 %v3218, %v3210
    %v4787 = vpack.c.b16 %v3219, %v3211
    %v4788 = vpack.c.b16 %v3220, %v3212
    %v4789 = vpack.c.b16 %v3229, %v3221
    %v4790 = vpack.c.b16 %v3230, %v3222
    %v4791 = vpack.c.b16 %v3231, %v3223
    %v4792 = vpack.c.b16 %v3232, %v3224
    %v4793 = vpack.c.b16 %v3233, %v3225
    %v4794 = vpack.c.b16 %v3234, %v3226
    %v4795 = vpack.c.b16 %v3235, %v3227
    %v4796 = vpack.c.b16 %v3236, %v3228
    %v4797 = vpack.c.b16 %v3245, %v3237
    %v4798 = vpack.c.b16 %v3246, %v3238
    %v4799 = vpack.c.b16 %v3247, %v3239
    %v4800 = vpack.c.b16 %v3248, %v3240
    %v4801 = vpack.c.b16 %v3249, %v3241
    %v4802 = vpack.c.b16 %v3250, %v3242
    %v4803 = vpack.c.b16 %v3251, %v3243
    %v4804 = vpack.c.b16 %v3252, %v3244
    %v4805 = vpack.c.b16 %v3261, %v3253
    %v4806 = vpack.c.b16 %v3262, %v3254
    %v4807 = vpack.c.b16 %v3263, %v3255
    %v4808 = vpack.c.b16 %v3264, %v3256
    %v4809 = vpack.c.b16 %v3265, %v3257
    %v4810 = vpack.c.b16 %v3266, %v3258
    %v4811 = vpack.c.b16 %v3267, %v3259
    %v4812 = vpack.c.b16 %v3268, %v3260
    %v4813 = vpack.c.b16 %v3277, %v3269
    %v4814 = vpack.c.b16 %v3278, %v3270
    %v4815 = vpack.c.b16 %v3279, %v3271
    %v4816 = vpack.c.b16 %v3280, %v3272
    %v4817 = vpack.c.b16 %v3281, %v3273
    %v4818 = vpack.c.b16 %v3282, %v3274
    %v4819 = vpack.c.b16 %v3283, %v3275
    %v4820 = vpack.c.b16 %v3284, %v3276
    %v4821 = vpack.c.b16 %v3293, %v3285
    %v4822 = vpack.c.b16 %v3294, %v3286
    %v4823 = vpack.c.b16 %v3295, %v3287
    %v4824 = vpack.c.b16 %v3296, %v3288
    %v4825 = vpack.c.b16 %v3297, %v3289
    %v4826 = vpack.c.b16 %v3298, %v3290
    %v4827 = vpack.c.b16 %v3299, %v3291
    %v4828 = vpack.c.b16 %v3300, %v3292
    %v4829 = vpack.c.b16 %v3309, %v3301
    %v4830 = vpack.c.b16 %v3310, %v3302
    %v4831 = vpack.c.b16 %v3311, %v3303
    %v4832 = vpack.c.b16 %v3312, %v3304
    %v4833 = vpack.c.b16 %v3313, %v3305
    %v4834 = vpack.c.b16 %v3314, %v3306
    %v4835 = vpack.c.b16 %v3315, %v3307
    %v4836 = vpack.c.b16 %v3316, %v3308
    %v4837 = vpack.c.b16 %v3325, %v3317
    %v4838 = vpack.c.b16 %v3326, %v3318
    %v4839 = vpack.c.b16 %v3327, %v3319
    %v4840 = vpack.c.b16 %v3328, %v3320
    %v4841 = vpack.c.b16 %v3329, %v3321
    %v4842 = vpack.c.b16 %v3330, %v3322
    %v4843 = vpack.c.b16 %v3331, %v3323
    %v4844 = vpack.c.b16 %v3332, %v3324
    %v4845 = vpack.c.b16 %v3341, %v3333
    %v4846 = vpack.c.b16 %v3342, %v3334
    %v4847 = vpack.c.b16 %v3343, %v3335
    %v4848 = vpack.c.b16 %v3344, %v3336
    %v4849 = vpack.c.b16 %v3345, %v3337
    %v4850 = vpack.c.b16 %v3346, %v3338
    %v4851 = vpack.c.b16 %v3347, %v3339
    %v4852 = vpack.c.b16 %v3348, %v3340
    %v4853 = vpack.c.b16 %v3357, %v3349
    %v4854 = vpack.c.b16 %v3358, %v3350
    %v4855 = vpack.c.b16 %v3359, %v3351
    %v4856 = vpack.c.b16 %v3360, %v3352
    %v4857 = vpack.c.b16 %v3361, %v3353
    %v4858 = vpack.c.b16 %v3362, %v3354
    %v4859 = vpack.c.b16 %v3363, %v3355
    %v4860 = vpack.c.b16 %v3364, %v3356
    %v4861 = vpack.c.b16 %v3373, %v3365
    %v4862 = vpack.c.b16 %v3374, %v3366
    %v4863 = vpack.c.b16 %v3375, %v3367
    %v4864 = vpack.c.b16 %v3376, %v3368
    %v4865 = vpack.c.b16 %v3377, %v3369
    %v4866 = vpack.c.b16 %v3378, %v3370
    %v4867 = vpack.c.b16 %v3379, %v3371
    %v4868 = vpack.c.b16 %v3380, %v3372
    %v4869 = vpack.c.b16 %v3389, %v3381
    %v4870 = vpack.c.b16 %v3390, %v3382
    %v4871 = vpack.c.b16 %v3391, %v3383
    %v4872 = vpack.c.b16 %v3392, %v3384
    %v4873 = vpack.c.b16 %v3393, %v3385
    %v4874 = vpack.c.b16 %v3394, %v3386
    %v4875 = vpack.c.b16 %v3395, %v3387
    %v4876 = vpack.c.b16 %v3396, %v3388
    %v4877 = vpack.c.b16 %v3405, %v3397
    %v4878 = vpack.c.b16 %v3406, %v3398
    %v4879 = vpack.c.b16 %v3407, %v3399
    %v4880 = vpack.c.b16 %v3408, %v3400
    %v4881 = vpack.c.b16 %v3409, %v3401
    %v4882 = vpack.c.b16 %v3410, %v3402
    %v4883 = vpack.c.b16 %v3411, %v3403
    %v4884 = vpack.c.b16 %v3412, %v3404
    %v4885 = vpack.c.b16 %v3421, %v3413
    %v4886 = vpack.c.b16 %v3422, %v3414
    %v4887 = vpack.c.b16 %v3423, %v3415
    %v4888 = vpack.c.b16 %v3424, %v3416
    %v4889 = vpack.c.b16 %v3425, %v3417
    %v4890 = vpack.c.b16 %v3426, %v3418
    %v4891 = vpack.c.b16 %v3427, %v3419
    %v4892 = vpack.c.b16 %v3428, %v3420
    %v4893 = vpack.c.b16 %v3437, %v3429
    %v4894 = vpack.c.b16 %v3438, %v3430
    %v4895 = vpack.c.b16 %v3439, %v3431
    %v4896 = vpack.c.b16 %v3440, %v3432
    %v4897 = vpack.c.b16 %v3441, %v3433
    %v4898 = vpack.c.b16 %v3442, %v3434
    %v4899 = vpack.c.b16 %v3443, %v3435
    %v4900 = vpack.c.b16 %v3444, %v3436
    %v4901 = vpack.c.b16 %v3453, %v3445
    %v4902 = vpack.c.b16 %v3454, %v3446
    %v4903 = vpack.c.b16 %v3455, %v3447
    %v4904 = vpack.c.b16 %v3456, %v3448
    %v4905 = vpack.c.b16 %v3457, %v3449
    %v4906 = vpack.c.b16 %v3458, %v3450
    %v4907 = vpack.c.b16 %v3459, %v3451
    %v4908 = vpack.c.b16 %v3460, %v3452
    %v4909 = vpack.c.b16 %v3469, %v3461
    %v4910 = vpack.c.b16 %v3470, %v3462
    %v4911 = vpack.c.b16 %v3471, %v3463
    %v4912 = vpack.c.b16 %v3472, %v3464
    %v4913 = vpack.c.b16 %v3473, %v3465
    %v4914 = vpack.c.b16 %v3474, %v3466
    %v4915 = vpack.c.b16 %v3475, %v3467
    %v4916 = vpack.c.b16 %v3476, %v3468
    %v4917 = vpack.c.b16 %v3485, %v3477
    %v4918 = vpack.c.b16 %v3486, %v3478
    %v4919 = vpack.c.b16 %v3487, %v3479
    %v4920 = vpack.c.b16 %v3488, %v3480
    %v4921 = vpack.c.b16 %v3489, %v3481
    %v4922 = vpack.c.b16 %v3490, %v3482
    %v4923 = vpack.c.b16 %v3491, %v3483
    %v4924 = vpack.c.b16 %v3492, %v3484
    %v4925 = vpack.c.b16 %v3501, %v3493
    %v4926 = vpack.c.b16 %v3502, %v3494
    %v4927 = vpack.c.b16 %v3503, %v3495
    %v4928 = vpack.c.b16 %v3504, %v3496
    %v4929 = vpack.c.b16 %v3505, %v3497
    %v4930 = vpack.c.b16 %v3506, %v3498
    %v4931 = vpack.c.b16 %v3507, %v3499
    %v4932 = vpack.c.b16 %v3508, %v3500
    %v4933 = vpack.c.b16 %v3517, %v3509
    %v4934 = vpack.c.b16 %v3518, %v3510
    %v4935 = vpack.c.b16 %v3519, %v3511
    %v4936 = vpack.c.b16 %v3520, %v3512
    %v4937 = vpack.c.b16 %v3521, %v3513
    %v4938 = vpack.c.b16 %v3522, %v3514
    %v4939 = vpack.c.b16 %v3523, %v3515
    %v4940 = vpack.c.b16 %v3524, %v3516
    %v4941 = vpack.c.b16 %v3533, %v3525
    %v4942 = vpack.c.b16 %v3534, %v3526
    %v4943 = vpack.c.b16 %v3535, %v3527
    %v4944 = vpack.c.b16 %v3536, %v3528
    %v4945 = vpack.c.b16 %v3537, %v3529
    %v4946 = vpack.c.b16 %v3538, %v3530
    %v4947 = vpack.c.b16 %v3539, %v3531
    %v4948 = vpack.c.b16 %v3540, %v3532
    %v4949 = vpack.c.b16 %v3549, %v3541
    %v4950 = vpack.c.b16 %v3550, %v3542
    %v4951 = vpack.c.b16 %v3551, %v3543
    %v4952 = vpack.c.b16 %v3552, %v3544
    %v4953 = vpack.c.b16 %v3553, %v3545
    %v4954 = vpack.c.b16 %v3554, %v3546
    %v4955 = vpack.c.b16 %v3555, %v3547
    %v4956 = vpack.c.b16 %v3556, %v3548
    %v4957 = vpack.c.b16 %v3565, %v3557
    %v4958 = vpack.c.b16 %v3566, %v3558
    %v4959 = vpack.c.b16 %v3567, %v3559
    %v4960 = vpack.c.b16 %v3568, %v3560
    %v4961 = vpack.c.b16 %v3569, %v3561
    %v4962 = vpack.c.b16 %v3570, %v3562
    %v4963 = vpack.c.b16 %v3571, %v3563
    %v4964 = vpack.c.b16 %v3572, %v3564
    %v4965 = vpack.c.b16 %v3581, %v3573
    %v4966 = vpack.c.b16 %v3582, %v3574
    %v4967 = vpack.c.b16 %v3583, %v3575
    %v4968 = vpack.c.b16 %v3584, %v3576
    %v4969 = vpack.c.b16 %v3585, %v3577
    %v4970 = vpack.c.b16 %v3586, %v3578
    %v4971 = vpack.c.b16 %v3587, %v3579
    %v4972 = vpack.c.b16 %v3588, %v3580
    %v4973 = vpack.c.b16 %v3597, %v3589
    %v4974 = vpack.c.b16 %v3598, %v3590
    %v4975 = vpack.c.b16 %v3599, %v3591
    %v4976 = vpack.c.b16 %v3600, %v3592
    %v4977 = vpack.c.b16 %v3601, %v3593
    %v4978 = vpack.c.b16 %v3602, %v3594
    %v4979 = vpack.c.b16 %v3603, %v3595
    %v4980 = vpack.c.b16 %v3604, %v3596
    %v4981 = vpack.c.b16 %v3613, %v3605
    %v4982 = vpack.c.b16 %v3614, %v3606
    %v4983 = vpack.c.b16 %v3615, %v3607
    %v4984 = vpack.c.b16 %v3616, %v3608
    %v4985 = vpack.c.b16 %v3617, %v3609
    %v4986 = vpack.c.b16 %v3618, %v3610
    %v4987 = vpack.c.b16 %v3619, %v3611
    %v4988 = vpack.c.b16 %v3620, %v3612
    %v4989 = vpack.c.b16 %v3629, %v3621
    %v4990 = vpack.c.b16 %v3630, %v3622
    %v4991 = vpack.c.b16 %v3631, %v3623
    %v4992 = vpack.c.b16 %v3632, %v3624
    %v4993 = vpack.c.b16 %v3633, %v3625
    %v4994 = vpack.c.b16 %v3634, %v3626
    %v4995 = vpack.c.b16 %v3635, %v3627
    %v4996 = vpack.c.b16 %v3636, %v3628
    %v4997 = vpack.c.b16 %v3645, %v3637
    %v4998 = vpack.c.b16 %v3646, %v3638
    %v4999 = vpack.c.b16 %v3647, %v3639
    %v5000 = vpack.c.b16 %v3648, %v3640
    %v5001 = vpack.c.b16 %v3649, %v3641
    %v5002 = vpack.c.b16 %v3650, %v3642
    %v5003 = vpack.c.b16 %v3651, %v3643
    %v5004 = vpack.c.b16 %v3652, %v3644
    %v5005 = vpack.c.b16 %v3661, %v3653
    %v5006 = vpack.c.b16 %v3662, %v3654
    %v5007 = vpack.c.b16 %v3663, %v3655
    %v5008 = vpack.c.b16 %v3664, %v3656
    %v5009 = vpack.c.b16 %v3665, %v3657
    %v5010 = vpack.c.b16 %v3666, %v3658
    %v5011 = vpack.c.b16 %v3667, %v3659
    %v5012 = vpack.c.b16 %v3668, %v3660
    %v5013 = vpack.c.b16 %v3677, %v3669
    %v5014 = vpack.c.b16 %v3678, %v3670
    %v5015 = vpack.c.b16 %v3679, %v3671
    %v5016 = vpack.c.b16 %v3680, %v3672
    %v5017 = vpack.c.b16 %v3681, %v3673
    %v5018 = vpack.c.b16 %v3682, %v3674
    %v5019 = vpack.c.b16 %v3683, %v3675
    %v5020 = vpack.c.b16 %v3684, %v3676
    %v5021 = vpack.c.b16 %v3693, %v3685
    %v5022 = vpack.c.b16 %v3694, %v3686
    %v5023 = vpack.c.b16 %v3695, %v3687
    %v5024 = vpack.c.b16 %v3696, %v3688
    %v5025 = vpack.c.b16 %v3697, %v3689
    %v5026 = vpack.c.b16 %v3698, %v3690
    %v5027 = vpack.c.b16 %v3699, %v3691
    %v5028 = vpack.c.b16 %v3700, %v3692
    %v5029 = vpack.c.b16 %v3709, %v3701
    %v5030 = vpack.c.b16 %v3710, %v3702
    %v5031 = vpack.c.b16 %v3711, %v3703
    %v5032 = vpack.c.b16 %v3712, %v3704
    %v5033 = vpack.c.b16 %v3713, %v3705
    %v5034 = vpack.c.b16 %v3714, %v3706
    %v5035 = vpack.c.b16 %v3715, %v3707
    %v5036 = vpack.c.b16 %v3716, %v3708
    %v5037 = vpack.c.b16 %v3725, %v3717
    %v5038 = vpack.c.b16 %v3726, %v3718
    %v5039 = vpack.c.b16 %v3727, %v3719
    %v5040 = vpack.c.b16 %v3728, %v3720
    %v5041 = vpack.c.b16 %v3729, %v3721
    %v5042 = vpack.c.b16 %v3730, %v3722
    %v5043 = vpack.c.b16 %v3731, %v3723
    %v5044 = vpack.c.b16 %v3732, %v3724
    %v5045 = vpack.c.b16 %v3741, %v3733
    %v5046 = vpack.c.b16 %v3742, %v3734
    %v5047 = vpack.c.b16 %v3743, %v3735
    %v5048 = vpack.c.b16 %v3744, %v3736
    %v5049 = vpack.c.b16 %v3745, %v3737
    %v5050 = vpack.c.b16 %v3746, %v3738
    %v5051 = vpack.c.b16 %v3747, %v3739
    %v5052 = vpack.c.b16 %v3748, %v3740
    %v5053 = vpack.c.b16 %v3757, %v3749
    %v5054 = vpack.c.b16 %v3758, %v3750
    %v5055 = vpack.c.b16 %v3759, %v3751
    %v5056 = vpack.c.b16 %v3760, %v3752
    %v5057 = vpack.c.b16 %v3761, %v3753
    %v5058 = vpack.c.b16 %v3762, %v3754
    %v5059 = vpack.c.b16 %v3763, %v3755
    %v5060 = vpack.c.b16 %v3764, %v3756
    %v5061 = vpack.c.b16 %v3773, %v3765
    %v5062 = vpack.c.b16 %v3774, %v3766
    %v5063 = vpack.c.b16 %v3775, %v3767
    %v5064 = vpack.c.b16 %v3776, %v3768
    %v5065 = vpack.c.b16 %v3777, %v3769
    %v5066 = vpack.c.b16 %v3778, %v3770
    %v5067 = vpack.c.b16 %v3779, %v3771
    %v5068 = vpack.c.b16 %v3780, %v3772
    %v5069 = vpack.c.b16 %v3789, %v3781
    %v5070 = vpack.c.b16 %v3790, %v3782
    %v5071 = vpack.c.b16 %v3791, %v3783
    %v5072 = vpack.c.b16 %v3792, %v3784
    %v5073 = vpack.c.b16 %v3793, %v3785
    %v5074 = vpack.c.b16 %v3794, %v3786
    %v5075 = vpack.c.b16 %v3795, %v3787
    %v5076 = vpack.c.b16 %v3796, %v3788
    %v5077 = vpack.c.b16 %v3805, %v3797
    %v5078 = vpack.c.b16 %v3806, %v3798
    %v5079 = vpack.c.b16 %v3807, %v3799
    %v5080 = vpack.c.b16 %v3808, %v3800
    %v5081 = vpack.c.b16 %v3809, %v3801
    %v5082 = vpack.c.b16 %v3810, %v3802
    %v5083 = vpack.c.b16 %v3811, %v3803
    %v5084 = vpack.c.b16 %v3812, %v3804
    %v5085 = vpack.c.b16 %v3821, %v3813
    %v5086 = vpack.c.b16 %v3822, %v3814
    %v5087 = vpack.c.b16 %v3823, %v3815
    %v5088 = vpack.c.b16 %v3824, %v3816
    %v5089 = vpack.c.b16 %v3825, %v3817
    %v5090 = vpack.c.b16 %v3826, %v3818
    %v5091 = vpack.c.b16 %v3827, %v3819
    %v5092 = vpack.c.b16 %v3828, %v3820
    %v5093 = vpack.c.b16 %v3837, %v3829
    %v5094 = vpack.c.b16 %v3838, %v3830
    %v5095 = vpack.c.b16 %v3839, %v3831
    %v5096 = vpack.c.b16 %v3840, %v3832
    %v5097 = vpack.c.b16 %v3841, %v3833
    %v5098 = vpack.c.b16 %v3842, %v3834
    %v5099 = vpack.c.b16 %v3843, %v3835
    %v5100 = vpack.c.b16 %v3844, %v3836
    %v5101 = vpack.c.b16 %v3853, %v3845
    %v5102 = vpack.c.b16 %v3854, %v3846
    %v5103 = vpack.c.b16 %v3855, %v3847
    %v5104 = vpack.c.b16 %v3856, %v3848
    %v5105 = vpack.c.b16 %v3857, %v3849
    %v5106 = vpack.c.b16 %v3858, %v3850
    %v5107 = vpack.c.b16 %v3859, %v3851
    %v5108 = vpack.c.b16 %v3860, %v3852
    %v5109 = vpack.c.b16 %v3869, %v3861
    %v5110 = vpack.c.b16 %v3870, %v3862
    %v5111 = vpack.c.b16 %v3871, %v3863
    %v5112 = vpack.c.b16 %v3872, %v3864
    %v5113 = vpack.c.b16 %v3873, %v3865
    %v5114 = vpack.c.b16 %v3874, %v3866
    %v5115 = vpack.c.b16 %v3875, %v3867
    %v5116 = vpack.c.b16 %v3876, %v3868
    %v5117 = vpack.c.b16 %v3885, %v3877
    %v5118 = vpack.c.b16 %v3886, %v3878
    %v5119 = vpack.c.b16 %v3887, %v3879
    %v5120 = vpack.c.b16 %v3888, %v3880
    %v5121 = vpack.c.b16 %v3889, %v3881
    %v5122 = vpack.c.b16 %v3890, %v3882
    %v5123 = vpack.c.b16 %v3891, %v3883
    %v5124 = vpack.c.b16 %v3892, %v3884
    %v5125 = vpack.c.b16 %v3901, %v3893
    %v5126 = vpack.c.b16 %v3902, %v3894
    %v5127 = vpack.c.b16 %v3903, %v3895
    %v5128 = vpack.c.b16 %v3904, %v3896
    %v5129 = vpack.c.b16 %v3905, %v3897
    %v5130 = vpack.c.b16 %v3906, %v3898
    %v5131 = vpack.c.b16 %v3907, %v3899
    %v5132 = vpack.c.b16 %v3908, %v3900
    %v5133 = vpack.c.b16 %v3917, %v3909
    %v5134 = vpack.c.b16 %v3918, %v3910
    %v5135 = vpack.c.b16 %v3919, %v3911
    %v5136 = vpack.c.b16 %v3920, %v3912
    %v5137 = vpack.c.b16 %v3921, %v3913
    %v5138 = vpack.c.b16 %v3922, %v3914
    %v5139 = vpack.c.b16 %v3923, %v3915
    %v5140 = vpack.c.b16 %v3924, %v3916
    %v5141 = vpack.c.b16 %v3933, %v3925
    %v5142 = vpack.c.b16 %v3934, %v3926
    %v5143 = vpack.c.b16 %v3935, %v3927
    %v5144 = vpack.c.b16 %v3936, %v3928
    %v5145 = vpack.c.b16 %v3937, %v3929
    %v5146 = vpack.c.b16 %v3938, %v3930
    %v5147 = vpack.c.b16 %v3939, %v3931
    %v5148 = vpack.c.b16 %v3940, %v3932
    %v5149 = vpack.c.b16 %v3949, %v3941
    %v5150 = vpack.c.b16 %v3950, %v3942
    %v5151 = vpack.c.b16 %v3951, %v3943
    %v5152 = vpack.c.b16 %v3952, %v3944
    %v5153 = vpack.c.b16 %v3953, %v3945
    %v5154 = vpack.c.b16 %v3954, %v3946
    %v5155 = vpack.c.b16 %v3955, %v3947
    %v5156 = vpack.c.b16 %v3956, %v3948
    %v5157 = vpack.c.b16 %v3965, %v3957
    %v5158 = vpack.c.b16 %v3966, %v3958
    %v5159 = vpack.c.b16 %v3967, %v3959
    %v5160 = vpack.c.b16 %v3968, %v3960
    %v5161 = vpack.c.b16 %v3969, %v3961
    %v5162 = vpack.c.b16 %v3970, %v3962
    %v5163 = vpack.c.b16 %v3971, %v3963
    %v5164 = vpack.c.b16 %v3972, %v3964
    %v5165 = vpack.c.b16 %v3981, %v3973
    %v5166 = vpack.c.b16 %v3982, %v3974
    %v5167 = vpack.c.b16 %v3983, %v3975
    %v5168 = vpack.c.b16 %v3984, %v3976
    %v5169 = vpack.c.b16 %v3985, %v3977
    %v5170 = vpack.c.b16 %v3986, %v3978
    %v5171 = vpack.c.b16 %v3987, %v3979
    %v5172 = vpack.c.b16 %v3988, %v3980
    %v5173 = vpack.c.b16 %v3997, %v3989
    %v5174 = vpack.c.b16 %v3998, %v3990
    %v5175 = vpack.c.b16 %v3999, %v3991
    %v5176 = vpack.c.b16 %v4000, %v3992
    %v5177 = vpack.c.b16 %v4001, %v3993
    %v5178 = vpack.c.b16 %v4002, %v3994
    %v5179 = vpack.c.b16 %v4003, %v3995
    %v5180 = vpack.c.b16 %v4004, %v3996
    %v5181 = vpack.c.b16 %v4013, %v4005
    %v5182 = vpack.c.b16 %v4014, %v4006
    %v5183 = vpack.c.b16 %v4015, %v4007
    %v5184 = vpack.c.b16 %v4016, %v4008
    %v5185 = vpack.c.b16 %v4017, %v4009
    %v5186 = vpack.c.b16 %v4018, %v4010
    %v5187 = vpack.c.b16 %v4019, %v4011
    %v5188 = vpack.c.b16 %v4020, %v4012
    %v5189 = vpack.c.b16 %v4029, %v4021
    %v5190 = vpack.c.b16 %v4030, %v4022
    %v5191 = vpack.c.b16 %v4031, %v4023
    %v5192 = vpack.c.b16 %v4032, %v4024
    %v5193 = vpack.c.b16 %v4033, %v4025
    %v5194 = vpack.c.b16 %v4034, %v4026
    %v5195 = vpack.c.b16 %v4035, %v4027
    %v5196 = vpack.c.b16 %v4036, %v4028
    %v5197 = vpack.c.b16 %v4045, %v4037
    %v5198 = vpack.c.b16 %v4046, %v4038
    %v5199 = vpack.c.b16 %v4047, %v4039
    %v5200 = vpack.c.b16 %v4048, %v4040
    %v5201 = vpack.c.b16 %v4049, %v4041
    %v5202 = vpack.c.b16 %v4050, %v4042
    %v5203 = vpack.c.b16 %v4051, %v4043
    %v5204 = vpack.c.b16 %v4052, %v4044
    %v5205 = vpack.c.b16 %v4061, %v4053
    %v5206 = vpack.c.b16 %v4062, %v4054
    %v5207 = vpack.c.b16 %v4063, %v4055
    %v5208 = vpack.c.b16 %v4064, %v4056
    %v5209 = vpack.c.b16 %v4065, %v4057
    %v5210 = vpack.c.b16 %v4066, %v4058
    %v5211 = vpack.c.b16 %v4067, %v4059
    %v5212 = vpack.c.b16 %v4068, %v4060
    %v5213 = vpack.c.b16 %v4077, %v4069
    %v5214 = vpack.c.b16 %v4078, %v4070
    %v5215 = vpack.c.b16 %v4079, %v4071
    %v5216 = vpack.c.b16 %v4080, %v4072
    %v5217 = vpack.c.b16 %v4081, %v4073
    %v5218 = vpack.c.b16 %v4082, %v4074
    %v5219 = vpack.c.b16 %v4083, %v4075
    %v5220 = vpack.c.b16 %v4084, %v4076
    %v5221 = vpack.c.b16 %v4093, %v4085
    %v5222 = vpack.c.b16 %v4094, %v4086
    %v5223 = vpack.c.b16 %v4095, %v4087
    %v5224 = vpack.c.b16 %v4096, %v4088
    %v5225 = vpack.c.b16 %v4097, %v4089
    %v5226 = vpack.c.b16 %v4098, %v4090
    %v5227 = vpack.c.b16 %v4099, %v4091
    %v5228 = vpack.c.b16 %v4100, %v4092
    %v5229 = vpack.c.b16 %v4109, %v4101
    %v5230 = vpack.c.b16 %v4110, %v4102
    %v5231 = vpack.c.b16 %v4111, %v4103
    %v5232 = vpack.c.b16 %v4112, %v4104
    %v5233 = vpack.c.b16 %v4113, %v4105
    %v5234 = vpack.c.b16 %v4114, %v4106
    %v5235 = vpack.c.b16 %v4115, %v4107
    %v5236 = vpack.c.b16 %v4116, %v4108
    %v5237 = vpack.c.b16 %v4125, %v4117
    %v5238 = vpack.c.b16 %v4126, %v4118
    %v5239 = vpack.c.b16 %v4127, %v4119
    %v5240 = vpack.c.b16 %v4128, %v4120
    %v5241 = vpack.c.b16 %v4129, %v4121
    %v5242 = vpack.c.b16 %v4130, %v4122
    %v5243 = vpack.c.b16 %v4131, %v4123
    %v5244 = vpack.c.b16 %v4132, %v4124
    %v5245 = vpack.c.b16 %v4141, %v4133
    %v5246 = vpack.c.b16 %v4142, %v4134
    %v5247 = vpack.c.b16 %v4143, %v4135
    %v5248 = vpack.c.b16 %v4144, %v4136
    %v5249 = vpack.c.b16 %v4145, %v4137
    %v5250 = vpack.c.b16 %v4146, %v4138
    %v5251 = vpack.c.b16 %v4147, %v4139
    %v5252 = vpack.c.b16 %v4148, %v4140
    %v5253 = vpack.c.b16 %v4157, %v4149
    %v5254 = vpack.c.b16 %v4158, %v4150
    %v5255 = vpack.c.b16 %v4159, %v4151
    %v5256 = vpack.c.b16 %v4160, %v4152
    %v5257 = vpack.c.b16 %v4161, %v4153
    %v5258 = vpack.c.b16 %v4162, %v4154
    %v5259 = vpack.c.b16 %v4163, %v4155
    %v5260 = vpack.c.b16 %v4164, %v4156
    %v5261 = vpack.c.b16 %v4173, %v4165
    %v5262 = vpack.c.b16 %v4174, %v4166
    %v5263 = vpack.c.b16 %v4175, %v4167
    %v5264 = vpack.c.b16 %v4176, %v4168
    %v5265 = vpack.c.b16 %v4177, %v4169
    %v5266 = vpack.c.b16 %v4178, %v4170
    %v5267 = vpack.c.b16 %v4179, %v4171
    %v5268 = vpack.c.b16 %v4180, %v4172
    %v5269 = vpack.c.b16 %v4189, %v4181
    %v5270 = vpack.c.b16 %v4190, %v4182
    %v5271 = vpack.c.b16 %v4191, %v4183
    %v5272 = vpack.c.b16 %v4192, %v4184
    %v5273 = vpack.c.b16 %v4193, %v4185
    %v5274 = vpack.c.b16 %v4194, %v4186
    %v5275 = vpack.c.b16 %v4195, %v4187
    %v5276 = vpack.c.b16 %v4196, %v4188
    %v5277 = vpack.c.b16 %v4205, %v4197
    %v5278 = vpack.c.b16 %v4206, %v4198
    %v5279 = vpack.c.b16 %v4207, %v4199
    %v5280 = vpack.c.b16 %v4208, %v4200
    %v5281 = vpack.c.b16 %v4209, %v4201
    %v5282 = vpack.c.b16 %v4210, %v4202
    %v5283 = vpack.c.b16 %v4211, %v4203
    %v5284 = vpack.c.b16 %v4212, %v4204
    %v5285 = vpack.c.b16 %v4221, %v4213
    %v5286 = vpack.c.b16 %v4222, %v4214
    %v5287 = vpack.c.b16 %v4223, %v4215
    %v5288 = vpack.c.b16 %v4224, %v4216
    %v5289 = vpack.c.b16 %v4225, %v4217
    %v5290 = vpack.c.b16 %v4226, %v4218
    %v5291 = vpack.c.b16 %v4227, %v4219
    %v5292 = vpack.c.b16 %v4228, %v4220
    %v5293 = vpack.c.b16 %v4237, %v4229
    %v5294 = vpack.c.b16 %v4238, %v4230
    %v5295 = vpack.c.b16 %v4239, %v4231
    %v5296 = vpack.c.b16 %v4240, %v4232
    %v5297 = vpack.c.b16 %v4241, %v4233
    %v5298 = vpack.c.b16 %v4242, %v4234
    %v5299 = vpack.c.b16 %v4243, %v4235
    %v5300 = vpack.c.b16 %v4244, %v4236
    %v5301 = vpack.c.b16 %v4253, %v4245
    %v5302 = vpack.c.b16 %v4254, %v4246
    %v5303 = vpack.c.b16 %v4255, %v4247
    %v5304 = vpack.c.b16 %v4256, %v4248
    %v5305 = vpack.c.b16 %v4257, %v4249
    %v5306 = vpack.c.b16 %v4258, %v4250
    %v5307 = vpack.c.b16 %v4259, %v4251
    %v5308 = vpack.c.b16 %v4260, %v4252
    %v5309 = vpack.c.b16 %v4269, %v4261
    %v5310 = vpack.c.b16 %v4270, %v4262
    %v5311 = vpack.c.b16 %v4271, %v4263
    %v5312 = vpack.c.b16 %v4272, %v4264
    %v5313 = vpack.c.b16 %v4273, %v4265
    %v5314 = vpack.c.b16 %v4274, %v4266
    %v5315 = vpack.c.b16 %v4275, %v4267
    %v5316 = vpack.c.b16 %v4276, %v4268
    %v5317 = vpack.c.b16 %v4285, %v4277
    %v5318 = vpack.c.b16 %v4286, %v4278
    %v5319 = vpack.c.b16 %v4287, %v4279
    %v5320 = vpack.c.b16 %v4288, %v4280
    %v5321 = vpack.c.b16 %v4289, %v4281
    %v5322 = vpack.c.b16 %v4290, %v4282
    %v5323 = vpack.c.b16 %v4291, %v4283
    %v5324 = vpack.c.b16 %v4292, %v4284
    %v5325 = vpack.c.b16 %v4301, %v4293
    %v5326 = vpack.c.b16 %v4302, %v4294
    %v5327 = vpack.c.b16 %v4303, %v4295
    %v5328 = vpack.c.b16 %v4304, %v4296
    %v5329 = vpack.c.b16 %v4305, %v4297
    %v5330 = vpack.c.b16 %v4306, %v4298
    %v5331 = vpack.c.b16 %v4307, %v4299
    %v5332 = vpack.c.b16 %v4308, %v4300
    %6357 = vmatprep.subr.bf16.mxu0 %v4310
    %6358 = vmatpush1.bf16.msra.mxu0 %v4309
    %6359 = vmatprep.subr.bf16.mxu0 %v4318
    %6360 = vmatpush1.bf16.msra.mxu0 %v4317
    %6361 = vmatprep.subr.bf16.mxu0 %v4326
    %6362 = vmatpush1.bf16.msra.mxu0 %v4325
    %6363 = vmatprep.subr.bf16.mxu0 %v4334
    %6364 = vmatpush1.bf16.msra.mxu0 %v4333
    %6365 = vmatprep.subr.bf16.mxu0 %v4342
    %6366 = vmatpush1.bf16.msra.mxu0 %v4341
    %6367 = vmatprep.subr.bf16.mxu0 %v4350
    %6368 = vmatpush1.bf16.msra.mxu0 %v4349
    %6369 = vmatprep.subr.bf16.mxu0 %v4358
    %6370 = vmatpush1.bf16.msra.mxu0 %v4357
    %6371 = vmatprep.subr.bf16.mxu0 %v4366
    %6372 = vmatpush1.bf16.msra.mxu0 %v4365
    %6373 = vmatprep.subr.bf16.mxu0 %v4374
    %6374 = vmatpush1.bf16.msra.mxu0 %v4373
    %6375 = vmatprep.subr.bf16.mxu0 %v4382
    %6376 = vmatpush1.bf16.msra.mxu0 %v4381
    %6377 = vmatprep.subr.bf16.mxu0 %v4390
    %6378 = vmatpush1.bf16.msra.mxu0 %v4389
    %6379 = vmatprep.subr.bf16.mxu0 %v4398
    %6380 = vmatpush1.bf16.msra.mxu0 %v4397
    %6381 = vmatprep.subr.bf16.mxu0 %v4406
    %6382 = vmatpush1.bf16.msra.mxu0 %v4405
    %6383 = vmatprep.subr.bf16.mxu0 %v4414
    %6384 = vmatpush1.bf16.msra.mxu0 %v4413
    %6385 = vmatprep.subr.bf16.mxu0 %v4422
    %6386 = vmatpush1.bf16.msra.mxu0 %v4421
    %6387 = vmatprep.subr.bf16.mxu0 %v4430
    %6388 = vmatpush1.bf16.msra.mxu0 %v4429
    %6389 = vmatprep.mubr.bf16.mxu0 %v1160
    %6390 = vmatmul.mubr.bf16.gmra.mrb[0].mxu0 %v1146
    %v6391 = vpop.f32.mrb[0].mxu0
    %v6392 = vadd.f32 0.0, %v6391
    %v6393 = vpop.f32.mrb[0].mxu0
    %v6394 = vadd.f32 0.0, %v6393
    %v6395 = vpop.f32.mrb[0].mxu0
    %v6396 = vpop.f32.mrb[0].mxu0
    %6397 = vdwg.mxu0
    %6398 = vmatprep.subr.bf16.mxu0 %v4438
    %6399 = vmatpush1.bf16.msra.mxu0 %v4437
    %6400 = vmatprep.subr.bf16.mxu0 %v4446
    %6401 = vmatpush1.bf16.msra.mxu0 %v4445
    %6402 = vmatprep.subr.bf16.mxu0 %v4454
    %6403 = vmatpush1.bf16.msra.mxu0 %v4453
    %6404 = vmatprep.subr.bf16.mxu0 %v4462
    %6405 = vmatpush1.bf16.msra.mxu0 %v4461
    %6406 = vmatprep.subr.bf16.mxu0 %v4470
    %6407 = vmatpush1.bf16.msra.mxu0 %v4469
    %6408 = vmatprep.subr.bf16.mxu0 %v4478
    %6409 = vmatpush1.bf16.msra.mxu0 %v4477
    %6410 = vmatprep.subr.bf16.mxu0 %v4486
    %6411 = vmatpush1.bf16.msra.mxu0 %v4485
    %6412 = vmatprep.subr.bf16.mxu0 %v4494
    %6413 = vmatpush1.bf16.msra.mxu0 %v4493
    %6414 = vmatprep.subr.bf16.mxu0 %v4502
    %6415 = vmatpush1.bf16.msra.mxu0 %v4501
    %6416 = vmatprep.subr.bf16.mxu0 %v4510
    %6417 = vmatpush1.bf16.msra.mxu0 %v4509
    %6418 = vmatprep.subr.bf16.mxu0 %v4518
    %6419 = vmatpush1.bf16.msra.mxu0 %v4517
    %6420 = vmatprep.subr.bf16.mxu0 %v4526
    %6421 = vmatpush1.bf16.msra.mxu0 %v4525
    %6422 = vmatprep.subr.bf16.mxu0 %v4534
    %6423 = vmatpush1.bf16.msra.mxu0 %v4533
    %6424 = vmatprep.subr.bf16.mxu0 %v4542
    %6425 = vmatpush1.bf16.msra.mxu0 %v4541
    %6426 = vmatprep.subr.bf16.mxu0 %v4550
    %6427 = vmatpush1.bf16.msra.mxu0 %v4549
    %6428 = vmatprep.subr.bf16.mxu0 %v4558
    %6429 = vmatpush1.bf16.msra.mxu0 %v4557
    %6430 = vmatprep.mubr.bf16.mxu0 %v1170
    %6431 = vmatmul.mubr.bf16.gmra.mrb[0].mxu0 %v1168
    %v6432 = vpop.f32.mrb[0].mxu0
    %v6433 = vadd.f32 %v6392, %v6432
    %v6434 = vpop.f32.mrb[0].mxu0
    %v6435 = vadd.f32 %v6394, %v6434
    %v6436 = vpop.f32.mrb[0].mxu0
    %v6437 = vpop.f32.mrb[0].mxu0
    %6438 = vdwg.mxu0
    %6439 = vmatprep.subr.bf16.mxu0 %v4566
    %6440 = vmatpush1.bf16.msra.mxu0 %v4565
    %6441 = vmatprep.subr.bf16.mxu0 %v4574
    %6442 = vmatpush1.bf16.msra.mxu0 %v4573
    %6443 = vmatprep.subr.bf16.mxu0 %v4582
    %6444 = vmatpush1.bf16.msra.mxu0 %v4581
    %6445 = vmatprep.subr.bf16.mxu0 %v4590
    %6446 = vmatpush1.bf16.msra.mxu0 %v4589
    %6447 = vmatprep.subr.bf16.mxu0 %v4598
    %6448 = vmatpush1.bf16.msra.mxu0 %v4597
    %6449 = vmatprep.subr.bf16.mxu0 %v4606
    %6450 = vmatpush1.bf16.msra.mxu0 %v4605
    %6451 = vmatprep.subr.bf16.mxu0 %v4614
    %6452 = vmatpush1.bf16.msra.mxu0 %v4613
    %6453 = vmatprep.subr.bf16.mxu0 %v4622
    %6454 = vmatpush1.bf16.msra.mxu0 %v4621
    %6455 = vmatprep.subr.bf16.mxu0 %v4630
    %6456 = vmatpush1.bf16.msra.mxu0 %v4629
    %6457 = vmatprep.subr.bf16.mxu0 %v4638
    %6458 = vmatpush1.bf16.msra.mxu0 %v4637
    %6459 = vmatprep.subr.bf16.mxu0 %v4646
    %6460 = vmatpush1.bf16.msra.mxu0 %v4645
    %6461 = vmatprep.subr.bf16.mxu0 %v4654
    %6462 = vmatpush1.bf16.msra.mxu0 %v4653
    %6463 = vmatprep.subr.bf16.mxu0 %v4662
    %6464 = vmatpush1.bf16.msra.mxu0 %v4661
    %6465 = vmatprep.subr.bf16.mxu0 %v4670
    %6466 = vmatpush1.bf16.msra.mxu0 %v4669
    %6467 = vmatprep.subr.bf16.mxu0 %v4678
    %6468 = vmatpush1.bf16.msra.mxu0 %v4677
    %6469 = vmatprep.subr.bf16.mxu0 %v4686
    %6470 = vmatpush1.bf16.msra.mxu0 %v4685
    %6471 = vmatprep.mubr.bf16.mxu0 %v1167
    %6472 = vmatmul.mubr.bf16.gmra.mrb[0].mxu0 %v1153
    %v6473 = vpop.f32.mrb[0].mxu0
    %v6474 = vadd.f32 %v6433, %v6473
    %v6475 = vpop.f32.mrb[0].mxu0
    %v6476 = vadd.f32 %v6435, %v6475
    %v6477 = vpop.f32.mrb[0].mxu0
    %v6478 = vpop.f32.mrb[0].mxu0
    %6479 = vdwg.mxu0
    %6480 = vmatprep.subr.bf16.mxu0 %v4694
    %6481 = vmatpush1.bf16.msra.mxu0 %v4693
    %6482 = vmatprep.subr.bf16.mxu0 %v4702
    %6483 = vmatpush1.bf16.msra.mxu0 %v4701
    %6484 = vmatprep.subr.bf16.mxu0 %v4710
    %6485 = vmatpush1.bf16.msra.mxu0 %v4709
    %6486 = vmatprep.subr.bf16.mxu0 %v4718
    %6487 = vmatpush1.bf16.msra.mxu0 %v4717
    %6488 = vmatprep.subr.bf16.mxu0 %v4726
    %6489 = vmatpush1.bf16.msra.mxu0 %v4725
    %6490 = vmatprep.subr.bf16.mxu0 %v4734
    %6491 = vmatpush1.bf16.msra.mxu0 %v4733
    %6492 = vmatprep.subr.bf16.mxu0 %v4742
    %6493 = vmatpush1.bf16.msra.mxu0 %v4741
    %6494 = vmatprep.subr.bf16.mxu0 %v4750
    %6495 = vmatpush1.bf16.msra.mxu0 %v4749
    %6496 = vmatprep.subr.bf16.mxu0 %v4758
    %6497 = vmatpush1.bf16.msra.mxu0 %v4757
    %6498 = vmatprep.subr.bf16.mxu0 %v4766
    %6499 = vmatpush1.bf16.msra.mxu0 %v4765
    %6500 = vmatprep.subr.bf16.mxu0 %v4774
    %6501 = vmatpush1.bf16.msra.mxu0 %v4773
    %6502 = vmatprep.subr.bf16.mxu0 %v4782
    %6503 = vmatpush1.bf16.msra.mxu0 %v4781
    %6504 = vmatprep.subr.bf16.mxu0 %v4790
    %6505 = vmatpush1.bf16.msra.mxu0 %v4789
    %6506 = vmatprep.subr.bf16.mxu0 %v4798
    %6507 = vmatpush1.bf16.msra.mxu0 %v4797
    %6508 = vmatprep.subr.bf16.mxu0 %v4806
    %6509 = vmatpush1.bf16.msra.mxu0 %v4805
    %6510 = vmatprep.subr.bf16.mxu0 %v4814
    %6511 = vmatpush1.bf16.msra.mxu0 %v4813
    %6512 = vmatprep.mubr.bf16.mxu0 %v1171
    %6513 = vmatmul.mubr.bf16.gmra.mrb[0].mxu0 %v1169
    %v6514 = vpop.f32.mrb[0].mxu0
    %v6515 = vadd.f32 %v6474, %v6514
    %v6516 = vpop.f32.mrb[0].mxu0
    %v6517 = vadd.f32 %v6476, %v6516
    %v6518 = vpop.f32.mrb[0].mxu0
    %v6519 = vpop.f32.mrb[0].mxu0
    %6520 = vdwg.mxu0
    %6521 = vmatprep.subr.bf16.mxu0 %v4822
    %6522 = vmatpush1.bf16.msra.mxu0 %v4821
    %6523 = vmatprep.subr.bf16.mxu0 %v4830
    %6524 = vmatpush1.bf16.msra.mxu0 %v4829
    %6525 = vmatprep.subr.bf16.mxu0 %v4838
    %6526 = vmatpush1.bf16.msra.mxu0 %v4837
    %6527 = vmatprep.subr.bf16.mxu0 %v4846
    %6528 = vmatpush1.bf16.msra.mxu0 %v4845
    %6529 = vmatprep.subr.bf16.mxu0 %v4854
    %6530 = vmatpush1.bf16.msra.mxu0 %v4853
    %6531 = vmatprep.subr.bf16.mxu0 %v4862
    %6532 = vmatpush1.bf16.msra.mxu0 %v4861
    %6533 = vmatprep.subr.bf16.mxu0 %v4870
    %6534 = vmatpush1.bf16.msra.mxu0 %v4869
    %6535 = vmatprep.subr.bf16.mxu0 %v4878
    %6536 = vmatpush1.bf16.msra.mxu0 %v4877
    %6537 = vmatprep.subr.bf16.mxu0 %v4886
    %6538 = vmatpush1.bf16.msra.mxu0 %v4885
    %6539 = vmatprep.subr.bf16.mxu0 %v4894
    %6540 = vmatpush1.bf16.msra.mxu0 %v4893
    %6541 = vmatprep.subr.bf16.mxu0 %v4902
    %6542 = vmatpush1.bf16.msra.mxu0 %v4901
    %6543 = vmatprep.subr.bf16.mxu0 %v4910
    %6544 = vmatpush1.bf16.msra.mxu0 %v4909
    %6545 = vmatprep.subr.bf16.mxu0 %v4918
    %6546 = vmatpush1.bf16.msra.mxu0 %v4917
    %6547 = vmatprep.subr.bf16.mxu0 %v4926
    %6548 = vmatpush1.bf16.msra.mxu0 %v4925
    %6549 = vmatprep.subr.bf16.mxu0 %v4934
    %6550 = vmatpush1.bf16.msra.mxu0 %v4933
    %6551 = vmatprep.subr.bf16.mxu0 %v4942
    %6552 = vmatpush1.bf16.msra.mxu0 %v4941
    %6553 = vmatprep.mubr.bf16.mxu0 %v1209
    %6554 = vmatmul.mubr.bf16.gmra.mrb[0].mxu0 %v1195
    %v6555 = vpop.f32.mrb[0].mxu0
    %v6556 = vadd.f32 %v6515, %v6555
    %v6557 = vpop.f32.mrb[0].mxu0
    %v6558 = vadd.f32 %v6517, %v6557
    %v6559 = vpop.f32.mrb[0].mxu0
    %v6560 = vpop.f32.mrb[0].mxu0
    %6561 = vdwg.mxu0
    %6562 = vmatprep.subr.bf16.mxu0 %v4950
    %6563 = vmatpush1.bf16.msra.mxu0 %v4949
    %6564 = vmatprep.subr.bf16.mxu0 %v4958
    %6565 = vmatpush1.bf16.msra.mxu0 %v4957
    %6566 = vmatprep.subr.bf16.mxu0 %v4966
    %6567 = vmatpush1.bf16.msra.mxu0 %v4965
    %6568 = vmatprep.subr.bf16.mxu0 %v4974
    %6569 = vmatpush1.bf16.msra.mxu0 %v4973
    %6570 = vmatprep.subr.bf16.mxu0 %v4982
    %6571 = vmatpush1.bf16.msra.mxu0 %v4981
    %6572 = vmatprep.subr.bf16.mxu0 %v4990
    %6573 = vmatpush1.bf16.msra.mxu0 %v4989
    %6574 = vmatprep.subr.bf16.mxu0 %v4998
    %6575 = vmatpush1.bf16.msra.mxu0 %v4997
    %6576 = vmatprep.subr.bf16.mxu0 %v5006
    %6577 = vmatpush1.bf16.msra.mxu0 %v5005
    %6578 = vmatprep.subr.bf16.mxu0 %v5014
    %6579 = vmatpush1.bf16.msra.mxu0 %v5013
    %6580 = vmatprep.subr.bf16.mxu0 %v5022
    %6581 = vmatpush1.bf16.msra.mxu0 %v5021
    %6582 = vmatprep.subr.bf16.mxu0 %v5030
    %6583 = vmatpush1.bf16.msra.mxu0 %v5029
    %6584 = vmatprep.subr.bf16.mxu0 %v5038
    %6585 = vmatpush1.bf16.msra.mxu0 %v5037
    %6586 = vmatprep.subr.bf16.mxu0 %v5046
    %6587 = vmatpush1.bf16.msra.mxu0 %v5045
    %6588 = vmatprep.subr.bf16.mxu0 %v5054
    %6589 = vmatpush1.bf16.msra.mxu0 %v5053
    %6590 = vmatprep.subr.bf16.mxu0 %v5062
    %6591 = vmatpush1.bf16.msra.mxu0 %v5061
    %6592 = vmatprep.subr.bf16.mxu0 %v5070
    %6593 = vmatpush1.bf16.msra.mxu0 %v5069
    %6594 = vmatprep.mubr.bf16.mxu0 %v1219
    %6595 = vmatmul.mubr.bf16.gmra.mrb[0].mxu0 %v1217
    %v6596 = vpop.f32.mrb[0].mxu0
    %v6597 = vadd.f32 %v6556, %v6596
    %v6598 = vpop.f32.mrb[0].mxu0
    %v6599 = vadd.f32 %v6558, %v6598
    %v6600 = vpop.f32.mrb[0].mxu0
    %v6601 = vpop.f32.mrb[0].mxu0
    %6602 = vdwg.mxu0
    %6603 = vmatprep.subr.bf16.mxu0 %v5078
    %6604 = vmatpush1.bf16.msra.mxu0 %v5077
    %6605 = vmatprep.subr.bf16.mxu0 %v5086
    %6606 = vmatpush1.bf16.msra.mxu0 %v5085
    %6607 = vmatprep.subr.bf16.mxu0 %v5094
    %6608 = vmatpush1.bf16.msra.mxu0 %v5093
    %6609 = vmatprep.subr.bf16.mxu0 %v5102
    %6610 = vmatpush1.bf16.msra.mxu0 %v5101
    %6611 = vmatprep.subr.bf16.mxu0 %v5110
    %6612 = vmatpush1.bf16.msra.mxu0 %v5109
    %6613 = vmatprep.subr.bf16.mxu0 %v5118
    %6614 = vmatpush1.bf16.msra.mxu0 %v5117
    %6615 = vmatprep.subr.bf16.mxu0 %v5126
    %6616 = vmatpush1.bf16.msra.mxu0 %v5125
    %6617 = vmatprep.subr.bf16.mxu0 %v5134
    %6618 = vmatpush1.bf16.msra.mxu0 %v5133
    %6619 = vmatprep.subr.bf16.mxu0 %v5142
    %6620 = vmatpush1.bf16.msra.mxu0 %v5141
    %6621 = vmatprep.subr.bf16.mxu0 %v5150
    %6622 = vmatpush1.bf16.msra.mxu0 %v5149
    %6623 = vmatprep.subr.bf16.mxu0 %v5158
    %6624 = vmatpush1.bf16.msra.mxu0 %v5157
    %6625 = vmatprep.subr.bf16.mxu0 %v5166
    %6626 = vmatpush1.bf16.msra.mxu0 %v5165
    %6627 = vmatprep.subr.bf16.mxu0 %v5174
    %6628 = vmatpush1.bf16.msra.mxu0 %v5173
    %6629 = vmatprep.subr.bf16.mxu0 %v5182
    %6630 = vmatpush1.bf16.msra.mxu0 %v5181
    %6631 = vmatprep.subr.bf16.mxu0 %v5190
    %6632 = vmatpush1.bf16.msra.mxu0 %v5189
    %6633 = vmatprep.subr.bf16.mxu0 %v5198
    %6634 = vmatpush1.bf16.msra.mxu0 %v5197
    %6635 = vmatprep.mubr.bf16.mxu0 %v1216
    %6636 = vmatmul.mubr.bf16.gmra.mrb[0].mxu0 %v1202
    %v6637 = vpop.f32.mrb[0].mxu0
    %v6638 = vadd.f32 %v6597, %v6637
    %v6639 = vpop.f32.mrb[0].mxu0
    %v6640 = vadd.f32 %v6599, %v6639
    %v6641 = vpop.f32.mrb[0].mxu0
    %v6642 = vpop.f32.mrb[0].mxu0
    %6643 = vdwg.mxu0
    %6644 = vmatprep.subr.bf16.mxu0 %v5206
    %6645 = vmatpush1.bf16.msra.mxu0 %v5205
    %6646 = vmatprep.subr.bf16.mxu0 %v5214
    %6647 = vmatpush1.bf16.msra.mxu0 %v5213
    %6648 = vmatprep.subr.bf16.mxu0 %v5222
    %6649 = vmatpush1.bf16.msra.mxu0 %v5221
    %6650 = vmatprep.subr.bf16.mxu0 %v5230
    %6651 = vmatpush1.bf16.msra.mxu0 %v5229
    %6652 = vmatprep.subr.bf16.mxu0 %v5238
    %6653 = vmatpush1.bf16.msra.mxu0 %v5237
    %6654 = vmatprep.subr.bf16.mxu0 %v5246
    %6655 = vmatpush1.bf16.msra.mxu0 %v5245
    %6656 = vmatprep.subr.bf16.mxu0 %v5254
    %6657 = vmatpush1.bf16.msra.mxu0 %v5253
    %6658 = vmatprep.subr.bf16.mxu0 %v5262
    %6659 = vmatpush1.bf16.msra.mxu0 %v5261
    %6660 = vmatprep.subr.bf16.mxu0 %v5270
    %6661 = vmatpush1.bf16.msra.mxu0 %v5269
    %6662 = vmatprep.subr.bf16.mxu0 %v5278
    %6663 = vmatpush1.bf16.msra.mxu0 %v5277
    %6664 = vmatprep.subr.bf16.mxu0 %v5286
    %6665 = vmatpush1.bf16.msra.mxu0 %v5285
    %6666 = vmatprep.subr.bf16.mxu0 %v5294
    %6667 = vmatpush1.bf16.msra.mxu0 %v5293
    %6668 = vmatprep.subr.bf16.mxu0 %v5302
    %6669 = vmatpush1.bf16.msra.mxu0 %v5301
    %6670 = vmatprep.subr.bf16.mxu0 %v5310
    %6671 = vmatpush1.bf16.msra.mxu0 %v5309
    %6672 = vmatprep.subr.bf16.mxu0 %v5318
    %6673 = vmatpush1.bf16.msra.mxu0 %v5317
    %6674 = vmatprep.subr.bf16.mxu0 %v5326
    %6675 = vmatpush1.bf16.msra.mxu0 %v5325
    %6676 = vmatprep.mubr.bf16.mxu0 %v1220
    %6677 = vmatmul.mubr.bf16.gmra.mrb[0].mxu0 %v1218
    %v6678 = vpop.f32.mrb[0].mxu0
    %v6679 = vadd.f32 %v6638, %v6678
    %v6680 = vpop.f32.mrb[0].mxu0
    %v6681 = vadd.f32 %v6640, %v6680
    %v6682 = vpop.f32.mrb[0].mxu0
    %v6683 = vpop.f32.mrb[0].mxu0
    %6684 = vdwg.mxu0
    %6685 = vmatprep.subr.bf16.mxu0 %v4312
    %6686 = vmatpush1.bf16.msra.mxu0 %v4311
    %6687 = vmatprep.subr.bf16.mxu0 %v4320
    %6688 = vmatpush1.bf16.msra.mxu0 %v4319
    %6689 = vmatprep.subr.bf16.mxu0 %v4328
    %6690 = vmatpush1.bf16.msra.mxu0 %v4327
    %6691 = vmatprep.subr.bf16.mxu0 %v4336
    %6692 = vmatpush1.bf16.msra.mxu0 %v4335
    %6693 = vmatprep.subr.bf16.mxu0 %v4344
    %6694 = vmatpush1.bf16.msra.mxu0 %v4343
    %6695 = vmatprep.subr.bf16.mxu0 %v4352
    %6696 = vmatpush1.bf16.msra.mxu0 %v4351
    %6697 = vmatprep.subr.bf16.mxu0 %v4360
    %6698 = vmatpush1.bf16.msra.mxu0 %v4359
    %6699 = vmatprep.subr.bf16.mxu0 %v4368
    %6700 = vmatpush1.bf16.msra.mxu0 %v4367
    %6701 = vmatprep.subr.bf16.mxu0 %v4376
    %6702 = vmatpush1.bf16.msra.mxu0 %v4375
    %6703 = vmatprep.subr.bf16.mxu0 %v4384
    %6704 = vmatpush1.bf16.msra.mxu0 %v4383
    %6705 = vmatprep.subr.bf16.mxu0 %v4392
    %6706 = vmatpush1.bf16.msra.mxu0 %v4391
    %6707 = vmatprep.subr.bf16.mxu0 %v4400
    %6708 = vmatpush1.bf16.msra.mxu0 %v4399
    %6709 = vmatprep.subr.bf16.mxu0 %v4408
    %6710 = vmatpush1.bf16.msra.mxu0 %v4407
    %6711 = vmatprep.subr.bf16.mxu0 %v4416
    %6712 = vmatpush1.bf16.msra.mxu0 %v4415
    %6713 = vmatprep.subr.bf16.mxu0 %v4424
    %6714 = vmatpush1.bf16.msra.mxu0 %v4423
    %6715 = vmatprep.subr.bf16.mxu0 %v4432
    %6716 = vmatpush1.bf16.msra.mxu0 %v4431
    %6717 = vmatprep.mubr.bf16.mxu0 %v1160
    %6718 = vmatmul.mubr.bf16.gmra.mrb[0].mxu0 %v1146
    %v6719 = vpop.f32.mrb[0].mxu0
    %v6720 = vadd.f32 0.0, %v6719
    %v6721 = vpop.f32.mrb[0].mxu0
    %v6722 = vadd.f32 0.0, %v6721
    %v6723 = vpop.f32.mrb[0].mxu0
    %v6724 = vpop.f32.mrb[0].mxu0
    %6725 = vdwg.mxu0
    %6726 = vmatprep.subr.bf16.mxu0 %v4440
    %6727 = vmatpush1.bf16.msra.mxu0 %v4439
    %6728 = vmatprep.subr.bf16.mxu0 %v4448
    %6729 = vmatpush1.bf16.msra.mxu0 %v4447
    %6730 = vmatprep.subr.bf16.mxu0 %v4456
    %6731 = vmatpush1.bf16.msra.mxu0 %v4455
    %6732 = vmatprep.subr.bf16.mxu0 %v4464
    %6733 = vmatpush1.bf16.msra.mxu0 %v4463
    %6734 = vmatprep.subr.bf16.mxu0 %v4472
    %6735 = vmatpush1.bf16.msra.mxu0 %v4471
    %6736 = vmatprep.subr.bf16.mxu0 %v4480
    %6737 = vmatpush1.bf16.msra.mxu0 %v4479
    %6738 = vmatprep.subr.bf16.mxu0 %v4488
    %6739 = vmatpush1.bf16.msra.mxu0 %v4487
    %6740 = vmatprep.subr.bf16.mxu0 %v4496
    %6741 = vmatpush1.bf16.msra.mxu0 %v4495
    %6742 = vmatprep.subr.bf16.mxu0 %v4504
    %6743 = vmatpush1.bf16.msra.mxu0 %v4503
    %6744 = vmatprep.subr.bf16.mxu0 %v4512
    %6745 = vmatpush1.bf16.msra.mxu0 %v4511
    %6746 = vmatprep.subr.bf16.mxu0 %v4520
    %6747 = vmatpush1.bf16.msra.mxu0 %v4519
    %6748 = vmatprep.subr.bf16.mxu0 %v4528
    %6749 = vmatpush1.bf16.msra.mxu0 %v4527
    %6750 = vmatprep.subr.bf16.mxu0 %v4536
    %6751 = vmatpush1.bf16.msra.mxu0 %v4535
    %6752 = vmatprep.subr.bf16.mxu0 %v4544
    %6753 = vmatpush1.bf16.msra.mxu0 %v4543
    %6754 = vmatprep.subr.bf16.mxu0 %v4552
    %6755 = vmatpush1.bf16.msra.mxu0 %v4551
    %6756 = vmatprep.subr.bf16.mxu0 %v4560
    %6757 = vmatpush1.bf16.msra.mxu0 %v4559
    %6758 = vmatprep.mubr.bf16.mxu0 %v1170
    %6759 = vmatmul.mubr.bf16.gmra.mrb[0].mxu0 %v1168
    %v6760 = vpop.f32.mrb[0].mxu0
    %v6761 = vadd.f32 %v6720, %v6760
    %v6762 = vpop.f32.mrb[0].mxu0
    %v6763 = vadd.f32 %v6722, %v6762
    %v6764 = vpop.f32.mrb[0].mxu0
    %v6765 = vpop.f32.mrb[0].mxu0
    %6766 = vdwg.mxu0
    %6767 = vmatprep.subr.bf16.mxu0 %v4568
    %6768 = vmatpush1.bf16.msra.mxu0 %v4567
    %6769 = vmatprep.subr.bf16.mxu0 %v4576
    %6770 = vmatpush1.bf16.msra.mxu0 %v4575
    %6771 = vmatprep.subr.bf16.mxu0 %v4584
    %6772 = vmatpush1.bf16.msra.mxu0 %v4583
    %6773 = vmatprep.subr.bf16.mxu0 %v4592
    %6774 = vmatpush1.bf16.msra.mxu0 %v4591
    %6775 = vmatprep.subr.bf16.mxu0 %v4600
    %6776 = vmatpush1.bf16.msra.mxu0 %v4599
    %6777 = vmatprep.subr.bf16.mxu0 %v4608
    %6778 = vmatpush1.bf16.msra.mxu0 %v4607
    %6779 = vmatprep.subr.bf16.mxu0 %v4616
    %6780 = vmatpush1.bf16.msra.mxu0 %v4615
    %6781 = vmatprep.subr.bf16.mxu0 %v4624
    %6782 = vmatpush1.bf16.msra.mxu0 %v4623
    %6783 = vmatprep.subr.bf16.mxu0 %v4632
    %6784 = vmatpush1.bf16.msra.mxu0 %v4631
    %6785 = vmatprep.subr.bf16.mxu0 %v4640
    %6786 = vmatpush1.bf16.msra.mxu0 %v4639
    %6787 = vmatprep.subr.bf16.mxu0 %v4648
    %6788 = vmatpush1.bf16.msra.mxu0 %v4647
    %6789 = vmatprep.subr.bf16.mxu0 %v4656
    %6790 = vmatpush1.bf16.msra.mxu0 %v4655
    %6791 = vmatprep.subr.bf16.mxu0 %v4664
    %6792 = vmatpush1.bf16.msra.mxu0 %v4663
    %6793 = vmatprep.subr.bf16.mxu0 %v4672
    %6794 = vmatpush1.bf16.msra.mxu0 %v4671
    %6795 = vmatprep.subr.bf16.mxu0 %v4680
    %6796 = vmatpush1.bf16.msra.mxu0 %v4679
    %6797 = vmatprep.subr.bf16.mxu0 %v4688
    %6798 = vmatpush1.bf16.msra.mxu0 %v4687
    %6799 = vmatprep.mubr.bf16.mxu0 %v1167
    %6800 = vmatmul.mubr.bf16.gmra.mrb[0].mxu0 %v1153
    %v6801 = vpop.f32.mrb[0].mxu0
    %v6802 = vadd.f32 %v6761, %v6801
    %v6803 = vpop.f32.mrb[0].mxu0
    %v6804 = vadd.f32 %v6763, %v6803
    %v6805 = vpop.f32.mrb[0].mxu0
    %v6806 = vpop.f32.mrb[0].mxu0
    %6807 = vdwg.mxu0
    %6808 = vmatprep.subr.bf16.mxu0 %v4696
    %6809 = vmatpush1.bf16.msra.mxu0 %v4695
    %6810 = vmatprep.subr.bf16.mxu0 %v4704
    %6811 = vmatpush1.bf16.msra.mxu0 %v4703
    %6812 = vmatprep.subr.bf16.mxu0 %v4712
    %6813 = vmatpush1.bf16.msra.mxu0 %v4711
    %6814 = vmatprep.subr.bf16.mxu0 %v4720
    %6815 = vmatpush1.bf16.msra.mxu0 %v4719
    %6816 = vmatprep.subr.bf16.mxu0 %v4728
    %6817 = vmatpush1.bf16.msra.mxu0 %v4727
    %6818 = vmatprep.subr.bf16.mxu0 %v4736
    %6819 = vmatpush1.bf16.msra.mxu0 %v4735
    %6820 = vmatprep.subr.bf16.mxu0 %v4744
    %6821 = vmatpush1.bf16.msra.mxu0 %v4743
    %6822 = vmatprep.subr.bf16.mxu0 %v4752
    %6823 = vmatpush1.bf16.msra.mxu0 %v4751
    %6824 = vmatprep.subr.bf16.mxu0 %v4760
    %6825 = vmatpush1.bf16.msra.mxu0 %v4759
    %6826 = vmatprep.subr.bf16.mxu0 %v4768
    %6827 = vmatpush1.bf16.msra.mxu0 %v4767
    %6828 = vmatprep.subr.bf16.mxu0 %v4776
    %6829 = vmatpush1.bf16.msra.mxu0 %v4775
    %6830 = vmatprep.subr.bf16.mxu0 %v4784
    %6831 = vmatpush1.bf16.msra.mxu0 %v4783
    %6832 = vmatprep.subr.bf16.mxu0 %v4792
    %6833 = vmatpush1.bf16.msra.mxu0 %v4791
    %6834 = vmatprep.subr.bf16.mxu0 %v4800
    %6835 = vmatpush1.bf16.msra.mxu0 %v4799
    %6836 = vmatprep.subr.bf16.mxu0 %v4808
    %6837 = vmatpush1.bf16.msra.mxu0 %v4807
    %6838 = vmatprep.subr.bf16.mxu0 %v4816
    %6839 = vmatpush1.bf16.msra.mxu0 %v4815
    %6840 = vmatprep.mubr.bf16.mxu0 %v1171
    %6841 = vmatmul.mubr.bf16.gmra.mrb[0].mxu0 %v1169
    %v6842 = vpop.f32.mrb[0].mxu0
    %v6843 = vadd.f32 %v6802, %v6842
    %v6844 = vpop.f32.mrb[0].mxu0
    %v6845 = vadd.f32 %v6804, %v6844
    %v6846 = vpop.f32.mrb[0].mxu0
    %v6847 = vpop.f32.mrb[0].mxu0
    %6848 = vdwg.mxu0
    %6849 = vmatprep.subr.bf16.mxu0 %v4824
    %6850 = vmatpush1.bf16.msra.mxu0 %v4823
    %6851 = vmatprep.subr.bf16.mxu0 %v4832
    %6852 = vmatpush1.bf16.msra.mxu0 %v4831
    %6853 = vmatprep.subr.bf16.mxu0 %v4840
    %6854 = vmatpush1.bf16.msra.mxu0 %v4839
    %6855 = vmatprep.subr.bf16.mxu0 %v4848
    %6856 = vmatpush1.bf16.msra.mxu0 %v4847
    %6857 = vmatprep.subr.bf16.mxu0 %v4856
    %6858 = vmatpush1.bf16.msra.mxu0 %v4855
    %6859 = vmatprep.subr.bf16.mxu0 %v4864
    %6860 = vmatpush1.bf16.msra.mxu0 %v4863
    %6861 = vmatprep.subr.bf16.mxu0 %v4872
    %6862 = vmatpush1.bf16.msra.mxu0 %v4871
    %6863 = vmatprep.subr.bf16.mxu0 %v4880
    %6864 = vmatpush1.bf16.msra.mxu0 %v4879
    %6865 = vmatprep.subr.bf16.mxu0 %v4888
    %6866 = vmatpush1.bf16.msra.mxu0 %v4887
    %6867 = vmatprep.subr.bf16.mxu0 %v4896
    %6868 = vmatpush1.bf16.msra.mxu0 %v4895
    %6869 = vmatprep.subr.bf16.mxu0 %v4904
    %6870 = vmatpush1.bf16.msra.mxu0 %v4903
    %6871 = vmatprep.subr.bf16.mxu0 %v4912
    %6872 = vmatpush1.bf16.msra.mxu0 %v4911
    %6873 = vmatprep.subr.bf16.mxu0 %v4920
    %6874 = vmatpush1.bf16.msra.mxu0 %v4919
    %6875 = vmatprep.subr.bf16.mxu0 %v4928
    %6876 = vmatpush1.bf16.msra.mxu0 %v4927
    %6877 = vmatprep.subr.bf16.mxu0 %v4936
    %6878 = vmatpush1.bf16.msra.mxu0 %v4935
    %6879 = vmatprep.subr.bf16.mxu0 %v4944
    %6880 = vmatpush1.bf16.msra.mxu0 %v4943
    %6881 = vmatprep.mubr.bf16.mxu0 %v1209
    %6882 = vmatmul.mubr.bf16.gmra.mrb[0].mxu0 %v1195
    %v6883 = vpop.f32.mrb[0].mxu0
    %v6884 = vadd.f32 %v6843, %v6883
    %v6885 = vpop.f32.mrb[0].mxu0
    %v6886 = vadd.f32 %v6845, %v6885
    %v6887 = vpop.f32.mrb[0].mxu0
    %v6888 = vpop.f32.mrb[0].mxu0
    %6889 = vdwg.mxu0
    %6890 = vmatprep.subr.bf16.mxu0 %v4952
    %6891 = vmatpush1.bf16.msra.mxu0 %v4951
    %6892 = vmatprep.subr.bf16.mxu0 %v4960
    %6893 = vmatpush1.bf16.msra.mxu0 %v4959
    %6894 = vmatprep.subr.bf16.mxu0 %v4968
    %6895 = vmatpush1.bf16.msra.mxu0 %v4967
    %6896 = vmatprep.subr.bf16.mxu0 %v4976
    %6897 = vmatpush1.bf16.msra.mxu0 %v4975
    %6898 = vmatprep.subr.bf16.mxu0 %v4984
    %6899 = vmatpush1.bf16.msra.mxu0 %v4983
    %6900 = vmatprep.subr.bf16.mxu0 %v4992
    %6901 = vmatpush1.bf16.msra.mxu0 %v4991
    %6902 = vmatprep.subr.bf16.mxu0 %v5000
    %6903 = vmatpush1.bf16.msra.mxu0 %v4999
    %6904 = vmatprep.subr.bf16.mxu0 %v5008
    %6905 = vmatpush1.bf16.msra.mxu0 %v5007
    %6906 = vmatprep.subr.bf16.mxu0 %v5016
    %6907 = vmatpush1.bf16.msra.mxu0 %v5015
    %6908 = vmatprep.subr.bf16.mxu0 %v5024
    %6909 = vmatpush1.bf16.msra.mxu0 %v5023
    %6910 = vmatprep.subr.bf16.mxu0 %v5032
    %6911 = vmatpush1.bf16.msra.mxu0 %v5031
    %6912 = vmatprep.subr.bf16.mxu0 %v5040
    %6913 = vmatpush1.bf16.msra.mxu0 %v5039
    %6914 = vmatprep.subr.bf16.mxu0 %v5048
    %6915 = vmatpush1.bf16.msra.mxu0 %v5047
    %6916 = vmatprep.subr.bf16.mxu0 %v5056
    %6917 = vmatpush1.bf16.msra.mxu0 %v5055
    %6918 = vmatprep.subr.bf16.mxu0 %v5064
    %6919 = vmatpush1.bf16.msra.mxu0 %v5063
    %6920 = vmatprep.subr.bf16.mxu0 %v5072
    %6921 = vmatpush1.bf16.msra.mxu0 %v5071
    %6922 = vmatprep.mubr.bf16.mxu0 %v1219
    %6923 = vmatmul.mubr.bf16.gmra.mrb[0].mxu0 %v1217
    %v6924 = vpop.f32.mrb[0].mxu0
    %v6925 = vadd.f32 %v6884, %v6924
    %v6926 = vpop.f32.mrb[0].mxu0
    %v6927 = vadd.f32 %v6886, %v6926
    %v6928 = vpop.f32.mrb[0].mxu0
    %v6929 = vpop.f32.mrb[0].mxu0
    %6930 = vdwg.mxu0
    %6931 = vmatprep.subr.bf16.mxu0 %v5080
    %6932 = vmatpush1.bf16.msra.mxu0 %v5079
    %6933 = vmatprep.subr.bf16.mxu0 %v5088
    %6934 = vmatpush1.bf16.msra.mxu0 %v5087
    %6935 = vmatprep.subr.bf16.mxu0 %v5096
    %6936 = vmatpush1.bf16.msra.mxu0 %v5095
    %6937 = vmatprep.subr.bf16.mxu0 %v5104
    %6938 = vmatpush1.bf16.msra.mxu0 %v5103
    %6939 = vmatprep.subr.bf16.mxu0 %v5112
    %6940 = vmatpush1.bf16.msra.mxu0 %v5111
    %6941 = vmatprep.subr.bf16.mxu0 %v5120
    %6942 = vmatpush1.bf16.msra.mxu0 %v5119
    %6943 = vmatprep.subr.bf16.mxu0 %v5128
    %6944 = vmatpush1.bf16.msra.mxu0 %v5127
    %6945 = vmatprep.subr.bf16.mxu0 %v5136
    %6946 = vmatpush1.bf16.msra.mxu0 %v5135
    %6947 = vmatprep.subr.bf16.mxu0 %v5144
    %6948 = vmatpush1.bf16.msra.mxu0 %v5143
    %6949 = vmatprep.subr.bf16.mxu0 %v5152
    %6950 = vmatpush1.bf16.msra.mxu0 %v5151
    %6951 = vmatprep.subr.bf16.mxu0 %v5160
    %6952 = vmatpush1.bf16.msra.mxu0 %v5159
    %6953 = vmatprep.subr.bf16.mxu0 %v5168
    %6954 = vmatpush1.bf16.msra.mxu0 %v5167
    %6955 = vmatprep.subr.bf16.mxu0 %v5176
    %6956 = vmatpush1.bf16.msra.mxu0 %v5175
    %6957 = vmatprep.subr.bf16.mxu0 %v5184
    %6958 = vmatpush1.bf16.msra.mxu0 %v5183
    %6959 = vmatprep.subr.bf16.mxu0 %v5192
    %6960 = vmatpush1.bf16.msra.mxu0 %v5191
    %6961 = vmatprep.subr.bf16.mxu0 %v5200
    %6962 = vmatpush1.bf16.msra.mxu0 %v5199
    %6963 = vmatprep.mubr.bf16.mxu0 %v1216
    %6964 = vmatmul.mubr.bf16.gmra.mrb[0].mxu0 %v1202
    %v6965 = vpop.f32.mrb[0].mxu0
    %v6966 = vadd.f32 %v6925, %v6965
    %v6967 = vpop.f32.mrb[0].mxu0
    %v6968 = vadd.f32 %v6927, %v6967
    %v6969 = vpop.f32.mrb[0].mxu0
    %v6970 = vpop.f32.mrb[0].mxu0
    %6971 = vdwg.mxu0
    %6972 = vmatprep.subr.bf16.mxu0 %v5208
    %6973 = vmatpush1.bf16.msra.mxu0 %v5207
    %6974 = vmatprep.subr.bf16.mxu0 %v5216
    %6975 = vmatpush1.bf16.msra.mxu0 %v5215
    %6976 = vmatprep.subr.bf16.mxu0 %v5224
    %6977 = vmatpush1.bf16.msra.mxu0 %v5223
    %6978 = vmatprep.subr.bf16.mxu0 %v5232
    %6979 = vmatpush1.bf16.msra.mxu0 %v5231
    %6980 = vmatprep.subr.bf16.mxu0 %v5240
    %6981 = vmatpush1.bf16.msra.mxu0 %v5239
    %6982 = vmatprep.subr.bf16.mxu0 %v5248
    %6983 = vmatpush1.bf16.msra.mxu0 %v5247
    %6984 = vmatprep.subr.bf16.mxu0 %v5256
    %6985 = vmatpush1.bf16.msra.mxu0 %v5255
    %6986 = vmatprep.subr.bf16.mxu0 %v5264
    %6987 = vmatpush1.bf16.msra.mxu0 %v5263
    %6988 = vmatprep.subr.bf16.mxu0 %v5272
    %6989 = vmatpush1.bf16.msra.mxu0 %v5271
    %6990 = vmatprep.subr.bf16.mxu0 %v5280
    %6991 = vmatpush1.bf16.msra.mxu0 %v5279
    %6992 = vmatprep.subr.bf16.mxu0 %v5288
    %6993 = vmatpush1.bf16.msra.mxu0 %v5287
    %6994 = vmatprep.subr.bf16.mxu0 %v5296
    %6995 = vmatpush1.bf16.msra.mxu0 %v5295
    %6996 = vmatprep.subr.bf16.mxu0 %v5304
    %6997 = vmatpush1.bf16.msra.mxu0 %v5303
    %6998 = vmatprep.subr.bf16.mxu0 %v5312
    %6999 = vmatpush1.bf16.msra.mxu0 %v5311
    %7000 = vmatprep.subr.bf16.mxu0 %v5320
    %7001 = vmatpush1.bf16.msra.mxu0 %v5319
    %7002 = vmatprep.subr.bf16.mxu0 %v5328
    %7003 = vmatpush1.bf16.msra.mxu0 %v5327
    %7004 = vmatprep.mubr.bf16.mxu0 %v1220
    %7005 = vmatmul.mubr.bf16.gmra.mrb[0].mxu0 %v1218
    %v7006 = vpop.f32.mrb[0].mxu0
    %v7007 = vadd.f32 %v6966, %v7006
    %v7008 = vpop.f32.mrb[0].mxu0
    %v7009 = vadd.f32 %v6968, %v7008
    %v7010 = vpop.f32.mrb[0].mxu0
    %v7011 = vpop.f32.mrb[0].mxu0
    %7012 = vdwg.mxu0
    %7013 = vmatprep.subr.bf16.mxu0 %v4314
    %7014 = vmatpush1.bf16.msra.mxu0 %v4313
    %7015 = vmatprep.subr.bf16.mxu0 %v4322
    %7016 = vmatpush1.bf16.msra.mxu0 %v4321
    %7017 = vmatprep.subr.bf16.mxu0 %v4330
    %7018 = vmatpush1.bf16.msra.mxu0 %v4329
    %7019 = vmatprep.subr.bf16.mxu0 %v4338
    %7020 = vmatpush1.bf16.msra.mxu0 %v4337
    %7021 = vmatprep.subr.bf16.mxu0 %v4346
    %7022 = vmatpush1.bf16.msra.mxu0 %v4345
    %7023 = vmatprep.subr.bf16.mxu0 %v4354
    %7024 = vmatpush1.bf16.msra.mxu0 %v4353
    %7025 = vmatprep.subr.bf16.mxu0 %v4362
    %7026 = vmatpush1.bf16.msra.mxu0 %v4361
    %7027 = vmatprep.subr.bf16.mxu0 %v4370
    %7028 = vmatpush1.bf16.msra.mxu0 %v4369
    %7029 = vmatprep.subr.bf16.mxu0 %v4378
    %7030 = vmatpush1.bf16.msra.mxu0 %v4377
    %7031 = vmatprep.subr.bf16.mxu0 %v4386
    %7032 = vmatpush1.bf16.msra.mxu0 %v4385
    %7033 = vmatprep.subr.bf16.mxu0 %v4394
    %7034 = vmatpush1.bf16.msra.mxu0 %v4393
    %7035 = vmatprep.subr.bf16.mxu0 %v4402
    %7036 = vmatpush1.bf16.msra.mxu0 %v4401
    %7037 = vmatprep.subr.bf16.mxu0 %v4410
    %7038 = vmatpush1.bf16.msra.mxu0 %v4409
    %7039 = vmatprep.subr.bf16.mxu0 %v4418
    %7040 = vmatpush1.bf16.msra.mxu0 %v4417
    %7041 = vmatprep.subr.bf16.mxu0 %v4426
    %7042 = vmatpush1.bf16.msra.mxu0 %v4425
    %7043 = vmatprep.subr.bf16.mxu0 %v4434
    %7044 = vmatpush1.bf16.msra.mxu0 %v4433
    %7045 = vmatprep.mubr.bf16.mxu0 %v1160
    %7046 = vmatmul.mubr.bf16.gmra.mrb[0].mxu0 %v1146
    %v7047 = vpop.f32.mrb[0].mxu0
    %v7048 = vadd.f32 0.0, %v7047
    %v7049 = vpop.f32.mrb[0].mxu0
    %v7050 = vadd.f32 0.0, %v7049
    %v7051 = vpop.f32.mrb[0].mxu0
    %v7052 = vpop.f32.mrb[0].mxu0
    %7053 = vdwg.mxu0
    %7054 = vmatprep.subr.bf16.mxu0 %v4442
    %7055 = vmatpush1.bf16.msra.mxu0 %v4441
    %7056 = vmatprep.subr.bf16.mxu0 %v4450
    %7057 = vmatpush1.bf16.msra.mxu0 %v4449
    %7058 = vmatprep.subr.bf16.mxu0 %v4458
    %7059 = vmatpush1.bf16.msra.mxu0 %v4457
    %7060 = vmatprep.subr.bf16.mxu0 %v4466
    %7061 = vmatpush1.bf16.msra.mxu0 %v4465
    %7062 = vmatprep.subr.bf16.mxu0 %v4474
    %7063 = vmatpush1.bf16.msra.mxu0 %v4473
    %7064 = vmatprep.subr.bf16.mxu0 %v4482
    %7065 = vmatpush1.bf16.msra.mxu0 %v4481
    %7066 = vmatprep.subr.bf16.mxu0 %v4490
    %7067 = vmatpush1.bf16.msra.mxu0 %v4489
    %7068 = vmatprep.subr.bf16.mxu0 %v4498
    %7069 = vmatpush1.bf16.msra.mxu0 %v4497
    %7070 = vmatprep.subr.bf16.mxu0 %v4506
    %7071 = vmatpush1.bf16.msra.mxu0 %v4505
    %7072 = vmatprep.subr.bf16.mxu0 %v4514
    %7073 = vmatpush1.bf16.msra.mxu0 %v4513
    %7074 = vmatprep.subr.bf16.mxu0 %v4522
    %7075 = vmatpush1.bf16.msra.mxu0 %v4521
    %7076 = vmatprep.subr.bf16.mxu0 %v4530
    %7077 = vmatpush1.bf16.msra.mxu0 %v4529
    %7078 = vmatprep.subr.bf16.mxu0 %v4538
    %7079 = vmatpush1.bf16.msra.mxu0 %v4537
    %7080 = vmatprep.subr.bf16.mxu0 %v4546
    %7081 = vmatpush1.bf16.msra.mxu0 %v4545
    %7082 = vmatprep.subr.bf16.mxu0 %v4554
    %7083 = vmatpush1.bf16.msra.mxu0 %v4553
    %7084 = vmatprep.subr.bf16.mxu0 %v4562
    %7085 = vmatpush1.bf16.msra.mxu0 %v4561
    %7086 = vmatprep.mubr.bf16.mxu0 %v1170
    %7087 = vmatmul.mubr.bf16.gmra.mrb[0].mxu0 %v1168
    %v7088 = vpop.f32.mrb[0].mxu0
    %v7089 = vadd.f32 %v7048, %v7088
    %v7090 = vpop.f32.mrb[0].mxu0
    %v7091 = vadd.f32 %v7050, %v7090
    %v7092 = vpop.f32.mrb[0].mxu0
    %v7093 = vpop.f32.mrb[0].mxu0
    %7094 = vdwg.mxu0
    %7095 = vmatprep.subr.bf16.mxu0 %v4570
    %7096 = vmatpush1.bf16.msra.mxu0 %v4569
    %7097 = vmatprep.subr.bf16.mxu0 %v4578
    %7098 = vmatpush1.bf16.msra.mxu0 %v4577
    %7099 = vmatprep.subr.bf16.mxu0 %v4586
    %7100 = vmatpush1.bf16.msra.mxu0 %v4585
    %7101 = vmatprep.subr.bf16.mxu0 %v4594
    %7102 = vmatpush1.bf16.msra.mxu0 %v4593
    %7103 = vmatprep.subr.bf16.mxu0 %v4602
    %7104 = vmatpush1.bf16.msra.mxu0 %v4601
    %7105 = vmatprep.subr.bf16.mxu0 %v4610
    %7106 = vmatpush1.bf16.msra.mxu0 %v4609
    %7107 = vmatprep.subr.bf16.mxu0 %v4618
    %7108 = vmatpush1.bf16.msra.mxu0 %v4617
    %7109 = vmatprep.subr.bf16.mxu0 %v4626
    %7110 = vmatpush1.bf16.msra.mxu0 %v4625
    %7111 = vmatprep.subr.bf16.mxu0 %v4634
    %7112 = vmatpush1.bf16.msra.mxu0 %v4633
    %7113 = vmatprep.subr.bf16.mxu0 %v4642
    %7114 = vmatpush1.bf16.msra.mxu0 %v4641
    %7115 = vmatprep.subr.bf16.mxu0 %v4650
    %7116 = vmatpush1.bf16.msra.mxu0 %v4649
    %7117 = vmatprep.subr.bf16.mxu0 %v4658
    %7118 = vmatpush1.bf16.msra.mxu0 %v4657
    %7119 = vmatprep.subr.bf16.mxu0 %v4666
    %7120 = vmatpush1.bf16.msra.mxu0 %v4665
    %7121 = vmatprep.subr.bf16.mxu0 %v4674
    %7122 = vmatpush1.bf16.msra.mxu0 %v4673
    %7123 = vmatprep.subr.bf16.mxu0 %v4682
    %7124 = vmatpush1.bf16.msra.mxu0 %v4681
    %7125 = vmatprep.subr.bf16.mxu0 %v4690
    %7126 = vmatpush1.bf16.msra.mxu0 %v4689
    %7127 = vmatprep.mubr.bf16.mxu0 %v1167
    %7128 = vmatmul.mubr.bf16.gmra.mrb[0].mxu0 %v1153
    %v7129 = vpop.f32.mrb[0].mxu0
    %v7130 = vadd.f32 %v7089, %v7129
    %v7131 = vpop.f32.mrb[0].mxu0
    %v7132 = vadd.f32 %v7091, %v7131
    %v7133 = vpop.f32.mrb[0].mxu0
    %v7134 = vpop.f32.mrb[0].mxu0
    %7135 = vdwg.mxu0
    %7136 = vmatprep.subr.bf16.mxu0 %v4698
    %7137 = vmatpush1.bf16.msra.mxu0 %v4697
    %7138 = vmatprep.subr.bf16.mxu0 %v4706
    %7139 = vmatpush1.bf16.msra.mxu0 %v4705
    %7140 = vmatprep.subr.bf16.mxu0 %v4714
    %7141 = vmatpush1.bf16.msra.mxu0 %v4713
    %7142 = vmatprep.subr.bf16.mxu0 %v4722
    %7143 = vmatpush1.bf16.msra.mxu0 %v4721
    %7144 = vmatprep.subr.bf16.mxu0 %v4730
    %7145 = vmatpush1.bf16.msra.mxu0 %v4729
    %7146 = vmatprep.subr.bf16.mxu0 %v4738
    %7147 = vmatpush1.bf16.msra.mxu0 %v4737
    %7148 = vmatprep.subr.bf16.mxu0 %v4746
    %7149 = vmatpush1.bf16.msra.mxu0 %v4745
    %7150 = vmatprep.subr.bf16.mxu0 %v4754
    %7151 = vmatpush1.bf16.msra.mxu0 %v4753
    %7152 = vmatprep.subr.bf16.mxu0 %v4762
    %7153 = vmatpush1.bf16.msra.mxu0 %v4761
    %7154 = vmatprep.subr.bf16.mxu0 %v4770
    %7155 = vmatpush1.bf16.msra.mxu0 %v4769
    %7156 = vmatprep.subr.bf16.mxu0 %v4778
    %7157 = vmatpush1.bf16.msra.mxu0 %v4777
    %7158 = vmatprep.subr.bf16.mxu0 %v4786
    %7159 = vmatpush1.bf16.msra.mxu0 %v4785
    %7160 = vmatprep.subr.bf16.mxu0 %v4794
    %7161 = vmatpush1.bf16.msra.mxu0 %v4793
    %7162 = vmatprep.subr.bf16.mxu0 %v4802
    %7163 = vmatpush1.bf16.msra.mxu0 %v4801
    %7164 = vmatprep.subr.bf16.mxu0 %v4810
    %7165 = vmatpush1.bf16.msra.mxu0 %v4809
    %7166 = vmatprep.subr.bf16.mxu0 %v4818
    %7167 = vmatpush1.bf16.msra.mxu0 %v4817
    %7168 = vmatprep.mubr.bf16.mxu0 %v1171
    %7169 = vmatmul.mubr.bf16.gmra.mrb[0].mxu0 %v1169
    %v7170 = vpop.f32.mrb[0].mxu0
    %v7171 = vadd.f32 %v7130, %v7170
    %v7172 = vpop.f32.mrb[0].mxu0
    %v7173 = vadd.f32 %v7132, %v7172
    %v7174 = vpop.f32.mrb[0].mxu0
    %v7175 = vpop.f32.mrb[0].mxu0
    %7176 = vdwg.mxu0
    %7177 = vmatprep.subr.bf16.mxu0 %v4826
    %7178 = vmatpush1.bf16.msra.mxu0 %v4825
    %7179 = vmatprep.subr.bf16.mxu0 %v4834
    %7180 = vmatpush1.bf16.msra.mxu0 %v4833
    %7181 = vmatprep.subr.bf16.mxu0 %v4842
    %7182 = vmatpush1.bf16.msra.mxu0 %v4841
    %7183 = vmatprep.subr.bf16.mxu0 %v4850
    %7184 = vmatpush1.bf16.msra.mxu0 %v4849
    %7185 = vmatprep.subr.bf16.mxu0 %v4858
    %7186 = vmatpush1.bf16.msra.mxu0 %v4857
    %7187 = vmatprep.subr.bf16.mxu0 %v4866
    %7188 = vmatpush1.bf16.msra.mxu0 %v4865
    %7189 = vmatprep.subr.bf16.mxu0 %v4874
    %7190 = vmatpush1.bf16.msra.mxu0 %v4873
    %7191 = vmatprep.subr.bf16.mxu0 %v4882
    %7192 = vmatpush1.bf16.msra.mxu0 %v4881
    %7193 = vmatprep.subr.bf16.mxu0 %v4890
    %7194 = vmatpush1.bf16.msra.mxu0 %v4889
    %7195 = vmatprep.subr.bf16.mxu0 %v4898
    %7196 = vmatpush1.bf16.msra.mxu0 %v4897
    %7197 = vmatprep.subr.bf16.mxu0 %v4906
    %7198 = vmatpush1.bf16.msra.mxu0 %v4905
    %7199 = vmatprep.subr.bf16.mxu0 %v4914
    %7200 = vmatpush1.bf16.msra.mxu0 %v4913
    %7201 = vmatprep.subr.bf16.mxu0 %v4922
    %7202 = vmatpush1.bf16.msra.mxu0 %v4921
    %7203 = vmatprep.subr.bf16.mxu0 %v4930
    %7204 = vmatpush1.bf16.msra.mxu0 %v4929
    %7205 = vmatprep.subr.bf16.mxu0 %v4938
    %7206 = vmatpush1.bf16.msra.mxu0 %v4937
    %7207 = vmatprep.subr.bf16.mxu0 %v4946
    %7208 = vmatpush1.bf16.msra.mxu0 %v4945
    %7209 = vmatprep.mubr.bf16.mxu0 %v1209
    %7210 = vmatmul.mubr.bf16.gmra.mrb[0].mxu0 %v1195
    %v7211 = vpop.f32.mrb[0].mxu0
    %v7212 = vadd.f32 %v7171, %v7211
    %v7213 = vpop.f32.mrb[0].mxu0
    %v7214 = vadd.f32 %v7173, %v7213
    %v7215 = vpop.f32.mrb[0].mxu0
    %v7216 = vpop.f32.mrb[0].mxu0
    %7217 = vdwg.mxu0
    %7218 = vmatprep.subr.bf16.mxu0 %v4954
    %7219 = vmatpush1.bf16.msra.mxu0 %v4953
    %7220 = vmatprep.subr.bf16.mxu0 %v4962
    %7221 = vmatpush1.bf16.msra.mxu0 %v4961
    %7222 = vmatprep.subr.bf16.mxu0 %v4970
    %7223 = vmatpush1.bf16.msra.mxu0 %v4969
    %7224 = vmatprep.subr.bf16.mxu0 %v4978
    %7225 = vmatpush1.bf16.msra.mxu0 %v4977
    %7226 = vmatprep.subr.bf16.mxu0 %v4986
    %7227 = vmatpush1.bf16.msra.mxu0 %v4985
    %7228 = vmatprep.subr.bf16.mxu0 %v4994
    %7229 = vmatpush1.bf16.msra.mxu0 %v4993
    %7230 = vmatprep.subr.bf16.mxu0 %v5002
    %7231 = vmatpush1.bf16.msra.mxu0 %v5001
    %7232 = vmatprep.subr.bf16.mxu0 %v5010
    %7233 = vmatpush1.bf16.msra.mxu0 %v5009
    %7234 = vmatprep.subr.bf16.mxu0 %v5018
    %7235 = vmatpush1.bf16.msra.mxu0 %v5017
    %7236 = vmatprep.subr.bf16.mxu0 %v5026
    %7237 = vmatpush1.bf16.msra.mxu0 %v5025
    %7238 = vmatprep.subr.bf16.mxu0 %v5034
    %7239 = vmatpush1.bf16.msra.mxu0 %v5033
    %7240 = vmatprep.subr.bf16.mxu0 %v5042
    %7241 = vmatpush1.bf16.msra.mxu0 %v5041
    %7242 = vmatprep.subr.bf16.mxu0 %v5050
    %7243 = vmatpush1.bf16.msra.mxu0 %v5049
    %7244 = vmatprep.subr.bf16.mxu0 %v5058
    %7245 = vmatpush1.bf16.msra.mxu0 %v5057
    %7246 = vmatprep.subr.bf16.mxu0 %v5066
    %7247 = vmatpush1.bf16.msra.mxu0 %v5065
    %7248 = vmatprep.subr.bf16.mxu0 %v5074
    %7249 = vmatpush1.bf16.msra.mxu0 %v5073
    %7250 = vmatprep.mubr.bf16.mxu0 %v1219
    %7251 = vmatmul.mubr.bf16.gmra.mrb[0].mxu0 %v1217
    %v7252 = vpop.f32.mrb[0].mxu0
    %v7253 = vadd.f32 %v7212, %v7252
    %v7254 = vpop.f32.mrb[0].mxu0
    %v7255 = vadd.f32 %v7214, %v7254
    %v7256 = vpop.f32.mrb[0].mxu0
    %v7257 = vpop.f32.mrb[0].mxu0
    %7258 = vdwg.mxu0
    %7259 = vmatprep.subr.bf16.mxu0 %v5082
    %7260 = vmatpush1.bf16.msra.mxu0 %v5081
    %7261 = vmatprep.subr.bf16.mxu0 %v5090
    %7262 = vmatpush1.bf16.msra.mxu0 %v5089
    %7263 = vmatprep.subr.bf16.mxu0 %v5098
    %7264 = vmatpush1.bf16.msra.mxu0 %v5097
    %7265 = vmatprep.subr.bf16.mxu0 %v5106
    %7266 = vmatpush1.bf16.msra.mxu0 %v5105
    %7267 = vmatprep.subr.bf16.mxu0 %v5114
    %7268 = vmatpush1.bf16.msra.mxu0 %v5113
    %7269 = vmatprep.subr.bf16.mxu0 %v5122
    %7270 = vmatpush1.bf16.msra.mxu0 %v5121
    %7271 = vmatprep.subr.bf16.mxu0 %v5130
    %7272 = vmatpush1.bf16.msra.mxu0 %v5129
    %7273 = vmatprep.subr.bf16.mxu0 %v5138
    %7274 = vmatpush1.bf16.msra.mxu0 %v5137
    %7275 = vmatprep.subr.bf16.mxu0 %v5146
    %7276 = vmatpush1.bf16.msra.mxu0 %v5145
    %7277 = vmatprep.subr.bf16.mxu0 %v5154
    %7278 = vmatpush1.bf16.msra.mxu0 %v5153
    %7279 = vmatprep.subr.bf16.mxu0 %v5162
    %7280 = vmatpush1.bf16.msra.mxu0 %v5161
    %7281 = vmatprep.subr.bf16.mxu0 %v5170
    %7282 = vmatpush1.bf16.msra.mxu0 %v5169
    %7283 = vmatprep.subr.bf16.mxu0 %v5178
    %7284 = vmatpush1.bf16.msra.mxu0 %v5177
    %7285 = vmatprep.subr.bf16.mxu0 %v5186
    %7286 = vmatpush1.bf16.msra.mxu0 %v5185
    %7287 = vmatprep.subr.bf16.mxu0 %v5194
    %7288 = vmatpush1.bf16.msra.mxu0 %v5193
    %7289 = vmatprep.subr.bf16.mxu0 %v5202
    %7290 = vmatpush1.bf16.msra.mxu0 %v5201
    %7291 = vmatprep.mubr.bf16.mxu0 %v1216
    %7292 = vmatmul.mubr.bf16.gmra.mrb[0].mxu0 %v1202
    %v7293 = vpop.f32.mrb[0].mxu0
    %v7294 = vadd.f32 %v7253, %v7293
    %v7295 = vpop.f32.mrb[0].mxu0
    %v7296 = vadd.f32 %v7255, %v7295
    %v7297 = vpop.f32.mrb[0].mxu0
    %v7298 = vpop.f32.mrb[0].mxu0
    %7299 = vdwg.mxu0
    %7300 = vmatprep.subr.bf16.mxu0 %v5210
    %7301 = vmatpush1.bf16.msra.mxu0 %v5209
    %7302 = vmatprep.subr.bf16.mxu0 %v5218
    %7303 = vmatpush1.bf16.msra.mxu0 %v5217
    %7304 = vmatprep.subr.bf16.mxu0 %v5226
    %7305 = vmatpush1.bf16.msra.mxu0 %v5225
    %7306 = vmatprep.subr.bf16.mxu0 %v5234
    %7307 = vmatpush1.bf16.msra.mxu0 %v5233
    %7308 = vmatprep.subr.bf16.mxu0 %v5242
    %7309 = vmatpush1.bf16.msra.mxu0 %v5241
    %7310 = vmatprep.subr.bf16.mxu0 %v5250
    %7311 = vmatpush1.bf16.msra.mxu0 %v5249
    %7312 = vmatprep.subr.bf16.mxu0 %v5258
    %7313 = vmatpush1.bf16.msra.mxu0 %v5257
    %7314 = vmatprep.subr.bf16.mxu0 %v5266
    %7315 = vmatpush1.bf16.msra.mxu0 %v5265
    %7316 = vmatprep.subr.bf16.mxu0 %v5274
    %7317 = vmatpush1.bf16.msra.mxu0 %v5273
    %7318 = vmatprep.subr.bf16.mxu0 %v5282
    %7319 = vmatpush1.bf16.msra.mxu0 %v5281
    %7320 = vmatprep.subr.bf16.mxu0 %v5290
    %7321 = vmatpush1.bf16.msra.mxu0 %v5289
    %7322 = vmatprep.subr.bf16.mxu0 %v5298
    %7323 = vmatpush1.bf16.msra.mxu0 %v5297
    %7324 = vmatprep.subr.bf16.mxu0 %v5306
    %7325 = vmatpush1.bf16.msra.mxu0 %v5305
    %7326 = vmatprep.subr.bf16.mxu0 %v5314
    %7327 = vmatpush1.bf16.msra.mxu0 %v5313
    %7328 = vmatprep.subr.bf16.mxu0 %v5322
    %7329 = vmatpush1.bf16.msra.mxu0 %v5321
    %7330 = vmatprep.subr.bf16.mxu0 %v5330
    %7331 = vmatpush1.bf16.msra.mxu0 %v5329
    %7332 = vmatprep.mubr.bf16.mxu0 %v1220
    %7333 = vmatmul.mubr.bf16.gmra.mrb[0].mxu0 %v1218
    %v7334 = vpop.f32.mrb[0].mxu0
    %v7335 = vadd.f32 %v7294, %v7334
    %v7336 = vpop.f32.mrb[0].mxu0
    %v7337 = vadd.f32 %v7296, %v7336
    %v7338 = vpop.f32.mrb[0].mxu0
    %v7339 = vpop.f32.mrb[0].mxu0
    %7340 = vdwg.mxu0
    %7341 = vmatprep.subr.bf16.mxu0 %v4316
    %7342 = vmatpush1.bf16.msra.mxu0 %v4315
    %7343 = vmatprep.subr.bf16.mxu0 %v4324
    %7344 = vmatpush1.bf16.msra.mxu0 %v4323
    %7345 = vmatprep.subr.bf16.mxu0 %v4332
    %7346 = vmatpush1.bf16.msra.mxu0 %v4331
    %7347 = vmatprep.subr.bf16.mxu0 %v4340
    %7348 = vmatpush1.bf16.msra.mxu0 %v4339
    %7349 = vmatprep.subr.bf16.mxu0 %v4348
    %7350 = vmatpush1.bf16.msra.mxu0 %v4347
    %7351 = vmatprep.subr.bf16.mxu0 %v4356
    %7352 = vmatpush1.bf16.msra.mxu0 %v4355
    %7353 = vmatprep.subr.bf16.mxu0 %v4364
    %7354 = vmatpush1.bf16.msra.mxu0 %v4363
    %7355 = vmatprep.subr.bf16.mxu0 %v4372
    %7356 = vmatpush1.bf16.msra.mxu0 %v4371
    %7357 = vmatprep.subr.bf16.mxu0 %v4380
    %7358 = vmatpush1.bf16.msra.mxu0 %v4379
    %7359 = vmatprep.subr.bf16.mxu0 %v4388
    %7360 = vmatpush1.bf16.msra.mxu0 %v4387
    %7361 = vmatprep.subr.bf16.mxu0 %v4396
    %7362 = vmatpush1.bf16.msra.mxu0 %v4395
    %7363 = vmatprep.subr.bf16.mxu0 %v4404
    %7364 = vmatpush1.bf16.msra.mxu0 %v4403
    %7365 = vmatprep.subr.bf16.mxu0 %v4412
    %7366 = vmatpush1.bf16.msra.mxu0 %v4411
    %7367 = vmatprep.subr.bf16.mxu0 %v4420
    %7368 = vmatpush1.bf16.msra.mxu0 %v4419
    %7369 = vmatprep.subr.bf16.mxu0 %v4428
    %7370 = vmatpush1.bf16.msra.mxu0 %v4427
    %7371 = vmatprep.subr.bf16.mxu0 %v4436
    %7372 = vmatpush1.bf16.msra.mxu0 %v4435
    %7373 = vmatprep.mubr.bf16.mxu0 %v1160
    %7374 = vmatmul.mubr.bf16.gmra.mrb[0].mxu0 %v1146
    %v7375 = vpop.f32.mrb[0].mxu0
    %v7376 = vadd.f32 0.0, %v7375
    %v7377 = vpop.f32.mrb[0].mxu0
    %v7378 = vadd.f32 0.0, %v7377
    %v7379 = vpop.f32.mrb[0].mxu0
    %v7380 = vpop.f32.mrb[0].mxu0
    %7381 = vdwg.mxu0
    %7382 = vmatprep.subr.bf16.mxu0 %v4444
    %7383 = vmatpush1.bf16.msra.mxu0 %v4443
    %7384 = vmatprep.subr.bf16.mxu0 %v4452
    %7385 = vmatpush1.bf16.msra.mxu0 %v4451
    %7386 = vmatprep.subr.bf16.mxu0 %v4460
    %7387 = vmatpush1.bf16.msra.mxu0 %v4459
    %7388 = vmatprep.subr.bf16.mxu0 %v4468
    %7389 = vmatpush1.bf16.msra.mxu0 %v4467
    %7390 = vmatprep.subr.bf16.mxu0 %v4476
    %7391 = vmatpush1.bf16.msra.mxu0 %v4475
    %7392 = vmatprep.subr.bf16.mxu0 %v4484
    %7393 = vmatpush1.bf16.msra.mxu0 %v4483
    %7394 = vmatprep.subr.bf16.mxu0 %v4492
    %7395 = vmatpush1.bf16.msra.mxu0 %v4491
    %7396 = vmatprep.subr.bf16.mxu0 %v4500
    %7397 = vmatpush1.bf16.msra.mxu0 %v4499
    %7398 = vmatprep.subr.bf16.mxu0 %v4508
    %7399 = vmatpush1.bf16.msra.mxu0 %v4507
    %7400 = vmatprep.subr.bf16.mxu0 %v4516
    %7401 = vmatpush1.bf16.msra.mxu0 %v4515
    %7402 = vmatprep.subr.bf16.mxu0 %v4524
    %7403 = vmatpush1.bf16.msra.mxu0 %v4523
    %7404 = vmatprep.subr.bf16.mxu0 %v4532
    %7405 = vmatpush1.bf16.msra.mxu0 %v4531
    %7406 = vmatprep.subr.bf16.mxu0 %v4540
    %7407 = vmatpush1.bf16.msra.mxu0 %v4539
    %7408 = vmatprep.subr.bf16.mxu0 %v4548
    %7409 = vmatpush1.bf16.msra.mxu0 %v4547
    %7410 = vmatprep.subr.bf16.mxu0 %v4556
    %7411 = vmatpush1.bf16.msra.mxu0 %v4555
    %7412 = vmatprep.subr.bf16.mxu0 %v4564
    %7413 = vmatpush1.bf16.msra.mxu0 %v4563
    %7414 = vmatprep.mubr.bf16.mxu0 %v1170
    %7415 = vmatmul.mubr.bf16.gmra.mrb[0].mxu0 %v1168
    %v7416 = vpop.f32.mrb[0].mxu0
    %v7417 = vadd.f32 %v7376, %v7416
    %v7418 = vpop.f32.mrb[0].mxu0
    %v7419 = vadd.f32 %v7378, %v7418
    %v7420 = vpop.f32.mrb[0].mxu0
    %v7421 = vpop.f32.mrb[0].mxu0
    %7422 = vdwg.mxu0
    %7423 = vmatprep.subr.bf16.mxu0 %v4572
    %7424 = vmatpush1.bf16.msra.mxu0 %v4571
    %7425 = vmatprep.subr.bf16.mxu0 %v4580
    %7426 = vmatpush1.bf16.msra.mxu0 %v4579
    %7427 = vmatprep.subr.bf16.mxu0 %v4588
    %7428 = vmatpush1.bf16.msra.mxu0 %v4587
    %7429 = vmatprep.subr.bf16.mxu0 %v4596
    %7430 = vmatpush1.bf16.msra.mxu0 %v4595
    %7431 = vmatprep.subr.bf16.mxu0 %v4604
    %7432 = vmatpush1.bf16.msra.mxu0 %v4603
    %7433 = vmatprep.subr.bf16.mxu0 %v4612
    %7434 = vmatpush1.bf16.msra.mxu0 %v4611
    %7435 = vmatprep.subr.bf16.mxu0 %v4620
    %7436 = vmatpush1.bf16.msra.mxu0 %v4619
    %7437 = vmatprep.subr.bf16.mxu0 %v4628
    %7438 = vmatpush1.bf16.msra.mxu0 %v4627
    %7439 = vmatprep.subr.bf16.mxu0 %v4636
    %7440 = vmatpush1.bf16.msra.mxu0 %v4635
    %7441 = vmatprep.subr.bf16.mxu0 %v4644
    %7442 = vmatpush1.bf16.msra.mxu0 %v4643
    %7443 = vmatprep.subr.bf16.mxu0 %v4652
    %7444 = vmatpush1.bf16.msra.mxu0 %v4651
    %7445 = vmatprep.subr.bf16.mxu0 %v4660
    %7446 = vmatpush1.bf16.msra.mxu0 %v4659
    %7447 = vmatprep.subr.bf16.mxu0 %v4668
    %7448 = vmatpush1.bf16.msra.mxu0 %v4667
    %7449 = vmatprep.subr.bf16.mxu0 %v4676
    %7450 = vmatpush1.bf16.msra.mxu0 %v4675
    %7451 = vmatprep.subr.bf16.mxu0 %v4684
    %7452 = vmatpush1.bf16.msra.mxu0 %v4683
    %7453 = vmatprep.subr.bf16.mxu0 %v4692
    %7454 = vmatpush1.bf16.msra.mxu0 %v4691
    %7455 = vmatprep.mubr.bf16.mxu0 %v1167
    %7456 = vmatmul.mubr.bf16.gmra.mrb[0].mxu0 %v1153
    %v7457 = vpop.f32.mrb[0].mxu0
    %v7458 = vadd.f32 %v7417, %v7457
    %v7459 = vpop.f32.mrb[0].mxu0
    %v7460 = vadd.f32 %v7419, %v7459
    %v7461 = vpop.f32.mrb[0].mxu0
    %v7462 = vpop.f32.mrb[0].mxu0
    %7463 = vdwg.mxu0
    %7464 = vmatprep.subr.bf16.mxu0 %v4700
    %7465 = vmatpush1.bf16.msra.mxu0 %v4699
    %7466 = vmatprep.subr.bf16.mxu0 %v4708
    %7467 = vmatpush1.bf16.msra.mxu0 %v4707
    %7468 = vmatprep.subr.bf16.mxu0 %v4716
    %7469 = vmatpush1.bf16.msra.mxu0 %v4715
    %7470 = vmatprep.subr.bf16.mxu0 %v4724
    %7471 = vmatpush1.bf16.msra.mxu0 %v4723
    %7472 = vmatprep.subr.bf16.mxu0 %v4732
    %7473 = vmatpush1.bf16.msra.mxu0 %v4731
    %7474 = vmatprep.subr.bf16.mxu0 %v4740
    %7475 = vmatpush1.bf16.msra.mxu0 %v4739
    %7476 = vmatprep.subr.bf16.mxu0 %v4748
    %7477 = vmatpush1.bf16.msra.mxu0 %v4747
    %7478 = vmatprep.subr.bf16.mxu0 %v4756
    %7479 = vmatpush1.bf16.msra.mxu0 %v4755
    %7480 = vmatprep.subr.bf16.mxu0 %v4764
    %7481 = vmatpush1.bf16.msra.mxu0 %v4763
    %7482 = vmatprep.subr.bf16.mxu0 %v4772
    %7483 = vmatpush1.bf16.msra.mxu0 %v4771
    %7484 = vmatprep.subr.bf16.mxu0 %v4780
    %7485 = vmatpush1.bf16.msra.mxu0 %v4779
    %7486 = vmatprep.subr.bf16.mxu0 %v4788
    %7487 = vmatpush1.bf16.msra.mxu0 %v4787
    %7488 = vmatprep.subr.bf16.mxu0 %v4796
    %7489 = vmatpush1.bf16.msra.mxu0 %v4795
    %7490 = vmatprep.subr.bf16.mxu0 %v4804
    %7491 = vmatpush1.bf16.msra.mxu0 %v4803
    %7492 = vmatprep.subr.bf16.mxu0 %v4812
    %7493 = vmatpush1.bf16.msra.mxu0 %v4811
    %7494 = vmatprep.subr.bf16.mxu0 %v4820
    %7495 = vmatpush1.bf16.msra.mxu0 %v4819
    %7496 = vmatprep.mubr.bf16.mxu0 %v1171
    %7497 = vmatmul.mubr.bf16.gmra.mrb[0].mxu0 %v1169
    %v7498 = vpop.f32.mrb[0].mxu0
    %v7499 = vadd.f32 %v7458, %v7498
    %v7500 = vpop.f32.mrb[0].mxu0
    %v7501 = vadd.f32 %v7460, %v7500
    %v7502 = vpop.f32.mrb[0].mxu0
    %v7503 = vpop.f32.mrb[0].mxu0
    %7504 = vdwg.mxu0
    %7505 = vmatprep.subr.bf16.mxu0 %v4828
    %7506 = vmatpush1.bf16.msra.mxu0 %v4827
    %7507 = vmatprep.subr.bf16.mxu0 %v4836
    %7508 = vmatpush1.bf16.msra.mxu0 %v4835
    %7509 = vmatprep.subr.bf16.mxu0 %v4844
    %7510 = vmatpush1.bf16.msra.mxu0 %v4843
    %7511 = vmatprep.subr.bf16.mxu0 %v4852
    %7512 = vmatpush1.bf16.msra.mxu0 %v4851
    %7513 = vmatprep.subr.bf16.mxu0 %v4860
    %7514 = vmatpush1.bf16.msra.mxu0 %v4859
    %7515 = vmatprep.subr.bf16.mxu0 %v4868
    %7516 = vmatpush1.bf16.msra.mxu0 %v4867
    %7517 = vmatprep.subr.bf16.mxu0 %v4876
    %7518 = vmatpush1.bf16.msra.mxu0 %v4875
    %7519 = vmatprep.subr.bf16.mxu0 %v4884
    %7520 = vmatpush1.bf16.msra.mxu0 %v4883
    %7521 = vmatprep.subr.bf16.mxu0 %v4892
    %7522 = vmatpush1.bf16.msra.mxu0 %v4891
    %7523 = vmatprep.subr.bf16.mxu0 %v4900
    %7524 = vmatpush1.bf16.msra.mxu0 %v4899
    %7525 = vmatprep.subr.bf16.mxu0 %v4908
    %7526 = vmatpush1.bf16.msra.mxu0 %v4907
    %7527 = vmatprep.subr.bf16.mxu0 %v4916
    %7528 = vmatpush1.bf16.msra.mxu0 %v4915
    %7529 = vmatprep.subr.bf16.mxu0 %v4924
    %7530 = vmatpush1.bf16.msra.mxu0 %v4923
    %7531 = vmatprep.subr.bf16.mxu0 %v4932
    %7532 = vmatpush1.bf16.msra.mxu0 %v4931
    %7533 = vmatprep.subr.bf16.mxu0 %v4940
    %7534 = vmatpush1.bf16.msra.mxu0 %v4939
    %7535 = vmatprep.subr.bf16.mxu0 %v4948
    %7536 = vmatpush1.bf16.msra.mxu0 %v4947
    %7537 = vmatprep.mubr.bf16.mxu0 %v1209
    %7538 = vmatmul.mubr.bf16.gmra.mrb[0].mxu0 %v1195
    %v7539 = vpop.f32.mrb[0].mxu0
    %v7540 = vadd.f32 %v7499, %v7539
    %v7541 = vpop.f32.mrb[0].mxu0
    %v7542 = vadd.f32 %v7501, %v7541
    %v7543 = vpop.f32.mrb[0].mxu0
    %v7544 = vpop.f32.mrb[0].mxu0
    %7545 = vdwg.mxu0
    %7546 = vmatprep.subr.bf16.mxu0 %v4956
    %7547 = vmatpush1.bf16.msra.mxu0 %v4955
    %7548 = vmatprep.subr.bf16.mxu0 %v4964
    %7549 = vmatpush1.bf16.msra.mxu0 %v4963
    %7550 = vmatprep.subr.bf16.mxu0 %v4972
    %7551 = vmatpush1.bf16.msra.mxu0 %v4971
    %7552 = vmatprep.subr.bf16.mxu0 %v4980
    %7553 = vmatpush1.bf16.msra.mxu0 %v4979
    %7554 = vmatprep.subr.bf16.mxu0 %v4988
    %7555 = vmatpush1.bf16.msra.mxu0 %v4987
    %7556 = vmatprep.subr.bf16.mxu0 %v4996
    %7557 = vmatpush1.bf16.msra.mxu0 %v4995
    %7558 = vmatprep.subr.bf16.mxu0 %v5004
    %7559 = vmatpush1.bf16.msra.mxu0 %v5003
    %7560 = vmatprep.subr.bf16.mxu0 %v5012
    %7561 = vmatpush1.bf16.msra.mxu0 %v5011
    %7562 = vmatprep.subr.bf16.mxu0 %v5020
    %7563 = vmatpush1.bf16.msra.mxu0 %v5019
    %7564 = vmatprep.subr.bf16.mxu0 %v5028
    %7565 = vmatpush1.bf16.msra.mxu0 %v5027
    %7566 = vmatprep.subr.bf16.mxu0 %v5036
    %7567 = vmatpush1.bf16.msra.mxu0 %v5035
    %7568 = vmatprep.subr.bf16.mxu0 %v5044
    %7569 = vmatpush1.bf16.msra.mxu0 %v5043
    %7570 = vmatprep.subr.bf16.mxu0 %v5052
    %7571 = vmatpush1.bf16.msra.mxu0 %v5051
    %7572 = vmatprep.subr.bf16.mxu0 %v5060
    %7573 = vmatpush1.bf16.msra.mxu0 %v5059
    %7574 = vmatprep.subr.bf16.mxu0 %v5068
    %7575 = vmatpush1.bf16.msra.mxu0 %v5067
    %7576 = vmatprep.subr.bf16.mxu0 %v5076
    %7577 = vmatpush1.bf16.msra.mxu0 %v5075
    %7578 = vmatprep.mubr.bf16.mxu0 %v1219
    %7579 = vmatmul.mubr.bf16.gmra.mrb[0].mxu0 %v1217
    %v7580 = vpop.f32.mrb[0].mxu0
    %v7581 = vadd.f32 %v7540, %v7580
    %v7582 = vpop.f32.mrb[0].mxu0
    %v7583 = vadd.f32 %v7542, %v7582
    %v7584 = vpop.f32.mrb[0].mxu0
    %v7585 = vpop.f32.mrb[0].mxu0
    %7586 = vdwg.mxu0
    %7587 = vmatprep.subr.bf16.mxu0 %v5084
    %7588 = vmatpush1.bf16.msra.mxu0 %v5083
    %7589 = vmatprep.subr.bf16.mxu0 %v5092
    %7590 = vmatpush1.bf16.msra.mxu0 %v5091
    %7591 = vmatprep.subr.bf16.mxu0 %v5100
    %7592 = vmatpush1.bf16.msra.mxu0 %v5099
    %7593 = vmatprep.subr.bf16.mxu0 %v5108
    %7594 = vmatpush1.bf16.msra.mxu0 %v5107
    %7595 = vmatprep.subr.bf16.mxu0 %v5116
    %7596 = vmatpush1.bf16.msra.mxu0 %v5115
    %7597 = vmatprep.subr.bf16.mxu0 %v5124
    %7598 = vmatpush1.bf16.msra.mxu0 %v5123
    %7599 = vmatprep.subr.bf16.mxu0 %v5132
    %7600 = vmatpush1.bf16.msra.mxu0 %v5131
    %7601 = vmatprep.subr.bf16.mxu0 %v5140
    %7602 = vmatpush1.bf16.msra.mxu0 %v5139
    %7603 = vmatprep.subr.bf16.mxu0 %v5148
    %7604 = vmatpush1.bf16.msra.mxu0 %v5147
    %7605 = vmatprep.subr.bf16.mxu0 %v5156
    %7606 = vmatpush1.bf16.msra.mxu0 %v5155
    %7607 = vmatprep.subr.bf16.mxu0 %v5164
    %7608 = vmatpush1.bf16.msra.mxu0 %v5163
    %7609 = vmatprep.subr.bf16.mxu0 %v5172
    %7610 = vmatpush1.bf16.msra.mxu0 %v5171
    %7611 = vmatprep.subr.bf16.mxu0 %v5180
    %7612 = vmatpush1.bf16.msra.mxu0 %v5179
    %7613 = vmatprep.subr.bf16.mxu0 %v5188
    %7614 = vmatpush1.bf16.msra.mxu0 %v5187
    %7615 = vmatprep.subr.bf16.mxu0 %v5196
    %7616 = vmatpush1.bf16.msra.mxu0 %v5195
    %7617 = vmatprep.subr.bf16.mxu0 %v5204
    %7618 = vmatpush1.bf16.msra.mxu0 %v5203
    %7619 = vmatprep.mubr.bf16.mxu0 %v1216
    %7620 = vmatmul.mubr.bf16.gmra.mrb[0].mxu0 %v1202
    %v7621 = vpop.f32.mrb[0].mxu0
    %v7622 = vadd.f32 %v7581, %v7621
    %v7623 = vpop.f32.mrb[0].mxu0
    %v7624 = vadd.f32 %v7583, %v7623
    %v7625 = vpop.f32.mrb[0].mxu0
    %v7626 = vpop.f32.mrb[0].mxu0
    %7627 = vdwg.mxu0
    %7628 = vmatprep.subr.bf16.mxu0 %v5212
    %7629 = vmatpush1.bf16.msra.mxu0 %v5211
    %7630 = vmatprep.subr.bf16.mxu0 %v5220
    %7631 = vmatpush1.bf16.msra.mxu0 %v5219
    %7632 = vmatprep.subr.bf16.mxu0 %v5228
    %7633 = vmatpush1.bf16.msra.mxu0 %v5227
    %7634 = vmatprep.subr.bf16.mxu0 %v5236
    %7635 = vmatpush1.bf16.msra.mxu0 %v5235
    %7636 = vmatprep.subr.bf16.mxu0 %v5244
    %7637 = vmatpush1.bf16.msra.mxu0 %v5243
    %7638 = vmatprep.subr.bf16.mxu0 %v5252
    %7639 = vmatpush1.bf16.msra.mxu0 %v5251
    %7640 = vmatprep.subr.bf16.mxu0 %v5260
    %7641 = vmatpush1.bf16.msra.mxu0 %v5259
    %7642 = vmatprep.subr.bf16.mxu0 %v5268
    %7643 = vmatpush1.bf16.msra.mxu0 %v5267
    %7644 = vmatprep.subr.bf16.mxu0 %v5276
    %7645 = vmatpush1.bf16.msra.mxu0 %v5275
    %7646 = vmatprep.subr.bf16.mxu0 %v5284
    %7647 = vmatpush1.bf16.msra.mxu0 %v5283
    %7648 = vmatprep.subr.bf16.mxu0 %v5292
    %7649 = vmatpush1.bf16.msra.mxu0 %v5291
    %7650 = vmatprep.subr.bf16.mxu0 %v5300
    %7651 = vmatpush1.bf16.msra.mxu0 %v5299
    %7652 = vmatprep.subr.bf16.mxu0 %v5308
    %7653 = vmatpush1.bf16.msra.mxu0 %v5307
    %7654 = vmatprep.subr.bf16.mxu0 %v5316
    %7655 = vmatpush1.bf16.msra.mxu0 %v5315
    %7656 = vmatprep.subr.bf16.mxu0 %v5324
    %7657 = vmatpush1.bf16.msra.mxu0 %v5323
    %7658 = vmatprep.subr.bf16.mxu0 %v5332
    %7659 = vmatpush1.bf16.msra.mxu0 %v5331
    %7660 = vmatprep.mubr.bf16.mxu0 %v1220
    %7661 = vmatmul.mubr.bf16.gmra.mrb[0].mxu0 %v1218
    %v7662 = vpop.f32.mrb[0].mxu0
    %v7663 = vadd.f32 %v7622, %v7662
    %v7664 = vpop.f32.mrb[0].mxu0
    %v7665 = vadd.f32 %v7624, %v7664
    %v7666 = vpop.f32.mrb[0].mxu0
    %v7667 = vpop.f32.mrb[0].mxu0
    %7668 = vdwg.mxu0
    %v7677 = vcombine.low %v6679, %v6681
    %v7678 = vcombine.low %v7007, %v7009
    %v7680 = vunpack.c.l.s4 1983009808
    %v7681 = vunpack.c.0.s8 %v7680
    %v7682 = vlaneseq
    %v7683 = vshrl.u32 %v7682, 7
    %v7684 = vsub.s32 %v7681, %v7683
    %v7685 = vrot.slane %v7677, %v7684
    %v7687 = vunpack.c.l.s4 1983009808
    %v7688 = vunpack.c.0.s8 %v7687
    %v7689 = vlaneseq
    %v7690 = vshrl.u32 %v7689, 7
    %v7691 = vsub.s32 %v7688, %v7690
    %v7692 = vrot.slane %v7678, %v7691
    %v7693 = vcombine.low %v7685, %v7692
    %v7694 = vcombine.low %v7335, %v7337
    %v7695 = vcombine.low %v7663, %v7665
    %v7697 = vunpack.c.l.s4 1983009808
    %v7698 = vunpack.c.0.s8 %v7697
    %v7699 = vlaneseq
    %v7700 = vshrl.u32 %v7699, 7
    %v7701 = vsub.s32 %v7698, %v7700
    %v7702 = vrot.slane %v7694, %v7701
    %v7704 = vunpack.c.l.s4 1983009808
    %v7705 = vunpack.c.0.s8 %v7704
    %v7706 = vlaneseq
    %v7707 = vshrl.u32 %v7706, 7
    %v7708 = vsub.s32 %v7705, %v7707
    %v7709 = vrot.slane %v7695, %v7708
    %v7710 = vcombine.low %v7702, %v7709
    %v7713 = vadd.f32 %v95, %v7693
    %v7714 = vadd.f32 %v96, %v7710
    %7715 = vst [vmem:[#allocation2] sm:$0xff] %v7713
    %7716 = vst [vmem:[#allocation2 + $0x8] sm:$0xff] %v7714
    // Predicated region
    $region46: #{tpu_custom_call.1} parent=1 // pred_check
      %p7717 = pneg %p83
    $region47: #{tpu_custom_call.1} parent=1 // pred_check_branch
      %7719 = sbr.rel (%p7717) target = $region49
    $region48: #{tpu_custom_call.1} parent=1 // pred_region
      %v7720 = vld [vmem:[#allocation2] sm:$0xff]
      %v7721 = vld [vmem:[#allocation2 + $0x8] sm:$0xff]
      %v7722 = vld [vmem:[#allocation8] sm:$0xff]
      %v7724 = vlaneseq
      %v7725 = vshrl.u32 %v7724, 7
      %v7726 = vsub.s32 0, %v7725
      %v7727 = vrot.slane %v7722, %v7726
      %v7728 = vlaneseq
      %v7729 = vshrl.u32 %v7728, 7
      %v7730 = vsub.s32 1, %v7729
      %v7731 = vrot.slane %v7722, %v7730
      %v7732 = vlaneseq
      %v7733 = vshrl.u32 %v7732, 7
      %v7734 = vsub.s32 2, %v7733
      %v7735 = vrot.slane %v7722, %v7734
      %v7736 = vlaneseq
      %v7737 = vshrl.u32 %v7736, 7
      %v7738 = vsub.s32 3, %v7737
      %v7739 = vrot.slane %v7722, %v7738
      %v7740 = vlaneseq
      %v7741 = vshrl.u32 %v7740, 7
      %v7742 = vsub.s32 4, %v7741
      %v7743 = vrot.slane %v7722, %v7742
      %v7744 = vlaneseq
      %v7745 = vshrl.u32 %v7744, 7
      %v7746 = vsub.s32 5, %v7745
      %v7747 = vrot.slane %v7722, %v7746
      %v7748 = vlaneseq
      %v7749 = vshrl.u32 %v7748, 7
      %v7750 = vsub.s32 6, %v7749
      %v7751 = vrot.slane %v7722, %v7750
      %v7752 = vlaneseq
      %v7753 = vshrl.u32 %v7752, 7
      %v7754 = vsub.s32 7, %v7753
      %v7755 = vrot.slane %v7722, %v7754
      %v7756 = vcombine.low %v7727, %v7731
      %v7757 = vcombine.low %v7735, %v7739
      %v7759 = vunpack.c.l.s4 1983009808
      %v7760 = vunpack.c.0.s8 %v7759
      %v7761 = vlaneseq
      %v7762 = vshrl.u32 %v7761, 7
      %v7763 = vsub.s32 %v7760, %v7762
      %v7764 = vrot.slane %v7756, %v7763
      %v7766 = vunpack.c.l.s4 1983009808
      %v7767 = vunpack.c.0.s8 %v7766
      %v7768 = vlaneseq
      %v7769 = vshrl.u32 %v7768, 7
      %v7770 = vsub.s32 %v7767, %v7769
      %v7771 = vrot.slane %v7757, %v7770
      %v7772 = vcombine.low %v7764, %v7771
      %v7773 = vcombine.low %v7743, %v7747
      %v7774 = vcombine.low %v7751, %v7755
      %v7776 = vunpack.c.l.s4 1983009808
      %v7777 = vunpack.c.0.s8 %v7776
      %v7778 = vlaneseq
      %v7779 = vshrl.u32 %v7778, 7
      %v7780 = vsub.s32 %v7777, %v7779
      %v7781 = vrot.slane %v7773, %v7780
      %v7783 = vunpack.c.l.s4 1983009808
      %v7784 = vunpack.c.0.s8 %v7783
      %v7785 = vlaneseq
      %v7786 = vshrl.u32 %v7785, 7
      %v7787 = vsub.s32 %v7784, %v7786
      %v7788 = vrot.slane %v7774, %v7787
      %v7789 = vcombine.low %v7781, %v7788
      %v7792 = vadd.f32 %v7720, %v7772
      %v7793 = vadd.f32 %v7721, %v7789
      %v7794 = vmax.f32 %v7792, 0.0
      %v7795 = vmax.f32 %v7793, 0.0
      %v7798 = vcombine.high %v7794, %v7794
      %v7800 = vunpack.c.l.s4 1983009808
      %v7801 = vunpack.c.0.s8 %v7800
      %v7802 = vlaneseq
      %v7803 = vshrl.u32 %v7802, 7
      %v7804 = vsub.s32 %v7801, %v7803
      %v7805 = vrot.slane %v7794, %v7804
      %v7807 = vunpack.c.l.s4 1983009808
      %v7808 = vunpack.c.0.s8 %v7807
      %v7809 = vlaneseq
      %v7810 = vshrl.u32 %v7809, 7
      %v7811 = vsub.s32 %v7808, %v7810
      %v7812 = vrot.slane %v7798, %v7811
      %v7813 = vcombine.high %v7805, %v7805
      %v7814 = vcombine.high %v7812, %v7812
      %v7815 = vcombine.high %v7795, %v7795
      %v7817 = vunpack.c.l.s4 1983009808
      %v7818 = vunpack.c.0.s8 %v7817
      %v7819 = vlaneseq
      %v7820 = vshrl.u32 %v7819, 7
      %v7821 = vsub.s32 %v7818, %v7820
      %v7822 = vrot.slane %v7795, %v7821
      %v7824 = vunpack.c.l.s4 1983009808
      %v7825 = vunpack.c.0.s8 %v7824
      %v7826 = vlaneseq
      %v7827 = vshrl.u32 %v7826, 7
      %v7828 = vsub.s32 %v7825, %v7827
      %v7829 = vrot.slane %v7815, %v7828
      %v7830 = vcombine.high %v7822, %v7822
      %v7831 = vcombine.high %v7829, %v7829
      %v7840 = vpack.c.bf16 %v7805, %v7805
      %v7841 = vpack.c.bf16 %v7813, %v7813
      %v7842 = vpack.c.bf16 %v7812, %v7812
      %v7843 = vpack.c.bf16 %v7814, %v7814
      %v7844 = vpack.c.bf16 %v7822, %v7822
      %v7845 = vpack.c.bf16 %v7830, %v7830
      %v7846 = vpack.c.bf16 %v7829, %v7829
      %v7847 = vpack.c.bf16 %v7831, %v7831
      %v7848 = vld [vmem:[#allocation9] sm:$0xff]
      %v7849 = vld [vmem:[#allocation9 + $0x8] sm:$0xff]
      %v7850 = vld [vmem:[#allocation9 + $0x10] sm:$0xff]
      %v7851 = vld [vmem:[#allocation9 + $0x18] sm:$0xff]
      %v7852 = vld [vmem:[#allocation9 + $0x20] sm:$0xff]
      %v7853 = vld [vmem:[#allocation9 + $0x28] sm:$0xff]
      %v7854 = vld [vmem:[#allocation9 + $0x30] sm:$0xff]
      %v7855 = vld [vmem:[#allocation9 + $0x38] sm:$0xff]
      %v7856 = vld [vmem:[#allocation9 + $0x40] sm:$0xff]
      %v7857 = vld [vmem:[#allocation9 + $0x48] sm:$0xff]
      %v7858 = vld [vmem:[#allocation9 + $0x50] sm:$0xff]
      %v7859 = vld [vmem:[#allocation9 + $0x58] sm:$0xff]
      %v7860 = vld [vmem:[#allocation9 + $0x60] sm:$0xff]
      %v7861 = vld [vmem:[#allocation9 + $0x68] sm:$0xff]
      %v7862 = vld [vmem:[#allocation9 + $0x70] sm:$0xff]
      %v7863 = vld [vmem:[#allocation9 + $0x78] sm:$0xff]
      %v7864 = vld [vmem:[#allocation9 + $0x80] sm:$0xff]
      %v7865 = vld [vmem:[#allocation9 + $0x88] sm:$0xff]
      %v7866 = vld [vmem:[#allocation9 + $0x90] sm:$0xff]
      %v7867 = vld [vmem:[#allocation9 + $0x98] sm:$0xff]
      %v7868 = vld [vmem:[#allocation9 + $0xa0] sm:$0xff]
      %v7869 = vld [vmem:[#allocation9 + $0xa8] sm:$0xff]
      %v7870 = vld [vmem:[#allocation9 + $0xb0] sm:$0xff]
      %v7871 = vld [vmem:[#allocation9 + $0xb8] sm:$0xff]
      %v7872 = vld [vmem:[#allocation9 + $0xc0] sm:$0xff]
      %v7873 = vld [vmem:[#allocation9 + $0xc8] sm:$0xff]
      %v7874 = vld [vmem:[#allocation9 + $0xd0] sm:$0xff]
      %v7875 = vld [vmem:[#allocation9 + $0xd8] sm:$0xff]
      %v7876 = vld [vmem:[#allocation9 + $0xe0] sm:$0xff]
      %v7877 = vld [vmem:[#allocation9 + $0xe8] sm:$0xff]
      %v7878 = vld [vmem:[#allocation9 + $0xf0] sm:$0xff]
      %v7879 = vld [vmem:[#allocation9 + $0xf8] sm:$0xff]
      %v7880 = vld [vmem:[#allocation9 + $0x100] sm:$0xff]
      %v7881 = vld [vmem:[#allocation9 + $0x108] sm:$0xff]
      %v7882 = vld [vmem:[#allocation9 + $0x110] sm:$0xff]
      %v7883 = vld [vmem:[#allocation9 + $0x118] sm:$0xff]
      %v7884 = vld [vmem:[#allocation9 + $0x120] sm:$0xff]
      %v7885 = vld [vmem:[#allocation9 + $0x128] sm:$0xff]
      %v7886 = vld [vmem:[#allocation9 + $0x130] sm:$0xff]
      %v7887 = vld [vmem:[#allocation9 + $0x138] sm:$0xff]
      %v7888 = vld [vmem:[#allocation9 + $0x140] sm:$0xff]
      %v7889 = vld [vmem:[#allocation9 + $0x148] sm:$0xff]
      %v7890 = vld [vmem:[#allocation9 + $0x150] sm:$0xff]
      %v7891 = vld [vmem:[#allocation9 + $0x158] sm:$0xff]
      %v7892 = vld [vmem:[#allocation9 + $0x160] sm:$0xff]
      %v7893 = vld [vmem:[#allocation9 + $0x168] sm:$0xff]
      %v7894 = vld [vmem:[#allocation9 + $0x170] sm:$0xff]
      %v7895 = vld [vmem:[#allocation9 + $0x178] sm:$0xff]
      %v7896 = vld [vmem:[#allocation9 + $0x180] sm:$0xff]
      %v7897 = vld [vmem:[#allocation9 + $0x188] sm:$0xff]
      %v7898 = vld [vmem:[#allocation9 + $0x190] sm:$0xff]
      %v7899 = vld [vmem:[#allocation9 + $0x198] sm:$0xff]
      %v7900 = vld [vmem:[#allocation9 + $0x1a0] sm:$0xff]
      %v7901 = vld [vmem:[#allocation9 + $0x1a8] sm:$0xff]
      %v7902 = vld [vmem:[#allocation9 + $0x1b0] sm:$0xff]
      %v7903 = vld [vmem:[#allocation9 + $0x1b8] sm:$0xff]
      %v7904 = vld [vmem:[#allocation9 + $0x1c0] sm:$0xff]
      %v7905 = vld [vmem:[#allocation9 + $0x1c8] sm:$0xff]
      %v7906 = vld [vmem:[#allocation9 + $0x1d0] sm:$0xff]
      %v7907 = vld [vmem:[#allocation9 + $0x1d8] sm:$0xff]
      %v7908 = vld [vmem:[#allocation9 + $0x1e0] sm:$0xff]
      %v7909 = vld [vmem:[#allocation9 + $0x1e8] sm:$0xff]
      %v7910 = vld [vmem:[#allocation9 + $0x1f0] sm:$0xff]
      %v7911 = vld [vmem:[#allocation9 + $0x1f8] sm:$0xff]
      %v7912 = vld [vmem:[#allocation9 + $0x200] sm:$0xff]
      %v7913 = vld [vmem:[#allocation9 + $0x208] sm:$0xff]
      %v7914 = vld [vmem:[#allocation9 + $0x210] sm:$0xff]
      %v7915 = vld [vmem:[#allocation9 + $0x218] sm:$0xff]
      %v7916 = vld [vmem:[#allocation9 + $0x220] sm:$0xff]
      %v7917 = vld [vmem:[#allocation9 + $0x228] sm:$0xff]
      %v7918 = vld [vmem:[#allocation9 + $0x230] sm:$0xff]
      %v7919 = vld [vmem:[#allocation9 + $0x238] sm:$0xff]
      %v7920 = vld [vmem:[#allocation9 + $0x240] sm:$0xff]
      %v7921 = vld [vmem:[#allocation9 + $0x248] sm:$0xff]
      %v7922 = vld [vmem:[#allocation9 + $0x250] sm:$0xff]
      %v7923 = vld [vmem:[#allocation9 + $0x258] sm:$0xff]
      %v7924 = vld [vmem:[#allocation9 + $0x260] sm:$0xff]
      %v7925 = vld [vmem:[#allocation9 + $0x268] sm:$0xff]
      %v7926 = vld [vmem:[#allocation9 + $0x270] sm:$0xff]
      %v7927 = vld [vmem:[#allocation9 + $0x278] sm:$0xff]
      %v7928 = vld [vmem:[#allocation9 + $0x280] sm:$0xff]
      %v7929 = vld [vmem:[#allocation9 + $0x288] sm:$0xff]
      %v7930 = vld [vmem:[#allocation9 + $0x290] sm:$0xff]
      %v7931 = vld [vmem:[#allocation9 + $0x298] sm:$0xff]
      %v7932 = vld [vmem:[#allocation9 + $0x2a0] sm:$0xff]
      %v7933 = vld [vmem:[#allocation9 + $0x2a8] sm:$0xff]
      %v7934 = vld [vmem:[#allocation9 + $0x2b0] sm:$0xff]
      %v7935 = vld [vmem:[#allocation9 + $0x2b8] sm:$0xff]
      %v7936 = vld [vmem:[#allocation9 + $0x2c0] sm:$0xff]
      %v7937 = vld [vmem:[#allocation9 + $0x2c8] sm:$0xff]
      %v7938 = vld [vmem:[#allocation9 + $0x2d0] sm:$0xff]
      %v7939 = vld [vmem:[#allocation9 + $0x2d8] sm:$0xff]
      %v7940 = vld [vmem:[#allocation9 + $0x2e0] sm:$0xff]
      %v7941 = vld [vmem:[#allocation9 + $0x2e8] sm:$0xff]
      %v7942 = vld [vmem:[#allocation9 + $0x2f0] sm:$0xff]
      %v7943 = vld [vmem:[#allocation9 + $0x2f8] sm:$0xff]
      %v7944 = vld [vmem:[#allocation9 + $0x300] sm:$0xff]
      %v7945 = vld [vmem:[#allocation9 + $0x308] sm:$0xff]
      %v7946 = vld [vmem:[#allocation9 + $0x310] sm:$0xff]
      %v7947 = vld [vmem:[#allocation9 + $0x318] sm:$0xff]
      %v7948 = vld [vmem:[#allocation9 + $0x320] sm:$0xff]
      %v7949 = vld [vmem:[#allocation9 + $0x328] sm:$0xff]
      %v7950 = vld [vmem:[#allocation9 + $0x330] sm:$0xff]
      %v7951 = vld [vmem:[#allocation9 + $0x338] sm:$0xff]
      %v7952 = vld [vmem:[#allocation9 + $0x340] sm:$0xff]
      %v7953 = vld [vmem:[#allocation9 + $0x348] sm:$0xff]
      %v7954 = vld [vmem:[#allocation9 + $0x350] sm:$0xff]
      %v7955 = vld [vmem:[#allocation9 + $0x358] sm:$0xff]
      %v7956 = vld [vmem:[#allocation9 + $0x360] sm:$0xff]
      %v7957 = vld [vmem:[#allocation9 + $0x368] sm:$0xff]
      %v7958 = vld [vmem:[#allocation9 + $0x370] sm:$0xff]
      %v7959 = vld [vmem:[#allocation9 + $0x378] sm:$0xff]
      %v7960 = vld [vmem:[#allocation9 + $0x380] sm:$0xff]
      %v7961 = vld [vmem:[#allocation9 + $0x388] sm:$0xff]
      %v7962 = vld [vmem:[#allocation9 + $0x390] sm:$0xff]
      %v7963 = vld [vmem:[#allocation9 + $0x398] sm:$0xff]
      %v7964 = vld [vmem:[#allocation9 + $0x3a0] sm:$0xff]
      %v7965 = vld [vmem:[#allocation9 + $0x3a8] sm:$0xff]
      %v7966 = vld [vmem:[#allocation9 + $0x3b0] sm:$0xff]
      %v7967 = vld [vmem:[#allocation9 + $0x3b8] sm:$0xff]
      %v7968 = vld [vmem:[#allocation9 + $0x3c0] sm:$0xff]
      %v7969 = vld [vmem:[#allocation9 + $0x3c8] sm:$0xff]
      %v7970 = vld [vmem:[#allocation9 + $0x3d0] sm:$0xff]
      %v7971 = vld [vmem:[#allocation9 + $0x3d8] sm:$0xff]
      %v7972 = vld [vmem:[#allocation9 + $0x3e0] sm:$0xff]
      %v7973 = vld [vmem:[#allocation9 + $0x3e8] sm:$0xff]
      %v7974 = vld [vmem:[#allocation9 + $0x3f0] sm:$0xff]
      %v7975 = vld [vmem:[#allocation9 + $0x3f8] sm:$0xff]
      %v7976 = vld [vmem:[#allocation9 + $0x400] sm:$0xff]
      %v7977 = vld [vmem:[#allocation9 + $0x408] sm:$0xff]
      %v7978 = vld [vmem:[#allocation9 + $0x410] sm:$0xff]
      %v7979 = vld [vmem:[#allocation9 + $0x418] sm:$0xff]
      %v7980 = vld [vmem:[#allocation9 + $0x420] sm:$0xff]
      %v7981 = vld [vmem:[#allocation9 + $0x428] sm:$0xff]
      %v7982 = vld [vmem:[#allocation9 + $0x430] sm:$0xff]
      %v7983 = vld [vmem:[#allocation9 + $0x438] sm:$0xff]
      %v7984 = vld [vmem:[#allocation9 + $0x440] sm:$0xff]
      %v7985 = vld [vmem:[#allocation9 + $0x448] sm:$0xff]
      %v7986 = vld [vmem:[#allocation9 + $0x450] sm:$0xff]
      %v7987 = vld [vmem:[#allocation9 + $0x458] sm:$0xff]
      %v7988 = vld [vmem:[#allocation9 + $0x460] sm:$0xff]
      %v7989 = vld [vmem:[#allocation9 + $0x468] sm:$0xff]
      %v7990 = vld [vmem:[#allocation9 + $0x470] sm:$0xff]
      %v7991 = vld [vmem:[#allocation9 + $0x478] sm:$0xff]
      %v7992 = vld [vmem:[#allocation9 + $0x480] sm:$0xff]
      %v7993 = vld [vmem:[#allocation9 + $0x488] sm:$0xff]
      %v7994 = vld [vmem:[#allocation9 + $0x490] sm:$0xff]
      %v7995 = vld [vmem:[#allocation9 + $0x498] sm:$0xff]
      %v7996 = vld [vmem:[#allocation9 + $0x4a0] sm:$0xff]
      %v7997 = vld [vmem:[#allocation9 + $0x4a8] sm:$0xff]
      %v7998 = vld [vmem:[#allocation9 + $0x4b0] sm:$0xff]
      %v7999 = vld [vmem:[#allocation9 + $0x4b8] sm:$0xff]
      %v8000 = vld [vmem:[#allocation9 + $0x4c0] sm:$0xff]
      %v8001 = vld [vmem:[#allocation9 + $0x4c8] sm:$0xff]
      %v8002 = vld [vmem:[#allocation9 + $0x4d0] sm:$0xff]
      %v8003 = vld [vmem:[#allocation9 + $0x4d8] sm:$0xff]
      %v8004 = vld [vmem:[#allocation9 + $0x4e0] sm:$0xff]
      %v8005 = vld [vmem:[#allocation9 + $0x4e8] sm:$0xff]
      %v8006 = vld [vmem:[#allocation9 + $0x4f0] sm:$0xff]
      %v8007 = vld [vmem:[#allocation9 + $0x4f8] sm:$0xff]
      %v8008 = vld [vmem:[#allocation9 + $0x500] sm:$0xff]
      %v8009 = vld [vmem:[#allocation9 + $0x508] sm:$0xff]
      %v8010 = vld [vmem:[#allocation9 + $0x510] sm:$0xff]
      %v8011 = vld [vmem:[#allocation9 + $0x518] sm:$0xff]
      %v8012 = vld [vmem:[#allocation9 + $0x520] sm:$0xff]
      %v8013 = vld [vmem:[#allocation9 + $0x528] sm:$0xff]
      %v8014 = vld [vmem:[#allocation9 + $0x530] sm:$0xff]
      %v8015 = vld [vmem:[#allocation9 + $0x538] sm:$0xff]
      %v8016 = vld [vmem:[#allocation9 + $0x540] sm:$0xff]
      %v8017 = vld [vmem:[#allocation9 + $0x548] sm:$0xff]
      %v8018 = vld [vmem:[#allocation9 + $0x550] sm:$0xff]
      %v8019 = vld [vmem:[#allocation9 + $0x558] sm:$0xff]
      %v8020 = vld [vmem:[#allocation9 + $0x560] sm:$0xff]
      %v8021 = vld [vmem:[#allocation9 + $0x568] sm:$0xff]
      %v8022 = vld [vmem:[#allocation9 + $0x570] sm:$0xff]
      %v8023 = vld [vmem:[#allocation9 + $0x578] sm:$0xff]
      %v8024 = vld [vmem:[#allocation9 + $0x580] sm:$0xff]
      %v8025 = vld [vmem:[#allocation9 + $0x588] sm:$0xff]
      %v8026 = vld [vmem:[#allocation9 + $0x590] sm:$0xff]
      %v8027 = vld [vmem:[#allocation9 + $0x598] sm:$0xff]
      %v8028 = vld [vmem:[#allocation9 + $0x5a0] sm:$0xff]
      %v8029 = vld [vmem:[#allocation9 + $0x5a8] sm:$0xff]
      %v8030 = vld [vmem:[#allocation9 + $0x5b0] sm:$0xff]
      %v8031 = vld [vmem:[#allocation9 + $0x5b8] sm:$0xff]
      %v8032 = vld [vmem:[#allocation9 + $0x5c0] sm:$0xff]
      %v8033 = vld [vmem:[#allocation9 + $0x5c8] sm:$0xff]
      %v8034 = vld [vmem:[#allocation9 + $0x5d0] sm:$0xff]
      %v8035 = vld [vmem:[#allocation9 + $0x5d8] sm:$0xff]
      %v8036 = vld [vmem:[#allocation9 + $0x5e0] sm:$0xff]
      %v8037 = vld [vmem:[#allocation9 + $0x5e8] sm:$0xff]
      %v8038 = vld [vmem:[#allocation9 + $0x5f0] sm:$0xff]
      %v8039 = vld [vmem:[#allocation9 + $0x5f8] sm:$0xff]
      %v8040 = vld [vmem:[#allocation9 + $0x600] sm:$0xff]
      %v8041 = vld [vmem:[#allocation9 + $0x608] sm:$0xff]
      %v8042 = vld [vmem:[#allocation9 + $0x610] sm:$0xff]
      %v8043 = vld [vmem:[#allocation9 + $0x618] sm:$0xff]
      %v8044 = vld [vmem:[#allocation9 + $0x620] sm:$0xff]
      %v8045 = vld [vmem:[#allocation9 + $0x628] sm:$0xff]
      %v8046 = vld [vmem:[#allocation9 + $0x630] sm:$0xff]
      %v8047 = vld [vmem:[#allocation9 + $0x638] sm:$0xff]
      %v8048 = vld [vmem:[#allocation9 + $0x640] sm:$0xff]
      %v8049 = vld [vmem:[#allocation9 + $0x648] sm:$0xff]
      %v8050 = vld [vmem:[#allocation9 + $0x650] sm:$0xff]
      %v8051 = vld [vmem:[#allocation9 + $0x658] sm:$0xff]
      %v8052 = vld [vmem:[#allocation9 + $0x660] sm:$0xff]
      %v8053 = vld [vmem:[#allocation9 + $0x668] sm:$0xff]
      %v8054 = vld [vmem:[#allocation9 + $0x670] sm:$0xff]
      %v8055 = vld [vmem:[#allocation9 + $0x678] sm:$0xff]
      %v8056 = vld [vmem:[#allocation9 + $0x680] sm:$0xff]
      %v8057 = vld [vmem:[#allocation9 + $0x688] sm:$0xff]
      %v8058 = vld [vmem:[#allocation9 + $0x690] sm:$0xff]
      %v8059 = vld [vmem:[#allocation9 + $0x698] sm:$0xff]
      %v8060 = vld [vmem:[#allocation9 + $0x6a0] sm:$0xff]
      %v8061 = vld [vmem:[#allocation9 + $0x6a8] sm:$0xff]
      %v8062 = vld [vmem:[#allocation9 + $0x6b0] sm:$0xff]
      %v8063 = vld [vmem:[#allocation9 + $0x6b8] sm:$0xff]
      %v8064 = vld [vmem:[#allocation9 + $0x6c0] sm:$0xff]
      %v8065 = vld [vmem:[#allocation9 + $0x6c8] sm:$0xff]
      %v8066 = vld [vmem:[#allocation9 + $0x6d0] sm:$0xff]
      %v8067 = vld [vmem:[#allocation9 + $0x6d8] sm:$0xff]
      %v8068 = vld [vmem:[#allocation9 + $0x6e0] sm:$0xff]
      %v8069 = vld [vmem:[#allocation9 + $0x6e8] sm:$0xff]
      %v8070 = vld [vmem:[#allocation9 + $0x6f0] sm:$0xff]
      %v8071 = vld [vmem:[#allocation9 + $0x6f8] sm:$0xff]
      %v8072 = vld [vmem:[#allocation9 + $0x700] sm:$0xff]
      %v8073 = vld [vmem:[#allocation9 + $0x708] sm:$0xff]
      %v8074 = vld [vmem:[#allocation9 + $0x710] sm:$0xff]
      %v8075 = vld [vmem:[#allocation9 + $0x718] sm:$0xff]
      %v8076 = vld [vmem:[#allocation9 + $0x720] sm:$0xff]
      %v8077 = vld [vmem:[#allocation9 + $0x728] sm:$0xff]
      %v8078 = vld [vmem:[#allocation9 + $0x730] sm:$0xff]
      %v8079 = vld [vmem:[#allocation9 + $0x738] sm:$0xff]
      %v8080 = vld [vmem:[#allocation9 + $0x740] sm:$0xff]
      %v8081 = vld [vmem:[#allocation9 + $0x748] sm:$0xff]
      %v8082 = vld [vmem:[#allocation9 + $0x750] sm:$0xff]
      %v8083 = vld [vmem:[#allocation9 + $0x758] sm:$0xff]
      %v8084 = vld [vmem:[#allocation9 + $0x760] sm:$0xff]
      %v8085 = vld [vmem:[#allocation9 + $0x768] sm:$0xff]
      %v8086 = vld [vmem:[#allocation9 + $0x770] sm:$0xff]
      %v8087 = vld [vmem:[#allocation9 + $0x778] sm:$0xff]
      %v8088 = vld [vmem:[#allocation9 + $0x780] sm:$0xff]
      %v8089 = vld [vmem:[#allocation9 + $0x788] sm:$0xff]
      %v8090 = vld [vmem:[#allocation9 + $0x790] sm:$0xff]
      %v8091 = vld [vmem:[#allocation9 + $0x798] sm:$0xff]
      %v8092 = vld [vmem:[#allocation9 + $0x7a0] sm:$0xff]
      %v8093 = vld [vmem:[#allocation9 + $0x7a8] sm:$0xff]
      %v8094 = vld [vmem:[#allocation9 + $0x7b0] sm:$0xff]
      %v8095 = vld [vmem:[#allocation9 + $0x7b8] sm:$0xff]
      %v8096 = vld [vmem:[#allocation9 + $0x7c0] sm:$0xff]
      %v8097 = vld [vmem:[#allocation9 + $0x7c8] sm:$0xff]
      %v8098 = vld [vmem:[#allocation9 + $0x7d0] sm:$0xff]
      %v8099 = vld [vmem:[#allocation9 + $0x7d8] sm:$0xff]
      %v8100 = vld [vmem:[#allocation9 + $0x7e0] sm:$0xff]
      %v8101 = vld [vmem:[#allocation9 + $0x7e8] sm:$0xff]
      %v8102 = vld [vmem:[#allocation9 + $0x7f0] sm:$0xff]
      %v8103 = vld [vmem:[#allocation9 + $0x7f8] sm:$0xff]
      %v8104 = vld [vmem:[#allocation11] sm:$0xf]
      %v8106 = vlaneseq
      %v8107 = vshrl.u32 %v8106, 7
      %v8108 = vsub.s32 0, %v8107
      %v8109 = vrot.slane %v8104, %v8108
      %v8110 = vlaneseq
      %v8111 = vshrl.u32 %v8110, 7
      %v8112 = vsub.s32 1, %v8111
      %v8113 = vrot.slane %v8104, %v8112
      %v8114 = vlaneseq
      %v8115 = vshrl.u32 %v8114, 7
      %v8116 = vsub.s32 2, %v8115
      %v8117 = vrot.slane %v8104, %v8116
      %v8118 = vlaneseq
      %v8119 = vshrl.u32 %v8118, 7
      %v8120 = vsub.s32 3, %v8119
      %v8121 = vrot.slane %v8104, %v8120
      %v8382 = vunpack.c.l.b16 %v7848
      %v8383 = vunpack.c.h.b16 %v7848
      %v8384 = vunpack.c.l.b16 %v7849
      %v8385 = vunpack.c.h.b16 %v7849
      %v8386 = vunpack.c.l.b16 %v7850
      %v8387 = vunpack.c.h.b16 %v7850
      %v8388 = vunpack.c.l.b16 %v7851
      %v8389 = vunpack.c.h.b16 %v7851
      %v8390 = vunpack.c.l.b16 %v7852
      %v8391 = vunpack.c.h.b16 %v7852
      %v8392 = vunpack.c.l.b16 %v7853
      %v8393 = vunpack.c.h.b16 %v7853
      %v8394 = vunpack.c.l.b16 %v7854
      %v8395 = vunpack.c.h.b16 %v7854
      %v8396 = vunpack.c.l.b16 %v7855
      %v8397 = vunpack.c.h.b16 %v7855
      %v8398 = vunpack.c.l.b16 %v7856
      %v8399 = vunpack.c.h.b16 %v7856
      %v8400 = vunpack.c.l.b16 %v7857
      %v8401 = vunpack.c.h.b16 %v7857
      %v8402 = vunpack.c.l.b16 %v7858
      %v8403 = vunpack.c.h.b16 %v7858
      %v8404 = vunpack.c.l.b16 %v7859
      %v8405 = vunpack.c.h.b16 %v7859
      %v8406 = vunpack.c.l.b16 %v7860
      %v8407 = vunpack.c.h.b16 %v7860
      %v8408 = vunpack.c.l.b16 %v7861
      %v8409 = vunpack.c.h.b16 %v7861
      %v8410 = vunpack.c.l.b16 %v7862
      %v8411 = vunpack.c.h.b16 %v7862
      %v8412 = vunpack.c.l.b16 %v7863
      %v8413 = vunpack.c.h.b16 %v7863
      %v8414 = vunpack.c.l.b16 %v7864
      %v8415 = vunpack.c.h.b16 %v7864
      %v8416 = vunpack.c.l.b16 %v7865
      %v8417 = vunpack.c.h.b16 %v7865
      %v8418 = vunpack.c.l.b16 %v7866
      %v8419 = vunpack.c.h.b16 %v7866
      %v8420 = vunpack.c.l.b16 %v7867
      %v8421 = vunpack.c.h.b16 %v7867
      %v8422 = vunpack.c.l.b16 %v7868
      %v8423 = vunpack.c.h.b16 %v7868
      %v8424 = vunpack.c.l.b16 %v7869
      %v8425 = vunpack.c.h.b16 %v7869
      %v8426 = vunpack.c.l.b16 %v7870
      %v8427 = vunpack.c.h.b16 %v7870
      %v8428 = vunpack.c.l.b16 %v7871
      %v8429 = vunpack.c.h.b16 %v7871
      %v8430 = vunpack.c.l.b16 %v7872
      %v8431 = vunpack.c.h.b16 %v7872
      %v8432 = vunpack.c.l.b16 %v7873
      %v8433 = vunpack.c.h.b16 %v7873
      %v8434 = vunpack.c.l.b16 %v7874
      %v8435 = vunpack.c.h.b16 %v7874
      %v8436 = vunpack.c.l.b16 %v7875
      %v8437 = vunpack.c.h.b16 %v7875
      %v8438 = vunpack.c.l.b16 %v7876
      %v8439 = vunpack.c.h.b16 %v7876
      %v8440 = vunpack.c.l.b16 %v7877
      %v8441 = vunpack.c.h.b16 %v7877
      %v8442 = vunpack.c.l.b16 %v7878
      %v8443 = vunpack.c.h.b16 %v7878
      %v8444 = vunpack.c.l.b16 %v7879
      %v8445 = vunpack.c.h.b16 %v7879
      %v8446 = vunpack.c.l.b16 %v7880
      %v8447 = vunpack.c.h.b16 %v7880
      %v8448 = vunpack.c.l.b16 %v7881
      %v8449 = vunpack.c.h.b16 %v7881
      %v8450 = vunpack.c.l.b16 %v7882
      %v8451 = vunpack.c.h.b16 %v7882
      %v8452 = vunpack.c.l.b16 %v7883
      %v8453 = vunpack.c.h.b16 %v7883
      %v8454 = vunpack.c.l.b16 %v7884
      %v8455 = vunpack.c.h.b16 %v7884
      %v8456 = vunpack.c.l.b16 %v7885
      %v8457 = vunpack.c.h.b16 %v7885
      %v8458 = vunpack.c.l.b16 %v7886
      %v8459 = vunpack.c.h.b16 %v7886
      %v8460 = vunpack.c.l.b16 %v7887
      %v8461 = vunpack.c.h.b16 %v7887
      %v8462 = vunpack.c.l.b16 %v7888
      %v8463 = vunpack.c.h.b16 %v7888
      %v8464 = vunpack.c.l.b16 %v7889
      %v8465 = vunpack.c.h.b16 %v7889
      %v8466 = vunpack.c.l.b16 %v7890
      %v8467 = vunpack.c.h.b16 %v7890
      %v8468 = vunpack.c.l.b16 %v7891
      %v8469 = vunpack.c.h.b16 %v7891
      %v8470 = vunpack.c.l.b16 %v7892
      %v8471 = vunpack.c.h.b16 %v7892
      %v8472 = vunpack.c.l.b16 %v7893
      %v8473 = vunpack.c.h.b16 %v7893
      %v8474 = vunpack.c.l.b16 %v7894
      %v8475 = vunpack.c.h.b16 %v7894
      %v8476 = vunpack.c.l.b16 %v7895
      %v8477 = vunpack.c.h.b16 %v7895
      %v8478 = vunpack.c.l.b16 %v7896
      %v8479 = vunpack.c.h.b16 %v7896
      %v8480 = vunpack.c.l.b16 %v7897
      %v8481 = vunpack.c.h.b16 %v7897
      %v8482 = vunpack.c.l.b16 %v7898
      %v8483 = vunpack.c.h.b16 %v7898
      %v8484 = vunpack.c.l.b16 %v7899
      %v8485 = vunpack.c.h.b16 %v7899
      %v8486 = vunpack.c.l.b16 %v7900
      %v8487 = vunpack.c.h.b16 %v7900
      %v8488 = vunpack.c.l.b16 %v7901
      %v8489 = vunpack.c.h.b16 %v7901
      %v8490 = vunpack.c.l.b16 %v7902
      %v8491 = vunpack.c.h.b16 %v7902
      %v8492 = vunpack.c.l.b16 %v7903
      %v8493 = vunpack.c.h.b16 %v7903
      %v8494 = vunpack.c.l.b16 %v7904
      %v8495 = vunpack.c.h.b16 %v7904
      %v8496 = vunpack.c.l.b16 %v7905
      %v8497 = vunpack.c.h.b16 %v7905
      %v8498 = vunpack.c.l.b16 %v7906
      %v8499 = vunpack.c.h.b16 %v7906
      %v8500 = vunpack.c.l.b16 %v7907
      %v8501 = vunpack.c.h.b16 %v7907
      %v8502 = vunpack.c.l.b16 %v7908
      %v8503 = vunpack.c.h.b16 %v7908
      %v8504 = vunpack.c.l.b16 %v7909
      %v8505 = vunpack.c.h.b16 %v7909
      %v8506 = vunpack.c.l.b16 %v7910
      %v8507 = vunpack.c.h.b16 %v7910
      %v8508 = vunpack.c.l.b16 %v7911
      %v8509 = vunpack.c.h.b16 %v7911
      %v8510 = vunpack.c.l.b16 %v7912
      %v8511 = vunpack.c.h.b16 %v7912
      %v8512 = vunpack.c.l.b16 %v7913
      %v8513 = vunpack.c.h.b16 %v7913
      %v8514 = vunpack.c.l.b16 %v7914
      %v8515 = vunpack.c.h.b16 %v7914
      %v8516 = vunpack.c.l.b16 %v7915
      %v8517 = vunpack.c.h.b16 %v7915
      %v8518 = vunpack.c.l.b16 %v7916
      %v8519 = vunpack.c.h.b16 %v7916
      %v8520 = vunpack.c.l.b16 %v7917
      %v8521 = vunpack.c.h.b16 %v7917
      %v8522 = vunpack.c.l.b16 %v7918
      %v8523 = vunpack.c.h.b16 %v7918
      %v8524 = vunpack.c.l.b16 %v7919
      %v8525 = vunpack.c.h.b16 %v7919
      %v8526 = vunpack.c.l.b16 %v7920
      %v8527 = vunpack.c.h.b16 %v7920
      %v8528 = vunpack.c.l.b16 %v7921
      %v8529 = vunpack.c.h.b16 %v7921
      %v8530 = vunpack.c.l.b16 %v7922
      %v8531 = vunpack.c.h.b16 %v7922
      %v8532 = vunpack.c.l.b16 %v7923
      %v8533 = vunpack.c.h.b16 %v7923
      %v8534 = vunpack.c.l.b16 %v7924
      %v8535 = vunpack.c.h.b16 %v7924
      %v8536 = vunpack.c.l.b16 %v7925
      %v8537 = vunpack.c.h.b16 %v7925
      %v8538 = vunpack.c.l.b16 %v7926
      %v8539 = vunpack.c.h.b16 %v7926
      %v8540 = vunpack.c.l.b16 %v7927
      %v8541 = vunpack.c.h.b16 %v7927
      %v8542 = vunpack.c.l.b16 %v7928
      %v8543 = vunpack.c.h.b16 %v7928
      %v8544 = vunpack.c.l.b16 %v7929
      %v8545 = vunpack.c.h.b16 %v7929
      %v8546 = vunpack.c.l.b16 %v7930
      %v8547 = vunpack.c.h.b16 %v7930
      %v8548 = vunpack.c.l.b16 %v7931
      %v8549 = vunpack.c.h.b16 %v7931
      %v8550 = vunpack.c.l.b16 %v7932
      %v8551 = vunpack.c.h.b16 %v7932
      %v8552 = vunpack.c.l.b16 %v7933
      %v8553 = vunpack.c.h.b16 %v7933
      %v8554 = vunpack.c.l.b16 %v7934
      %v8555 = vunpack.c.h.b16 %v7934
      %v8556 = vunpack.c.l.b16 %v7935
      %v8557 = vunpack.c.h.b16 %v7935
      %v8558 = vunpack.c.l.b16 %v7936
      %v8559 = vunpack.c.h.b16 %v7936
      %v8560 = vunpack.c.l.b16 %v7937
      %v8561 = vunpack.c.h.b16 %v7937
      %v8562 = vunpack.c.l.b16 %v7938
      %v8563 = vunpack.c.h.b16 %v7938
      %v8564 = vunpack.c.l.b16 %v7939
      %v8565 = vunpack.c.h.b16 %v7939
      %v8566 = vunpack.c.l.b16 %v7940
      %v8567 = vunpack.c.h.b16 %v7940
      %v8568 = vunpack.c.l.b16 %v7941
      %v8569 = vunpack.c.h.b16 %v7941
      %v8570 = vunpack.c.l.b16 %v7942
      %v8571 = vunpack.c.h.b16 %v7942
      %v8572 = vunpack.c.l.b16 %v7943
      %v8573 = vunpack.c.h.b16 %v7943
      %v8574 = vunpack.c.l.b16 %v7944
      %v8575 = vunpack.c.h.b16 %v7944
      %v8576 = vunpack.c.l.b16 %v7945
      %v8577 = vunpack.c.h.b16 %v7945
      %v8578 = vunpack.c.l.b16 %v7946
      %v8579 = vunpack.c.h.b16 %v7946
      %v8580 = vunpack.c.l.b16 %v7947
      %v8581 = vunpack.c.h.b16 %v7947
      %v8582 = vunpack.c.l.b16 %v7948
      %v8583 = vunpack.c.h.b16 %v7948
      %v8584 = vunpack.c.l.b16 %v7949
      %v8585 = vunpack.c.h.b16 %v7949
      %v8586 = vunpack.c.l.b16 %v7950
      %v8587 = vunpack.c.h.b16 %v7950
      %v8588 = vunpack.c.l.b16 %v7951
      %v8589 = vunpack.c.h.b16 %v7951
      %v8590 = vunpack.c.l.b16 %v7952
      %v8591 = vunpack.c.h.b16 %v7952
      %v8592 = vunpack.c.l.b16 %v7953
      %v8593 = vunpack.c.h.b16 %v7953
      %v8594 = vunpack.c.l.b16 %v7954
      %v8595 = vunpack.c.h.b16 %v7954
      %v8596 = vunpack.c.l.b16 %v7955
      %v8597 = vunpack.c.h.b16 %v7955
      %v8598 = vunpack.c.l.b16 %v7956
      %v8599 = vunpack.c.h.b16 %v7956
      %v8600 = vunpack.c.l.b16 %v7957
      %v8601 = vunpack.c.h.b16 %v7957
      %v8602 = vunpack.c.l.b16 %v7958
      %v8603 = vunpack.c.h.b16 %v7958
      %v8604 = vunpack.c.l.b16 %v7959
      %v8605 = vunpack.c.h.b16 %v7959
      %v8606 = vunpack.c.l.b16 %v7960
      %v8607 = vunpack.c.h.b16 %v7960
      %v8608 = vunpack.c.l.b16 %v7961
      %v8609 = vunpack.c.h.b16 %v7961
      %v8610 = vunpack.c.l.b16 %v7962
      %v8611 = vunpack.c.h.b16 %v7962
      %v8612 = vunpack.c.l.b16 %v7963
      %v8613 = vunpack.c.h.b16 %v7963
      %v8614 = vunpack.c.l.b16 %v7964
      %v8615 = vunpack.c.h.b16 %v7964
      %v8616 = vunpack.c.l.b16 %v7965
      %v8617 = vunpack.c.h.b16 %v7965
      %v8618 = vunpack.c.l.b16 %v7966
      %v8619 = vunpack.c.h.b16 %v7966
      %v8620 = vunpack.c.l.b16 %v7967
      %v8621 = vunpack.c.h.b16 %v7967
      %v8622 = vunpack.c.l.b16 %v7968
      %v8623 = vunpack.c.h.b16 %v7968
      %v8624 = vunpack.c.l.b16 %v7969
      %v8625 = vunpack.c.h.b16 %v7969
      %v8626 = vunpack.c.l.b16 %v7970
      %v8627 = vunpack.c.h.b16 %v7970
      %v8628 = vunpack.c.l.b16 %v7971
      %v8629 = vunpack.c.h.b16 %v7971
      %v8630 = vunpack.c.l.b16 %v7972
      %v8631 = vunpack.c.h.b16 %v7972
      %v8632 = vunpack.c.l.b16 %v7973
      %v8633 = vunpack.c.h.b16 %v7973
      %v8634 = vunpack.c.l.b16 %v7974
      %v8635 = vunpack.c.h.b16 %v7974
      %v8636 = vunpack.c.l.b16 %v7975
      %v8637 = vunpack.c.h.b16 %v7975
      %v8638 = vunpack.c.l.b16 %v7976
      %v8639 = vunpack.c.h.b16 %v7976
      %v8640 = vunpack.c.l.b16 %v7977
      %v8641 = vunpack.c.h.b16 %v7977
      %v8642 = vunpack.c.l.b16 %v7978
      %v8643 = vunpack.c.h.b16 %v7978
      %v8644 = vunpack.c.l.b16 %v7979
      %v8645 = vunpack.c.h.b16 %v7979
      %v8646 = vunpack.c.l.b16 %v7980
      %v8647 = vunpack.c.h.b16 %v7980
      %v8648 = vunpack.c.l.b16 %v7981
      %v8649 = vunpack.c.h.b16 %v7981
      %v8650 = vunpack.c.l.b16 %v7982
      %v8651 = vunpack.c.h.b16 %v7982
      %v8652 = vunpack.c.l.b16 %v7983
      %v8653 = vunpack.c.h.b16 %v7983
      %v8654 = vunpack.c.l.b16 %v7984
      %v8655 = vunpack.c.h.b16 %v7984
      %v8656 = vunpack.c.l.b16 %v7985
      %v8657 = vunpack.c.h.b16 %v7985
      %v8658 = vunpack.c.l.b16 %v7986
      %v8659 = vunpack.c.h.b16 %v7986
      %v8660 = vunpack.c.l.b16 %v7987
      %v8661 = vunpack.c.h.b16 %v7987
      %v8662 = vunpack.c.l.b16 %v7988
      %v8663 = vunpack.c.h.b16 %v7988
      %v8664 = vunpack.c.l.b16 %v7989
      %v8665 = vunpack.c.h.b16 %v7989
      %v8666 = vunpack.c.l.b16 %v7990
      %v8667 = vunpack.c.h.b16 %v7990
      %v8668 = vunpack.c.l.b16 %v7991
      %v8669 = vunpack.c.h.b16 %v7991
      %v8670 = vunpack.c.l.b16 %v7992
      %v8671 = vunpack.c.h.b16 %v7992
      %v8672 = vunpack.c.l.b16 %v7993
      %v8673 = vunpack.c.h.b16 %v7993
      %v8674 = vunpack.c.l.b16 %v7994
      %v8675 = vunpack.c.h.b16 %v7994
      %v8676 = vunpack.c.l.b16 %v7995
      %v8677 = vunpack.c.h.b16 %v7995
      %v8678 = vunpack.c.l.b16 %v7996
      %v8679 = vunpack.c.h.b16 %v7996
      %v8680 = vunpack.c.l.b16 %v7997
      %v8681 = vunpack.c.h.b16 %v7997
      %v8682 = vunpack.c.l.b16 %v7998
      %v8683 = vunpack.c.h.b16 %v7998
      %v8684 = vunpack.c.l.b16 %v7999
      %v8685 = vunpack.c.h.b16 %v7999
      %v8686 = vunpack.c.l.b16 %v8000
      %v8687 = vunpack.c.h.b16 %v8000
      %v8688 = vunpack.c.l.b16 %v8001
      %v8689 = vunpack.c.h.b16 %v8001
      %v8690 = vunpack.c.l.b16 %v8002
      %v8691 = vunpack.c.h.b16 %v8002
      %v8692 = vunpack.c.l.b16 %v8003
      %v8693 = vunpack.c.h.b16 %v8003
      %v8694 = vunpack.c.l.b16 %v8004
      %v8695 = vunpack.c.h.b16 %v8004
      %v8696 = vunpack.c.l.b16 %v8005
      %v8697 = vunpack.c.h.b16 %v8005
      %v8698 = vunpack.c.l.b16 %v8006
      %v8699 = vunpack.c.h.b16 %v8006
      %v8700 = vunpack.c.l.b16 %v8007
      %v8701 = vunpack.c.h.b16 %v8007
      %v8702 = vunpack.c.l.b16 %v8008
      %v8703 = vunpack.c.h.b16 %v8008
      %v8704 = vunpack.c.l.b16 %v8009
      %v8705 = vunpack.c.h.b16 %v8009
      %v8706 = vunpack.c.l.b16 %v8010
      %v8707 = vunpack.c.h.b16 %v8010
      %v8708 = vunpack.c.l.b16 %v8011
      %v8709 = vunpack.c.h.b16 %v8011
      %v8710 = vunpack.c.l.b16 %v8012
      %v8711 = vunpack.c.h.b16 %v8012
      %v8712 = vunpack.c.l.b16 %v8013
      %v8713 = vunpack.c.h.b16 %v8013
      %v8714 = vunpack.c.l.b16 %v8014
      %v8715 = vunpack.c.h.b16 %v8014
      %v8716 = vunpack.c.l.b16 %v8015
      %v8717 = vunpack.c.h.b16 %v8015
      %v8718 = vunpack.c.l.b16 %v8016
      %v8719 = vunpack.c.h.b16 %v8016
      %v8720 = vunpack.c.l.b16 %v8017
      %v8721 = vunpack.c.h.b16 %v8017
      %v8722 = vunpack.c.l.b16 %v8018
      %v8723 = vunpack.c.h.b16 %v8018
      %v8724 = vunpack.c.l.b16 %v8019
      %v8725 = vunpack.c.h.b16 %v8019
      %v8726 = vunpack.c.l.b16 %v8020
      %v8727 = vunpack.c.h.b16 %v8020
      %v8728 = vunpack.c.l.b16 %v8021
      %v8729 = vunpack.c.h.b16 %v8021
      %v8730 = vunpack.c.l.b16 %v8022
      %v8731 = vunpack.c.h.b16 %v8022
      %v8732 = vunpack.c.l.b16 %v8023
      %v8733 = vunpack.c.h.b16 %v8023
      %v8734 = vunpack.c.l.b16 %v8024
      %v8735 = vunpack.c.h.b16 %v8024
      %v8736 = vunpack.c.l.b16 %v8025
      %v8737 = vunpack.c.h.b16 %v8025
      %v8738 = vunpack.c.l.b16 %v8026
      %v8739 = vunpack.c.h.b16 %v8026
      %v8740 = vunpack.c.l.b16 %v8027
      %v8741 = vunpack.c.h.b16 %v8027
      %v8742 = vunpack.c.l.b16 %v8028
      %v8743 = vunpack.c.h.b16 %v8028
      %v8744 = vunpack.c.l.b16 %v8029
      %v8745 = vunpack.c.h.b16 %v8029
      %v8746 = vunpack.c.l.b16 %v8030
      %v8747 = vunpack.c.h.b16 %v8030
      %v8748 = vunpack.c.l.b16 %v8031
      %v8749 = vunpack.c.h.b16 %v8031
      %v8750 = vunpack.c.l.b16 %v8032
      %v8751 = vunpack.c.h.b16 %v8032
      %v8752 = vunpack.c.l.b16 %v8033
      %v8753 = vunpack.c.h.b16 %v8033
      %v8754 = vunpack.c.l.b16 %v8034
      %v8755 = vunpack.c.h.b16 %v8034
      %v8756 = vunpack.c.l.b16 %v8035
      %v8757 = vunpack.c.h.b16 %v8035
      %v8758 = vunpack.c.l.b16 %v8036
      %v8759 = vunpack.c.h.b16 %v8036
      %v8760 = vunpack.c.l.b16 %v8037
      %v8761 = vunpack.c.h.b16 %v8037
      %v8762 = vunpack.c.l.b16 %v8038
      %v8763 = vunpack.c.h.b16 %v8038
      %v8764 = vunpack.c.l.b16 %v8039
      %v8765 = vunpack.c.h.b16 %v8039
      %v8766 = vunpack.c.l.b16 %v8040
      %v8767 = vunpack.c.h.b16 %v8040
      %v8768 = vunpack.c.l.b16 %v8041
      %v8769 = vunpack.c.h.b16 %v8041
      %v8770 = vunpack.c.l.b16 %v8042
      %v8771 = vunpack.c.h.b16 %v8042
      %v8772 = vunpack.c.l.b16 %v8043
      %v8773 = vunpack.c.h.b16 %v8043
      %v8774 = vunpack.c.l.b16 %v8044
      %v8775 = vunpack.c.h.b16 %v8044
      %v8776 = vunpack.c.l.b16 %v8045
      %v8777 = vunpack.c.h.b16 %v8045
      %v8778 = vunpack.c.l.b16 %v8046
      %v8779 = vunpack.c.h.b16 %v8046
      %v8780 = vunpack.c.l.b16 %v8047
      %v8781 = vunpack.c.h.b16 %v8047
      %v8782 = vunpack.c.l.b16 %v8048
      %v8783 = vunpack.c.h.b16 %v8048
      %v8784 = vunpack.c.l.b16 %v8049
      %v8785 = vunpack.c.h.b16 %v8049
      %v8786 = vunpack.c.l.b16 %v8050
      %v8787 = vunpack.c.h.b16 %v8050
      %v8788 = vunpack.c.l.b16 %v8051
      %v8789 = vunpack.c.h.b16 %v8051
      %v8790 = vunpack.c.l.b16 %v8052
      %v8791 = vunpack.c.h.b16 %v8052
      %v8792 = vunpack.c.l.b16 %v8053
      %v8793 = vunpack.c.h.b16 %v8053
      %v8794 = vunpack.c.l.b16 %v8054
      %v8795 = vunpack.c.h.b16 %v8054
      %v8796 = vunpack.c.l.b16 %v8055
      %v8797 = vunpack.c.h.b16 %v8055
      %v8798 = vunpack.c.l.b16 %v8056
      %v8799 = vunpack.c.h.b16 %v8056
      %v8800 = vunpack.c.l.b16 %v8057
      %v8801 = vunpack.c.h.b16 %v8057
      %v8802 = vunpack.c.l.b16 %v8058
      %v8803 = vunpack.c.h.b16 %v8058
      %v8804 = vunpack.c.l.b16 %v8059
      %v8805 = vunpack.c.h.b16 %v8059
      %v8806 = vunpack.c.l.b16 %v8060
      %v8807 = vunpack.c.h.b16 %v8060
      %v8808 = vunpack.c.l.b16 %v8061
      %v8809 = vunpack.c.h.b16 %v8061
      %v8810 = vunpack.c.l.b16 %v8062
      %v8811 = vunpack.c.h.b16 %v8062
      %v8812 = vunpack.c.l.b16 %v8063
      %v8813 = vunpack.c.h.b16 %v8063
      %v8814 = vunpack.c.l.b16 %v8064
      %v8815 = vunpack.c.h.b16 %v8064
      %v8816 = vunpack.c.l.b16 %v8065
      %v8817 = vunpack.c.h.b16 %v8065
      %v8818 = vunpack.c.l.b16 %v8066
      %v8819 = vunpack.c.h.b16 %v8066
      %v8820 = vunpack.c.l.b16 %v8067
      %v8821 = vunpack.c.h.b16 %v8067
      %v8822 = vunpack.c.l.b16 %v8068
      %v8823 = vunpack.c.h.b16 %v8068
      %v8824 = vunpack.c.l.b16 %v8069
      %v8825 = vunpack.c.h.b16 %v8069
      %v8826 = vunpack.c.l.b16 %v8070
      %v8827 = vunpack.c.h.b16 %v8070
      %v8828 = vunpack.c.l.b16 %v8071
      %v8829 = vunpack.c.h.b16 %v8071
      %v8830 = vunpack.c.l.b16 %v8072
      %v8831 = vunpack.c.h.b16 %v8072
      %v8832 = vunpack.c.l.b16 %v8073
      %v8833 = vunpack.c.h.b16 %v8073
      %v8834 = vunpack.c.l.b16 %v8074
      %v8835 = vunpack.c.h.b16 %v8074
      %v8836 = vunpack.c.l.b16 %v8075
      %v8837 = vunpack.c.h.b16 %v8075
      %v8838 = vunpack.c.l.b16 %v8076
      %v8839 = vunpack.c.h.b16 %v8076
      %v8840 = vunpack.c.l.b16 %v8077
      %v8841 = vunpack.c.h.b16 %v8077
      %v8842 = vunpack.c.l.b16 %v8078
      %v8843 = vunpack.c.h.b16 %v8078
      %v8844 = vunpack.c.l.b16 %v8079
      %v8845 = vunpack.c.h.b16 %v8079
      %v8846 = vunpack.c.l.b16 %v8080
      %v8847 = vunpack.c.h.b16 %v8080
      %v8848 = vunpack.c.l.b16 %v8081
      %v8849 = vunpack.c.h.b16 %v8081
      %v8850 = vunpack.c.l.b16 %v8082
      %v8851 = vunpack.c.h.b16 %v8082
      %v8852 = vunpack.c.l.b16 %v8083
      %v8853 = vunpack.c.h.b16 %v8083
      %v8854 = vunpack.c.l.b16 %v8084
      %v8855 = vunpack.c.h.b16 %v8084
      %v8856 = vunpack.c.l.b16 %v8085
      %v8857 = vunpack.c.h.b16 %v8085
      %v8858 = vunpack.c.l.b16 %v8086
      %v8859 = vunpack.c.h.b16 %v8086
      %v8860 = vunpack.c.l.b16 %v8087
      %v8861 = vunpack.c.h.b16 %v8087
      %v8862 = vunpack.c.l.b16 %v8088
      %v8863 = vunpack.c.h.b16 %v8088
      %v8864 = vunpack.c.l.b16 %v8089
      %v8865 = vunpack.c.h.b16 %v8089
      %v8866 = vunpack.c.l.b16 %v8090
      %v8867 = vunpack.c.h.b16 %v8090
      %v8868 = vunpack.c.l.b16 %v8091
      %v8869 = vunpack.c.h.b16 %v8091
      %v8870 = vunpack.c.l.b16 %v8092
      %v8871 = vunpack.c.h.b16 %v8092
      %v8872 = vunpack.c.l.b16 %v8093
      %v8873 = vunpack.c.h.b16 %v8093
      %v8874 = vunpack.c.l.b16 %v8094
      %v8875 = vunpack.c.h.b16 %v8094
      %v8876 = vunpack.c.l.b16 %v8095
      %v8877 = vunpack.c.h.b16 %v8095
      %v8878 = vunpack.c.l.b16 %v8096
      %v8879 = vunpack.c.h.b16 %v8096
      %v8880 = vunpack.c.l.b16 %v8097
      %v8881 = vunpack.c.h.b16 %v8097
      %v8882 = vunpack.c.l.b16 %v8098
      %v8883 = vunpack.c.h.b16 %v8098
      %v8884 = vunpack.c.l.b16 %v8099
      %v8885 = vunpack.c.h.b16 %v8099
      %v8886 = vunpack.c.l.b16 %v8100
      %v8887 = vunpack.c.h.b16 %v8100
      %v8888 = vunpack.c.l.b16 %v8101
      %v8889 = vunpack.c.h.b16 %v8101
      %v8890 = vunpack.c.l.b16 %v8102
      %v8891 = vunpack.c.h.b16 %v8102
      %v8892 = vunpack.c.l.b16 %v8103
      %v8893 = vunpack.c.h.b16 %v8103
      %v8894 = vpack.c.b16 %v8386, %v8382
      %v8895 = vpack.c.b16 %v8387, %v8383
      %v8896 = vpack.c.b16 %v8388, %v8384
      %v8897 = vpack.c.b16 %v8389, %v8385
      %v8898 = vpack.c.b16 %v8394, %v8390
      %v8899 = vpack.c.b16 %v8395, %v8391
      %v8900 = vpack.c.b16 %v8396, %v8392
      %v8901 = vpack.c.b16 %v8397, %v8393
      %v8902 = vpack.c.b16 %v8402, %v8398
      %v8903 = vpack.c.b16 %v8403, %v8399
      %v8904 = vpack.c.b16 %v8404, %v8400
      %v8905 = vpack.c.b16 %v8405, %v8401
      %v8906 = vpack.c.b16 %v8410, %v8406
      %v8907 = vpack.c.b16 %v8411, %v8407
      %v8908 = vpack.c.b16 %v8412, %v8408
      %v8909 = vpack.c.b16 %v8413, %v8409
      %v8910 = vpack.c.b16 %v8418, %v8414
      %v8911 = vpack.c.b16 %v8419, %v8415
      %v8912 = vpack.c.b16 %v8420, %v8416
      %v8913 = vpack.c.b16 %v8421, %v8417
      %v8914 = vpack.c.b16 %v8426, %v8422
      %v8915 = vpack.c.b16 %v8427, %v8423
      %v8916 = vpack.c.b16 %v8428, %v8424
      %v8917 = vpack.c.b16 %v8429, %v8425
      %v8918 = vpack.c.b16 %v8434, %v8430
      %v8919 = vpack.c.b16 %v8435, %v8431
      %v8920 = vpack.c.b16 %v8436, %v8432
      %v8921 = vpack.c.b16 %v8437, %v8433
      %v8922 = vpack.c.b16 %v8442, %v8438
      %v8923 = vpack.c.b16 %v8443, %v8439
      %v8924 = vpack.c.b16 %v8444, %v8440
      %v8925 = vpack.c.b16 %v8445, %v8441
      %v8926 = vpack.c.b16 %v8450, %v8446
      %v8927 = vpack.c.b16 %v8451, %v8447
      %v8928 = vpack.c.b16 %v8452, %v8448
      %v8929 = vpack.c.b16 %v8453, %v8449
      %v8930 = vpack.c.b16 %v8458, %v8454
      %v8931 = vpack.c.b16 %v8459, %v8455
      %v8932 = vpack.c.b16 %v8460, %v8456
      %v8933 = vpack.c.b16 %v8461, %v8457
      %v8934 = vpack.c.b16 %v8466, %v8462
      %v8935 = vpack.c.b16 %v8467, %v8463
      %v8936 = vpack.c.b16 %v8468, %v8464
      %v8937 = vpack.c.b16 %v8469, %v8465
      %v8938 = vpack.c.b16 %v8474, %v8470
      %v8939 = vpack.c.b16 %v8475, %v8471
      %v8940 = vpack.c.b16 %v8476, %v8472
      %v8941 = vpack.c.b16 %v8477, %v8473
      %v8942 = vpack.c.b16 %v8482, %v8478
      %v8943 = vpack.c.b16 %v8483, %v8479
      %v8944 = vpack.c.b16 %v8484, %v8480
      %v8945 = vpack.c.b16 %v8485, %v8481
      %v8946 = vpack.c.b16 %v8490, %v8486
      %v8947 = vpack.c.b16 %v8491, %v8487
      %v8948 = vpack.c.b16 %v8492, %v8488
      %v8949 = vpack.c.b16 %v8493, %v8489
      %v8950 = vpack.c.b16 %v8498, %v8494
      %v8951 = vpack.c.b16 %v8499, %v8495
      %v8952 = vpack.c.b16 %v8500, %v8496
      %v8953 = vpack.c.b16 %v8501, %v8497
      %v8954 = vpack.c.b16 %v8506, %v8502
      %v8955 = vpack.c.b16 %v8507, %v8503
      %v8956 = vpack.c.b16 %v8508, %v8504
      %v8957 = vpack.c.b16 %v8509, %v8505
      %v8958 = vpack.c.b16 %v8514, %v8510
      %v8959 = vpack.c.b16 %v8515, %v8511
      %v8960 = vpack.c.b16 %v8516, %v8512
      %v8961 = vpack.c.b16 %v8517, %v8513
      %v8962 = vpack.c.b16 %v8522, %v8518
      %v8963 = vpack.c.b16 %v8523, %v8519
      %v8964 = vpack.c.b16 %v8524, %v8520
      %v8965 = vpack.c.b16 %v8525, %v8521
      %v8966 = vpack.c.b16 %v8530, %v8526
      %v8967 = vpack.c.b16 %v8531, %v8527
      %v8968 = vpack.c.b16 %v8532, %v8528
      %v8969 = vpack.c.b16 %v8533, %v8529
      %v8970 = vpack.c.b16 %v8538, %v8534
      %v8971 = vpack.c.b16 %v8539, %v8535
      %v8972 = vpack.c.b16 %v8540, %v8536
      %v8973 = vpack.c.b16 %v8541, %v8537
      %v8974 = vpack.c.b16 %v8546, %v8542
      %v8975 = vpack.c.b16 %v8547, %v8543
      %v8976 = vpack.c.b16 %v8548, %v8544
      %v8977 = vpack.c.b16 %v8549, %v8545
      %v8978 = vpack.c.b16 %v8554, %v8550
      %v8979 = vpack.c.b16 %v8555, %v8551
      %v8980 = vpack.c.b16 %v8556, %v8552
      %v8981 = vpack.c.b16 %v8557, %v8553
      %v8982 = vpack.c.b16 %v8562, %v8558
      %v8983 = vpack.c.b16 %v8563, %v8559
      %v8984 = vpack.c.b16 %v8564, %v8560
      %v8985 = vpack.c.b16 %v8565, %v8561
      %v8986 = vpack.c.b16 %v8570, %v8566
      %v8987 = vpack.c.b16 %v8571, %v8567
      %v8988 = vpack.c.b16 %v8572, %v8568
      %v8989 = vpack.c.b16 %v8573, %v8569
      %v8990 = vpack.c.b16 %v8578, %v8574
      %v8991 = vpack.c.b16 %v8579, %v8575
      %v8992 = vpack.c.b16 %v8580, %v8576
      %v8993 = vpack.c.b16 %v8581, %v8577
      %v8994 = vpack.c.b16 %v8586, %v8582
      %v8995 = vpack.c.b16 %v8587, %v8583
      %v8996 = vpack.c.b16 %v8588, %v8584
      %v8997 = vpack.c.b16 %v8589, %v8585
      %v8998 = vpack.c.b16 %v8594, %v8590
      %v8999 = vpack.c.b16 %v8595, %v8591
      %v9000 = vpack.c.b16 %v8596, %v8592
      %v9001 = vpack.c.b16 %v8597, %v8593
      %v9002 = vpack.c.b16 %v8602, %v8598
      %v9003 = vpack.c.b16 %v8603, %v8599
      %v9004 = vpack.c.b16 %v8604, %v8600
      %v9005 = vpack.c.b16 %v8605, %v8601
      %v9006 = vpack.c.b16 %v8610, %v8606
      %v9007 = vpack.c.b16 %v8611, %v8607
      %v9008 = vpack.c.b16 %v8612, %v8608
      %v9009 = vpack.c.b16 %v8613, %v8609
      %v9010 = vpack.c.b16 %v8618, %v8614
      %v9011 = vpack.c.b16 %v8619, %v8615
      %v9012 = vpack.c.b16 %v8620, %v8616
      %v9013 = vpack.c.b16 %v8621, %v8617
      %v9014 = vpack.c.b16 %v8626, %v8622
      %v9015 = vpack.c.b16 %v8627, %v8623
      %v9016 = vpack.c.b16 %v8628, %v8624
      %v9017 = vpack.c.b16 %v8629, %v8625
      %v9018 = vpack.c.b16 %v8634, %v8630
      %v9019 = vpack.c.b16 %v8635, %v8631
      %v9020 = vpack.c.b16 %v8636, %v8632
      %v9021 = vpack.c.b16 %v8637, %v8633
      %v9022 = vpack.c.b16 %v8642, %v8638
      %v9023 = vpack.c.b16 %v8643, %v8639
      %v9024 = vpack.c.b16 %v8644, %v8640
      %v9025 = vpack.c.b16 %v8645, %v8641
      %v9026 = vpack.c.b16 %v8650, %v8646
      %v9027 = vpack.c.b16 %v8651, %v8647
      %v9028 = vpack.c.b16 %v8652, %v8648
      %v9029 = vpack.c.b16 %v8653, %v8649
      %v9030 = vpack.c.b16 %v8658, %v8654
      %v9031 = vpack.c.b16 %v8659, %v8655
      %v9032 = vpack.c.b16 %v8660, %v8656
      %v9033 = vpack.c.b16 %v8661, %v8657
      %v9034 = vpack.c.b16 %v8666, %v8662
      %v9035 = vpack.c.b16 %v8667, %v8663
      %v9036 = vpack.c.b16 %v8668, %v8664
      %v9037 = vpack.c.b16 %v8669, %v8665
      %v9038 = vpack.c.b16 %v8674, %v8670
      %v9039 = vpack.c.b16 %v8675, %v8671
      %v9040 = vpack.c.b16 %v8676, %v8672
      %v9041 = vpack.c.b16 %v8677, %v8673
      %v9042 = vpack.c.b16 %v8682, %v8678
      %v9043 = vpack.c.b16 %v8683, %v8679
      %v9044 = vpack.c.b16 %v8684, %v8680
      %v9045 = vpack.c.b16 %v8685, %v8681
      %v9046 = vpack.c.b16 %v8690, %v8686
      %v9047 = vpack.c.b16 %v8691, %v8687
      %v9048 = vpack.c.b16 %v8692, %v8688
      %v9049 = vpack.c.b16 %v8693, %v8689
      %v9050 = vpack.c.b16 %v8698, %v8694
      %v9051 = vpack.c.b16 %v8699, %v8695
      %v9052 = vpack.c.b16 %v8700, %v8696
      %v9053 = vpack.c.b16 %v8701, %v8697
      %v9054 = vpack.c.b16 %v8706, %v8702
      %v9055 = vpack.c.b16 %v8707, %v8703
      %v9056 = vpack.c.b16 %v8708, %v8704
      %v9057 = vpack.c.b16 %v8709, %v8705
      %v9058 = vpack.c.b16 %v8714, %v8710
      %v9059 = vpack.c.b16 %v8715, %v8711
      %v9060 = vpack.c.b16 %v8716, %v8712
      %v9061 = vpack.c.b16 %v8717, %v8713
      %v9062 = vpack.c.b16 %v8722, %v8718
      %v9063 = vpack.c.b16 %v8723, %v8719
      %v9064 = vpack.c.b16 %v8724, %v8720
      %v9065 = vpack.c.b16 %v8725, %v8721
      %v9066 = vpack.c.b16 %v8730, %v8726
      %v9067 = vpack.c.b16 %v8731, %v8727
      %v9068 = vpack.c.b16 %v8732, %v8728
      %v9069 = vpack.c.b16 %v8733, %v8729
      %v9070 = vpack.c.b16 %v8738, %v8734
      %v9071 = vpack.c.b16 %v8739, %v8735
      %v9072 = vpack.c.b16 %v8740, %v8736
      %v9073 = vpack.c.b16 %v8741, %v8737
      %v9074 = vpack.c.b16 %v8746, %v8742
      %v9075 = vpack.c.b16 %v8747, %v8743
      %v9076 = vpack.c.b16 %v8748, %v8744
      %v9077 = vpack.c.b16 %v8749, %v8745
      %v9078 = vpack.c.b16 %v8754, %v8750
      %v9079 = vpack.c.b16 %v8755, %v8751
      %v9080 = vpack.c.b16 %v8756, %v8752
      %v9081 = vpack.c.b16 %v8757, %v8753
      %v9082 = vpack.c.b16 %v8762, %v8758
      %v9083 = vpack.c.b16 %v8763, %v8759
      %v9084 = vpack.c.b16 %v8764, %v8760
      %v9085 = vpack.c.b16 %v8765, %v8761
      %v9086 = vpack.c.b16 %v8770, %v8766
      %v9087 = vpack.c.b16 %v8771, %v8767
      %v9088 = vpack.c.b16 %v8772, %v8768
      %v9089 = vpack.c.b16 %v8773, %v8769
      %v9090 = vpack.c.b16 %v8778, %v8774
      %v9091 = vpack.c.b16 %v8779, %v8775
      %v9092 = vpack.c.b16 %v8780, %v8776
      %v9093 = vpack.c.b16 %v8781, %v8777
      %v9094 = vpack.c.b16 %v8786, %v8782
      %v9095 = vpack.c.b16 %v8787, %v8783
      %v9096 = vpack.c.b16 %v8788, %v8784
      %v9097 = vpack.c.b16 %v8789, %v8785
      %v9098 = vpack.c.b16 %v8794, %v8790
      %v9099 = vpack.c.b16 %v8795, %v8791
      %v9100 = vpack.c.b16 %v8796, %v8792
      %v9101 = vpack.c.b16 %v8797, %v8793
      %v9102 = vpack.c.b16 %v8802, %v8798
      %v9103 = vpack.c.b16 %v8803, %v8799
      %v9104 = vpack.c.b16 %v8804, %v8800
      %v9105 = vpack.c.b16 %v8805, %v8801
      %v9106 = vpack.c.b16 %v8810, %v8806
      %v9107 = vpack.c.b16 %v8811, %v8807
      %v9108 = vpack.c.b16 %v8812, %v8808
      %v9109 = vpack.c.b16 %v8813, %v8809
      %v9110 = vpack.c.b16 %v8818, %v8814
      %v9111 = vpack.c.b16 %v8819, %v8815
      %v9112 = vpack.c.b16 %v8820, %v8816
      %v9113 = vpack.c.b16 %v8821, %v8817
      %v9114 = vpack.c.b16 %v8826, %v8822
      %v9115 = vpack.c.b16 %v8827, %v8823
      %v9116 = vpack.c.b16 %v8828, %v8824
      %v9117 = vpack.c.b16 %v8829, %v8825
      %v9118 = vpack.c.b16 %v8834, %v8830
      %v9119 = vpack.c.b16 %v8835, %v8831
      %v9120 = vpack.c.b16 %v8836, %v8832
      %v9121 = vpack.c.b16 %v8837, %v8833
      %v9122 = vpack.c.b16 %v8842, %v8838
      %v9123 = vpack.c.b16 %v8843, %v8839
      %v9124 = vpack.c.b16 %v8844, %v8840
      %v9125 = vpack.c.b16 %v8845, %v8841
      %v9126 = vpack.c.b16 %v8850, %v8846
      %v9127 = vpack.c.b16 %v8851, %v8847
      %v9128 = vpack.c.b16 %v8852, %v8848
      %v9129 = vpack.c.b16 %v8853, %v8849
      %v9130 = vpack.c.b16 %v8858, %v8854
      %v9131 = vpack.c.b16 %v8859, %v8855
      %v9132 = vpack.c.b16 %v8860, %v8856
      %v9133 = vpack.c.b16 %v8861, %v8857
      %v9134 = vpack.c.b16 %v8866, %v8862
      %v9135 = vpack.c.b16 %v8867, %v8863
      %v9136 = vpack.c.b16 %v8868, %v8864
      %v9137 = vpack.c.b16 %v8869, %v8865
      %v9138 = vpack.c.b16 %v8874, %v8870
      %v9139 = vpack.c.b16 %v8875, %v8871
      %v9140 = vpack.c.b16 %v8876, %v8872
      %v9141 = vpack.c.b16 %v8877, %v8873
      %v9142 = vpack.c.b16 %v8882, %v8878
      %v9143 = vpack.c.b16 %v8883, %v8879
      %v9144 = vpack.c.b16 %v8884, %v8880
      %v9145 = vpack.c.b16 %v8885, %v8881
      %v9146 = vpack.c.b16 %v8890, %v8886
      %v9147 = vpack.c.b16 %v8891, %v8887
      %v9148 = vpack.c.b16 %v8892, %v8888
      %v9149 = vpack.c.b16 %v8893, %v8889
      %9406 = vmatprep.subr.bf16.mxu0 %v8895
      %9407 = vmatpush1.bf16.msra.mxu0 %v8894
      %9408 = vmatprep.subr.bf16.mxu0 %v8899
      %9409 = vmatpush1.bf16.msra.mxu0 %v8898
      %9410 = vmatprep.subr.bf16.mxu0 %v8903
      %9411 = vmatpush1.bf16.msra.mxu0 %v8902
      %9412 = vmatprep.subr.bf16.mxu0 %v8907
      %9413 = vmatpush1.bf16.msra.mxu0 %v8906
      %9414 = vmatprep.subr.bf16.mxu0 %v8911
      %9415 = vmatpush1.bf16.msra.mxu0 %v8910
      %9416 = vmatprep.subr.bf16.mxu0 %v8915
      %9417 = vmatpush1.bf16.msra.mxu0 %v8914
      %9418 = vmatprep.subr.bf16.mxu0 %v8919
      %9419 = vmatpush1.bf16.msra.mxu0 %v8918
      %9420 = vmatprep.subr.bf16.mxu0 %v8923
      %9421 = vmatpush1.bf16.msra.mxu0 %v8922
      %9422 = vmatprep.subr.bf16.mxu0 %v8927
      %9423 = vmatpush1.bf16.msra.mxu0 %v8926
      %9424 = vmatprep.subr.bf16.mxu0 %v8931
      %9425 = vmatpush1.bf16.msra.mxu0 %v8930
      %9426 = vmatprep.subr.bf16.mxu0 %v8935
      %9427 = vmatpush1.bf16.msra.mxu0 %v8934
      %9428 = vmatprep.subr.bf16.mxu0 %v8939
      %9429 = vmatpush1.bf16.msra.mxu0 %v8938
      %9430 = vmatprep.subr.bf16.mxu0 %v8943
      %9431 = vmatpush1.bf16.msra.mxu0 %v8942
      %9432 = vmatprep.subr.bf16.mxu0 %v8947
      %9433 = vmatpush1.bf16.msra.mxu0 %v8946
      %9434 = vmatprep.subr.bf16.mxu0 %v8951
      %9435 = vmatpush1.bf16.msra.mxu0 %v8950
      %9436 = vmatprep.subr.bf16.mxu0 %v8955
      %9437 = vmatpush1.bf16.msra.mxu0 %v8954
      %9438 = vmatprep.mubr.bf16.mxu0 %v7841
      %9439 = vmatmul.mubr.bf16.gmra.mrb[0].mxu0 %v7840
      %v9440 = vpop.f32.mrb[0].mxu0
      %v9441 = vadd.f32 %v8109, %v9440
      %v9442 = vpop.f32.mrb[0].mxu0
      %v9443 = vadd.f32 %v8113, %v9442
      %v9444 = vpop.f32.mrb[0].mxu0
      %v9445 = vpop.f32.mrb[0].mxu0
      %9446 = vdwg.mxu0
      %9447 = vmatprep.subr.bf16.mxu0 %v8959
      %9448 = vmatpush1.bf16.msra.mxu0 %v8958
      %9449 = vmatprep.subr.bf16.mxu0 %v8963
      %9450 = vmatpush1.bf16.msra.mxu0 %v8962
      %9451 = vmatprep.subr.bf16.mxu0 %v8967
      %9452 = vmatpush1.bf16.msra.mxu0 %v8966
      %9453 = vmatprep.subr.bf16.mxu0 %v8971
      %9454 = vmatpush1.bf16.msra.mxu0 %v8970
      %9455 = vmatprep.subr.bf16.mxu0 %v8975
      %9456 = vmatpush1.bf16.msra.mxu0 %v8974
      %9457 = vmatprep.subr.bf16.mxu0 %v8979
      %9458 = vmatpush1.bf16.msra.mxu0 %v8978
      %9459 = vmatprep.subr.bf16.mxu0 %v8983
      %9460 = vmatpush1.bf16.msra.mxu0 %v8982
      %9461 = vmatprep.subr.bf16.mxu0 %v8987
      %9462 = vmatpush1.bf16.msra.mxu0 %v8986
      %9463 = vmatprep.subr.bf16.mxu0 %v8991
      %9464 = vmatpush1.bf16.msra.mxu0 %v8990
      %9465 = vmatprep.subr.bf16.mxu0 %v8995
      %9466 = vmatpush1.bf16.msra.mxu0 %v8994
      %9467 = vmatprep.subr.bf16.mxu0 %v8999
      %9468 = vmatpush1.bf16.msra.mxu0 %v8998
      %9469 = vmatprep.subr.bf16.mxu0 %v9003
      %9470 = vmatpush1.bf16.msra.mxu0 %v9002
      %9471 = vmatprep.subr.bf16.mxu0 %v9007
      %9472 = vmatpush1.bf16.msra.mxu0 %v9006
      %9473 = vmatprep.subr.bf16.mxu0 %v9011
      %9474 = vmatpush1.bf16.msra.mxu0 %v9010
      %9475 = vmatprep.subr.bf16.mxu0 %v9015
      %9476 = vmatpush1.bf16.msra.mxu0 %v9014
      %9477 = vmatprep.subr.bf16.mxu0 %v9019
      %9478 = vmatpush1.bf16.msra.mxu0 %v9018
      %9479 = vmatprep.mubr.bf16.mxu0 %v7843
      %9480 = vmatmul.mubr.bf16.gmra.mrb[0].mxu0 %v7842
      %v9481 = vpop.f32.mrb[0].mxu0
      %v9482 = vadd.f32 %v9441, %v9481
      %v9483 = vpop.f32.mrb[0].mxu0
      %v9484 = vadd.f32 %v9443, %v9483
      %v9485 = vpop.f32.mrb[0].mxu0
      %v9486 = vpop.f32.mrb[0].mxu0
      %9487 = vdwg.mxu0
      %9488 = vmatprep.subr.bf16.mxu0 %v9023
      %9489 = vmatpush1.bf16.msra.mxu0 %v9022
      %9490 = vmatprep.subr.bf16.mxu0 %v9027
      %9491 = vmatpush1.bf16.msra.mxu0 %v9026
      %9492 = vmatprep.subr.bf16.mxu0 %v9031
      %9493 = vmatpush1.bf16.msra.mxu0 %v9030
      %9494 = vmatprep.subr.bf16.mxu0 %v9035
      %9495 = vmatpush1.bf16.msra.mxu0 %v9034
      %9496 = vmatprep.subr.bf16.mxu0 %v9039
      %9497 = vmatpush1.bf16.msra.mxu0 %v9038
      %9498 = vmatprep.subr.bf16.mxu0 %v9043
      %9499 = vmatpush1.bf16.msra.mxu0 %v9042
      %9500 = vmatprep.subr.bf16.mxu0 %v9047
      %9501 = vmatpush1.bf16.msra.mxu0 %v9046
      %9502 = vmatprep.subr.bf16.mxu0 %v9051
      %9503 = vmatpush1.bf16.msra.mxu0 %v9050
      %9504 = vmatprep.subr.bf16.mxu0 %v9055
      %9505 = vmatpush1.bf16.msra.mxu0 %v9054
      %9506 = vmatprep.subr.bf16.mxu0 %v9059
      %9507 = vmatpush1.bf16.msra.mxu0 %v9058
      %9508 = vmatprep.subr.bf16.mxu0 %v9063
      %9509 = vmatpush1.bf16.msra.mxu0 %v9062
      %9510 = vmatprep.subr.bf16.mxu0 %v9067
      %9511 = vmatpush1.bf16.msra.mxu0 %v9066
      %9512 = vmatprep.subr.bf16.mxu0 %v9071
      %9513 = vmatpush1.bf16.msra.mxu0 %v9070
      %9514 = vmatprep.subr.bf16.mxu0 %v9075
      %9515 = vmatpush1.bf16.msra.mxu0 %v9074
      %9516 = vmatprep.subr.bf16.mxu0 %v9079
      %9517 = vmatpush1.bf16.msra.mxu0 %v9078
      %9518 = vmatprep.subr.bf16.mxu0 %v9083
      %9519 = vmatpush1.bf16.msra.mxu0 %v9082
      %9520 = vmatprep.mubr.bf16.mxu0 %v7845
      %9521 = vmatmul.mubr.bf16.gmra.mrb[0].mxu0 %v7844
      %v9522 = vpop.f32.mrb[0].mxu0
      %v9523 = vadd.f32 %v9482, %v9522
      %v9524 = vpop.f32.mrb[0].mxu0
      %v9525 = vadd.f32 %v9484, %v9524
      %v9526 = vpop.f32.mrb[0].mxu0
      %v9527 = vpop.f32.mrb[0].mxu0
      %9528 = vdwg.mxu0
      %9529 = vmatprep.subr.bf16.mxu0 %v9087
      %9530 = vmatpush1.bf16.msra.mxu0 %v9086
      %9531 = vmatprep.subr.bf16.mxu0 %v9091
      %9532 = vmatpush1.bf16.msra.mxu0 %v9090
      %9533 = vmatprep.subr.bf16.mxu0 %v9095
      %9534 = vmatpush1.bf16.msra.mxu0 %v9094
      %9535 = vmatprep.subr.bf16.mxu0 %v9099
      %9536 = vmatpush1.bf16.msra.mxu0 %v9098
      %9537 = vmatprep.subr.bf16.mxu0 %v9103
      %9538 = vmatpush1.bf16.msra.mxu0 %v9102
      %9539 = vmatprep.subr.bf16.mxu0 %v9107
      %9540 = vmatpush1.bf16.msra.mxu0 %v9106
      %9541 = vmatprep.subr.bf16.mxu0 %v9111
      %9542 = vmatpush1.bf16.msra.mxu0 %v9110
      %9543 = vmatprep.subr.bf16.mxu0 %v9115
      %9544 = vmatpush1.bf16.msra.mxu0 %v9114
      %9545 = vmatprep.subr.bf16.mxu0 %v9119
      %9546 = vmatpush1.bf16.msra.mxu0 %v9118
      %9547 = vmatprep.subr.bf16.mxu0 %v9123
      %9548 = vmatpush1.bf16.msra.mxu0 %v9122
      %9549 = vmatprep.subr.bf16.mxu0 %v9127
      %9550 = vmatpush1.bf16.msra.mxu0 %v9126
      %9551 = vmatprep.subr.bf16.mxu0 %v9131
      %9552 = vmatpush1.bf16.msra.mxu0 %v9130
      %9553 = vmatprep.subr.bf16.mxu0 %v9135
      %9554 = vmatpush1.bf16.msra.mxu0 %v9134
      %9555 = vmatprep.subr.bf16.mxu0 %v9139
      %9556 = vmatpush1.bf16.msra.mxu0 %v9138
      %9557 = vmatprep.subr.bf16.mxu0 %v9143
      %9558 = vmatpush1.bf16.msra.mxu0 %v9142
      %9559 = vmatprep.subr.bf16.mxu0 %v9147
      %9560 = vmatpush1.bf16.msra.mxu0 %v9146
      %9561 = vmatprep.mubr.bf16.mxu0 %v7847
      %9562 = vmatmul.mubr.bf16.gmra.mrb[0].mxu0 %v7846
      %v9563 = vpop.f32.mrb[0].mxu0
      %v9564 = vadd.f32 %v9523, %v9563
      %v9565 = vpop.f32.mrb[0].mxu0
      %v9566 = vadd.f32 %v9525, %v9565
      %v9567 = vpop.f32.mrb[0].mxu0
      %v9568 = vpop.f32.mrb[0].mxu0
      %9569 = vdwg.mxu0
      %9570 = vmatprep.subr.bf16.mxu0 %v8897
      %9571 = vmatpush1.bf16.msra.mxu0 %v8896
      %9572 = vmatprep.subr.bf16.mxu0 %v8901
      %9573 = vmatpush1.bf16.msra.mxu0 %v8900
      %9574 = vmatprep.subr.bf16.mxu0 %v8905
      %9575 = vmatpush1.bf16.msra.mxu0 %v8904
      %9576 = vmatprep.subr.bf16.mxu0 %v8909
      %9577 = vmatpush1.bf16.msra.mxu0 %v8908
      %9578 = vmatprep.subr.bf16.mxu0 %v8913
      %9579 = vmatpush1.bf16.msra.mxu0 %v8912
      %9580 = vmatprep.subr.bf16.mxu0 %v8917
      %9581 = vmatpush1.bf16.msra.mxu0 %v8916
      %9582 = vmatprep.subr.bf16.mxu0 %v8921
      %9583 = vmatpush1.bf16.msra.mxu0 %v8920
      %9584 = vmatprep.subr.bf16.mxu0 %v8925
      %9585 = vmatpush1.bf16.msra.mxu0 %v8924
      %9586 = vmatprep.subr.bf16.mxu0 %v8929
      %9587 = vmatpush1.bf16.msra.mxu0 %v8928
      %9588 = vmatprep.subr.bf16.mxu0 %v8933
      %9589 = vmatpush1.bf16.msra.mxu0 %v8932
      %9590 = vmatprep.subr.bf16.mxu0 %v8937
      %9591 = vmatpush1.bf16.msra.mxu0 %v8936
      %9592 = vmatprep.subr.bf16.mxu0 %v8941
      %9593 = vmatpush1.bf16.msra.mxu0 %v8940
      %9594 = vmatprep.subr.bf16.mxu0 %v8945
      %9595 = vmatpush1.bf16.msra.mxu0 %v8944
      %9596 = vmatprep.subr.bf16.mxu0 %v8949
      %9597 = vmatpush1.bf16.msra.mxu0 %v8948
      %9598 = vmatprep.subr.bf16.mxu0 %v8953
      %9599 = vmatpush1.bf16.msra.mxu0 %v8952
      %9600 = vmatprep.subr.bf16.mxu0 %v8957
      %9601 = vmatpush1.bf16.msra.mxu0 %v8956
      %9602 = vmatprep.mubr.bf16.mxu0 %v7841
      %9603 = vmatmul.mubr.bf16.gmra.mrb[0].mxu0 %v7840
      %v9604 = vpop.f32.mrb[0].mxu0
      %v9605 = vadd.f32 %v8117, %v9604
      %v9606 = vpop.f32.mrb[0].mxu0
      %v9607 = vadd.f32 %v8121, %v9606
      %v9608 = vpop.f32.mrb[0].mxu0
      %v9609 = vpop.f32.mrb[0].mxu0
      %9610 = vdwg.mxu0
      %9611 = vmatprep.subr.bf16.mxu0 %v8961
      %9612 = vmatpush1.bf16.msra.mxu0 %v8960
      %9613 = vmatprep.subr.bf16.mxu0 %v8965
      %9614 = vmatpush1.bf16.msra.mxu0 %v8964
      %9615 = vmatprep.subr.bf16.mxu0 %v8969
      %9616 = vmatpush1.bf16.msra.mxu0 %v8968
      %9617 = vmatprep.subr.bf16.mxu0 %v8973
      %9618 = vmatpush1.bf16.msra.mxu0 %v8972
      %9619 = vmatprep.subr.bf16.mxu0 %v8977
      %9620 = vmatpush1.bf16.msra.mxu0 %v8976
      %9621 = vmatprep.subr.bf16.mxu0 %v8981
      %9622 = vmatpush1.bf16.msra.mxu0 %v8980
      %9623 = vmatprep.subr.bf16.mxu0 %v8985
      %9624 = vmatpush1.bf16.msra.mxu0 %v8984
      %9625 = vmatprep.subr.bf16.mxu0 %v8989
      %9626 = vmatpush1.bf16.msra.mxu0 %v8988
      %9627 = vmatprep.subr.bf16.mxu0 %v8993
      %9628 = vmatpush1.bf16.msra.mxu0 %v8992
      %9629 = vmatprep.subr.bf16.mxu0 %v8997
      %9630 = vmatpush1.bf16.msra.mxu0 %v8996
      %9631 = vmatprep.subr.bf16.mxu0 %v9001
      %9632 = vmatpush1.bf16.msra.mxu0 %v9000
      %9633 = vmatprep.subr.bf16.mxu0 %v9005
      %9634 = vmatpush1.bf16.msra.mxu0 %v9004
      %9635 = vmatprep.subr.bf16.mxu0 %v9009
      %9636 = vmatpush1.bf16.msra.mxu0 %v9008
      %9637 = vmatprep.subr.bf16.mxu0 %v9013
      %9638 = vmatpush1.bf16.msra.mxu0 %v9012
      %9639 = vmatprep.subr.bf16.mxu0 %v9017
      %9640 = vmatpush1.bf16.msra.mxu0 %v9016
      %9641 = vmatprep.subr.bf16.mxu0 %v9021
      %9642 = vmatpush1.bf16.msra.mxu0 %v9020
      %9643 = vmatprep.mubr.bf16.mxu0 %v7843
      %9644 = vmatmul.mubr.bf16.gmra.mrb[0].mxu0 %v7842
      %v9645 = vpop.f32.mrb[0].mxu0
      %v9646 = vadd.f32 %v9605, %v9645
      %v9647 = vpop.f32.mrb[0].mxu0
      %v9648 = vadd.f32 %v9607, %v9647
      %v9649 = vpop.f32.mrb[0].mxu0
      %v9650 = vpop.f32.mrb[0].mxu0
      %9651 = vdwg.mxu0
      %9652 = vmatprep.subr.bf16.mxu0 %v9025
      %9653 = vmatpush1.bf16.msra.mxu0 %v9024
      %9654 = vmatprep.subr.bf16.mxu0 %v9029
      %9655 = vmatpush1.bf16.msra.mxu0 %v9028
      %9656 = vmatprep.subr.bf16.mxu0 %v9033
      %9657 = vmatpush1.bf16.msra.mxu0 %v9032
      %9658 = vmatprep.subr.bf16.mxu0 %v9037
      %9659 = vmatpush1.bf16.msra.mxu0 %v9036
      %9660 = vmatprep.subr.bf16.mxu0 %v9041
      %9661 = vmatpush1.bf16.msra.mxu0 %v9040
      %9662 = vmatprep.subr.bf16.mxu0 %v9045
      %9663 = vmatpush1.bf16.msra.mxu0 %v9044
      %9664 = vmatprep.subr.bf16.mxu0 %v9049
      %9665 = vmatpush1.bf16.msra.mxu0 %v9048
      %9666 = vmatprep.subr.bf16.mxu0 %v9053
      %9667 = vmatpush1.bf16.msra.mxu0 %v9052
      %9668 = vmatprep.subr.bf16.mxu0 %v9057
      %9669 = vmatpush1.bf16.msra.mxu0 %v9056
      %9670 = vmatprep.subr.bf16.mxu0 %v9061
      %9671 = vmatpush1.bf16.msra.mxu0 %v9060
      %9672 = vmatprep.subr.bf16.mxu0 %v9065
      %9673 = vmatpush1.bf16.msra.mxu0 %v9064
      %9674 = vmatprep.subr.bf16.mxu0 %v9069
      %9675 = vmatpush1.bf16.msra.mxu0 %v9068
      %9676 = vmatprep.subr.bf16.mxu0 %v9073
      %9677 = vmatpush1.bf16.msra.mxu0 %v9072
      %9678 = vmatprep.subr.bf16.mxu0 %v9077
      %9679 = vmatpush1.bf16.msra.mxu0 %v9076
      %9680 = vmatprep.subr.bf16.mxu0 %v9081
      %9681 = vmatpush1.bf16.msra.mxu0 %v9080
      %9682 = vmatprep.subr.bf16.mxu0 %v9085
      %9683 = vmatpush1.bf16.msra.mxu0 %v9084
      %9684 = vmatprep.mubr.bf16.mxu0 %v7845
      %9685 = vmatmul.mubr.bf16.gmra.mrb[0].mxu0 %v7844
      %v9686 = vpop.f32.mrb[0].mxu0
      %v9687 = vadd.f32 %v9646, %v9686
      %v9688 = vpop.f32.mrb[0].mxu0
      %v9689 = vadd.f32 %v9648, %v9688
      %v9690 = vpop.f32.mrb[0].mxu0
      %v9691 = vpop.f32.mrb[0].mxu0
      %9692 = vdwg.mxu0
      %9693 = vmatprep.subr.bf16.mxu0 %v9089
      %9694 = vmatpush1.bf16.msra.mxu0 %v9088
      %9695 = vmatprep.subr.bf16.mxu0 %v9093
      %9696 = vmatpush1.bf16.msra.mxu0 %v9092
      %9697 = vmatprep.subr.bf16.mxu0 %v9097
      %9698 = vmatpush1.bf16.msra.mxu0 %v9096
      %9699 = vmatprep.subr.bf16.mxu0 %v9101
      %9700 = vmatpush1.bf16.msra.mxu0 %v9100
      %9701 = vmatprep.subr.bf16.mxu0 %v9105
      %9702 = vmatpush1.bf16.msra.mxu0 %v9104
      %9703 = vmatprep.subr.bf16.mxu0 %v9109
      %9704 = vmatpush1.bf16.msra.mxu0 %v9108
      %9705 = vmatprep.subr.bf16.mxu0 %v9113
      %9706 = vmatpush1.bf16.msra.mxu0 %v9112
      %9707 = vmatprep.subr.bf16.mxu0 %v9117
      %9708 = vmatpush1.bf16.msra.mxu0 %v9116
      %9709 = vmatprep.subr.bf16.mxu0 %v9121
      %9710 = vmatpush1.bf16.msra.mxu0 %v9120
      %9711 = vmatprep.subr.bf16.mxu0 %v9125
      %9712 = vmatpush1.bf16.msra.mxu0 %v9124
      %9713 = vmatprep.subr.bf16.mxu0 %v9129
      %9714 = vmatpush1.bf16.msra.mxu0 %v9128
      %9715 = vmatprep.subr.bf16.mxu0 %v9133
      %9716 = vmatpush1.bf16.msra.mxu0 %v9132
      %9717 = vmatprep.subr.bf16.mxu0 %v9137
      %9718 = vmatpush1.bf16.msra.mxu0 %v9136
      %9719 = vmatprep.subr.bf16.mxu0 %v9141
      %9720 = vmatpush1.bf16.msra.mxu0 %v9140
      %9721 = vmatprep.subr.bf16.mxu0 %v9145
      %9722 = vmatpush1.bf16.msra.mxu0 %v9144
      %9723 = vmatprep.subr.bf16.mxu0 %v9149
      %9724 = vmatpush1.bf16.msra.mxu0 %v9148
      %9725 = vmatprep.mubr.bf16.mxu0 %v7847
      %9726 = vmatmul.mubr.bf16.gmra.mrb[0].mxu0 %v7846
      %v9727 = vpop.f32.mrb[0].mxu0
      %v9728 = vadd.f32 %v9687, %v9727
      %v9729 = vpop.f32.mrb[0].mxu0
      %v9730 = vadd.f32 %v9689, %v9729
      %v9731 = vpop.f32.mrb[0].mxu0
      %v9732 = vpop.f32.mrb[0].mxu0
      %9733 = vdwg.mxu0
      %v9738 = vcombine.low %v9564, %v9566
      %v9739 = vcombine.low %v9728, %v9730
      %v9741 = vunpack.c.l.s4 1983009808
      %v9742 = vunpack.c.0.s8 %v9741
      %v9743 = vlaneseq
      %v9744 = vshrl.u32 %v9743, 7
      %v9745 = vsub.s32 %v9742, %v9744
      %v9746 = vrot.slane %v9738, %v9745
      %v9748 = vunpack.c.l.s4 1983009808
      %v9749 = vunpack.c.0.s8 %v9748
      %v9750 = vlaneseq
      %v9751 = vshrl.u32 %v9750, 7
      %v9752 = vsub.s32 %v9749, %v9751
      %v9753 = vrot.slane %v9739, %v9752
      %v9754 = vcombine.low %v9746, %v9753
      %9756 = vst [vmem:[#allocation12] sm:$0xff] %v9754
    $region49: #{tpu_custom_call.1} parent=1 // pred_fallthru
      _
    // Predicated region
    $region50: #{tpu_custom_call.1} parent=1 // pred_check
      _
    $region51: #{tpu_custom_call.1} parent=1 // pred_check_branch
      %9758 = sbr.rel (0) target = $region53
    $region52: #{tpu_custom_call.1} parent=1 // pred_region
      %s9760 = ssub.s32 128, 128
      %9761 = vsyncadd [#allocation5], %s9760
      %s9763 = sshll.u32 [#allocation12], 4
      %s9764 = int_to_ptr.vmem [resolvable:$true] %s9763
      %9766 = dma.vmem_to_hbm [thread:$0]  %s9764, 128, %s5, [#allocation5]
    $region53: #{tpu_custom_call.1} parent=1 // pred_fallthru
      _
    // Predicated region
    $region54: #{tpu_custom_call.1} parent=1 // pred_check
      _
    $region55: #{tpu_custom_call.1} parent=1 // pred_check_branch
      %9768 = sbr.rel (0) target = $region57
    $region56: #{tpu_custom_call.1} parent=1 // pred_region
      %9769 = dma.done [#allocation5], 128
    $region57: #{tpu_custom_call.1} parent=1 // pred_fallthru
      _
    %9770 = vsyncpa [#allocation4], 1
    %9771 = vsyncpa [#allocation7], 1
    %9772 = vsyncpa [#allocation10], 1
    %9773 = vsyncpa [#allocation5], 1

</llo_original>
